<compile_context>
chip_gen: v7x
topology: tpu7x:2x2x1
jax: 0.10.0
libtpu: 0.0.40
codegen_flags: <defaults>
</compile_context>

<pallas_src>
import math

import jax
import jax.numpy as jnp
from jax.experimental import pallas as pl
from jax.experimental.pallas import tpu as pltpu

D_EMBED = 64
NUM_HEADS = 4
CONTEXT_LEN = 128
HEAD_SIZE = D_EMBED // NUM_HEADS       # 16 (as computed in Block.__init__)
N_HEADS_EFF = HEAD_SIZE                # 16 heads ...
HEAD_DIM_EFF = NUM_HEADS               # ... each of size 4 (arg swap in the module)
D_HIDDEN = 4 * D_EMBED                 # 256
LN_EPS = 1e-5


def _layer_norm(x, g, b):
    mu = jnp.mean(x, axis=-1, keepdims=True)
    xc = x - mu
    var = jnp.mean(xc * xc, axis=-1, keepdims=True)
    return xc * jax.lax.rsqrt(var + LN_EPS) * g + b


# ----------------------------------------------------------------------------
# Fused Block kernel (one grid step per batch element)
# ----------------------------------------------------------------------------
def _block_kernel(x_ref, wqkv_ref, wo_ref, bo_ref, mask_ref,
                  g1_ref, bn1_ref, w1_ref, b1_ref, w2_ref, b2_ref,
                  g2_ref, bn2_ref, o_ref):
    S, D = x_ref.shape
    hd = HEAD_DIM_EFF
    n_heads = D // hd

    x = x_ref[...]                                                # (S, D) f32
    xb = x.astype(jnp.bfloat16)

    # --- attention: one packed QKV projection (bf16 MXU, f32 accumulation) ---
    qkv = jnp.dot(xb, wqkv_ref[...],
                  preferred_element_type=jnp.float32)             # (S, 3D)
    q = qkv[:, :D] * (1.0 / math.sqrt(D))     # module scales by 1/sqrt(d_embed)
    k = qkv[:, D:2 * D]
    v = qkv[:, 2 * D:]
    qb = q.astype(jnp.bfloat16)
    kb = k.astype(jnp.bfloat16)
    vb = v.astype(jnp.bfloat16)

    mask = mask_ref[...]                      # (S, S) resident additive causal bias

    ctx_heads = []
    for h in range(n_heads):                  # 16 tiny heads, unrolled in-kernel
        lo = h * hd
        hi = lo + hd
        s = jax.lax.dot_general(qb[:, lo:hi], kb[:, lo:hi],
                                (((1,), (1,)), ((), ())),
                                preferred_element_type=jnp.float32)   # (S, S)
        s = s + mask
        m = jnp.max(s, axis=-1, keepdims=True)
        p = jnp.exp(s - m)                    # softmax kept in f32 (v5e constraint)
        p = p * pl.reciprocal(jnp.sum(p, axis=-1, keepdims=True), approx=True)
        ctx_heads.append(jnp.dot(p.astype(jnp.bfloat16), vb[:, lo:hi],
                                 preferred_element_type=jnp.float32))  # (S, hd)
    ctx = jnp.concatenate(ctx_heads, axis=-1)                          # (S, D)

    attn = jnp.dot(ctx.astype(jnp.bfloat16), wo_ref[...],
                   preferred_element_type=jnp.float32) + bo_ref[...]

    # --- residual + LayerNorm1 (f32) ---
    x1 = _layer_norm(x + attn, g1_ref[...], bn1_ref[...])

    # --- FeedForward: bf16 operands on the MXU, f32 bias / ReLU ---
    hid = jnp.dot(x1.astype(jnp.bfloat16), w1_ref[...],
                  preferred_element_type=jnp.float32) + b1_ref[...]
    hid = jnp.maximum(hid, 0.0)
    ff = jnp.dot(hid.astype(jnp.bfloat16), w2_ref[...],
                 preferred_element_type=jnp.float32) + b2_ref[...]

    # --- residual + LayerNorm2 (f32) ---
    out = _layer_norm(x1 + ff, g2_ref[...], bn2_ref[...])
    # TODO(synk): lane-dense (S//2, 128) output repack (masked->unmasked vst for
    # D=64) needs an in-kernel cross-lane relayout; skipped to keep lowering robust.
    o_ref[...] = out.astype(o_ref.dtype)


def _pack_qkv(wq, wk, wv):
    """Per-head (H, D, hd) weights -> one packed (D, 3*H*hd) bf16 QKV matrix."""
    def cat(w):
        H, D, hd = w.shape
        return jnp.transpose(w, (1, 0, 2)).reshape(D, H * hd)
    return jnp.concatenate([cat(wq), cat(wk), cat(wv)], axis=1).astype(jnp.bfloat16)


def block_forward(x, p):
    """Full Block forward: LN2(x1 + FFN(x1)), x1 = LN1(x + MHA(x))."""
    B, S, D = x.shape
    H, _, hd = p["wq"].shape
    Hh = p["w1"].shape[1]

    wqkv = _pack_qkv(p["wq"], p["wk"], p["wv"])                     # (D, 3D) bf16
    wo = p["wo"].reshape(H * hd, D).astype(jnp.bfloat16)            # (D, D)  bf16
    w1 = p["w1"].astype(jnp.bfloat16)
    w2 = p["w2"].astype(jnp.bfloat16)

    # Precomputed causal additive bias (0 / -1e30), resident in VMEM.
    row = jax.lax.broadcasted_iota(jnp.int32, (S, S), 0)
    col = jax.lax.broadcasted_iota(jnp.int32, (S, S), 1)
    mask_bias = jnp.where(col <= row, 0.0, -1e30).astype(jnp.float32)

    flops = (2 * B * S * D * 3 * D          # packed QKV projection
             + 4 * B * H * S * S * hd       # per-head scores + context
             + 2 * B * S * D * D            # output projection
             + 4 * B * S * D * Hh)          # feed-forward (two matmuls)
    cost = pl.CostEstimate(
        flops=flops,
        transcendentals=B * H * S * S + 6 * B * S,
        bytes_accessed=(2 * B * S * D * 4 + S * S * 4
                        + 2 * (3 * D * D + D * D + 2 * D * Hh)
                        + 8 * D * 4 + Hh * 4),
    )

    def resident(r, c):
        return pl.BlockSpec((r, c), lambda b: (0, 0))

    return pl.pallas_call(
        _block_kernel,
        out_shape=jax.ShapeDtypeStruct((B, S, D), jnp.float32),
        grid_spec=pltpu.PrefetchScalarGridSpec(
            num_scalar_prefetch=0,
            grid=(B,),                       # >=2 "parallel" steps -> both v7x TCs busy
            in_specs=[
                pl.BlockSpec((None, S, D), lambda b: (b, 0, 0)),    # x (per batch)
                resident(D, 3 * D),                                 # packed Wqkv (bf16)
                resident(D, D),                                     # Wo (bf16)
                resident(1, D),                                     # bo
                resident(S, S),                                     # causal mask bias
                resident(1, D),                                     # LN1 gamma
                resident(1, D),                                     # LN1 beta
                resident(D, Hh),                                    # W1 (bf16)
                resident(1, Hh),                                    # b1
                resident(Hh, D),                                    # W2 (bf16)
                resident(1, D),                                     # b2
                resident(1, D),                                     # LN2 gamma
                resident(1, D),                                     # LN2 beta
            ],
            out_specs=pl.BlockSpec((None, S, D), lambda b: (b, 0, 0)),
        ),
        compiler_params=pltpu.CompilerParams(
            dimension_semantics=("parallel",)),
        cost_estimate=cost,
    )(x, wqkv, wo, p["bo"].reshape(1, D), mask_bias,
      p["ln1_g"].reshape(1, D), p["ln1_b"].reshape(1, D),
      w1, p["b1"].reshape(1, Hh), w2, p["b2"].reshape(1, D),
      p["ln2_g"].reshape(1, D), p["ln2_b"].reshape(1, D))


# ----------------------------------------------------------------------------
# Parameters (deterministic, matching nn.Linear / nn.LayerNorm defaults)
# ----------------------------------------------------------------------------
def init_params(key):
    ks = jax.random.split(key, 9)
    bd = 1.0 / math.sqrt(D_EMBED)
    bh = 1.0 / math.sqrt(D_HIDDEN)
    u = jax.random.uniform
    return dict(
        # attention: 16 heads of size 4; per-head K/Q/V are Linear(64, 4, bias=False)
        wq=u(ks[0], (N_HEADS_EFF, D_EMBED, HEAD_DIM_EFF), jnp.float32, -bd, bd),
        wk=u(ks[1], (N_HEADS_EFF, D_EMBED, HEAD_DIM_EFF), jnp.float32, -bd, bd),
        wv=u(ks[2], (N_HEADS_EFF, D_EMBED, HEAD_DIM_EFF), jnp.float32, -bd, bd),
        # output projection Linear(64, 64), stored as per-head (hd, D) slices
        wo=u(ks[3], (N_HEADS_EFF, HEAD_DIM_EFF, D_EMBED), jnp.float32, -bd, bd),
        bo=u(ks[4], (D_EMBED,), jnp.float32, -bd, bd),
        ln1_g=jnp.ones((D_EMBED,), jnp.float32),
        ln1_b=jnp.zeros((D_EMBED,), jnp.float32),
        # feed-forward: Linear(64,256) -> ReLU -> Linear(256,64), stored (in, out)
        w1=u(ks[5], (D_EMBED, D_HIDDEN), jnp.float32, -bd, bd),
        b1=u(ks[6], (D_HIDDEN,), jnp.float32, -bd, bd),
        w2=u(ks[7], (D_HIDDEN, D_EMBED), jnp.float32, -bh, bh),
        b2=u(ks[8], (D_EMBED,), jnp.float32, -bh, bh),
        ln2_g=jnp.ones((D_EMBED,), jnp.float32),
        ln2_b=jnp.zeros((D_EMBED,), jnp.float32),
    )


# ----------------------------------------------------------------------------
# Plain-JAX reference (mirrors the kernel's bf16 matmul operands)
# ----------------------------------------------------------------------------
def block_reference(x, p):
    bf, f32 = jnp.bfloat16, jnp.float32
    xb = x.astype(bf)
    q = jnp.einsum('bsd,hdf->bhsf', xb, p['wq'].astype(bf),
                   preferred_element_type=f32) / math.sqrt(x.shape[-1])
    k = jnp.einsum('bsd,hdf->bhsf', xb, p['wk'].astype(bf),
                   preferred_element_type=f32)
    v = jnp.einsum('bsd,hdf->bhsf', xb, p['wv'].astype(bf),
                   preferred_element_type=f32)
    s = jnp.einsum('bhqf,bhkf->bhqk', q.astype(bf), k.astype(bf),
                   preferred_element_type=f32)
    S = x.shape[1]
    mask = jnp.tril(jnp.ones((S, S), dtype=bool))
    s = jnp.where(mask, s, -jnp.inf)
    pr = jax.nn.softmax(s, axis=-1)
    ctx = jnp.einsum('bhqk,bhkf->bhqf', pr.astype(bf), v.astype(bf),
                     preferred_element_type=f32)
    attn = jnp.einsum('bhqf,hfd->bqd', ctx.astype(bf), p['wo'].astype(bf),
                      preferred_element_type=f32) + p['bo']
    x1 = _layer_norm(x + attn, p['ln1_g'], p['ln1_b'])
    h = jnp.dot(x1.astype(bf), p['w1'].astype(bf),
                preferred_element_type=f32) + p['b1']
    h = jnp.maximum(h, 0.0)
    y = jnp.dot(h.astype(bf), p['w2'].astype(bf),
                preferred_element_type=f32) + p['b2']
    return _layer_norm(x1 + y, p['ln2_g'], p['ln2_b'])


if __name__ == "__main__":
    key = jax.random.PRNGKey(0)
    kx, kp = jax.random.split(key)

    batch, seq = 2, CONTEXT_LEN   # the module's causal mask assumes seq == context_length
    x = jax.random.normal(kx, (batch, seq, D_EMBED), jnp.float32)
    params = init_params(kp)

    y = jax.block_until_ready(block_forward(x, params))

    ref = block_reference(x, params)
    assert y.shape == x.shape
    err = float(jnp.max(jnp.abs(y - ref)))
    assert jnp.allclose(y, ref, atol=5e-2, rtol=5e-2), \
        f"mismatch vs reference: max_abs_err={err}"

    print("KERNEL_OK")
</pallas_src>

<mosaic_0001>
module attributes {stable_mosaic.version = 11 : i64} {
  func.func @_block_kernel(%arg0: i32, %arg1: memref<1x128x64xf32, #tpu.memory_space<vmem>>, %arg2: memref<64x192xbf16, #tpu.memory_space<vmem>>, %arg3: memref<64x64xbf16, #tpu.memory_space<vmem>>, %arg4: memref<1x64xf32, #tpu.memory_space<vmem>>, %arg5: memref<128x128xf32, #tpu.memory_space<vmem>>, %arg6: memref<1x64xf32, #tpu.memory_space<vmem>>, %arg7: memref<1x64xf32, #tpu.memory_space<vmem>>, %arg8: memref<64x256xbf16, #tpu.memory_space<vmem>>, %arg9: memref<1x256xf32, #tpu.memory_space<vmem>>, %arg10: memref<256x64xbf16, #tpu.memory_space<vmem>>, %arg11: memref<1x64xf32, #tpu.memory_space<vmem>>, %arg12: memref<1x64xf32, #tpu.memory_space<vmem>>, %arg13: memref<1x64xf32, #tpu.memory_space<vmem>>, %arg14: memref<1x128x64xf32, #tpu.memory_space<vmem>>) attributes {dimension_semantics = [#tpu.dimension_semantics<parallel>], iteration_bounds = array<i64: 2>, scalar_prefetch = 0 : i64, scratch_operands = 0 : i64, tpu.core_type = #tpu.core_type<tc>, window_params = [{transform_indices = @transform_0, window_bounds = array<i64: 1, 128, 64>}, {pipeline_mode = #tpu.pipeline_mode<synchronous>, transform_indices = @transform_1, window_bounds = array<i64: 64, 192>}, {pipeline_mode = #tpu.pipeline_mode<synchronous>, transform_indices = @transform_2, window_bounds = array<i64: 64, 64>}, {pipeline_mode = #tpu.pipeline_mode<synchronous>, transform_indices = @transform_3, window_bounds = array<i64: 1, 64>}, {pipeline_mode = #tpu.pipeline_mode<synchronous>, transform_indices = @transform_4, window_bounds = array<i64: 128, 128>}, {pipeline_mode = #tpu.pipeline_mode<synchronous>, transform_indices = @transform_5, window_bounds = array<i64: 1, 64>}, {pipeline_mode = #tpu.pipeline_mode<synchronous>, transform_indices = @transform_6, window_bounds = array<i64: 1, 64>}, {pipeline_mode = #tpu.pipeline_mode<synchronous>, transform_indices = @transform_7, window_bounds = array<i64: 64, 256>}, {pipeline_mode = #tpu.pipeline_mode<synchronous>, transform_indices = @transform_8, window_bounds = array<i64: 1, 256>}, {pipeline_mode = #tpu.pipeline_mode<synchronous>, transform_indices = @transform_9, window_bounds = array<i64: 256, 64>}, {pipeline_mode = #tpu.pipeline_mode<synchronous>, transform_indices = @transform_10, window_bounds = array<i64: 1, 64>}, {pipeline_mode = #tpu.pipeline_mode<synchronous>, transform_indices = @transform_11, window_bounds = array<i64: 1, 64>}, {pipeline_mode = #tpu.pipeline_mode<synchronous>, transform_indices = @transform_12, window_bounds = array<i64: 1, 64>}, {transform_indices = @transform_13, window_bounds = array<i64: 1, 128, 64>}]} {
    %c0 = arith.constant 0 : index
    %c0_0 = arith.constant 0 : index
    %c0_1 = arith.constant 0 : index
    %0 = vector.load %arg1[%c0, %c0_0, %c0_1] : memref<1x128x64xf32, #tpu.memory_space<vmem>>, vector<1x128x64xf32>
    %1 = vector.shape_cast %0 : vector<1x128x64xf32> to vector<128x64xf32>
    %2 = arith.truncf %1 : vector<128x64xf32> to vector<128x64xbf16>
    %c0_2 = arith.constant 0 : index
    %c0_3 = arith.constant 0 : index
    %3 = vector.load %arg2[%c0_2, %c0_3] : memref<64x192xbf16, #tpu.memory_space<vmem>>, vector<64x192xbf16>
    %cst = arith.constant dense<0.000000e+00> : vector<128x192xf32>
    %4 = tpu.matmul %2, %3, %cst {dimension_numbers = #tpu.dot_dimension_numbers<[1], [0], [0], [1], [0, 0, 1, 1], [], []>} : vector<128x64xbf16>, vector<64x192xbf16>, vector<128x192xf32> -> vector<128x192xf32>
    %5 = vector.extract_strided_slice %4 {offsets = [0, 0], sizes = [128, 64], strides = [1, 1]} : vector<128x192xf32> to vector<128x64xf32>
    %cst_4 = arith.constant 1.250000e-01 : f32
    %6 = vector.broadcast %cst_4 : f32 to vector<128x64xf32>
    %7 = arith.mulf %5, %6 : vector<128x64xf32>
    %8 = vector.extract_strided_slice %4 {offsets = [0, 64], sizes = [128, 64], strides = [1, 1]} : vector<128x192xf32> to vector<128x64xf32>
    %9 = vector.extract_strided_slice %4 {offsets = [0, 128], sizes = [128, 64], strides = [1, 1]} : vector<128x192xf32> to vector<128x64xf32>
    %10 = arith.truncf %7 : vector<128x64xf32> to vector<128x64xbf16>
    %11 = arith.truncf %8 : vector<128x64xf32> to vector<128x64xbf16>
    %12 = arith.truncf %9 : vector<128x64xf32> to vector<128x64xbf16>
    %c0_5 = arith.constant 0 : index
    %c0_6 = arith.constant 0 : index
    %13 = vector.load %arg5[%c0_5, %c0_6] : memref<128x128xf32, #tpu.memory_space<vmem>>, vector<128x128xf32>
    %14 = vector.extract_strided_slice %10 {offsets = [0, 0], sizes = [128, 4], strides = [1, 1]} : vector<128x64xbf16> to vector<128x4xbf16>
    %15 = vector.extract_strided_slice %11 {offsets = [0, 0], sizes = [128, 4], strides = [1, 1]} : vector<128x64xbf16> to vector<128x4xbf16>
    %cst_7 = arith.constant dense<0.000000e+00> : vector<128x128xf32>
    %16 = tpu.matmul %14, %15, %cst_7 {dimension_numbers = #tpu.dot_dimension_numbers<[1], [1], [0], [0], [0, 0, 1, 0], [], []>} : vector<128x4xbf16>, vector<128x4xbf16>, vector<128x128xf32> -> vector<128x128xf32>
    %17 = arith.addf %16, %13 : vector<128x128xf32>
    %cst_8 = arith.constant dense<0xFF800000> : vector<128xf32>
    %18 = vector.multi_reduction <maximumf>, %17, %cst_8 [1] : vector<128x128xf32> to vector<128xf32>
    %19 = vector.shape_cast %18 : vector<128xf32> to vector<128x1xf32>
    %20 = vector.broadcast %19 : vector<128x1xf32> to vector<128x128xf32>
    %21 = arith.subf %17, %20 : vector<128x128xf32>
    %22 = math.exp %21 : vector<128x128xf32>
    %cst_9 = arith.constant dense<0.000000e+00> : vector<128xf32>
    %23 = vector.multi_reduction <add>, %22, %cst_9 [1] : vector<128x128xf32> to vector<128xf32>
    %24 = vector.shape_cast %23 : vector<128xf32> to vector<128x1xf32>
    %25 = tpu.reciprocal %24 {approx = true} : vector<128x1xf32> -> vector<128x1xf32>
    %26 = vector.broadcast %25 : vector<128x1xf32> to vector<128x128xf32>
    %27 = arith.mulf %22, %26 : vector<128x128xf32>
    %28 = arith.truncf %27 : vector<128x128xf32> to vector<128x128xbf16>
    %29 = vector.extract_strided_slice %12 {offsets = [0, 0], sizes = [128, 4], strides = [1, 1]} : vector<128x64xbf16> to vector<128x4xbf16>
    %cst_10 = arith.constant dense<0.000000e+00> : vector<128x4xf32>
    %30 = tpu.matmul %28, %29, %cst_10 {dimension_numbers = #tpu.dot_dimension_numbers<[1], [0], [0], [1], [0, 0, 1, 1], [], []>} : vector<128x128xbf16>, vector<128x4xbf16>, vector<128x4xf32> -> vector<128x4xf32>
    %31 = vector.extract_strided_slice %10 {offsets = [0, 4], sizes = [128, 4], strides = [1, 1]} : vector<128x64xbf16> to vector<128x4xbf16>
    %32 = vector.extract_strided_slice %11 {offsets = [0, 4], sizes = [128, 4], strides = [1, 1]} : vector<128x64xbf16> to vector<128x4xbf16>
    %cst_11 = arith.constant dense<0.000000e+00> : vector<128x128xf32>
    %33 = tpu.matmul %31, %32, %cst_11 {dimension_numbers = #tpu.dot_dimension_numbers<[1], [1], [0], [0], [0, 0, 1, 0], [], []>} : vector<128x4xbf16>, vector<128x4xbf16>, vector<128x128xf32> -> vector<128x128xf32>
    %34 = arith.addf %33, %13 : vector<128x128xf32>
    %cst_12 = arith.constant dense<0xFF800000> : vector<128xf32>
    %35 = vector.multi_reduction <maximumf>, %34, %cst_12 [1] : vector<128x128xf32> to vector<128xf32>
    %36 = vector.shape_cast %35 : vector<128xf32> to vector<128x1xf32>
    %37 = vector.broadcast %36 : vector<128x1xf32> to vector<128x128xf32>
    %38 = arith.subf %34, %37 : vector<128x128xf32>
    %39 = math.exp %38 : vector<128x128xf32>
    %cst_13 = arith.constant dense<0.000000e+00> : vector<128xf32>
    %40 = vector.multi_reduction <add>, %39, %cst_13 [1] : vector<128x128xf32> to vector<128xf32>
    %41 = vector.shape_cast %40 : vector<128xf32> to vector<128x1xf32>
    %42 = tpu.reciprocal %41 {approx = true} : vector<128x1xf32> -> vector<128x1xf32>
    %43 = vector.broadcast %42 : vector<128x1xf32> to vector<128x128xf32>
    %44 = arith.mulf %39, %43 : vector<128x128xf32>
    %45 = arith.truncf %44 : vector<128x128xf32> to vector<128x128xbf16>
    %46 = vector.extract_strided_slice %12 {offsets = [0, 4], sizes = [128, 4], strides = [1, 1]} : vector<128x64xbf16> to vector<128x4xbf16>
    %cst_14 = arith.constant dense<0.000000e+00> : vector<128x4xf32>
    %47 = tpu.matmul %45, %46, %cst_14 {dimension_numbers = #tpu.dot_dimension_numbers<[1], [0], [0], [1], [0, 0, 1, 1], [], []>} : vector<128x128xbf16>, vector<128x4xbf16>, vector<128x4xf32> -> vector<128x4xf32>
    %48 = vector.extract_strided_slice %10 {offsets = [0, 8], sizes = [128, 4], strides = [1, 1]} : vector<128x64xbf16> to vector<128x4xbf16>
    %49 = vector.extract_strided_slice %11 {offsets = [0, 8], sizes = [128, 4], strides = [1, 1]} : vector<128x64xbf16> to vector<128x4xbf16>
    %cst_15 = arith.constant dense<0.000000e+00> : vector<128x128xf32>
    %50 = tpu.matmul %48, %49, %cst_15 {dimension_numbers = #tpu.dot_dimension_numbers<[1], [1], [0], [0], [0, 0, 1, 0], [], []>} : vector<128x4xbf16>, vector<128x4xbf16>, vector<128x128xf32> -> vector<128x128xf32>
    %51 = arith.addf %50, %13 : vector<128x128xf32>
    %cst_16 = arith.constant dense<0xFF800000> : vector<128xf32>
    %52 = vector.multi_reduction <maximumf>, %51, %cst_16 [1] : vector<128x128xf32> to vector<128xf32>
    %53 = vector.shape_cast %52 : vector<128xf32> to vector<128x1xf32>
    %54 = vector.broadcast %53 : vector<128x1xf32> to vector<128x128xf32>
    %55 = arith.subf %51, %54 : vector<128x128xf32>
    %56 = math.exp %55 : vector<128x128xf32>
    %cst_17 = arith.constant dense<0.000000e+00> : vector<128xf32>
    %57 = vector.multi_reduction <add>, %56, %cst_17 [1] : vector<128x128xf32> to vector<128xf32>
    %58 = vector.shape_cast %57 : vector<128xf32> to vector<128x1xf32>
    %59 = tpu.reciprocal %58 {approx = true} : vector<128x1xf32> -> vector<128x1xf32>
    %60 = vector.broadcast %59 : vector<128x1xf32> to vector<128x128xf32>
    %61 = arith.mulf %56, %60 : vector<128x128xf32>
    %62 = arith.truncf %61 : vector<128x128xf32> to vector<128x128xbf16>
    %63 = vector.extract_strided_slice %12 {offsets = [0, 8], sizes = [128, 4], strides = [1, 1]} : vector<128x64xbf16> to vector<128x4xbf16>
    %cst_18 = arith.constant dense<0.000000e+00> : vector<128x4xf32>
    %64 = tpu.matmul %62, %63, %cst_18 {dimension_numbers = #tpu.dot_dimension_numbers<[1], [0], [0], [1], [0, 0, 1, 1], [], []>} : vector<128x128xbf16>, vector<128x4xbf16>, vector<128x4xf32> -> vector<128x4xf32>
    %65 = vector.extract_strided_slice %10 {offsets = [0, 12], sizes = [128, 4], strides = [1, 1]} : vector<128x64xbf16> to vector<128x4xbf16>
    %66 = vector.extract_strided_slice %11 {offsets = [0, 12], sizes = [128, 4], strides = [1, 1]} : vector<128x64xbf16> to vector<128x4xbf16>
    %cst_19 = arith.constant dense<0.000000e+00> : vector<128x128xf32>
    %67 = tpu.matmul %65, %66, %cst_19 {dimension_numbers = #tpu.dot_dimension_numbers<[1], [1], [0], [0], [0, 0, 1, 0], [], []>} : vector<128x4xbf16>, vector<128x4xbf16>, vector<128x128xf32> -> vector<128x128xf32>
    %68 = arith.addf %67, %13 : vector<128x128xf32>
    %cst_20 = arith.constant dense<0xFF800000> : vector<128xf32>
    %69 = vector.multi_reduction <maximumf>, %68, %cst_20 [1] : vector<128x128xf32> to vector<128xf32>
    %70 = vector.shape_cast %69 : vector<128xf32> to vector<128x1xf32>
    %71 = vector.broadcast %70 : vector<128x1xf32> to vector<128x128xf32>
    %72 = arith.subf %68, %71 : vector<128x128xf32>
    %73 = math.exp %72 : vector<128x128xf32>
    %cst_21 = arith.constant dense<0.000000e+00> : vector<128xf32>
    %74 = vector.multi_reduction <add>, %73, %cst_21 [1] : vector<128x128xf32> to vector<128xf32>
    %75 = vector.shape_cast %74 : vector<128xf32> to vector<128x1xf32>
    %76 = tpu.reciprocal %75 {approx = true} : vector<128x1xf32> -> vector<128x1xf32>
    %77 = vector.broadcast %76 : vector<128x1xf32> to vector<128x128xf32>
    %78 = arith.mulf %73, %77 : vector<128x128xf32>
    %79 = arith.truncf %78 : vector<128x128xf32> to vector<128x128xbf16>
    %80 = vector.extract_strided_slice %12 {offsets = [0, 12], sizes = [128, 4], strides = [1, 1]} : vector<128x64xbf16> to vector<128x4xbf16>
    %cst_22 = arith.constant dense<0.000000e+00> : vector<128x4xf32>
    %81 = tpu.matmul %79, %80, %cst_22 {dimension_numbers = #tpu.dot_dimension_numbers<[1], [0], [0], [1], [0, 0, 1, 1], [], []>} : vector<128x128xbf16>, vector<128x4xbf16>, vector<128x4xf32> -> vector<128x4xf32>
    %82 = vector.extract_strided_slice %10 {offsets = [0, 16], sizes = [128, 4], strides = [1, 1]} : vector<128x64xbf16> to vector<128x4xbf16>
    %83 = vector.extract_strided_slice %11 {offsets = [0, 16], sizes = [128, 4], strides = [1, 1]} : vector<128x64xbf16> to vector<128x4xbf16>
    %cst_23 = arith.constant dense<0.000000e+00> : vector<128x128xf32>
    %84 = tpu.matmul %82, %83, %cst_23 {dimension_numbers = #tpu.dot_dimension_numbers<[1], [1], [0], [0], [0, 0, 1, 0], [], []>} : vector<128x4xbf16>, vector<128x4xbf16>, vector<128x128xf32> -> vector<128x128xf32>
    %85 = arith.addf %84, %13 : vector<128x128xf32>
    %cst_24 = arith.constant dense<0xFF800000> : vector<128xf32>
    %86 = vector.multi_reduction <maximumf>, %85, %cst_24 [1] : vector<128x128xf32> to vector<128xf32>
    %87 = vector.shape_cast %86 : vector<128xf32> to vector<128x1xf32>
    %88 = vector.broadcast %87 : vector<128x1xf32> to vector<128x128xf32>
    %89 = arith.subf %85, %88 : vector<128x128xf32>
    %90 = math.exp %89 : vector<128x128xf32>
    %cst_25 = arith.constant dense<0.000000e+00> : vector<128xf32>
    %91 = vector.multi_reduction <add>, %90, %cst_25 [1] : vector<128x128xf32> to vector<128xf32>
    %92 = vector.shape_cast %91 : vector<128xf32> to vector<128x1xf32>
    %93 = tpu.reciprocal %92 {approx = true} : vector<128x1xf32> -> vector<128x1xf32>
    %94 = vector.broadcast %93 : vector<128x1xf32> to vector<128x128xf32>
    %95 = arith.mulf %90, %94 : vector<128x128xf32>
    %96 = arith.truncf %95 : vector<128x128xf32> to vector<128x128xbf16>
    %97 = vector.extract_strided_slice %12 {offsets = [0, 16], sizes = [128, 4], strides = [1, 1]} : vector<128x64xbf16> to vector<128x4xbf16>
    %cst_26 = arith.constant dense<0.000000e+00> : vector<128x4xf32>
    %98 = tpu.matmul %96, %97, %cst_26 {dimension_numbers = #tpu.dot_dimension_numbers<[1], [0], [0], [1], [0, 0, 1, 1], [], []>} : vector<128x128xbf16>, vector<128x4xbf16>, vector<128x4xf32> -> vector<128x4xf32>
    %99 = vector.extract_strided_slice %10 {offsets = [0, 20], sizes = [128, 4], strides = [1, 1]} : vector<128x64xbf16> to vector<128x4xbf16>
    %100 = vector.extract_strided_slice %11 {offsets = [0, 20], sizes = [128, 4], strides = [1, 1]} : vector<128x64xbf16> to vector<128x4xbf16>
    %cst_27 = arith.constant dense<0.000000e+00> : vector<128x128xf32>
    %101 = tpu.matmul %99, %100, %cst_27 {dimension_numbers = #tpu.dot_dimension_numbers<[1], [1], [0], [0], [0, 0, 1, 0], [], []>} : vector<128x4xbf16>, vector<128x4xbf16>, vector<128x128xf32> -> vector<128x128xf32>
    %102 = arith.addf %101, %13 : vector<128x128xf32>
    %cst_28 = arith.constant dense<0xFF800000> : vector<128xf32>
    %103 = vector.multi_reduction <maximumf>, %102, %cst_28 [1] : vector<128x128xf32> to vector<128xf32>
    %104 = vector.shape_cast %103 : vector<128xf32> to vector<128x1xf32>
    %105 = vector.broadcast %104 : vector<128x1xf32> to vector<128x128xf32>
    %106 = arith.subf %102, %105 : vector<128x128xf32>
    %107 = math.exp %106 : vector<128x128xf32>
    %cst_29 = arith.constant dense<0.000000e+00> : vector<128xf32>
    %108 = vector.multi_reduction <add>, %107, %cst_29 [1] : vector<128x128xf32> to vector<128xf32>
    %109 = vector.shape_cast %108 : vector<128xf32> to vector<128x1xf32>
    %110 = tpu.reciprocal %109 {approx = true} : vector<128x1xf32> -> vector<128x1xf32>
    %111 = vector.broadcast %110 : vector<128x1xf32> to vector<128x128xf32>
    %112 = arith.mulf %107, %111 : vector<128x128xf32>
    %113 = arith.truncf %112 : vector<128x128xf32> to vector<128x128xbf16>
    %114 = vector.extract_strided_slice %12 {offsets = [0, 20], sizes = [128, 4], strides = [1, 1]} : vector<128x64xbf16> to vector<128x4xbf16>
    %cst_30 = arith.constant dense<0.000000e+00> : vector<128x4xf32>
    %115 = tpu.matmul %113, %114, %cst_30 {dimension_numbers = #tpu.dot_dimension_numbers<[1], [0], [0], [1], [0, 0, 1, 1], [], []>} : vector<128x128xbf16>, vector<128x4xbf16>, vector<128x4xf32> -> vector<128x4xf32>
    %116 = vector.extract_strided_slice %10 {offsets = [0, 24], sizes = [128, 4], strides = [1, 1]} : vector<128x64xbf16> to vector<128x4xbf16>
    %117 = vector.extract_strided_slice %11 {offsets = [0, 24], sizes = [128, 4], strides = [1, 1]} : vector<128x64xbf16> to vector<128x4xbf16>
    %cst_31 = arith.constant dense<0.000000e+00> : vector<128x128xf32>
    %118 = tpu.matmul %116, %117, %cst_31 {dimension_numbers = #tpu.dot_dimension_numbers<[1], [1], [0], [0], [0, 0, 1, 0], [], []>} : vector<128x4xbf16>, vector<128x4xbf16>, vector<128x128xf32> -> vector<128x128xf32>
    %119 = arith.addf %118, %13 : vector<128x128xf32>
    %cst_32 = arith.constant dense<0xFF800000> : vector<128xf32>
    %120 = vector.multi_reduction <maximumf>, %119, %cst_32 [1] : vector<128x128xf32> to vector<128xf32>
    %121 = vector.shape_cast %120 : vector<128xf32> to vector<128x1xf32>
    %122 = vector.broadcast %121 : vector<128x1xf32> to vector<128x128xf32>
    %123 = arith.subf %119, %122 : vector<128x128xf32>
    %124 = math.exp %123 : vector<128x128xf32>
    %cst_33 = arith.constant dense<0.000000e+00> : vector<128xf32>
    %125 = vector.multi_reduction <add>, %124, %cst_33 [1] : vector<128x128xf32> to vector<128xf32>
    %126 = vector.shape_cast %125 : vector<128xf32> to vector<128x1xf32>
    %127 = tpu.reciprocal %126 {approx = true} : vector<128x1xf32> -> vector<128x1xf32>
    %128 = vector.broadcast %127 : vector<128x1xf32> to vector<128x128xf32>
    %129 = arith.mulf %124, %128 : vector<128x128xf32>
    %130 = arith.truncf %129 : vector<128x128xf32> to vector<128x128xbf16>
    %131 = vector.extract_strided_slice %12 {offsets = [0, 24], sizes = [128, 4], strides = [1, 1]} : vector<128x64xbf16> to vector<128x4xbf16>
    %cst_34 = arith.constant dense<0.000000e+00> : vector<128x4xf32>
    %132 = tpu.matmul %130, %131, %cst_34 {dimension_numbers = #tpu.dot_dimension_numbers<[1], [0], [0], [1], [0, 0, 1, 1], [], []>} : vector<128x128xbf16>, vector<128x4xbf16>, vector<128x4xf32> -> vector<128x4xf32>
    %133 = vector.extract_strided_slice %10 {offsets = [0, 28], sizes = [128, 4], strides = [1, 1]} : vector<128x64xbf16> to vector<128x4xbf16>
    %134 = vector.extract_strided_slice %11 {offsets = [0, 28], sizes = [128, 4], strides = [1, 1]} : vector<128x64xbf16> to vector<128x4xbf16>
    %cst_35 = arith.constant dense<0.000000e+00> : vector<128x128xf32>
    %135 = tpu.matmul %133, %134, %cst_35 {dimension_numbers = #tpu.dot_dimension_numbers<[1], [1], [0], [0], [0, 0, 1, 0], [], []>} : vector<128x4xbf16>, vector<128x4xbf16>, vector<128x128xf32> -> vector<128x128xf32>
    %136 = arith.addf %135, %13 : vector<128x128xf32>
    %cst_36 = arith.constant dense<0xFF800000> : vector<128xf32>
    %137 = vector.multi_reduction <maximumf>, %136, %cst_36 [1] : vector<128x128xf32> to vector<128xf32>
    %138 = vector.shape_cast %137 : vector<128xf32> to vector<128x1xf32>
    %139 = vector.broadcast %138 : vector<128x1xf32> to vector<128x128xf32>
    %140 = arith.subf %136, %139 : vector<128x128xf32>
    %141 = math.exp %140 : vector<128x128xf32>
    %cst_37 = arith.constant dense<0.000000e+00> : vector<128xf32>
    %142 = vector.multi_reduction <add>, %141, %cst_37 [1] : vector<128x128xf32> to vector<128xf32>
    %143 = vector.shape_cast %142 : vector<128xf32> to vector<128x1xf32>
    %144 = tpu.reciprocal %143 {approx = true} : vector<128x1xf32> -> vector<128x1xf32>
    %145 = vector.broadcast %144 : vector<128x1xf32> to vector<128x128xf32>
    %146 = arith.mulf %141, %145 : vector<128x128xf32>
    %147 = arith.truncf %146 : vector<128x128xf32> to vector<128x128xbf16>
    %148 = vector.extract_strided_slice %12 {offsets = [0, 28], sizes = [128, 4], strides = [1, 1]} : vector<128x64xbf16> to vector<128x4xbf16>
    %cst_38 = arith.constant dense<0.000000e+00> : vector<128x4xf32>
    %149 = tpu.matmul %147, %148, %cst_38 {dimension_numbers = #tpu.dot_dimension_numbers<[1], [0], [0], [1], [0, 0, 1, 1], [], []>} : vector<128x128xbf16>, vector<128x4xbf16>, vector<128x4xf32> -> vector<128x4xf32>
    %150 = vector.extract_strided_slice %10 {offsets = [0, 32], sizes = [128, 4], strides = [1, 1]} : vector<128x64xbf16> to vector<128x4xbf16>
    %151 = vector.extract_strided_slice %11 {offsets = [0, 32], sizes = [128, 4], strides = [1, 1]} : vector<128x64xbf16> to vector<128x4xbf16>
    %cst_39 = arith.constant dense<0.000000e+00> : vector<128x128xf32>
    %152 = tpu.matmul %150, %151, %cst_39 {dimension_numbers = #tpu.dot_dimension_numbers<[1], [1], [0], [0], [0, 0, 1, 0], [], []>} : vector<128x4xbf16>, vector<128x4xbf16>, vector<128x128xf32> -> vector<128x128xf32>
    %153 = arith.addf %152, %13 : vector<128x128xf32>
    %cst_40 = arith.constant dense<0xFF800000> : vector<128xf32>
    %154 = vector.multi_reduction <maximumf>, %153, %cst_40 [1] : vector<128x128xf32> to vector<128xf32>
    %155 = vector.shape_cast %154 : vector<128xf32> to vector<128x1xf32>
    %156 = vector.broadcast %155 : vector<128x1xf32> to vector<128x128xf32>
    %157 = arith.subf %153, %156 : vector<128x128xf32>
    %158 = math.exp %157 : vector<128x128xf32>
    %cst_41 = arith.constant dense<0.000000e+00> : vector<128xf32>
    %159 = vector.multi_reduction <add>, %158, %cst_41 [1] : vector<128x128xf32> to vector<128xf32>
    %160 = vector.shape_cast %159 : vector<128xf32> to vector<128x1xf32>
    %161 = tpu.reciprocal %160 {approx = true} : vector<128x1xf32> -> vector<128x1xf32>
    %162 = vector.broadcast %161 : vector<128x1xf32> to vector<128x128xf32>
    %163 = arith.mulf %158, %162 : vector<128x128xf32>
    %164 = arith.truncf %163 : vector<128x128xf32> to vector<128x128xbf16>
    %165 = vector.extract_strided_slice %12 {offsets = [0, 32], sizes = [128, 4], strides = [1, 1]} : vector<128x64xbf16> to vector<128x4xbf16>
    %cst_42 = arith.constant dense<0.000000e+00> : vector<128x4xf32>
    %166 = tpu.matmul %164, %165, %cst_42 {dimension_numbers = #tpu.dot_dimension_numbers<[1], [0], [0], [1], [0, 0, 1, 1], [], []>} : vector<128x128xbf16>, vector<128x4xbf16>, vector<128x4xf32> -> vector<128x4xf32>
    %167 = vector.extract_strided_slice %10 {offsets = [0, 36], sizes = [128, 4], strides = [1, 1]} : vector<128x64xbf16> to vector<128x4xbf16>
    %168 = vector.extract_strided_slice %11 {offsets = [0, 36], sizes = [128, 4], strides = [1, 1]} : vector<128x64xbf16> to vector<128x4xbf16>
    %cst_43 = arith.constant dense<0.000000e+00> : vector<128x128xf32>
    %169 = tpu.matmul %167, %168, %cst_43 {dimension_numbers = #tpu.dot_dimension_numbers<[1], [1], [0], [0], [0, 0, 1, 0], [], []>} : vector<128x4xbf16>, vector<128x4xbf16>, vector<128x128xf32> -> vector<128x128xf32>
    %170 = arith.addf %169, %13 : vector<128x128xf32>
    %cst_44 = arith.constant dense<0xFF800000> : vector<128xf32>
    %171 = vector.multi_reduction <maximumf>, %170, %cst_44 [1] : vector<128x128xf32> to vector<128xf32>
    %172 = vector.shape_cast %171 : vector<128xf32> to vector<128x1xf32>
    %173 = vector.broadcast %172 : vector<128x1xf32> to vector<128x128xf32>
    %174 = arith.subf %170, %173 : vector<128x128xf32>
    %175 = math.exp %174 : vector<128x128xf32>
    %cst_45 = arith.constant dense<0.000000e+00> : vector<128xf32>
    %176 = vector.multi_reduction <add>, %175, %cst_45 [1] : vector<128x128xf32> to vector<128xf32>
    %177 = vector.shape_cast %176 : vector<128xf32> to vector<128x1xf32>
    %178 = tpu.reciprocal %177 {approx = true} : vector<128x1xf32> -> vector<128x1xf32>
    %179 = vector.broadcast %178 : vector<128x1xf32> to vector<128x128xf32>
    %180 = arith.mulf %175, %179 : vector<128x128xf32>
    %181 = arith.truncf %180 : vector<128x128xf32> to vector<128x128xbf16>
    %182 = vector.extract_strided_slice %12 {offsets = [0, 36], sizes = [128, 4], strides = [1, 1]} : vector<128x64xbf16> to vector<128x4xbf16>
    %cst_46 = arith.constant dense<0.000000e+00> : vector<128x4xf32>
    %183 = tpu.matmul %181, %182, %cst_46 {dimension_numbers = #tpu.dot_dimension_numbers<[1], [0], [0], [1], [0, 0, 1, 1], [], []>} : vector<128x128xbf16>, vector<128x4xbf16>, vector<128x4xf32> -> vector<128x4xf32>
    %184 = vector.extract_strided_slice %10 {offsets = [0, 40], sizes = [128, 4], strides = [1, 1]} : vector<128x64xbf16> to vector<128x4xbf16>
    %185 = vector.extract_strided_slice %11 {offsets = [0, 40], sizes = [128, 4], strides = [1, 1]} : vector<128x64xbf16> to vector<128x4xbf16>
    %cst_47 = arith.constant dense<0.000000e+00> : vector<128x128xf32>
    %186 = tpu.matmul %184, %185, %cst_47 {dimension_numbers = #tpu.dot_dimension_numbers<[1], [1], [0], [0], [0, 0, 1, 0], [], []>} : vector<128x4xbf16>, vector<128x4xbf16>, vector<128x128xf32> -> vector<128x128xf32>
    %187 = arith.addf %186, %13 : vector<128x128xf32>
    %cst_48 = arith.constant dense<0xFF800000> : vector<128xf32>
    %188 = vector.multi_reduction <maximumf>, %187, %cst_48 [1] : vector<128x128xf32> to vector<128xf32>
    %189 = vector.shape_cast %188 : vector<128xf32> to vector<128x1xf32>
    %190 = vector.broadcast %189 : vector<128x1xf32> to vector<128x128xf32>
    %191 = arith.subf %187, %190 : vector<128x128xf32>
    %192 = math.exp %191 : vector<128x128xf32>
    %cst_49 = arith.constant dense<0.000000e+00> : vector<128xf32>
    %193 = vector.multi_reduction <add>, %192, %cst_49 [1] : vector<128x128xf32> to vector<128xf32>
    %194 = vector.shape_cast %193 : vector<128xf32> to vector<128x1xf32>
    %195 = tpu.reciprocal %194 {approx = true} : vector<128x1xf32> -> vector<128x1xf32>
    %196 = vector.broadcast %195 : vector<128x1xf32> to vector<128x128xf32>
    %197 = arith.mulf %192, %196 : vector<128x128xf32>
    %198 = arith.truncf %197 : vector<128x128xf32> to vector<128x128xbf16>
    %199 = vector.extract_strided_slice %12 {offsets = [0, 40], sizes = [128, 4], strides = [1, 1]} : vector<128x64xbf16> to vector<128x4xbf16>
    %cst_50 = arith.constant dense<0.000000e+00> : vector<128x4xf32>
    %200 = tpu.matmul %198, %199, %cst_50 {dimension_numbers = #tpu.dot_dimension_numbers<[1], [0], [0], [1], [0, 0, 1, 1], [], []>} : vector<128x128xbf16>, vector<128x4xbf16>, vector<128x4xf32> -> vector<128x4xf32>
    %201 = vector.extract_strided_slice %10 {offsets = [0, 44], sizes = [128, 4], strides = [1, 1]} : vector<128x64xbf16> to vector<128x4xbf16>
    %202 = vector.extract_strided_slice %11 {offsets = [0, 44], sizes = [128, 4], strides = [1, 1]} : vector<128x64xbf16> to vector<128x4xbf16>
    %cst_51 = arith.constant dense<0.000000e+00> : vector<128x128xf32>
    %203 = tpu.matmul %201, %202, %cst_51 {dimension_numbers = #tpu.dot_dimension_numbers<[1], [1], [0], [0], [0, 0, 1, 0], [], []>} : vector<128x4xbf16>, vector<128x4xbf16>, vector<128x128xf32> -> vector<128x128xf32>
    %204 = arith.addf %203, %13 : vector<128x128xf32>
    %cst_52 = arith.constant dense<0xFF800000> : vector<128xf32>
    %205 = vector.multi_reduction <maximumf>, %204, %cst_52 [1] : vector<128x128xf32> to vector<128xf32>
    %206 = vector.shape_cast %205 : vector<128xf32> to vector<128x1xf32>
    %207 = vector.broadcast %206 : vector<128x1xf32> to vector<128x128xf32>
    %208 = arith.subf %204, %207 : vector<128x128xf32>
    %209 = math.exp %208 : vector<128x128xf32>
    %cst_53 = arith.constant dense<0.000000e+00> : vector<128xf32>
    %210 = vector.multi_reduction <add>, %209, %cst_53 [1] : vector<128x128xf32> to vector<128xf32>
    %211 = vector.shape_cast %210 : vector<128xf32> to vector<128x1xf32>
    %212 = tpu.reciprocal %211 {approx = true} : vector<128x1xf32> -> vector<128x1xf32>
    %213 = vector.broadcast %212 : vector<128x1xf32> to vector<128x128xf32>
    %214 = arith.mulf %209, %213 : vector<128x128xf32>
    %215 = arith.truncf %214 : vector<128x128xf32> to vector<128x128xbf16>
    %216 = vector.extract_strided_slice %12 {offsets = [0, 44], sizes = [128, 4], strides = [1, 1]} : vector<128x64xbf16> to vector<128x4xbf16>
    %cst_54 = arith.constant dense<0.000000e+00> : vector<128x4xf32>
    %217 = tpu.matmul %215, %216, %cst_54 {dimension_numbers = #tpu.dot_dimension_numbers<[1], [0], [0], [1], [0, 0, 1, 1], [], []>} : vector<128x128xbf16>, vector<128x4xbf16>, vector<128x4xf32> -> vector<128x4xf32>
    %218 = vector.extract_strided_slice %10 {offsets = [0, 48], sizes = [128, 4], strides = [1, 1]} : vector<128x64xbf16> to vector<128x4xbf16>
    %219 = vector.extract_strided_slice %11 {offsets = [0, 48], sizes = [128, 4], strides = [1, 1]} : vector<128x64xbf16> to vector<128x4xbf16>
    %cst_55 = arith.constant dense<0.000000e+00> : vector<128x128xf32>
    %220 = tpu.matmul %218, %219, %cst_55 {dimension_numbers = #tpu.dot_dimension_numbers<[1], [1], [0], [0], [0, 0, 1, 0], [], []>} : vector<128x4xbf16>, vector<128x4xbf16>, vector<128x128xf32> -> vector<128x128xf32>
    %221 = arith.addf %220, %13 : vector<128x128xf32>
    %cst_56 = arith.constant dense<0xFF800000> : vector<128xf32>
    %222 = vector.multi_reduction <maximumf>, %221, %cst_56 [1] : vector<128x128xf32> to vector<128xf32>
    %223 = vector.shape_cast %222 : vector<128xf32> to vector<128x1xf32>
    %224 = vector.broadcast %223 : vector<128x1xf32> to vector<128x128xf32>
    %225 = arith.subf %221, %224 : vector<128x128xf32>
    %226 = math.exp %225 : vector<128x128xf32>
    %cst_57 = arith.constant dense<0.000000e+00> : vector<128xf32>
    %227 = vector.multi_reduction <add>, %226, %cst_57 [1] : vector<128x128xf32> to vector<128xf32>
    %228 = vector.shape_cast %227 : vector<128xf32> to vector<128x1xf32>
    %229 = tpu.reciprocal %228 {approx = true} : vector<128x1xf32> -> vector<128x1xf32>
    %230 = vector.broadcast %229 : vector<128x1xf32> to vector<128x128xf32>
    %231 = arith.mulf %226, %230 : vector<128x128xf32>
    %232 = arith.truncf %231 : vector<128x128xf32> to vector<128x128xbf16>
    %233 = vector.extract_strided_slice %12 {offsets = [0, 48], sizes = [128, 4], strides = [1, 1]} : vector<128x64xbf16> to vector<128x4xbf16>
    %cst_58 = arith.constant dense<0.000000e+00> : vector<128x4xf32>
    %234 = tpu.matmul %232, %233, %cst_58 {dimension_numbers = #tpu.dot_dimension_numbers<[1], [0], [0], [1], [0, 0, 1, 1], [], []>} : vector<128x128xbf16>, vector<128x4xbf16>, vector<128x4xf32> -> vector<128x4xf32>
    %235 = vector.extract_strided_slice %10 {offsets = [0, 52], sizes = [128, 4], strides = [1, 1]} : vector<128x64xbf16> to vector<128x4xbf16>
    %236 = vector.extract_strided_slice %11 {offsets = [0, 52], sizes = [128, 4], strides = [1, 1]} : vector<128x64xbf16> to vector<128x4xbf16>
    %cst_59 = arith.constant dense<0.000000e+00> : vector<128x128xf32>
    %237 = tpu.matmul %235, %236, %cst_59 {dimension_numbers = #tpu.dot_dimension_numbers<[1], [1], [0], [0], [0, 0, 1, 0], [], []>} : vector<128x4xbf16>, vector<128x4xbf16>, vector<128x128xf32> -> vector<128x128xf32>
    %238 = arith.addf %237, %13 : vector<128x128xf32>
    %cst_60 = arith.constant dense<0xFF800000> : vector<128xf32>
    %239 = vector.multi_reduction <maximumf>, %238, %cst_60 [1] : vector<128x128xf32> to vector<128xf32>
    %240 = vector.shape_cast %239 : vector<128xf32> to vector<128x1xf32>
    %241 = vector.broadcast %240 : vector<128x1xf32> to vector<128x128xf32>
    %242 = arith.subf %238, %241 : vector<128x128xf32>
    %243 = math.exp %242 : vector<128x128xf32>
    %cst_61 = arith.constant dense<0.000000e+00> : vector<128xf32>
    %244 = vector.multi_reduction <add>, %243, %cst_61 [1] : vector<128x128xf32> to vector<128xf32>
    %245 = vector.shape_cast %244 : vector<128xf32> to vector<128x1xf32>
    %246 = tpu.reciprocal %245 {approx = true} : vector<128x1xf32> -> vector<128x1xf32>
    %247 = vector.broadcast %246 : vector<128x1xf32> to vector<128x128xf32>
    %248 = arith.mulf %243, %247 : vector<128x128xf32>
    %249 = arith.truncf %248 : vector<128x128xf32> to vector<128x128xbf16>
    %250 = vector.extract_strided_slice %12 {offsets = [0, 52], sizes = [128, 4], strides = [1, 1]} : vector<128x64xbf16> to vector<128x4xbf16>
    %cst_62 = arith.constant dense<0.000000e+00> : vector<128x4xf32>
    %251 = tpu.matmul %249, %250, %cst_62 {dimension_numbers = #tpu.dot_dimension_numbers<[1], [0], [0], [1], [0, 0, 1, 1], [], []>} : vector<128x128xbf16>, vector<128x4xbf16>, vector<128x4xf32> -> vector<128x4xf32>
    %252 = vector.extract_strided_slice %10 {offsets = [0, 56], sizes = [128, 4], strides = [1, 1]} : vector<128x64xbf16> to vector<128x4xbf16>
    %253 = vector.extract_strided_slice %11 {offsets = [0, 56], sizes = [128, 4], strides = [1, 1]} : vector<128x64xbf16> to vector<128x4xbf16>
    %cst_63 = arith.constant dense<0.000000e+00> : vector<128x128xf32>
    %254 = tpu.matmul %252, %253, %cst_63 {dimension_numbers = #tpu.dot_dimension_numbers<[1], [1], [0], [0], [0, 0, 1, 0], [], []>} : vector<128x4xbf16>, vector<128x4xbf16>, vector<128x128xf32> -> vector<128x128xf32>
    %255 = arith.addf %254, %13 : vector<128x128xf32>
    %cst_64 = arith.constant dense<0xFF800000> : vector<128xf32>
    %256 = vector.multi_reduction <maximumf>, %255, %cst_64 [1] : vector<128x128xf32> to vector<128xf32>
    %257 = vector.shape_cast %256 : vector<128xf32> to vector<128x1xf32>
    %258 = vector.broadcast %257 : vector<128x1xf32> to vector<128x128xf32>
    %259 = arith.subf %255, %258 : vector<128x128xf32>
    %260 = math.exp %259 : vector<128x128xf32>
    %cst_65 = arith.constant dense<0.000000e+00> : vector<128xf32>
    %261 = vector.multi_reduction <add>, %260, %cst_65 [1] : vector<128x128xf32> to vector<128xf32>
    %262 = vector.shape_cast %261 : vector<128xf32> to vector<128x1xf32>
    %263 = tpu.reciprocal %262 {approx = true} : vector<128x1xf32> -> vector<128x1xf32>
    %264 = vector.broadcast %263 : vector<128x1xf32> to vector<128x128xf32>
    %265 = arith.mulf %260, %264 : vector<128x128xf32>
    %266 = arith.truncf %265 : vector<128x128xf32> to vector<128x128xbf16>
    %267 = vector.extract_strided_slice %12 {offsets = [0, 56], sizes = [128, 4], strides = [1, 1]} : vector<128x64xbf16> to vector<128x4xbf16>
    %cst_66 = arith.constant dense<0.000000e+00> : vector<128x4xf32>
    %268 = tpu.matmul %266, %267, %cst_66 {dimension_numbers = #tpu.dot_dimension_numbers<[1], [0], [0], [1], [0, 0, 1, 1], [], []>} : vector<128x128xbf16>, vector<128x4xbf16>, vector<128x4xf32> -> vector<128x4xf32>
    %269 = vector.extract_strided_slice %10 {offsets = [0, 60], sizes = [128, 4], strides = [1, 1]} : vector<128x64xbf16> to vector<128x4xbf16>
    %270 = vector.extract_strided_slice %11 {offsets = [0, 60], sizes = [128, 4], strides = [1, 1]} : vector<128x64xbf16> to vector<128x4xbf16>
    %cst_67 = arith.constant dense<0.000000e+00> : vector<128x128xf32>
    %271 = tpu.matmul %269, %270, %cst_67 {dimension_numbers = #tpu.dot_dimension_numbers<[1], [1], [0], [0], [0, 0, 1, 0], [], []>} : vector<128x4xbf16>, vector<128x4xbf16>, vector<128x128xf32> -> vector<128x128xf32>
    %272 = arith.addf %271, %13 : vector<128x128xf32>
    %cst_68 = arith.constant dense<0xFF800000> : vector<128xf32>
    %273 = vector.multi_reduction <maximumf>, %272, %cst_68 [1] : vector<128x128xf32> to vector<128xf32>
    %274 = vector.shape_cast %273 : vector<128xf32> to vector<128x1xf32>
    %275 = vector.broadcast %274 : vector<128x1xf32> to vector<128x128xf32>
    %276 = arith.subf %272, %275 : vector<128x128xf32>
    %277 = math.exp %276 : vector<128x128xf32>
    %cst_69 = arith.constant dense<0.000000e+00> : vector<128xf32>
    %278 = vector.multi_reduction <add>, %277, %cst_69 [1] : vector<128x128xf32> to vector<128xf32>
    %279 = vector.shape_cast %278 : vector<128xf32> to vector<128x1xf32>
    %280 = tpu.reciprocal %279 {approx = true} : vector<128x1xf32> -> vector<128x1xf32>
    %281 = vector.broadcast %280 : vector<128x1xf32> to vector<128x128xf32>
    %282 = arith.mulf %277, %281 : vector<128x128xf32>
    %283 = arith.truncf %282 : vector<128x128xf32> to vector<128x128xbf16>
    %284 = vector.extract_strided_slice %12 {offsets = [0, 60], sizes = [128, 4], strides = [1, 1]} : vector<128x64xbf16> to vector<128x4xbf16>
    %cst_70 = arith.constant dense<0.000000e+00> : vector<128x4xf32>
    %285 = tpu.matmul %283, %284, %cst_70 {dimension_numbers = #tpu.dot_dimension_numbers<[1], [0], [0], [1], [0, 0, 1, 1], [], []>} : vector<128x128xbf16>, vector<128x4xbf16>, vector<128x4xf32> -> vector<128x4xf32>
    %286 = tpu.concatenate %30, %47, %64, %81, %98, %115, %132, %149, %166, %183, %200, %217, %234, %251, %268, %285 in 1 : vector<128x4xf32>, vector<128x4xf32>, vector<128x4xf32>, vector<128x4xf32>, vector<128x4xf32>, vector<128x4xf32>, vector<128x4xf32>, vector<128x4xf32>, vector<128x4xf32>, vector<128x4xf32>, vector<128x4xf32>, vector<128x4xf32>, vector<128x4xf32>, vector<128x4xf32>, vector<128x4xf32>, vector<128x4xf32> -> vector<128x64xf32>
    %287 = arith.truncf %286 : vector<128x64xf32> to vector<128x64xbf16>
    %c0_71 = arith.constant 0 : index
    %c0_72 = arith.constant 0 : index
    %288 = vector.load %arg3[%c0_71, %c0_72] : memref<64x64xbf16, #tpu.memory_space<vmem>>, vector<64x64xbf16>
    %cst_73 = arith.constant dense<0.000000e+00> : vector<128x64xf32>
    %289 = tpu.matmul %287, %288, %cst_73 {dimension_numbers = #tpu.dot_dimension_numbers<[1], [0], [0], [1], [0, 0, 1, 1], [], []>} : vector<128x64xbf16>, vector<64x64xbf16>, vector<128x64xf32> -> vector<128x64xf32>
    %c0_74 = arith.constant 0 : index
    %c0_75 = arith.constant 0 : index
    %290 = vector.load %arg4[%c0_74, %c0_75] : memref<1x64xf32, #tpu.memory_space<vmem>>, vector<1x64xf32>
    %291 = vector.broadcast %290 : vector<1x64xf32> to vector<128x64xf32>
    %292 = arith.addf %289, %291 : vector<128x64xf32>
    %293 = arith.addf %1, %292 : vector<128x64xf32>
    %c0_76 = arith.constant 0 : index
    %c0_77 = arith.constant 0 : index
    %294 = vector.load %arg6[%c0_76, %c0_77] : memref<1x64xf32, #tpu.memory_space<vmem>>, vector<1x64xf32>
    %c0_78 = arith.constant 0 : index
    %c0_79 = arith.constant 0 : index
    %295 = vector.load %arg7[%c0_78, %c0_79] : memref<1x64xf32, #tpu.memory_space<vmem>>, vector<1x64xf32>
    %cst_80 = arith.constant dense<0.000000e+00> : vector<128xf32>
    %296 = vector.multi_reduction <add>, %293, %cst_80 [1] : vector<128x64xf32> to vector<128xf32>
    %297 = vector.shape_cast %296 : vector<128xf32> to vector<128x1xf32>
    %cst_81 = arith.constant 6.400000e+01 : f32
    %298 = vector.broadcast %cst_81 : f32 to vector<128x1xf32>
    %299 = arith.divf %297, %298 : vector<128x1xf32>
    %300 = vector.broadcast %299 : vector<128x1xf32> to vector<128x64xf32>
    %301 = arith.subf %293, %300 : vector<128x64xf32>
    %302 = arith.mulf %301, %301 : vector<128x64xf32>
    %cst_82 = arith.constant dense<0.000000e+00> : vector<128xf32>
    %303 = vector.multi_reduction <add>, %302, %cst_82 [1] : vector<128x64xf32> to vector<128xf32>
    %304 = vector.shape_cast %303 : vector<128xf32> to vector<128x1xf32>
    %cst_83 = arith.constant 6.400000e+01 : f32
    %305 = vector.broadcast %cst_83 : f32 to vector<128x1xf32>
    %306 = arith.divf %304, %305 : vector<128x1xf32>
    %cst_84 = arith.constant 9.99999974E-6 : f32
    %307 = vector.broadcast %cst_84 : f32 to vector<128x1xf32>
    %308 = arith.addf %306, %307 : vector<128x1xf32>
    %309 = math.rsqrt %308 : vector<128x1xf32>
    %310 = vector.broadcast %309 : vector<128x1xf32> to vector<128x64xf32>
    %311 = arith.mulf %301, %310 : vector<128x64xf32>
    %312 = vector.broadcast %294 : vector<1x64xf32> to vector<128x64xf32>
    %313 = arith.mulf %311, %312 : vector<128x64xf32>
    %314 = vector.broadcast %295 : vector<1x64xf32> to vector<128x64xf32>
    %315 = arith.addf %313, %314 : vector<128x64xf32>
    %316 = arith.truncf %315 : vector<128x64xf32> to vector<128x64xbf16>
    %c0_85 = arith.constant 0 : index
    %c0_86 = arith.constant 0 : index
    %317 = vector.load %arg8[%c0_85, %c0_86] : memref<64x256xbf16, #tpu.memory_space<vmem>>, vector<64x256xbf16>
    %cst_87 = arith.constant dense<0.000000e+00> : vector<128x256xf32>
    %318 = tpu.matmul %316, %317, %cst_87 {dimension_numbers = #tpu.dot_dimension_numbers<[1], [0], [0], [1], [0, 0, 1, 1], [], []>} : vector<128x64xbf16>, vector<64x256xbf16>, vector<128x256xf32> -> vector<128x256xf32>
    %c0_88 = arith.constant 0 : index
    %c0_89 = arith.constant 0 : index
    %319 = vector.load %arg9[%c0_88, %c0_89] : memref<1x256xf32, #tpu.memory_space<vmem>>, vector<1x256xf32>
    %320 = vector.broadcast %319 : vector<1x256xf32> to vector<128x256xf32>
    %321 = arith.addf %318, %320 : vector<128x256xf32>
    %cst_90 = arith.constant 0.000000e+00 : f32
    %322 = vector.broadcast %cst_90 : f32 to vector<128x256xf32>
    %323 = arith.maximumf %321, %322 : vector<128x256xf32>
    %324 = arith.truncf %323 : vector<128x256xf32> to vector<128x256xbf16>
    %c0_91 = arith.constant 0 : index
    %c0_92 = arith.constant 0 : index
    %325 = vector.load %arg10[%c0_91, %c0_92] : memref<256x64xbf16, #tpu.memory_space<vmem>>, vector<256x64xbf16>
    %cst_93 = arith.constant dense<0.000000e+00> : vector<128x64xf32>
    %326 = tpu.matmul %324, %325, %cst_93 {dimension_numbers = #tpu.dot_dimension_numbers<[1], [0], [0], [1], [0, 0, 1, 1], [], []>} : vector<128x256xbf16>, vector<256x64xbf16>, vector<128x64xf32> -> vector<128x64xf32>
    %c0_94 = arith.constant 0 : index
    %c0_95 = arith.constant 0 : index
    %327 = vector.load %arg11[%c0_94, %c0_95] : memref<1x64xf32, #tpu.memory_space<vmem>>, vector<1x64xf32>
    %328 = vector.broadcast %327 : vector<1x64xf32> to vector<128x64xf32>
    %329 = arith.addf %326, %328 : vector<128x64xf32>
    %330 = arith.addf %315, %329 : vector<128x64xf32>
    %c0_96 = arith.constant 0 : index
    %c0_97 = arith.constant 0 : index
    %331 = vector.load %arg12[%c0_96, %c0_97] : memref<1x64xf32, #tpu.memory_space<vmem>>, vector<1x64xf32>
    %c0_98 = arith.constant 0 : index
    %c0_99 = arith.constant 0 : index
    %332 = vector.load %arg13[%c0_98, %c0_99] : memref<1x64xf32, #tpu.memory_space<vmem>>, vector<1x64xf32>
    %cst_100 = arith.constant dense<0.000000e+00> : vector<128xf32>
    %333 = vector.multi_reduction <add>, %330, %cst_100 [1] : vector<128x64xf32> to vector<128xf32>
    %334 = vector.shape_cast %333 : vector<128xf32> to vector<128x1xf32>
    %cst_101 = arith.constant 6.400000e+01 : f32
    %335 = vector.broadcast %cst_101 : f32 to vector<128x1xf32>
    %336 = arith.divf %334, %335 : vector<128x1xf32>
    %337 = vector.broadcast %336 : vector<128x1xf32> to vector<128x64xf32>
    %338 = arith.subf %330, %337 : vector<128x64xf32>
    %339 = arith.mulf %338, %338 : vector<128x64xf32>
    %cst_102 = arith.constant dense<0.000000e+00> : vector<128xf32>
    %340 = vector.multi_reduction <add>, %339, %cst_102 [1] : vector<128x64xf32> to vector<128xf32>
    %341 = vector.shape_cast %340 : vector<128xf32> to vector<128x1xf32>
    %cst_103 = arith.constant 6.400000e+01 : f32
    %342 = vector.broadcast %cst_103 : f32 to vector<128x1xf32>
    %343 = arith.divf %341, %342 : vector<128x1xf32>
    %cst_104 = arith.constant 9.99999974E-6 : f32
    %344 = vector.broadcast %cst_104 : f32 to vector<128x1xf32>
    %345 = arith.addf %343, %344 : vector<128x1xf32>
    %346 = math.rsqrt %345 : vector<128x1xf32>
    %347 = vector.broadcast %346 : vector<128x1xf32> to vector<128x64xf32>
    %348 = arith.mulf %338, %347 : vector<128x64xf32>
    %349 = vector.broadcast %331 : vector<1x64xf32> to vector<128x64xf32>
    %350 = arith.mulf %348, %349 : vector<128x64xf32>
    %351 = vector.broadcast %332 : vector<1x64xf32> to vector<128x64xf32>
    %352 = arith.addf %350, %351 : vector<128x64xf32>
    %c0_105 = arith.constant 0 : index
    %c0_106 = arith.constant 0 : index
    %c0_107 = arith.constant 0 : index
    %353 = vector.load %arg14[%c0_105, %c0_106, %c0_107] : memref<1x128x64xf32, #tpu.memory_space<vmem>>, vector<1x128x64xf32>
    %354 = vector.shape_cast %353 : vector<1x128x64xf32> to vector<128x64xf32>
    %355 = vector.shape_cast %352 : vector<128x64xf32> to vector<1x128x64xf32>
    tpu.vector_store %arg14[%c0_105, %c0_106, %c0_107], %355 {strides = array<i32>} : memref<1x128x64xf32, #tpu.memory_space<vmem>>, vector<1x128x64xf32>,
    return
  }
  func.func @transform_0(%arg0: i32) -> (i32, i32, i32) {
    %c0_i32 = arith.constant 0 : i32
    %c0_i32_0 = arith.constant 0 : i32
    %c0_i32_1 = arith.constant 0 : i32
    return %arg0, %c0_i32, %c0_i32_0 : i32, i32, i32
  }
  func.func @transform_1(%arg0: i32) -> (i32, i32) {
    %c0_i32 = arith.constant 0 : i32
    %c0_i32_0 = arith.constant 0 : i32
    %c0_i32_1 = arith.constant 0 : i32
    return %c0_i32, %c0_i32_0 : i32, i32
  }
  func.func @transform_2(%arg0: i32) -> (i32, i32) {
    %c0_i32 = arith.constant 0 : i32
    %c0_i32_0 = arith.constant 0 : i32
    %c0_i32_1 = arith.constant 0 : i32
    return %c0_i32, %c0_i32_0 : i32, i32
  }
  func.func @transform_3(%arg0: i32) -> (i32, i32) {
    %c0_i32 = arith.constant 0 : i32
    %c0_i32_0 = arith.constant 0 : i32
    %c0_i32_1 = arith.constant 0 : i32
    return %c0_i32, %c0_i32_0 : i32, i32
  }
  func.func @transform_4(%arg0: i32) -> (i32, i32) {
    %c0_i32 = arith.constant 0 : i32
    %c0_i32_0 = arith.constant 0 : i32
    %c0_i32_1 = arith.constant 0 : i32
    return %c0_i32, %c0_i32_0 : i32, i32
  }
  func.func @transform_5(%arg0: i32) -> (i32, i32) {
    %c0_i32 = arith.constant 0 : i32
    %c0_i32_0 = arith.constant 0 : i32
    %c0_i32_1 = arith.constant 0 : i32
    return %c0_i32, %c0_i32_0 : i32, i32
  }
  func.func @transform_6(%arg0: i32) -> (i32, i32) {
    %c0_i32 = arith.constant 0 : i32
    %c0_i32_0 = arith.constant 0 : i32
    %c0_i32_1 = arith.constant 0 : i32
    return %c0_i32, %c0_i32_0 : i32, i32
  }
  func.func @transform_7(%arg0: i32) -> (i32, i32) {
    %c0_i32 = arith.constant 0 : i32
    %c0_i32_0 = arith.constant 0 : i32
    %c0_i32_1 = arith.constant 0 : i32
    return %c0_i32, %c0_i32_0 : i32, i32
  }
  func.func @transform_8(%arg0: i32) -> (i32, i32) {
    %c0_i32 = arith.constant 0 : i32
    %c0_i32_0 = arith.constant 0 : i32
    %c0_i32_1 = arith.constant 0 : i32
    return %c0_i32, %c0_i32_0 : i32, i32
  }
  func.func @transform_9(%arg0: i32) -> (i32, i32) {
    %c0_i32 = arith.constant 0 : i32
    %c0_i32_0 = arith.constant 0 : i32
    %c0_i32_1 = arith.constant 0 : i32
    return %c0_i32, %c0_i32_0 : i32, i32
  }
  func.func @transform_10(%arg0: i32) -> (i32, i32) {
    %c0_i32 = arith.constant 0 : i32
    %c0_i32_0 = arith.constant 0 : i32
    %c0_i32_1 = arith.constant 0 : i32
    return %c0_i32, %c0_i32_0 : i32, i32
  }
  func.func @transform_11(%arg0: i32) -> (i32, i32) {
    %c0_i32 = arith.constant 0 : i32
    %c0_i32_0 = arith.constant 0 : i32
    %c0_i32_1 = arith.constant 0 : i32
    return %c0_i32, %c0_i32_0 : i32, i32
  }
  func.func @transform_12(%arg0: i32) -> (i32, i32) {
    %c0_i32 = arith.constant 0 : i32
    %c0_i32_0 = arith.constant 0 : i32
    %c0_i32_1 = arith.constant 0 : i32
    return %c0_i32, %c0_i32_0 : i32, i32
  }
  func.func @transform_13(%arg0: i32) -> (i32, i32, i32) {
    %c0_i32 = arith.constant 0 : i32
    %c0_i32_0 = arith.constant 0 : i32
    %c0_i32_1 = arith.constant 0 : i32
    return %arg0, %c0_i32, %c0_i32_0 : i32, i32, i32
  }
}

</mosaic_0001>

<llo_original>
// kernel: tpu_custom_call.1
$region0: #{tpu_custom_call.1}
  #allocation0 [shape = 'u32[]', space=smem, size = 0x4, offset = 0x4, fixed_abs, tag = 'smem constant byte address 0x4 - core index']
  #allocation1 [shape = 'u32[144,128]{1,0:T(1,128)}', space=vmem, size = 0x12000, scoped, tag = 'internal scratch']
  %s0 = inlined_call_operand.vmem [shape: f32[2,128,64], index: 0, kind: input, shape index: {}]
  %s1 = inlined_call_operand.vmem [shape: bf16[64,192], index: 1, kind: input, shape index: {}]
  %s2 = inlined_call_operand.vmem [shape: bf16[64,64], index: 2, kind: input, shape index: {}]
  %s3 = inlined_call_operand.vmem [shape: f32[1,64], index: 3, kind: input, shape index: {}]
  %s4 = inlined_call_operand.vmem [shape: f32[128,128], index: 4, kind: input, shape index: {}]
  %s5 = inlined_call_operand.vmem [shape: f32[1,64], index: 5, kind: input, shape index: {}]
  %s6 = inlined_call_operand.vmem [shape: f32[1,64], index: 6, kind: input, shape index: {}]
  %s7 = inlined_call_operand.vmem [shape: bf16[64,256], index: 7, kind: input, shape index: {}]
  %s8 = inlined_call_operand.vmem [shape: f32[1,256], index: 8, kind: input, shape index: {}]
  %s9 = inlined_call_operand.vmem [shape: bf16[256,64], index: 9, kind: input, shape index: {}]
  %s10 = inlined_call_operand.vmem [shape: f32[1,64], index: 10, kind: input, shape index: {}]
  %s11 = inlined_call_operand.vmem [shape: f32[1,64], index: 11, kind: input, shape index: {}]
  %s12 = inlined_call_operand.vmem [shape: f32[1,64], index: 12, kind: input, shape index: {}]
  %s13 = inlined_call_operand.vmem [shape: f32[2,128,64], index: 13, kind: output, shape index: {}]
  %s14 = sld [smem:[#allocation0]]
  $region85: #{tpu_custom_call.1} parent=0
    _
  %s16 = ssub.s32 1, %s14
  %s17 = scalar_select 0, %s16, %s14
  loop: start=0, step=1, limit=4
  $region2: #{tpu_custom_call.1} parent=0 // loop_pre_header
    _
  $region3: #{tpu_custom_call.1} parent=0 // loop_header
    %s19 = sphi 0, %s23
    %p20 = scmp.ge.s32.totalorder %s19, 4
    %s29 = sphi 0, %s31
    %s32 = sphi 0, %s29
    %s33 = sphi 0, %s32
    %s49 = sphi 0, %s33
    %s53 = sphi 0, %s53
    %s55 = sphi 0, %s53
    %s56 = sphi 0, %s55
    %s70 = sphi 0, %s56
    %s74 = sphi 0, %s74
    %s76 = sphi 0, %s74
    %s77 = sphi 0, %s76
    %s91 = sphi 0, %s77
    %s95 = sphi 0, %s95
    %s97 = sphi 0, %s95
    %s98 = sphi 0, %s97
    %s112 = sphi 0, %s98
    %s116 = sphi 0, %s116
    %s118 = sphi 0, %s116
    %s119 = sphi 0, %s118
    %s133 = sphi 0, %s119
    %s137 = sphi 0, %s137
    %s139 = sphi 0, %s137
    %s140 = sphi 0, %s139
    %s154 = sphi 0, %s140
    %s158 = sphi 0, %s158
    %s160 = sphi 0, %s158
    %s161 = sphi 0, %s160
    %s175 = sphi 0, %s161
    %s179 = sphi 0, %s179
    %s181 = sphi 0, %s179
    %s182 = sphi 0, %s181
    %s196 = sphi 0, %s182
    %s200 = sphi 0, %s200
    %s202 = sphi 0, %s200
    %s203 = sphi 0, %s202
    %s217 = sphi 0, %s203
    %s221 = sphi 0, %s221
    %s223 = sphi 0, %s221
    %s224 = sphi 0, %s223
    %s238 = sphi 0, %s224
    %s242 = sphi 0, %s242
    %s244 = sphi 0, %s242
    %s245 = sphi 0, %s244
    %s259 = sphi 0, %s245
    %s263 = sphi 0, %s263
    %s265 = sphi 0, %s263
    %s266 = sphi 0, %s265
    %s280 = sphi 0, %s266
    %s284 = sphi 0, %s284
    %s286 = sphi 0, %s284
    %s287 = sphi 0, %s286
    %s301 = sphi 0, %s287
    %s307 = sphi 0, %s309
    %s310 = sphi 0, %s307
    %s311 = sphi 0, %s310
    %s327 = sphi 0, %s311
  $region4: #{tpu_custom_call.1} parent=0 // loop_header_branch
    %22 = sbr.rel (%p20) target = $region8
  $region5: #{tpu_custom_call.1} parent=0 // loop_body
    %s24 = ssub.s32 %s19, 1
    %s25 = ssub.s32 %s19, 2
    %s26 = sadd.s32 %s19, 1
    %s27 = ssub.s32 %s19, %s26
    %p28 = scmp.eq.s32.totalorder %s27, 0
    %s30 = sadd.s32 %s29, 1
    %s31 = scalar_select %p28, %s29, %s30
    %p34 = pneg %p28
    %p35 = scmp.eq.s32.totalorder %s19, 1
    %p36 = por %p34, %p35
    %p37 = scmp.ne.s32.totalorder %s29, %s32
    %p38 = scmp.eq.s32.totalorder %s19, 0
    %p39 = por %p37, %p38
    %p40 = scmp.ne.s32.totalorder %s29, %s32
    %p41 = scmp.eq.s32.totalorder %s24, 1
    %p42 = por %p40, %p41
    %p43 = scmp.ne.s32.totalorder %s32, %s33
    %p44 = scmp.eq.s32.totalorder %s24, 0
    %p45 = por %p43, %p44
    %p46 = scmp.ne.s32.totalorder %s32, %s33
    %p47 = scmp.eq.s32.totalorder %s25, 1
    %p48 = por %p46, %p47
    %p50 = scmp.ne.s32.totalorder %s33, %s49
    %p51 = scmp.eq.s32.totalorder %s25, 0
    %p52 = por %p50, %p51
    %s54 = sadd.s32 %s53, 1
    %p57 = scmp.eq.s32.totalorder %s19, 1
    %p58 = scmp.ne.s32.totalorder %s53, %s55
    %p59 = scmp.eq.s32.totalorder %s19, 0
    %p60 = por %p58, %p59
    %p61 = scmp.ne.s32.totalorder %s53, %s55
    %p62 = scmp.eq.s32.totalorder %s24, 1
    %p63 = por %p61, %p62
    %p64 = scmp.ne.s32.totalorder %s55, %s56
    %p65 = scmp.eq.s32.totalorder %s24, 0
    %p66 = por %p64, %p65
    %p67 = scmp.ne.s32.totalorder %s55, %s56
    %p68 = scmp.eq.s32.totalorder %s25, 1
    %p69 = por %p67, %p68
    %p71 = scmp.ne.s32.totalorder %s56, %s70
    %p72 = scmp.eq.s32.totalorder %s25, 0
    %p73 = por %p71, %p72
    %s75 = sadd.s32 %s74, 1
    %p78 = scmp.eq.s32.totalorder %s19, 1
    %p79 = scmp.ne.s32.totalorder %s74, %s76
    %p80 = scmp.eq.s32.totalorder %s19, 0
    %p81 = por %p79, %p80
    %p82 = scmp.ne.s32.totalorder %s74, %s76
    %p83 = scmp.eq.s32.totalorder %s24, 1
    %p84 = por %p82, %p83
    %p85 = scmp.ne.s32.totalorder %s76, %s77
    %p86 = scmp.eq.s32.totalorder %s24, 0
    %p87 = por %p85, %p86
    %p88 = scmp.ne.s32.totalorder %s76, %s77
    %p89 = scmp.eq.s32.totalorder %s25, 1
    %p90 = por %p88, %p89
    %p92 = scmp.ne.s32.totalorder %s77, %s91
    %p93 = scmp.eq.s32.totalorder %s25, 0
    %p94 = por %p92, %p93
    %s96 = sadd.s32 %s95, 1
    %p99 = scmp.eq.s32.totalorder %s19, 1
    %p100 = scmp.ne.s32.totalorder %s95, %s97
    %p101 = scmp.eq.s32.totalorder %s19, 0
    %p102 = por %p100, %p101
    %p103 = scmp.ne.s32.totalorder %s95, %s97
    %p104 = scmp.eq.s32.totalorder %s24, 1
    %p105 = por %p103, %p104
    %p106 = scmp.ne.s32.totalorder %s97, %s98
    %p107 = scmp.eq.s32.totalorder %s24, 0
    %p108 = por %p106, %p107
    %p109 = scmp.ne.s32.totalorder %s97, %s98
    %p110 = scmp.eq.s32.totalorder %s25, 1
    %p111 = por %p109, %p110
    %p113 = scmp.ne.s32.totalorder %s98, %s112
    %p114 = scmp.eq.s32.totalorder %s25, 0
    %p115 = por %p113, %p114
    %s117 = sadd.s32 %s116, 1
    %p120 = scmp.eq.s32.totalorder %s19, 1
    %p121 = scmp.ne.s32.totalorder %s116, %s118
    %p122 = scmp.eq.s32.totalorder %s19, 0
    %p123 = por %p121, %p122
    %p124 = scmp.ne.s32.totalorder %s116, %s118
    %p125 = scmp.eq.s32.totalorder %s24, 1
    %p126 = por %p124, %p125
    %p127 = scmp.ne.s32.totalorder %s118, %s119
    %p128 = scmp.eq.s32.totalorder %s24, 0
    %p129 = por %p127, %p128
    %p130 = scmp.ne.s32.totalorder %s118, %s119
    %p131 = scmp.eq.s32.totalorder %s25, 1
    %p132 = por %p130, %p131
    %p134 = scmp.ne.s32.totalorder %s119, %s133
    %p135 = scmp.eq.s32.totalorder %s25, 0
    %p136 = por %p134, %p135
    %s138 = sadd.s32 %s137, 1
    %p141 = scmp.eq.s32.totalorder %s19, 1
    %p142 = scmp.ne.s32.totalorder %s137, %s139
    %p143 = scmp.eq.s32.totalorder %s19, 0
    %p144 = por %p142, %p143
    %p145 = scmp.ne.s32.totalorder %s137, %s139
    %p146 = scmp.eq.s32.totalorder %s24, 1
    %p147 = por %p145, %p146
    %p148 = scmp.ne.s32.totalorder %s139, %s140
    %p149 = scmp.eq.s32.totalorder %s24, 0
    %p150 = por %p148, %p149
    %p151 = scmp.ne.s32.totalorder %s139, %s140
    %p152 = scmp.eq.s32.totalorder %s25, 1
    %p153 = por %p151, %p152
    %p155 = scmp.ne.s32.totalorder %s140, %s154
    %p156 = scmp.eq.s32.totalorder %s25, 0
    %p157 = por %p155, %p156
    %s159 = sadd.s32 %s158, 1
    %p162 = scmp.eq.s32.totalorder %s19, 1
    %p163 = scmp.ne.s32.totalorder %s158, %s160
    %p164 = scmp.eq.s32.totalorder %s19, 0
    %p165 = por %p163, %p164
    %p166 = scmp.ne.s32.totalorder %s158, %s160
    %p167 = scmp.eq.s32.totalorder %s24, 1
    %p168 = por %p166, %p167
    %p169 = scmp.ne.s32.totalorder %s160, %s161
    %p170 = scmp.eq.s32.totalorder %s24, 0
    %p171 = por %p169, %p170
    %p172 = scmp.ne.s32.totalorder %s160, %s161
    %p173 = scmp.eq.s32.totalorder %s25, 1
    %p174 = por %p172, %p173
    %p176 = scmp.ne.s32.totalorder %s161, %s175
    %p177 = scmp.eq.s32.totalorder %s25, 0
    %p178 = por %p176, %p177
    %s180 = sadd.s32 %s179, 1
    %p183 = scmp.eq.s32.totalorder %s19, 1
    %p184 = scmp.ne.s32.totalorder %s179, %s181
    %p185 = scmp.eq.s32.totalorder %s19, 0
    %p186 = por %p184, %p185
    %p187 = scmp.ne.s32.totalorder %s179, %s181
    %p188 = scmp.eq.s32.totalorder %s24, 1
    %p189 = por %p187, %p188
    %p190 = scmp.ne.s32.totalorder %s181, %s182
    %p191 = scmp.eq.s32.totalorder %s24, 0
    %p192 = por %p190, %p191
    %p193 = scmp.ne.s32.totalorder %s181, %s182
    %p194 = scmp.eq.s32.totalorder %s25, 1
    %p195 = por %p193, %p194
    %p197 = scmp.ne.s32.totalorder %s182, %s196
    %p198 = scmp.eq.s32.totalorder %s25, 0
    %p199 = por %p197, %p198
    %s201 = sadd.s32 %s200, 1
    %p204 = scmp.eq.s32.totalorder %s19, 1
    %p205 = scmp.ne.s32.totalorder %s200, %s202
    %p206 = scmp.eq.s32.totalorder %s19, 0
    %p207 = por %p205, %p206
    %p208 = scmp.ne.s32.totalorder %s200, %s202
    %p209 = scmp.eq.s32.totalorder %s24, 1
    %p210 = por %p208, %p209
    %p211 = scmp.ne.s32.totalorder %s202, %s203
    %p212 = scmp.eq.s32.totalorder %s24, 0
    %p213 = por %p211, %p212
    %p214 = scmp.ne.s32.totalorder %s202, %s203
    %p215 = scmp.eq.s32.totalorder %s25, 1
    %p216 = por %p214, %p215
    %p218 = scmp.ne.s32.totalorder %s203, %s217
    %p219 = scmp.eq.s32.totalorder %s25, 0
    %p220 = por %p218, %p219
    %s222 = sadd.s32 %s221, 1
    %p225 = scmp.eq.s32.totalorder %s19, 1
    %p226 = scmp.ne.s32.totalorder %s221, %s223
    %p227 = scmp.eq.s32.totalorder %s19, 0
    %p228 = por %p226, %p227
    %p229 = scmp.ne.s32.totalorder %s221, %s223
    %p230 = scmp.eq.s32.totalorder %s24, 1
    %p231 = por %p229, %p230
    %p232 = scmp.ne.s32.totalorder %s223, %s224
    %p233 = scmp.eq.s32.totalorder %s24, 0
    %p234 = por %p232, %p233
    %p235 = scmp.ne.s32.totalorder %s223, %s224
    %p236 = scmp.eq.s32.totalorder %s25, 1
    %p237 = por %p235, %p236
    %p239 = scmp.ne.s32.totalorder %s224, %s238
    %p240 = scmp.eq.s32.totalorder %s25, 0
    %p241 = por %p239, %p240
    %s243 = sadd.s32 %s242, 1
    %p246 = scmp.eq.s32.totalorder %s19, 1
    %p247 = scmp.ne.s32.totalorder %s242, %s244
    %p248 = scmp.eq.s32.totalorder %s19, 0
    %p249 = por %p247, %p248
    %p250 = scmp.ne.s32.totalorder %s242, %s244
    %p251 = scmp.eq.s32.totalorder %s24, 1
    %p252 = por %p250, %p251
    %p253 = scmp.ne.s32.totalorder %s244, %s245
    %p254 = scmp.eq.s32.totalorder %s24, 0
    %p255 = por %p253, %p254
    %p256 = scmp.ne.s32.totalorder %s244, %s245
    %p257 = scmp.eq.s32.totalorder %s25, 1
    %p258 = por %p256, %p257
    %p260 = scmp.ne.s32.totalorder %s245, %s259
    %p261 = scmp.eq.s32.totalorder %s25, 0
    %p262 = por %p260, %p261
    %s264 = sadd.s32 %s263, 1
    %p267 = scmp.eq.s32.totalorder %s19, 1
    %p268 = scmp.ne.s32.totalorder %s263, %s265
    %p269 = scmp.eq.s32.totalorder %s19, 0
    %p270 = por %p268, %p269
    %p271 = scmp.ne.s32.totalorder %s263, %s265
    %p272 = scmp.eq.s32.totalorder %s24, 1
    %p273 = por %p271, %p272
    %p274 = scmp.ne.s32.totalorder %s265, %s266
    %p275 = scmp.eq.s32.totalorder %s24, 0
    %p276 = por %p274, %p275
    %p277 = scmp.ne.s32.totalorder %s265, %s266
    %p278 = scmp.eq.s32.totalorder %s25, 1
    %p279 = por %p277, %p278
    %p281 = scmp.ne.s32.totalorder %s266, %s280
    %p282 = scmp.eq.s32.totalorder %s25, 0
    %p283 = por %p281, %p282
    %s285 = sadd.s32 %s284, 1
    %p288 = scmp.eq.s32.totalorder %s19, 1
    %p289 = scmp.ne.s32.totalorder %s284, %s286
    %p290 = scmp.eq.s32.totalorder %s19, 0
    %p291 = por %p289, %p290
    %p292 = scmp.ne.s32.totalorder %s284, %s286
    %p293 = scmp.eq.s32.totalorder %s24, 1
    %p294 = por %p292, %p293
    %p295 = scmp.ne.s32.totalorder %s286, %s287
    %p296 = scmp.eq.s32.totalorder %s24, 0
    %p297 = por %p295, %p296
    %p298 = scmp.ne.s32.totalorder %s286, %s287
    %p299 = scmp.eq.s32.totalorder %s25, 1
    %p300 = por %p298, %p299
    %p302 = scmp.ne.s32.totalorder %s287, %s301
    %p303 = scmp.eq.s32.totalorder %s25, 0
    %p304 = por %p302, %p303
    %s305 = ssub.s32 %s19, %s26
    %p306 = scmp.eq.s32.totalorder %s305, 0
    %s308 = sadd.s32 %s307, 1
    %s309 = scalar_select %p306, %s307, %s308
    %p312 = pneg %p306
    %p313 = scmp.eq.s32.totalorder %s19, 1
    %p314 = por %p312, %p313
    %p315 = scmp.ne.s32.totalorder %s307, %s310
    %p316 = scmp.eq.s32.totalorder %s19, 0
    %p317 = por %p315, %p316
    %p318 = scmp.ne.s32.totalorder %s307, %s310
    %p319 = scmp.eq.s32.totalorder %s24, 1
    %p320 = por %p318, %p319
    %p321 = scmp.ne.s32.totalorder %s310, %s311
    %p322 = scmp.eq.s32.totalorder %s24, 0
    %p323 = por %p321, %p322
    %p324 = scmp.ne.s32.totalorder %s310, %s311
    %p325 = scmp.eq.s32.totalorder %s25, 1
    %p326 = por %p324, %p325
    %p328 = scmp.ne.s32.totalorder %s311, %s327
    %p329 = scmp.eq.s32.totalorder %s25, 0
    %p330 = por %p328, %p329
    %p331 = scmp.le.s32.totalorder 1, %s19
    %p332 = scmp.lt.s32.totalorder %s19, 3
    %p333 = pnand %p331, %p332
    %p334 = pneg %p333
    // Predicated region
    $region9: #{tpu_custom_call.1} parent=5 // pred_check
      _
    $region10: #{tpu_custom_call.1} parent=5 // pred_check_branch
      %336 = sbr.rel (%p333) target = $region12
    $region11: #{tpu_custom_call.1} parent=5 // pred_region
      %s337 = ssub.s32 %s19, 1
      // Predicated region
      $region13: #{tpu_custom_call.1} parent=11 // pred_check
        %p338 = pneg %p66
      $region14: #{tpu_custom_call.1} parent=11 // pred_check_branch
        %340 = sbr.rel (%p338) target = $region16
      $region15: #{tpu_custom_call.1} parent=11 // pred_region
        _
      $region16: #{tpu_custom_call.1} parent=11 // pred_fallthru
        _
      // Predicated region
      $region17: #{tpu_custom_call.1} parent=11 // pred_check
        %p341 = pneg %p87
      $region18: #{tpu_custom_call.1} parent=11 // pred_check_branch
        %343 = sbr.rel (%p341) target = $region20
      $region19: #{tpu_custom_call.1} parent=11 // pred_region
        _
      $region20: #{tpu_custom_call.1} parent=11 // pred_fallthru
        _
      // Predicated region
      $region21: #{tpu_custom_call.1} parent=11 // pred_check
        %p344 = pneg %p108
      $region22: #{tpu_custom_call.1} parent=11 // pred_check_branch
        %346 = sbr.rel (%p344) target = $region24
      $region23: #{tpu_custom_call.1} parent=11 // pred_region
        _
      $region24: #{tpu_custom_call.1} parent=11 // pred_fallthru
        _
      // Predicated region
      $region25: #{tpu_custom_call.1} parent=11 // pred_check
        %p347 = pneg %p129
      $region26: #{tpu_custom_call.1} parent=11 // pred_check_branch
        %349 = sbr.rel (%p347) target = $region28
      $region27: #{tpu_custom_call.1} parent=11 // pred_region
        _
      $region28: #{tpu_custom_call.1} parent=11 // pred_fallthru
        _
      // Predicated region
      $region29: #{tpu_custom_call.1} parent=11 // pred_check
        %p350 = pneg %p150
      $region30: #{tpu_custom_call.1} parent=11 // pred_check_branch
        %352 = sbr.rel (%p350) target = $region32
      $region31: #{tpu_custom_call.1} parent=11 // pred_region
        _
      $region32: #{tpu_custom_call.1} parent=11 // pred_fallthru
        _
      // Predicated region
      $region33: #{tpu_custom_call.1} parent=11 // pred_check
        %p353 = pneg %p171
      $region34: #{tpu_custom_call.1} parent=11 // pred_check_branch
        %355 = sbr.rel (%p353) target = $region36
      $region35: #{tpu_custom_call.1} parent=11 // pred_region
        _
      $region36: #{tpu_custom_call.1} parent=11 // pred_fallthru
        _
      // Predicated region
      $region37: #{tpu_custom_call.1} parent=11 // pred_check
        %p356 = pneg %p192
      $region38: #{tpu_custom_call.1} parent=11 // pred_check_branch
        %358 = sbr.rel (%p356) target = $region40
      $region39: #{tpu_custom_call.1} parent=11 // pred_region
        _
      $region40: #{tpu_custom_call.1} parent=11 // pred_fallthru
        _
      // Predicated region
      $region41: #{tpu_custom_call.1} parent=11 // pred_check
        %p359 = pneg %p213
      $region42: #{tpu_custom_call.1} parent=11 // pred_check_branch
        %361 = sbr.rel (%p359) target = $region44
      $region43: #{tpu_custom_call.1} parent=11 // pred_region
        _
      $region44: #{tpu_custom_call.1} parent=11 // pred_fallthru
        _
      // Predicated region
      $region45: #{tpu_custom_call.1} parent=11 // pred_check
        %p362 = pneg %p234
      $region46: #{tpu_custom_call.1} parent=11 // pred_check_branch
        %364 = sbr.rel (%p362) target = $region48
      $region47: #{tpu_custom_call.1} parent=11 // pred_region
        _
      $region48: #{tpu_custom_call.1} parent=11 // pred_fallthru
        _
      // Predicated region
      $region49: #{tpu_custom_call.1} parent=11 // pred_check
        %p365 = pneg %p255
      $region50: #{tpu_custom_call.1} parent=11 // pred_check_branch
        %367 = sbr.rel (%p365) target = $region52
      $region51: #{tpu_custom_call.1} parent=11 // pred_region
        _
      $region52: #{tpu_custom_call.1} parent=11 // pred_fallthru
        _
      // Predicated region
      $region53: #{tpu_custom_call.1} parent=11 // pred_check
        %p368 = pneg %p276
      $region54: #{tpu_custom_call.1} parent=11 // pred_check_branch
        %370 = sbr.rel (%p368) target = $region56
      $region55: #{tpu_custom_call.1} parent=11 // pred_region
        _
      $region56: #{tpu_custom_call.1} parent=11 // pred_fallthru
        _
      // Predicated region
      $region57: #{tpu_custom_call.1} parent=11 // pred_check
        %p371 = pneg %p297
      $region58: #{tpu_custom_call.1} parent=11 // pred_check_branch
        %373 = sbr.rel (%p371) target = $region60
      $region59: #{tpu_custom_call.1} parent=11 // pred_region
        _
      $region60: #{tpu_custom_call.1} parent=11 // pred_fallthru
        _
    $region12: #{tpu_custom_call.1} parent=5 // pred_fallthru
      _
    %p374 = scmp.lt.s32.totalorder %s19, 2
    // Predicated region
    $region61: #{tpu_custom_call.1} parent=5 // pred_check
      %p375 = pneg %p374
    $region62: #{tpu_custom_call.1} parent=5 // pred_check_branch
      %377 = sbr.rel (%p375) target = $region64
    $region63: #{tpu_custom_call.1} parent=5 // pred_region
      // Predicated region
      $region65: #{tpu_custom_call.1} parent=63 // pred_check
        %p378 = pneg %p39
      $region66: #{tpu_custom_call.1} parent=63 // pred_check_branch
        %380 = sbr.rel (%p378) target = $region68
      $region67: #{tpu_custom_call.1} parent=63 // pred_region
        %p381 = scmp.lt.s32.totalorder %s19, 1
        %s382 = scalar_select %p381, %s19, 1
        %s383 = smul.addr %s382, 16
        %s384 = smul.addr %s383, 8
        %s385 = scalar_lea.vmem %s0, %s384
      $region68: #{tpu_custom_call.1} parent=63 // pred_fallthru
        _
    $region64: #{tpu_custom_call.1} parent=5 // pred_fallthru
      _
    %p386 = scmp.le.s32.totalorder 1, %s19
    %p387 = scmp.lt.s32.totalorder %s19, 3
    %p388 = pnand %p386, %p387
    %p389 = pneg %p388
    // Predicated region
    $region69: #{tpu_custom_call.1} parent=5 // pred_check
      _
    $region70: #{tpu_custom_call.1} parent=5 // pred_check_branch
      %391 = sbr.rel (%p388) target = $region72
    $region71: #{tpu_custom_call.1} parent=5 // pred_region
      %s392 = ssub.s32 %s19, 1
      %p393 = scmp.lt.s32.totalorder %s24, 1
      %s394 = scalar_select %p393, %s24, 1
      %s395 = smul.addr %s394, 16
      %s396 = smul.addr %s395, 8
      %s397 = scalar_lea.vmem %s0, %s396
      %p398 = pneg %p45
      %p399 = pneg %p42
      %p400 = pneg %p66
      %p401 = pneg %p63
      %p402 = pneg %p87
      %p403 = pneg %p84
      %p404 = pneg %p108
      %p405 = pneg %p105
      %p406 = pneg %p129
      %p407 = pneg %p126
      %p408 = pneg %p150
      %p409 = pneg %p147
      %p410 = pneg %p171
      %p411 = pneg %p168
      %p412 = pneg %p192
      %p413 = pneg %p189
      %p414 = pneg %p213
      %p415 = pneg %p210
      %p416 = pneg %p234
      %p417 = pneg %p231
      %p418 = pneg %p255
      %p419 = pneg %p252
      %p420 = pneg %p276
      %p421 = pneg %p273
      %p422 = pneg %p297
      %p423 = pneg %p294
      %p424 = pneg %p323
      %p425 = pneg %p320
      %p426 = scmp.lt.s32.totalorder %s24, 1
      %s427 = scalar_select %p426, %s24, 1
      %s428 = smul.addr %s427, 16
      %s429 = smul.addr %s428, 8
      %s430 = scalar_lea.vmem %s13, %s429
      %p431 = scmp.lt.s32.totalorder %s24, 1
      %s432 = scalar_select %p431, %s24, 1
      %s433 = smul.addr %s432, 16
      %s434 = smul.addr %s433, 8
      %s435 = scalar_lea.vmem %s0, %s434
      %p436 = scmp.lt.s32.totalorder %s24, 1
      %s437 = scalar_select %p436, %s24, 1
      %s438 = smul.addr %s437, 16
      %s439 = smul.addr %s438, 8
      %s440 = scalar_lea.vmem %s13, %s439
      %v442 = vld [vmem:[%s435] sm:$0xff]
      %v443 = vld [vmem:[%s435 + $0x8] sm:$0xff]
      %v444 = vld [vmem:[%s435 + $0x10] sm:$0xff]
      %v445 = vld [vmem:[%s435 + $0x18] sm:$0xff]
      %v446 = vld [vmem:[%s435 + $0x20] sm:$0xff]
      %v447 = vld [vmem:[%s435 + $0x28] sm:$0xff]
      %v448 = vld [vmem:[%s435 + $0x30] sm:$0xff]
      %v449 = vld [vmem:[%s435 + $0x38] sm:$0xff]
      %v450 = vld [vmem:[%s435 + $0x40] sm:$0xff]
      %v451 = vld [vmem:[%s435 + $0x48] sm:$0xff]
      %v452 = vld [vmem:[%s435 + $0x50] sm:$0xff]
      %v453 = vld [vmem:[%s435 + $0x58] sm:$0xff]
      %v454 = vld [vmem:[%s435 + $0x60] sm:$0xff]
      %v455 = vld [vmem:[%s435 + $0x68] sm:$0xff]
      %v456 = vld [vmem:[%s435 + $0x70] sm:$0xff]
      %v457 = vld [vmem:[%s435 + $0x78] sm:$0xff]
      %v458 = vpack.c.bf16 %v443, %v442
      %v459 = vpack.c.bf16 %v445, %v444
      %v460 = vpack.c.bf16 %v447, %v446
      %v461 = vpack.c.bf16 %v449, %v448
      %v462 = vpack.c.bf16 %v451, %v450
      %v463 = vpack.c.bf16 %v453, %v452
      %v464 = vpack.c.bf16 %v455, %v454
      %v465 = vpack.c.bf16 %v457, %v456
      %v466 = vld [vmem:[%s1] sm:$0xff]
      %v467 = vld [vmem:[%s1 + $0x8] sm:$0xff]
      %v468 = vld [vmem:[%s1 + $0x10] sm:$0xff]
      %v469 = vld [vmem:[%s1 + $0x18] sm:$0xff]
      %v470 = vld [vmem:[%s1 + $0x20] sm:$0xff]
      %v471 = vld [vmem:[%s1 + $0x28] sm:$0xff]
      %v472 = vld [vmem:[%s1 + $0x30] sm:$0xff]
      %v473 = vld [vmem:[%s1 + $0x38] sm:$0xff]
      %v482 = vunpack.c.l.b16 %v466
      %v483 = vunpack.c.h.b16 %v466
      %v484 = vunpack.c.l.b16 %v467
      %v485 = vunpack.c.h.b16 %v467
      %v486 = vunpack.c.l.b16 %v468
      %v487 = vunpack.c.h.b16 %v468
      %v488 = vunpack.c.l.b16 %v469
      %v489 = vunpack.c.h.b16 %v469
      %v490 = vunpack.c.l.b16 %v470
      %v491 = vunpack.c.h.b16 %v470
      %v492 = vunpack.c.l.b16 %v471
      %v493 = vunpack.c.h.b16 %v471
      %v494 = vunpack.c.l.b16 %v472
      %v495 = vunpack.c.h.b16 %v472
      %v496 = vunpack.c.l.b16 %v473
      %v497 = vunpack.c.h.b16 %v473
      %v498 = vpack.c.b16 %v484, %v482
      %v499 = vpack.c.b16 %v485, %v483
      %v500 = vpack.c.b16 %v488, %v486
      %v501 = vpack.c.b16 %v489, %v487
      %v502 = vpack.c.b16 %v492, %v490
      %v503 = vpack.c.b16 %v493, %v491
      %v504 = vpack.c.b16 %v496, %v494
      %v505 = vpack.c.b16 %v497, %v495
      %vm514 = vcmask 523264
      %v516 = vsel %vm514, %v458, 0
      %v519 = vsel %vm514, %v459, 0
      %v522 = vsel %vm514, %v460, 0
      %v525 = vsel %vm514, %v461, 0
      %v528 = vsel %vm514, %v462, 0
      %v531 = vsel %vm514, %v463, 0
      %v534 = vsel %vm514, %v464, 0
      %v537 = vsel %vm514, %v465, 0
      %539 = vmatprep.subr.bf16.mxu0 %v499
      %540 = vmatpush1.bf16.msra.mxu0 %v498
      %541 = vmatprep.subr.bf16.mxu0 %v501
      %542 = vmatpush1.bf16.msra.mxu0 %v500
      %543 = vmatprep.subr.bf16.mxu0 %v503
      %544 = vmatpush1.bf16.msra.mxu0 %v502
      %545 = vmatprep.subr.bf16.mxu0 %v505
      %546 = vmatpush1.bf16.msra.mxu0 %v504
      %547 = vmatprep.subr.bf16.mxu0 0
      %548 = vmatpush1.bf16.msra.mxu0 0
      %549 = vmatprep.subr.bf16.mxu0 0
      %550 = vmatpush1.bf16.msra.mxu0 0
      %551 = vmatprep.subr.bf16.mxu0 0
      %552 = vmatpush1.bf16.msra.mxu0 0
      %553 = vmatprep.subr.bf16.mxu0 0
      %554 = vmatpush1.bf16.msra.mxu0 0
      %555 = vmatprep.subr.bf16.mxu0 0
      %556 = vmatpush1.bf16.msra.mxu0 0
      %557 = vmatprep.subr.bf16.mxu0 0
      %558 = vmatpush1.bf16.msra.mxu0 0
      %559 = vmatprep.subr.bf16.mxu0 0
      %560 = vmatpush1.bf16.msra.mxu0 0
      %561 = vmatprep.subr.bf16.mxu0 0
      %562 = vmatpush1.bf16.msra.mxu0 0
      %563 = vmatprep.subr.bf16.mxu0 0
      %564 = vmatpush1.bf16.msra.mxu0 0
      %565 = vmatprep.subr.bf16.mxu0 0
      %566 = vmatpush1.bf16.msra.mxu0 0
      %567 = vmatprep.subr.bf16.mxu0 0
      %568 = vmatpush1.bf16.msra.mxu0 0
      %569 = vmatprep.subr.bf16.mxu0 0
      %570 = vmatpush1.bf16.msra.mxu0 0
      %571 = vmatprep.mubr.bf16.mxu0 0
      %572 = vmatmul.mubr.bf16.gmra.mrb[0].mxu0 %v516
      %v573 = vpop.f32.mrb[0].mxu0
      %v574 = vadd.f32 0.0, %v573
      %v575 = vpop.f32.mrb[0].mxu0
      %v576 = vadd.f32 0.0, %v575
      %v577 = vpop.f32.mrb[0].mxu0
      %v578 = vadd.f32 0.0, %v577
      %v579 = vpop.f32.mrb[0].mxu0
      %v580 = vadd.f32 0.0, %v579
      %581 = vmatprep.mubr.bf16.mxu0 0
      %582 = vmatmul.mubr.bf16.gmra.mrb[0].mxu0 %v519
      %v583 = vpop.f32.mrb[0].mxu0
      %v584 = vadd.f32 0.0, %v583
      %v585 = vpop.f32.mrb[0].mxu0
      %v586 = vadd.f32 0.0, %v585
      %v587 = vpop.f32.mrb[0].mxu0
      %v588 = vadd.f32 0.0, %v587
      %v589 = vpop.f32.mrb[0].mxu0
      %v590 = vadd.f32 0.0, %v589
      %591 = vmatprep.mubr.bf16.mxu0 0
      %592 = vmatmul.mubr.bf16.gmra.mrb[0].mxu0 %v522
      %v593 = vpop.f32.mrb[0].mxu0
      %v594 = vadd.f32 0.0, %v593
      %v595 = vpop.f32.mrb[0].mxu0
      %v596 = vadd.f32 0.0, %v595
      %v597 = vpop.f32.mrb[0].mxu0
      %v598 = vadd.f32 0.0, %v597
      %v599 = vpop.f32.mrb[0].mxu0
      %v600 = vadd.f32 0.0, %v599
      %601 = vmatprep.mubr.bf16.mxu0 0
      %602 = vmatmul.mubr.bf16.gmra.mrb[0].mxu0 %v525
      %v603 = vpop.f32.mrb[0].mxu0
      %v604 = vadd.f32 0.0, %v603
      %v605 = vpop.f32.mrb[0].mxu0
      %v606 = vadd.f32 0.0, %v605
      %v607 = vpop.f32.mrb[0].mxu0
      %v608 = vadd.f32 0.0, %v607
      %v609 = vpop.f32.mrb[0].mxu0
      %v610 = vadd.f32 0.0, %v609
      %611 = vmatprep.mubr.bf16.mxu0 0
      %612 = vmatmul.mubr.bf16.gmra.mrb[0].mxu0 %v528
      %v613 = vpop.f32.mrb[0].mxu0
      %v614 = vadd.f32 0.0, %v613
      %v615 = vpop.f32.mrb[0].mxu0
      %v616 = vadd.f32 0.0, %v615
      %v617 = vpop.f32.mrb[0].mxu0
      %v618 = vadd.f32 0.0, %v617
      %v619 = vpop.f32.mrb[0].mxu0
      %v620 = vadd.f32 0.0, %v619
      %621 = vmatprep.mubr.bf16.mxu0 0
      %622 = vmatmul.mubr.bf16.gmra.mrb[0].mxu0 %v531
      %v623 = vpop.f32.mrb[0].mxu0
      %v624 = vadd.f32 0.0, %v623
      %v625 = vpop.f32.mrb[0].mxu0
      %v626 = vadd.f32 0.0, %v625
      %v627 = vpop.f32.mrb[0].mxu0
      %v628 = vadd.f32 0.0, %v627
      %v629 = vpop.f32.mrb[0].mxu0
      %v630 = vadd.f32 0.0, %v629
      %631 = vmatprep.mubr.bf16.mxu0 0
      %632 = vmatmul.mubr.bf16.gmra.mrb[0].mxu0 %v534
      %v633 = vpop.f32.mrb[0].mxu0
      %v634 = vadd.f32 0.0, %v633
      %v635 = vpop.f32.mrb[0].mxu0
      %v636 = vadd.f32 0.0, %v635
      %v637 = vpop.f32.mrb[0].mxu0
      %v638 = vadd.f32 0.0, %v637
      %v639 = vpop.f32.mrb[0].mxu0
      %v640 = vadd.f32 0.0, %v639
      %641 = vmatprep.mubr.bf16.mxu0 0
      %642 = vmatmul.mubr.bf16.gmra.mrb[0].mxu0 %v537
      %v643 = vpop.f32.mrb[0].mxu0
      %v644 = vadd.f32 0.0, %v643
      %v645 = vpop.f32.mrb[0].mxu0
      %v646 = vadd.f32 0.0, %v645
      %v647 = vpop.f32.mrb[0].mxu0
      %v648 = vadd.f32 0.0, %v647
      %v649 = vpop.f32.mrb[0].mxu0
      %v650 = vadd.f32 0.0, %v649
      %651 = vdwg.mxu0
      %v652 = vmul.f32 %v574, 0.125
      %v653 = vmul.f32 %v578, 0.125
      %v654 = vmul.f32 %v584, 0.125
      %v655 = vmul.f32 %v588, 0.125
      %v656 = vmul.f32 %v594, 0.125
      %v657 = vmul.f32 %v598, 0.125
      %v658 = vmul.f32 %v604, 0.125
      %v659 = vmul.f32 %v608, 0.125
      %v660 = vmul.f32 %v614, 0.125
      %v661 = vmul.f32 %v618, 0.125
      %v662 = vmul.f32 %v624, 0.125
      %v663 = vmul.f32 %v628, 0.125
      %v664 = vmul.f32 %v634, 0.125
      %v665 = vmul.f32 %v638, 0.125
      %v666 = vmul.f32 %v644, 0.125
      %v667 = vmul.f32 %v648, 0.125
      %v668 = vpack.c.bf16 %v653, %v652
      %v669 = vpack.c.bf16 %v655, %v654
      %v670 = vpack.c.bf16 %v657, %v656
      %v671 = vpack.c.bf16 %v659, %v658
      %v672 = vpack.c.bf16 %v661, %v660
      %v673 = vpack.c.bf16 %v663, %v662
      %v674 = vpack.c.bf16 %v665, %v664
      %v675 = vpack.c.bf16 %v667, %v666
      %v676 = vpack.c.bf16 %v578, %v574
      %v677 = vpack.c.bf16 %v588, %v584
      %v678 = vpack.c.bf16 %v598, %v594
      %v679 = vpack.c.bf16 %v608, %v604
      %v680 = vpack.c.bf16 %v618, %v614
      %v681 = vpack.c.bf16 %v628, %v624
      %v682 = vpack.c.bf16 %v638, %v634
      %v683 = vpack.c.bf16 %v648, %v644
      %v684 = vpack.c.bf16 %v580, %v576
      %v685 = vpack.c.bf16 %v590, %v586
      %v686 = vpack.c.bf16 %v600, %v596
      %v687 = vpack.c.bf16 %v610, %v606
      %v688 = vpack.c.bf16 %v620, %v616
      %v689 = vpack.c.bf16 %v630, %v626
      %v690 = vpack.c.bf16 %v640, %v636
      %v691 = vpack.c.bf16 %v650, %v646
      %v692 = vld [vmem:[%s4] sm:$0xff]
      %v693 = vld [vmem:[%s4 + $0x8] sm:$0xff]
      %v694 = vld [vmem:[%s4 + $0x10] sm:$0xff]
      %v695 = vld [vmem:[%s4 + $0x18] sm:$0xff]
      %v696 = vld [vmem:[%s4 + $0x20] sm:$0xff]
      %v697 = vld [vmem:[%s4 + $0x28] sm:$0xff]
      %v698 = vld [vmem:[%s4 + $0x30] sm:$0xff]
      %v699 = vld [vmem:[%s4 + $0x38] sm:$0xff]
      %v700 = vld [vmem:[%s4 + $0x40] sm:$0xff]
      %v701 = vld [vmem:[%s4 + $0x48] sm:$0xff]
      %v702 = vld [vmem:[%s4 + $0x50] sm:$0xff]
      %v703 = vld [vmem:[%s4 + $0x58] sm:$0xff]
      %v704 = vld [vmem:[%s4 + $0x60] sm:$0xff]
      %v705 = vld [vmem:[%s4 + $0x68] sm:$0xff]
      %v706 = vld [vmem:[%s4 + $0x70] sm:$0xff]
      %v707 = vld [vmem:[%s4 + $0x78] sm:$0xff]
      %716 = vrot.lane.b32.xlu0 %v676, 64
      %v717 = vpop.permute.xlu0 %716
      %718 = vrot.lane.b32.xlu0 %v677, 64
      %v719 = vpop.permute.xlu0 %718
      %720 = vrot.lane.b32.xlu0 %v678, 64
      %v721 = vpop.permute.xlu0 %720
      %722 = vrot.lane.b32.xlu0 %v679, 64
      %v723 = vpop.permute.xlu0 %722
      %724 = vrot.lane.b32.xlu0 %v680, 64
      %v725 = vpop.permute.xlu0 %724
      %726 = vrot.lane.b32.xlu0 %v681, 64
      %v727 = vpop.permute.xlu0 %726
      %728 = vrot.lane.b32.xlu0 %v682, 64
      %v729 = vpop.permute.xlu0 %728
      %730 = vrot.lane.b32.xlu0 %v683, 64
      %v731 = vpop.permute.xlu0 %730
      %vm732 = vcmask 31744
      %v734 = vsel %vm732, %v668, 0
      %v737 = vsel %vm732, %v669, 0
      %v740 = vsel %vm732, %v670, 0
      %v743 = vsel %vm732, %v671, 0
      %v746 = vsel %vm732, %v672, 0
      %v749 = vsel %vm732, %v673, 0
      %v752 = vsel %vm732, %v674, 0
      %v755 = vsel %vm732, %v675, 0
      %v758 = vsel %vm732, %v717, 0
      %v761 = vsel %vm732, %v719, 0
      %v764 = vsel %vm732, %v721, 0
      %v767 = vsel %vm732, %v723, 0
      %v770 = vsel %vm732, %v725, 0
      %v773 = vsel %vm732, %v727, 0
      %v776 = vsel %vm732, %v729, 0
      %v779 = vsel %vm732, %v731, 0
      %781 = vmatprep.subr.bf16.mxu0 0
      %782 = vmatpush1.bf16.xpose.msra.mxu0 %v758
      %783 = vmatprep.subr.bf16.mxu0 0
      %784 = vmatpush1.bf16.xpose.msra.mxu0 %v761
      %785 = vmatprep.subr.bf16.mxu0 0
      %786 = vmatpush1.bf16.xpose.msra.mxu0 %v764
      %787 = vmatprep.subr.bf16.mxu0 0
      %788 = vmatpush1.bf16.xpose.msra.mxu0 %v767
      %789 = vmatprep.subr.bf16.mxu0 0
      %790 = vmatpush1.bf16.xpose.msra.mxu0 %v770
      %791 = vmatprep.subr.bf16.mxu0 0
      %792 = vmatpush1.bf16.xpose.msra.mxu0 %v773
      %793 = vmatprep.subr.bf16.mxu0 0
      %794 = vmatpush1.bf16.xpose.msra.mxu0 %v776
      %795 = vmatprep.subr.bf16.mxu0 0
      %796 = vmatpush1.bf16.xpose.msra.mxu0 %v779
      %797 = vmatprep.subr.bf16.mxu0 0
      %798 = vmatpush1.bf16.xpose.msra.mxu0 0
      %799 = vmatprep.subr.bf16.mxu0 0
      %800 = vmatpush1.bf16.xpose.msra.mxu0 0
      %801 = vmatprep.subr.bf16.mxu0 0
      %802 = vmatpush1.bf16.xpose.msra.mxu0 0
      %803 = vmatprep.subr.bf16.mxu0 0
      %804 = vmatpush1.bf16.xpose.msra.mxu0 0
      %805 = vmatprep.subr.bf16.mxu0 0
      %806 = vmatpush1.bf16.xpose.msra.mxu0 0
      %807 = vmatprep.subr.bf16.mxu0 0
      %808 = vmatpush1.bf16.xpose.msra.mxu0 0
      %809 = vmatprep.subr.bf16.mxu0 0
      %810 = vmatpush1.bf16.xpose.msra.mxu0 0
      %811 = vmatprep.subr.bf16.mxu0 0
      %812 = vmatpush1.bf16.xpose.msra.mxu0 0
      %813 = vmatprep.mubr.bf16.mxu0 0
      %814 = vmatmul.mubr.bf16.gmra.mrb[0].mxu0 %v734
      %v815 = vpop.f32.mrb[0].mxu0
      %v816 = vadd.f32 %v692, %v815
      %v817 = vpop.f32.mrb[0].mxu0
      %v818 = vpop.f32.mrb[0].mxu0
      %v819 = vadd.f32 %v693, %v818
      %v820 = vpop.f32.mrb[0].mxu0
      %821 = vmatprep.mubr.bf16.mxu0 0
      %822 = vmatmul.mubr.bf16.gmra.mrb[0].mxu0 %v737
      %v823 = vpop.f32.mrb[0].mxu0
      %v824 = vadd.f32 %v694, %v823
      %v825 = vpop.f32.mrb[0].mxu0
      %v826 = vpop.f32.mrb[0].mxu0
      %v827 = vadd.f32 %v695, %v826
      %v828 = vpop.f32.mrb[0].mxu0
      %829 = vmatprep.mubr.bf16.mxu0 0
      %830 = vmatmul.mubr.bf16.gmra.mrb[0].mxu0 %v740
      %v831 = vpop.f32.mrb[0].mxu0
      %v832 = vadd.f32 %v696, %v831
      %v833 = vpop.f32.mrb[0].mxu0
      %v834 = vpop.f32.mrb[0].mxu0
      %v835 = vadd.f32 %v697, %v834
      %v836 = vpop.f32.mrb[0].mxu0
      %837 = vmatprep.mubr.bf16.mxu0 0
      %838 = vmatmul.mubr.bf16.gmra.mrb[0].mxu0 %v743
      %v839 = vpop.f32.mrb[0].mxu0
      %v840 = vadd.f32 %v698, %v839
      %v841 = vpop.f32.mrb[0].mxu0
      %v842 = vpop.f32.mrb[0].mxu0
      %v843 = vadd.f32 %v699, %v842
      %v844 = vpop.f32.mrb[0].mxu0
      %845 = vmatprep.mubr.bf16.mxu0 0
      %846 = vmatmul.mubr.bf16.gmra.mrb[0].mxu0 %v746
      %v847 = vpop.f32.mrb[0].mxu0
      %v848 = vadd.f32 %v700, %v847
      %v849 = vpop.f32.mrb[0].mxu0
      %v850 = vpop.f32.mrb[0].mxu0
      %v851 = vadd.f32 %v701, %v850
      %v852 = vpop.f32.mrb[0].mxu0
      %853 = vmatprep.mubr.bf16.mxu0 0
      %854 = vmatmul.mubr.bf16.gmra.mrb[0].mxu0 %v749
      %v855 = vpop.f32.mrb[0].mxu0
      %v856 = vadd.f32 %v702, %v855
      %v857 = vpop.f32.mrb[0].mxu0
      %v858 = vpop.f32.mrb[0].mxu0
      %v859 = vadd.f32 %v703, %v858
      %v860 = vpop.f32.mrb[0].mxu0
      %861 = vmatprep.mubr.bf16.mxu0 0
      %862 = vmatmul.mubr.bf16.gmra.mrb[0].mxu0 %v752
      %v863 = vpop.f32.mrb[0].mxu0
      %v864 = vadd.f32 %v704, %v863
      %v865 = vpop.f32.mrb[0].mxu0
      %v866 = vpop.f32.mrb[0].mxu0
      %v867 = vadd.f32 %v705, %v866
      %v868 = vpop.f32.mrb[0].mxu0
      %869 = vmatprep.mubr.bf16.mxu0 0
      %870 = vmatmul.mubr.bf16.gmra.mrb[0].mxu0 %v755
      %v871 = vpop.f32.mrb[0].mxu0
      %v872 = vadd.f32 %v706, %v871
      %v873 = vpop.f32.mrb[0].mxu0
      %v874 = vpop.f32.mrb[0].mxu0
      %v875 = vadd.f32 %v707, %v874
      %v876 = vpop.f32.mrb[0].mxu0
      %877 = vdwg.mxu0
      %878 = vmax.xlane.f32.xlu0 %v816
      %v879 = vpop.xlane.xlu0 %878
      %880 = vmax.xlane.f32.xlu0 %v819
      %v881 = vpop.xlane.xlu0 %880
      %882 = vmax.xlane.f32.xlu0 %v824
      %v883 = vpop.xlane.xlu0 %882
      %884 = vmax.xlane.f32.xlu0 %v827
      %v885 = vpop.xlane.xlu0 %884
      %886 = vmax.xlane.f32.xlu0 %v832
      %v887 = vpop.xlane.xlu0 %886
      %888 = vmax.xlane.f32.xlu0 %v835
      %v889 = vpop.xlane.xlu0 %888
      %890 = vmax.xlane.f32.xlu0 %v840
      %v891 = vpop.xlane.xlu0 %890
      %892 = vmax.xlane.f32.xlu0 %v843
      %v893 = vpop.xlane.xlu0 %892
      %894 = vmax.xlane.f32.xlu0 %v848
      %v895 = vpop.xlane.xlu0 %894
      %896 = vmax.xlane.f32.xlu0 %v851
      %v897 = vpop.xlane.xlu0 %896
      %898 = vmax.xlane.f32.xlu0 %v856
      %v899 = vpop.xlane.xlu0 %898
      %900 = vmax.xlane.f32.xlu0 %v859
      %v901 = vpop.xlane.xlu0 %900
      %902 = vmax.xlane.f32.xlu0 %v864
      %v903 = vpop.xlane.xlu0 %902
      %904 = vmax.xlane.f32.xlu0 %v867
      %v905 = vpop.xlane.xlu0 %904
      %906 = vmax.xlane.f32.xlu0 %v872
      %v907 = vpop.xlane.xlu0 %906
      %908 = vmax.xlane.f32.xlu0 %v875
      %v909 = vpop.xlane.xlu0 %908
      %v910 = vsub.f32 %v816, %v879
      %v911 = vsub.f32 %v819, %v881
      %v912 = vsub.f32 %v824, %v883
      %v913 = vsub.f32 %v827, %v885
      %v914 = vsub.f32 %v832, %v887
      %v915 = vsub.f32 %v835, %v889
      %v916 = vsub.f32 %v840, %v891
      %v917 = vsub.f32 %v843, %v893
      %v918 = vsub.f32 %v848, %v895
      %v919 = vsub.f32 %v851, %v897
      %v920 = vsub.f32 %v856, %v899
      %v921 = vsub.f32 %v859, %v901
      %v922 = vsub.f32 %v864, %v903
      %v923 = vsub.f32 %v867, %v905
      %v924 = vsub.f32 %v872, %v907
      %v925 = vsub.f32 %v875, %v909
      %v926 = vmul.f32 %v910, 1.442695
      %v927 = vpow.pop %v926
      %v928 = vmul.f32 %v911, 1.442695
      %v929 = vpow.pop %v928
      %v930 = vmul.f32 %v912, 1.442695
      %v931 = vpow.pop %v930
      %v932 = vmul.f32 %v913, 1.442695
      %v933 = vpow.pop %v932
      %v934 = vmul.f32 %v914, 1.442695
      %v935 = vpow.pop %v934
      %v936 = vmul.f32 %v915, 1.442695
      %v937 = vpow.pop %v936
      %v938 = vmul.f32 %v916, 1.442695
      %v939 = vpow.pop %v938
      %v940 = vmul.f32 %v917, 1.442695
      %v941 = vpow.pop %v940
      %v942 = vmul.f32 %v918, 1.442695
      %v943 = vpow.pop %v942
      %v944 = vmul.f32 %v919, 1.442695
      %v945 = vpow.pop %v944
      %v946 = vmul.f32 %v920, 1.442695
      %v947 = vpow.pop %v946
      %v948 = vmul.f32 %v921, 1.442695
      %v949 = vpow.pop %v948
      %v950 = vmul.f32 %v922, 1.442695
      %v951 = vpow.pop %v950
      %v952 = vmul.f32 %v923, 1.442695
      %v953 = vpow.pop %v952
      %v954 = vmul.f32 %v924, 1.442695
      %v955 = vpow.pop %v954
      %v956 = vmul.f32 %v925, 1.442695
      %v957 = vpow.pop %v956
      %958 = vadd.xlane.f32.xlu0 %v927
      %v959 = vpop.xlane.xlu0 %958
      %960 = vadd.xlane.f32.xlu0 %v929
      %v961 = vpop.xlane.xlu0 %960
      %962 = vadd.xlane.f32.xlu0 %v931
      %v963 = vpop.xlane.xlu0 %962
      %964 = vadd.xlane.f32.xlu0 %v933
      %v965 = vpop.xlane.xlu0 %964
      %966 = vadd.xlane.f32.xlu0 %v935
      %v967 = vpop.xlane.xlu0 %966
      %968 = vadd.xlane.f32.xlu0 %v937
      %v969 = vpop.xlane.xlu0 %968
      %970 = vadd.xlane.f32.xlu0 %v939
      %v971 = vpop.xlane.xlu0 %970
      %972 = vadd.xlane.f32.xlu0 %v941
      %v973 = vpop.xlane.xlu0 %972
      %974 = vadd.xlane.f32.xlu0 %v943
      %v975 = vpop.xlane.xlu0 %974
      %976 = vadd.xlane.f32.xlu0 %v945
      %v977 = vpop.xlane.xlu0 %976
      %978 = vadd.xlane.f32.xlu0 %v947
      %v979 = vpop.xlane.xlu0 %978
      %980 = vadd.xlane.f32.xlu0 %v949
      %v981 = vpop.xlane.xlu0 %980
      %982 = vadd.xlane.f32.xlu0 %v951
      %v983 = vpop.xlane.xlu0 %982
      %984 = vadd.xlane.f32.xlu0 %v953
      %v985 = vpop.xlane.xlu0 %984
      %986 = vadd.xlane.f32.xlu0 %v955
      %v987 = vpop.xlane.xlu0 %986
      %988 = vadd.xlane.f32.xlu0 %v957
      %v989 = vpop.xlane.xlu0 %988
      %v990 = vrcp.pop %v959
      %v991 = vrcp.pop %v961
      %v992 = vrcp.pop %v963
      %v993 = vrcp.pop %v965
      %v994 = vrcp.pop %v967
      %v995 = vrcp.pop %v969
      %v996 = vrcp.pop %v971
      %v997 = vrcp.pop %v973
      %v998 = vrcp.pop %v975
      %v999 = vrcp.pop %v977
      %v1000 = vrcp.pop %v979
      %v1001 = vrcp.pop %v981
      %v1002 = vrcp.pop %v983
      %v1003 = vrcp.pop %v985
      %v1004 = vrcp.pop %v987
      %v1005 = vrcp.pop %v989
      %v1006 = vmul.f32 %v927, %v990
      %v1007 = vmul.f32 %v929, %v991
      %v1008 = vmul.f32 %v931, %v992
      %v1009 = vmul.f32 %v933, %v993
      %v1010 = vmul.f32 %v935, %v994
      %v1011 = vmul.f32 %v937, %v995
      %v1012 = vmul.f32 %v939, %v996
      %v1013 = vmul.f32 %v941, %v997
      %v1014 = vmul.f32 %v943, %v998
      %v1015 = vmul.f32 %v945, %v999
      %v1016 = vmul.f32 %v947, %v1000
      %v1017 = vmul.f32 %v949, %v1001
      %v1018 = vmul.f32 %v951, %v1002
      %v1019 = vmul.f32 %v953, %v1003
      %v1020 = vmul.f32 %v955, %v1004
      %v1021 = vmul.f32 %v957, %v1005
      %v1022 = vpack.c.bf16 %v1007, %v1006
      %v1023 = vpack.c.bf16 %v1009, %v1008
      %v1024 = vpack.c.bf16 %v1011, %v1010
      %v1025 = vpack.c.bf16 %v1013, %v1012
      %v1026 = vpack.c.bf16 %v1015, %v1014
      %v1027 = vpack.c.bf16 %v1017, %v1016
      %v1028 = vpack.c.bf16 %v1019, %v1018
      %v1029 = vpack.c.bf16 %v1021, %v1020
      %1030 = vmatprep.subr.bf16.mxu0 0
      %1031 = vmatpush1.bf16.msra.mxu0 %v684
      %1032 = vmatprep.subr.bf16.mxu0 0
      %1033 = vmatpush1.bf16.msra.mxu0 %v685
      %1034 = vmatprep.subr.bf16.mxu0 0
      %1035 = vmatpush1.bf16.msra.mxu0 %v686
      %1036 = vmatprep.subr.bf16.mxu0 0
      %1037 = vmatpush1.bf16.msra.mxu0 %v687
      %1038 = vmatprep.subr.bf16.mxu0 0
      %1039 = vmatpush1.bf16.msra.mxu0 %v688
      %1040 = vmatprep.subr.bf16.mxu0 0
      %1041 = vmatpush1.bf16.msra.mxu0 %v689
      %1042 = vmatprep.subr.bf16.mxu0 0
      %1043 = vmatpush1.bf16.msra.mxu0 %v690
      %1044 = vmatprep.subr.bf16.mxu0 0
      %1045 = vmatpush1.bf16.msra.mxu0 %v691
      %1046 = vmatprep.subr.bf16.mxu0 0
      %1047 = vmatpush1.bf16.msra.mxu0 0
      %1048 = vmatprep.subr.bf16.mxu0 0
      %1049 = vmatpush1.bf16.msra.mxu0 0
      %1050 = vmatprep.subr.bf16.mxu0 0
      %1051 = vmatpush1.bf16.msra.mxu0 0
      %1052 = vmatprep.subr.bf16.mxu0 0
      %1053 = vmatpush1.bf16.msra.mxu0 0
      %1054 = vmatprep.subr.bf16.mxu0 0
      %1055 = vmatpush1.bf16.msra.mxu0 0
      %1056 = vmatprep.subr.bf16.mxu0 0
      %1057 = vmatpush1.bf16.msra.mxu0 0
      %1058 = vmatprep.subr.bf16.mxu0 0
      %1059 = vmatpush1.bf16.msra.mxu0 0
      %1060 = vmatprep.subr.bf16.mxu0 0
      %1061 = vmatpush1.bf16.msra.mxu0 0
      %1062 = vmatprep.mubr.bf16.mxu0 0
      %1063 = vmatmul.mubr.bf16.gmra.mrb[0].mxu0 %v1022
      %v1064 = vpop.f32.mrb[0].mxu0
      %v1065 = vadd.f32 0.0, %v1064
      %v1066 = vpop.f32.mrb[0].mxu0
      %v1067 = vpop.f32.mrb[0].mxu0
      %v1068 = vadd.f32 0.0, %v1067
      %v1069 = vpop.f32.mrb[0].mxu0
      %1070 = vmatprep.mubr.bf16.mxu0 0
      %1071 = vmatmul.mubr.bf16.gmra.mrb[0].mxu0 %v1023
      %v1072 = vpop.f32.mrb[0].mxu0
      %v1073 = vadd.f32 0.0, %v1072
      %v1074 = vpop.f32.mrb[0].mxu0
      %v1075 = vpop.f32.mrb[0].mxu0
      %v1076 = vadd.f32 0.0, %v1075
      %v1077 = vpop.f32.mrb[0].mxu0
      %1078 = vmatprep.mubr.bf16.mxu0 0
      %1079 = vmatmul.mubr.bf16.gmra.mrb[0].mxu0 %v1024
      %v1080 = vpop.f32.mrb[0].mxu0
      %v1081 = vadd.f32 0.0, %v1080
      %v1082 = vpop.f32.mrb[0].mxu0
      %v1083 = vpop.f32.mrb[0].mxu0
      %v1084 = vadd.f32 0.0, %v1083
      %v1085 = vpop.f32.mrb[0].mxu0
      %1086 = vmatprep.mubr.bf16.mxu0 0
      %1087 = vmatmul.mubr.bf16.gmra.mrb[0].mxu0 %v1025
      %v1088 = vpop.f32.mrb[0].mxu0
      %v1089 = vadd.f32 0.0, %v1088
      %v1090 = vpop.f32.mrb[0].mxu0
      %v1091 = vpop.f32.mrb[0].mxu0
      %v1092 = vadd.f32 0.0, %v1091
      %v1093 = vpop.f32.mrb[0].mxu0
      %1094 = vmatprep.mubr.bf16.mxu0 0
      %1095 = vmatmul.mubr.bf16.gmra.mrb[0].mxu0 %v1026
      %v1096 = vpop.f32.mrb[0].mxu0
      %v1097 = vadd.f32 0.0, %v1096
      %v1098 = vpop.f32.mrb[0].mxu0
      %v1099 = vpop.f32.mrb[0].mxu0
      %v1100 = vadd.f32 0.0, %v1099
      %v1101 = vpop.f32.mrb[0].mxu0
      %1102 = vmatprep.mubr.bf16.mxu0 0
      %1103 = vmatmul.mubr.bf16.gmra.mrb[0].mxu0 %v1027
      %v1104 = vpop.f32.mrb[0].mxu0
      %v1105 = vadd.f32 0.0, %v1104
      %v1106 = vpop.f32.mrb[0].mxu0
      %v1107 = vpop.f32.mrb[0].mxu0
      %v1108 = vadd.f32 0.0, %v1107
      %v1109 = vpop.f32.mrb[0].mxu0
      %1110 = vmatprep.mubr.bf16.mxu0 0
      %1111 = vmatmul.mubr.bf16.gmra.mrb[0].mxu0 %v1028
      %v1112 = vpop.f32.mrb[0].mxu0
      %v1113 = vadd.f32 0.0, %v1112
      %v1114 = vpop.f32.mrb[0].mxu0
      %v1115 = vpop.f32.mrb[0].mxu0
      %v1116 = vadd.f32 0.0, %v1115
      %v1117 = vpop.f32.mrb[0].mxu0
      %1118 = vmatprep.mubr.bf16.mxu0 0
      %1119 = vmatmul.mubr.bf16.gmra.mrb[0].mxu0 %v1029
      %v1120 = vpop.f32.mrb[0].mxu0
      %v1121 = vadd.f32 0.0, %v1120
      %v1122 = vpop.f32.mrb[0].mxu0
      %v1123 = vpop.f32.mrb[0].mxu0
      %v1124 = vadd.f32 0.0, %v1123
      %v1125 = vpop.f32.mrb[0].mxu0
      %1126 = vdwg.mxu0
      %1135 = vrot.lane.b32.xlu0 %v668, 124
      %v1136 = vpop.permute.xlu0 %1135
      %1137 = vrot.lane.b32.xlu0 %v669, 124
      %v1138 = vpop.permute.xlu0 %1137
      %1139 = vrot.lane.b32.xlu0 %v670, 124
      %v1140 = vpop.permute.xlu0 %1139
      %1141 = vrot.lane.b32.xlu0 %v671, 124
      %v1142 = vpop.permute.xlu0 %1141
      %1143 = vrot.lane.b32.xlu0 %v672, 124
      %v1144 = vpop.permute.xlu0 %1143
      %1145 = vrot.lane.b32.xlu0 %v673, 124
      %v1146 = vpop.permute.xlu0 %1145
      %1147 = vrot.lane.b32.xlu0 %v674, 124
      %v1148 = vpop.permute.xlu0 %1147
      %1149 = vrot.lane.b32.xlu0 %v675, 124
      %v1150 = vpop.permute.xlu0 %1149
      %1151 = vrot.lane.b32.xlu0 %v676, 60
      %v1152 = vpop.permute.xlu0 %1151
      %1153 = vrot.lane.b32.xlu0 %v677, 60
      %v1154 = vpop.permute.xlu0 %1153
      %1155 = vrot.lane.b32.xlu0 %v678, 60
      %v1156 = vpop.permute.xlu0 %1155
      %1157 = vrot.lane.b32.xlu0 %v679, 60
      %v1158 = vpop.permute.xlu0 %1157
      %1159 = vrot.lane.b32.xlu0 %v680, 60
      %v1160 = vpop.permute.xlu0 %1159
      %1161 = vrot.lane.b32.xlu0 %v681, 60
      %v1162 = vpop.permute.xlu0 %1161
      %1163 = vrot.lane.b32.xlu0 %v682, 60
      %v1164 = vpop.permute.xlu0 %1163
      %1165 = vrot.lane.b32.xlu0 %v683, 60
      %v1166 = vpop.permute.xlu0 %1165
      %v1168 = vsel %vm732, %v1136, 0
      %v1171 = vsel %vm732, %v1138, 0
      %v1174 = vsel %vm732, %v1140, 0
      %v1177 = vsel %vm732, %v1142, 0
      %v1180 = vsel %vm732, %v1144, 0
      %v1183 = vsel %vm732, %v1146, 0
      %v1186 = vsel %vm732, %v1148, 0
      %v1189 = vsel %vm732, %v1150, 0
      %v1192 = vsel %vm732, %v1152, 0
      %v1195 = vsel %vm732, %v1154, 0
      %v1198 = vsel %vm732, %v1156, 0
      %v1201 = vsel %vm732, %v1158, 0
      %v1204 = vsel %vm732, %v1160, 0
      %v1207 = vsel %vm732, %v1162, 0
      %v1210 = vsel %vm732, %v1164, 0
      %v1213 = vsel %vm732, %v1166, 0
      %1215 = vmatprep.subr.bf16.mxu0 0
      %1216 = vmatpush1.bf16.xpose.msra.mxu0 %v1192
      %1217 = vmatprep.subr.bf16.mxu0 0
      %1218 = vmatpush1.bf16.xpose.msra.mxu0 %v1195
      %1219 = vmatprep.subr.bf16.mxu0 0
      %1220 = vmatpush1.bf16.xpose.msra.mxu0 %v1198
      %1221 = vmatprep.subr.bf16.mxu0 0
      %1222 = vmatpush1.bf16.xpose.msra.mxu0 %v1201
      %1223 = vmatprep.subr.bf16.mxu0 0
      %1224 = vmatpush1.bf16.xpose.msra.mxu0 %v1204
      %1225 = vmatprep.subr.bf16.mxu0 0
      %1226 = vmatpush1.bf16.xpose.msra.mxu0 %v1207
      %1227 = vmatprep.subr.bf16.mxu0 0
      %1228 = vmatpush1.bf16.xpose.msra.mxu0 %v1210
      %1229 = vmatprep.subr.bf16.mxu0 0
      %1230 = vmatpush1.bf16.xpose.msra.mxu0 %v1213
      %1231 = vmatprep.subr.bf16.mxu0 0
      %1232 = vmatpush1.bf16.xpose.msra.mxu0 0
      %1233 = vmatprep.subr.bf16.mxu0 0
      %1234 = vmatpush1.bf16.xpose.msra.mxu0 0
      %1235 = vmatprep.subr.bf16.mxu0 0
      %1236 = vmatpush1.bf16.xpose.msra.mxu0 0
      %1237 = vmatprep.subr.bf16.mxu0 0
      %1238 = vmatpush1.bf16.xpose.msra.mxu0 0
      %1239 = vmatprep.subr.bf16.mxu0 0
      %1240 = vmatpush1.bf16.xpose.msra.mxu0 0
      %1241 = vmatprep.subr.bf16.mxu0 0
      %1242 = vmatpush1.bf16.xpose.msra.mxu0 0
      %1243 = vmatprep.subr.bf16.mxu0 0
      %1244 = vmatpush1.bf16.xpose.msra.mxu0 0
      %1245 = vmatprep.subr.bf16.mxu0 0
      %1246 = vmatpush1.bf16.xpose.msra.mxu0 0
      %1247 = vmatprep.mubr.bf16.mxu0 0
      %1248 = vmatmul.mubr.bf16.gmra.mrb[0].mxu0 %v1168
      %v1249 = vpop.f32.mrb[0].mxu0
      %v1250 = vadd.f32 %v692, %v1249
      %v1251 = vpop.f32.mrb[0].mxu0
      %v1252 = vpop.f32.mrb[0].mxu0
      %v1253 = vadd.f32 %v693, %v1252
      %v1254 = vpop.f32.mrb[0].mxu0
      %1255 = vmatprep.mubr.bf16.mxu0 0
      %1256 = vmatmul.mubr.bf16.gmra.mrb[0].mxu0 %v1171
      %v1257 = vpop.f32.mrb[0].mxu0
      %v1258 = vadd.f32 %v694, %v1257
      %v1259 = vpop.f32.mrb[0].mxu0
      %v1260 = vpop.f32.mrb[0].mxu0
      %v1261 = vadd.f32 %v695, %v1260
      %v1262 = vpop.f32.mrb[0].mxu0
      %1263 = vmatprep.mubr.bf16.mxu0 0
      %1264 = vmatmul.mubr.bf16.gmra.mrb[0].mxu0 %v1174
      %v1265 = vpop.f32.mrb[0].mxu0
      %v1266 = vadd.f32 %v696, %v1265
      %v1267 = vpop.f32.mrb[0].mxu0
      %v1268 = vpop.f32.mrb[0].mxu0
      %v1269 = vadd.f32 %v697, %v1268
      %v1270 = vpop.f32.mrb[0].mxu0
      %1271 = vmatprep.mubr.bf16.mxu0 0
      %1272 = vmatmul.mubr.bf16.gmra.mrb[0].mxu0 %v1177
      %v1273 = vpop.f32.mrb[0].mxu0
      %v1274 = vadd.f32 %v698, %v1273
      %v1275 = vpop.f32.mrb[0].mxu0
      %v1276 = vpop.f32.mrb[0].mxu0
      %v1277 = vadd.f32 %v699, %v1276
      %v1278 = vpop.f32.mrb[0].mxu0
      %1279 = vmatprep.mubr.bf16.mxu0 0
      %1280 = vmatmul.mubr.bf16.gmra.mrb[0].mxu0 %v1180
      %v1281 = vpop.f32.mrb[0].mxu0
      %v1282 = vadd.f32 %v700, %v1281
      %v1283 = vpop.f32.mrb[0].mxu0
      %v1284 = vpop.f32.mrb[0].mxu0
      %v1285 = vadd.f32 %v701, %v1284
      %v1286 = vpop.f32.mrb[0].mxu0
      %1287 = vmatprep.mubr.bf16.mxu0 0
      %1288 = vmatmul.mubr.bf16.gmra.mrb[0].mxu0 %v1183
      %v1289 = vpop.f32.mrb[0].mxu0
      %v1290 = vadd.f32 %v702, %v1289
      %v1291 = vpop.f32.mrb[0].mxu0
      %v1292 = vpop.f32.mrb[0].mxu0
      %v1293 = vadd.f32 %v703, %v1292
      %v1294 = vpop.f32.mrb[0].mxu0
      %1295 = vmatprep.mubr.bf16.mxu0 0
      %1296 = vmatmul.mubr.bf16.gmra.mrb[0].mxu0 %v1186
      %v1297 = vpop.f32.mrb[0].mxu0
      %v1298 = vadd.f32 %v704, %v1297
      %v1299 = vpop.f32.mrb[0].mxu0
      %v1300 = vpop.f32.mrb[0].mxu0
      %v1301 = vadd.f32 %v705, %v1300
      %v1302 = vpop.f32.mrb[0].mxu0
      %1303 = vmatprep.mubr.bf16.mxu0 0
      %1304 = vmatmul.mubr.bf16.gmra.mrb[0].mxu0 %v1189
      %v1305 = vpop.f32.mrb[0].mxu0
      %v1306 = vadd.f32 %v706, %v1305
      %v1307 = vpop.f32.mrb[0].mxu0
      %v1308 = vpop.f32.mrb[0].mxu0
      %v1309 = vadd.f32 %v707, %v1308
      %v1310 = vpop.f32.mrb[0].mxu0
      %1311 = vdwg.mxu0
      %1312 = vmax.xlane.f32.xlu0 %v1250
      %v1313 = vpop.xlane.xlu0 %1312
      %1314 = vmax.xlane.f32.xlu0 %v1253
      %v1315 = vpop.xlane.xlu0 %1314
      %1316 = vmax.xlane.f32.xlu0 %v1258
      %v1317 = vpop.xlane.xlu0 %1316
      %1318 = vmax.xlane.f32.xlu0 %v1261
      %v1319 = vpop.xlane.xlu0 %1318
      %1320 = vmax.xlane.f32.xlu0 %v1266
      %v1321 = vpop.xlane.xlu0 %1320
      %1322 = vmax.xlane.f32.xlu0 %v1269
      %v1323 = vpop.xlane.xlu0 %1322
      %1324 = vmax.xlane.f32.xlu0 %v1274
      %v1325 = vpop.xlane.xlu0 %1324
      %1326 = vmax.xlane.f32.xlu0 %v1277
      %v1327 = vpop.xlane.xlu0 %1326
      %1328 = vmax.xlane.f32.xlu0 %v1282
      %v1329 = vpop.xlane.xlu0 %1328
      %1330 = vmax.xlane.f32.xlu0 %v1285
      %v1331 = vpop.xlane.xlu0 %1330
      %1332 = vmax.xlane.f32.xlu0 %v1290
      %v1333 = vpop.xlane.xlu0 %1332
      %1334 = vmax.xlane.f32.xlu0 %v1293
      %v1335 = vpop.xlane.xlu0 %1334
      %1336 = vmax.xlane.f32.xlu0 %v1298
      %v1337 = vpop.xlane.xlu0 %1336
      %1338 = vmax.xlane.f32.xlu0 %v1301
      %v1339 = vpop.xlane.xlu0 %1338
      %1340 = vmax.xlane.f32.xlu0 %v1306
      %v1341 = vpop.xlane.xlu0 %1340
      %1342 = vmax.xlane.f32.xlu0 %v1309
      %v1343 = vpop.xlane.xlu0 %1342
      %v1344 = vsub.f32 %v1250, %v1313
      %v1345 = vsub.f32 %v1253, %v1315
      %v1346 = vsub.f32 %v1258, %v1317
      %v1347 = vsub.f32 %v1261, %v1319
      %v1348 = vsub.f32 %v1266, %v1321
      %v1349 = vsub.f32 %v1269, %v1323
      %v1350 = vsub.f32 %v1274, %v1325
      %v1351 = vsub.f32 %v1277, %v1327
      %v1352 = vsub.f32 %v1282, %v1329
      %v1353 = vsub.f32 %v1285, %v1331
      %v1354 = vsub.f32 %v1290, %v1333
      %v1355 = vsub.f32 %v1293, %v1335
      %v1356 = vsub.f32 %v1298, %v1337
      %v1357 = vsub.f32 %v1301, %v1339
      %v1358 = vsub.f32 %v1306, %v1341
      %v1359 = vsub.f32 %v1309, %v1343
      %v1360 = vmul.f32 %v1344, 1.442695
      %v1361 = vpow.pop %v1360
      %v1362 = vmul.f32 %v1345, 1.442695
      %v1363 = vpow.pop %v1362
      %v1364 = vmul.f32 %v1346, 1.442695
      %v1365 = vpow.pop %v1364
      %v1366 = vmul.f32 %v1347, 1.442695
      %v1367 = vpow.pop %v1366
      %v1368 = vmul.f32 %v1348, 1.442695
      %v1369 = vpow.pop %v1368
      %v1370 = vmul.f32 %v1349, 1.442695
      %v1371 = vpow.pop %v1370
      %v1372 = vmul.f32 %v1350, 1.442695
      %v1373 = vpow.pop %v1372
      %v1374 = vmul.f32 %v1351, 1.442695
      %v1375 = vpow.pop %v1374
      %v1376 = vmul.f32 %v1352, 1.442695
      %v1377 = vpow.pop %v1376
      %v1378 = vmul.f32 %v1353, 1.442695
      %v1379 = vpow.pop %v1378
      %v1380 = vmul.f32 %v1354, 1.442695
      %v1381 = vpow.pop %v1380
      %v1382 = vmul.f32 %v1355, 1.442695
      %v1383 = vpow.pop %v1382
      %v1384 = vmul.f32 %v1356, 1.442695
      %v1385 = vpow.pop %v1384
      %v1386 = vmul.f32 %v1357, 1.442695
      %v1387 = vpow.pop %v1386
      %v1388 = vmul.f32 %v1358, 1.442695
      %v1389 = vpow.pop %v1388
      %v1390 = vmul.f32 %v1359, 1.442695
      %v1391 = vpow.pop %v1390
      %1392 = vadd.xlane.f32.xlu0 %v1361
      %v1393 = vpop.xlane.xlu0 %1392
      %1394 = vadd.xlane.f32.xlu0 %v1363
      %v1395 = vpop.xlane.xlu0 %1394
      %1396 = vadd.xlane.f32.xlu0 %v1365
      %v1397 = vpop.xlane.xlu0 %1396
      %1398 = vadd.xlane.f32.xlu0 %v1367
      %v1399 = vpop.xlane.xlu0 %1398
      %1400 = vadd.xlane.f32.xlu0 %v1369
      %v1401 = vpop.xlane.xlu0 %1400
      %1402 = vadd.xlane.f32.xlu0 %v1371
      %v1403 = vpop.xlane.xlu0 %1402
      %1404 = vadd.xlane.f32.xlu0 %v1373
      %v1405 = vpop.xlane.xlu0 %1404
      %1406 = vadd.xlane.f32.xlu0 %v1375
      %v1407 = vpop.xlane.xlu0 %1406
      %1408 = vadd.xlane.f32.xlu0 %v1377
      %v1409 = vpop.xlane.xlu0 %1408
      %1410 = vadd.xlane.f32.xlu0 %v1379
      %v1411 = vpop.xlane.xlu0 %1410
      %1412 = vadd.xlane.f32.xlu0 %v1381
      %v1413 = vpop.xlane.xlu0 %1412
      %1414 = vadd.xlane.f32.xlu0 %v1383
      %v1415 = vpop.xlane.xlu0 %1414
      %1416 = vadd.xlane.f32.xlu0 %v1385
      %v1417 = vpop.xlane.xlu0 %1416
      %1418 = vadd.xlane.f32.xlu0 %v1387
      %v1419 = vpop.xlane.xlu0 %1418
      %1420 = vadd.xlane.f32.xlu0 %v1389
      %v1421 = vpop.xlane.xlu0 %1420
      %1422 = vadd.xlane.f32.xlu0 %v1391
      %v1423 = vpop.xlane.xlu0 %1422
      %v1424 = vrcp.pop %v1393
      %v1425 = vrcp.pop %v1395
      %v1426 = vrcp.pop %v1397
      %v1427 = vrcp.pop %v1399
      %v1428 = vrcp.pop %v1401
      %v1429 = vrcp.pop %v1403
      %v1430 = vrcp.pop %v1405
      %v1431 = vrcp.pop %v1407
      %v1432 = vrcp.pop %v1409
      %v1433 = vrcp.pop %v1411
      %v1434 = vrcp.pop %v1413
      %v1435 = vrcp.pop %v1415
      %v1436 = vrcp.pop %v1417
      %v1437 = vrcp.pop %v1419
      %v1438 = vrcp.pop %v1421
      %v1439 = vrcp.pop %v1423
      %v1440 = vmul.f32 %v1361, %v1424
      %v1441 = vmul.f32 %v1363, %v1425
      %v1442 = vmul.f32 %v1365, %v1426
      %v1443 = vmul.f32 %v1367, %v1427
      %v1444 = vmul.f32 %v1369, %v1428
      %v1445 = vmul.f32 %v1371, %v1429
      %v1446 = vmul.f32 %v1373, %v1430
      %v1447 = vmul.f32 %v1375, %v1431
      %v1448 = vmul.f32 %v1377, %v1432
      %v1449 = vmul.f32 %v1379, %v1433
      %v1450 = vmul.f32 %v1381, %v1434
      %v1451 = vmul.f32 %v1383, %v1435
      %v1452 = vmul.f32 %v1385, %v1436
      %v1453 = vmul.f32 %v1387, %v1437
      %v1454 = vmul.f32 %v1389, %v1438
      %v1455 = vmul.f32 %v1391, %v1439
      %v1456 = vpack.c.bf16 %v1441, %v1440
      %v1457 = vpack.c.bf16 %v1443, %v1442
      %v1458 = vpack.c.bf16 %v1445, %v1444
      %v1459 = vpack.c.bf16 %v1447, %v1446
      %v1460 = vpack.c.bf16 %v1449, %v1448
      %v1461 = vpack.c.bf16 %v1451, %v1450
      %v1462 = vpack.c.bf16 %v1453, %v1452
      %v1463 = vpack.c.bf16 %v1455, %v1454
      %1472 = vrot.lane.b32.xlu0 %v684, 124
      %v1473 = vpop.permute.xlu0 %1472
      %1474 = vrot.lane.b32.xlu0 %v685, 124
      %v1475 = vpop.permute.xlu0 %1474
      %1476 = vrot.lane.b32.xlu0 %v686, 124
      %v1477 = vpop.permute.xlu0 %1476
      %1478 = vrot.lane.b32.xlu0 %v687, 124
      %v1479 = vpop.permute.xlu0 %1478
      %1480 = vrot.lane.b32.xlu0 %v688, 124
      %v1481 = vpop.permute.xlu0 %1480
      %1482 = vrot.lane.b32.xlu0 %v689, 124
      %v1483 = vpop.permute.xlu0 %1482
      %1484 = vrot.lane.b32.xlu0 %v690, 124
      %v1485 = vpop.permute.xlu0 %1484
      %1486 = vrot.lane.b32.xlu0 %v691, 124
      %v1487 = vpop.permute.xlu0 %1486
      %1496 = vmatprep.subr.bf16.mxu0 0
      %1497 = vmatpush1.bf16.msra.mxu0 %v1473
      %1498 = vmatprep.subr.bf16.mxu0 0
      %1499 = vmatpush1.bf16.msra.mxu0 %v1475
      %1500 = vmatprep.subr.bf16.mxu0 0
      %1501 = vmatpush1.bf16.msra.mxu0 %v1477
      %1502 = vmatprep.subr.bf16.mxu0 0
      %1503 = vmatpush1.bf16.msra.mxu0 %v1479
      %1504 = vmatprep.subr.bf16.mxu0 0
      %1505 = vmatpush1.bf16.msra.mxu0 %v1481
      %1506 = vmatprep.subr.bf16.mxu0 0
      %1507 = vmatpush1.bf16.msra.mxu0 %v1483
      %1508 = vmatprep.subr.bf16.mxu0 0
      %1509 = vmatpush1.bf16.msra.mxu0 %v1485
      %1510 = vmatprep.subr.bf16.mxu0 0
      %1511 = vmatpush1.bf16.msra.mxu0 %v1487
      %1512 = vmatprep.subr.bf16.mxu0 0
      %1513 = vmatpush1.bf16.msra.mxu0 0
      %1514 = vmatprep.subr.bf16.mxu0 0
      %1515 = vmatpush1.bf16.msra.mxu0 0
      %1516 = vmatprep.subr.bf16.mxu0 0
      %1517 = vmatpush1.bf16.msra.mxu0 0
      %1518 = vmatprep.subr.bf16.mxu0 0
      %1519 = vmatpush1.bf16.msra.mxu0 0
      %1520 = vmatprep.subr.bf16.mxu0 0
      %1521 = vmatpush1.bf16.msra.mxu0 0
      %1522 = vmatprep.subr.bf16.mxu0 0
      %1523 = vmatpush1.bf16.msra.mxu0 0
      %1524 = vmatprep.subr.bf16.mxu0 0
      %1525 = vmatpush1.bf16.msra.mxu0 0
      %1526 = vmatprep.subr.bf16.mxu0 0
      %1527 = vmatpush1.bf16.msra.mxu0 0
      %1528 = vmatprep.mubr.bf16.mxu0 0
      %1529 = vmatmul.mubr.bf16.gmra.mrb[0].mxu0 %v1456
      %v1530 = vpop.f32.mrb[0].mxu0
      %v1531 = vadd.f32 0.0, %v1530
      %v1532 = vpop.f32.mrb[0].mxu0
      %v1533 = vpop.f32.mrb[0].mxu0
      %v1534 = vadd.f32 0.0, %v1533
      %v1535 = vpop.f32.mrb[0].mxu0
      %1536 = vmatprep.mubr.bf16.mxu0 0
      %1537 = vmatmul.mubr.bf16.gmra.mrb[0].mxu0 %v1457
      %v1538 = vpop.f32.mrb[0].mxu0
      %v1539 = vadd.f32 0.0, %v1538
      %v1540 = vpop.f32.mrb[0].mxu0
      %v1541 = vpop.f32.mrb[0].mxu0
      %v1542 = vadd.f32 0.0, %v1541
      %v1543 = vpop.f32.mrb[0].mxu0
      %1544 = vmatprep.mubr.bf16.mxu0 0
      %1545 = vmatmul.mubr.bf16.gmra.mrb[0].mxu0 %v1458
      %v1546 = vpop.f32.mrb[0].mxu0
      %v1547 = vadd.f32 0.0, %v1546
      %v1548 = vpop.f32.mrb[0].mxu0
      %v1549 = vpop.f32.mrb[0].mxu0
      %v1550 = vadd.f32 0.0, %v1549
      %v1551 = vpop.f32.mrb[0].mxu0
      %1552 = vmatprep.mubr.bf16.mxu0 0
      %1553 = vmatmul.mubr.bf16.gmra.mrb[0].mxu0 %v1459
      %v1554 = vpop.f32.mrb[0].mxu0
      %v1555 = vadd.f32 0.0, %v1554
      %v1556 = vpop.f32.mrb[0].mxu0
      %v1557 = vpop.f32.mrb[0].mxu0
      %v1558 = vadd.f32 0.0, %v1557
      %v1559 = vpop.f32.mrb[0].mxu0
      %1560 = vmatprep.mubr.bf16.mxu0 0
      %1561 = vmatmul.mubr.bf16.gmra.mrb[0].mxu0 %v1460
      %v1562 = vpop.f32.mrb[0].mxu0
      %v1563 = vadd.f32 0.0, %v1562
      %v1564 = vpop.f32.mrb[0].mxu0
      %v1565 = vpop.f32.mrb[0].mxu0
      %v1566 = vadd.f32 0.0, %v1565
      %v1567 = vpop.f32.mrb[0].mxu0
      %1568 = vmatprep.mubr.bf16.mxu0 0
      %1569 = vmatmul.mubr.bf16.gmra.mrb[0].mxu0 %v1461
      %v1570 = vpop.f32.mrb[0].mxu0
      %v1571 = vadd.f32 0.0, %v1570
      %v1572 = vpop.f32.mrb[0].mxu0
      %v1573 = vpop.f32.mrb[0].mxu0
      %v1574 = vadd.f32 0.0, %v1573
      %v1575 = vpop.f32.mrb[0].mxu0
      %1576 = vmatprep.mubr.bf16.mxu0 0
      %1577 = vmatmul.mubr.bf16.gmra.mrb[0].mxu0 %v1462
      %v1578 = vpop.f32.mrb[0].mxu0
      %v1579 = vadd.f32 0.0, %v1578
      %v1580 = vpop.f32.mrb[0].mxu0
      %v1581 = vpop.f32.mrb[0].mxu0
      %v1582 = vadd.f32 0.0, %v1581
      %v1583 = vpop.f32.mrb[0].mxu0
      %1584 = vmatprep.mubr.bf16.mxu0 0
      %1585 = vmatmul.mubr.bf16.gmra.mrb[0].mxu0 %v1463
      %v1586 = vpop.f32.mrb[0].mxu0
      %v1587 = vadd.f32 0.0, %v1586
      %v1588 = vpop.f32.mrb[0].mxu0
      %v1589 = vpop.f32.mrb[0].mxu0
      %v1590 = vadd.f32 0.0, %v1589
      %v1591 = vpop.f32.mrb[0].mxu0
      %1592 = vdwg.mxu0
      %1593 = vrot.lane.b32.xlu0 %v668, 120
      %v1594 = vpop.permute.xlu0 %1593
      %1595 = vrot.lane.b32.xlu0 %v669, 120
      %v1596 = vpop.permute.xlu0 %1595
      %1597 = vrot.lane.b32.xlu0 %v670, 120
      %v1598 = vpop.permute.xlu0 %1597
      %1599 = vrot.lane.b32.xlu0 %v671, 120
      %v1600 = vpop.permute.xlu0 %1599
      %1601 = vrot.lane.b32.xlu0 %v672, 120
      %v1602 = vpop.permute.xlu0 %1601
      %1603 = vrot.lane.b32.xlu0 %v673, 120
      %v1604 = vpop.permute.xlu0 %1603
      %1605 = vrot.lane.b32.xlu0 %v674, 120
      %v1606 = vpop.permute.xlu0 %1605
      %1607 = vrot.lane.b32.xlu0 %v675, 120
      %v1608 = vpop.permute.xlu0 %1607
      %1609 = vrot.lane.b32.xlu0 %v676, 56
      %v1610 = vpop.permute.xlu0 %1609
      %1611 = vrot.lane.b32.xlu0 %v677, 56
      %v1612 = vpop.permute.xlu0 %1611
      %1613 = vrot.lane.b32.xlu0 %v678, 56
      %v1614 = vpop.permute.xlu0 %1613
      %1615 = vrot.lane.b32.xlu0 %v679, 56
      %v1616 = vpop.permute.xlu0 %1615
      %1617 = vrot.lane.b32.xlu0 %v680, 56
      %v1618 = vpop.permute.xlu0 %1617
      %1619 = vrot.lane.b32.xlu0 %v681, 56
      %v1620 = vpop.permute.xlu0 %1619
      %1621 = vrot.lane.b32.xlu0 %v682, 56
      %v1622 = vpop.permute.xlu0 %1621
      %1623 = vrot.lane.b32.xlu0 %v683, 56
      %v1624 = vpop.permute.xlu0 %1623
      %v1626 = vsel %vm732, %v1594, 0
      %v1629 = vsel %vm732, %v1596, 0
      %v1632 = vsel %vm732, %v1598, 0
      %v1635 = vsel %vm732, %v1600, 0
      %v1638 = vsel %vm732, %v1602, 0
      %v1641 = vsel %vm732, %v1604, 0
      %v1644 = vsel %vm732, %v1606, 0
      %v1647 = vsel %vm732, %v1608, 0
      %v1650 = vsel %vm732, %v1610, 0
      %v1653 = vsel %vm732, %v1612, 0
      %v1656 = vsel %vm732, %v1614, 0
      %v1659 = vsel %vm732, %v1616, 0
      %v1662 = vsel %vm732, %v1618, 0
      %v1665 = vsel %vm732, %v1620, 0
      %v1668 = vsel %vm732, %v1622, 0
      %v1671 = vsel %vm732, %v1624, 0
      %1673 = vmatprep.subr.bf16.mxu0 0
      %1674 = vmatpush1.bf16.xpose.msra.mxu0 %v1650
      %1675 = vmatprep.subr.bf16.mxu0 0
      %1676 = vmatpush1.bf16.xpose.msra.mxu0 %v1653
      %1677 = vmatprep.subr.bf16.mxu0 0
      %1678 = vmatpush1.bf16.xpose.msra.mxu0 %v1656
      %1679 = vmatprep.subr.bf16.mxu0 0
      %1680 = vmatpush1.bf16.xpose.msra.mxu0 %v1659
      %1681 = vmatprep.subr.bf16.mxu0 0
      %1682 = vmatpush1.bf16.xpose.msra.mxu0 %v1662
      %1683 = vmatprep.subr.bf16.mxu0 0
      %1684 = vmatpush1.bf16.xpose.msra.mxu0 %v1665
      %1685 = vmatprep.subr.bf16.mxu0 0
      %1686 = vmatpush1.bf16.xpose.msra.mxu0 %v1668
      %1687 = vmatprep.subr.bf16.mxu0 0
      %1688 = vmatpush1.bf16.xpose.msra.mxu0 %v1671
      %1689 = vmatprep.subr.bf16.mxu0 0
      %1690 = vmatpush1.bf16.xpose.msra.mxu0 0
      %1691 = vmatprep.subr.bf16.mxu0 0
      %1692 = vmatpush1.bf16.xpose.msra.mxu0 0
      %1693 = vmatprep.subr.bf16.mxu0 0
      %1694 = vmatpush1.bf16.xpose.msra.mxu0 0
      %1695 = vmatprep.subr.bf16.mxu0 0
      %1696 = vmatpush1.bf16.xpose.msra.mxu0 0
      %1697 = vmatprep.subr.bf16.mxu0 0
      %1698 = vmatpush1.bf16.xpose.msra.mxu0 0
      %1699 = vmatprep.subr.bf16.mxu0 0
      %1700 = vmatpush1.bf16.xpose.msra.mxu0 0
      %1701 = vmatprep.subr.bf16.mxu0 0
      %1702 = vmatpush1.bf16.xpose.msra.mxu0 0
      %1703 = vmatprep.subr.bf16.mxu0 0
      %1704 = vmatpush1.bf16.xpose.msra.mxu0 0
      %1705 = vmatprep.mubr.bf16.mxu0 0
      %1706 = vmatmul.mubr.bf16.gmra.mrb[0].mxu0 %v1626
      %v1707 = vpop.f32.mrb[0].mxu0
      %v1708 = vadd.f32 %v692, %v1707
      %v1709 = vpop.f32.mrb[0].mxu0
      %v1710 = vpop.f32.mrb[0].mxu0
      %v1711 = vadd.f32 %v693, %v1710
      %v1712 = vpop.f32.mrb[0].mxu0
      %1713 = vmatprep.mubr.bf16.mxu0 0
      %1714 = vmatmul.mubr.bf16.gmra.mrb[0].mxu0 %v1629
      %v1715 = vpop.f32.mrb[0].mxu0
      %v1716 = vadd.f32 %v694, %v1715
      %v1717 = vpop.f32.mrb[0].mxu0
      %v1718 = vpop.f32.mrb[0].mxu0
      %v1719 = vadd.f32 %v695, %v1718
      %v1720 = vpop.f32.mrb[0].mxu0
      %1721 = vmatprep.mubr.bf16.mxu0 0
      %1722 = vmatmul.mubr.bf16.gmra.mrb[0].mxu0 %v1632
      %v1723 = vpop.f32.mrb[0].mxu0
      %v1724 = vadd.f32 %v696, %v1723
      %v1725 = vpop.f32.mrb[0].mxu0
      %v1726 = vpop.f32.mrb[0].mxu0
      %v1727 = vadd.f32 %v697, %v1726
      %v1728 = vpop.f32.mrb[0].mxu0
      %1729 = vmatprep.mubr.bf16.mxu0 0
      %1730 = vmatmul.mubr.bf16.gmra.mrb[0].mxu0 %v1635
      %v1731 = vpop.f32.mrb[0].mxu0
      %v1732 = vadd.f32 %v698, %v1731
      %v1733 = vpop.f32.mrb[0].mxu0
      %v1734 = vpop.f32.mrb[0].mxu0
      %v1735 = vadd.f32 %v699, %v1734
      %v1736 = vpop.f32.mrb[0].mxu0
      %1737 = vmatprep.mubr.bf16.mxu0 0
      %1738 = vmatmul.mubr.bf16.gmra.mrb[0].mxu0 %v1638
      %v1739 = vpop.f32.mrb[0].mxu0
      %v1740 = vadd.f32 %v700, %v1739
      %v1741 = vpop.f32.mrb[0].mxu0
      %v1742 = vpop.f32.mrb[0].mxu0
      %v1743 = vadd.f32 %v701, %v1742
      %v1744 = vpop.f32.mrb[0].mxu0
      %1745 = vmatprep.mubr.bf16.mxu0 0
      %1746 = vmatmul.mubr.bf16.gmra.mrb[0].mxu0 %v1641
      %v1747 = vpop.f32.mrb[0].mxu0
      %v1748 = vadd.f32 %v702, %v1747
      %v1749 = vpop.f32.mrb[0].mxu0
      %v1750 = vpop.f32.mrb[0].mxu0
      %v1751 = vadd.f32 %v703, %v1750
      %v1752 = vpop.f32.mrb[0].mxu0
      %1753 = vmatprep.mubr.bf16.mxu0 0
      %1754 = vmatmul.mubr.bf16.gmra.mrb[0].mxu0 %v1644
      %v1755 = vpop.f32.mrb[0].mxu0
      %v1756 = vadd.f32 %v704, %v1755
      %v1757 = vpop.f32.mrb[0].mxu0
      %v1758 = vpop.f32.mrb[0].mxu0
      %v1759 = vadd.f32 %v705, %v1758
      %v1760 = vpop.f32.mrb[0].mxu0
      %1761 = vmatprep.mubr.bf16.mxu0 0
      %1762 = vmatmul.mubr.bf16.gmra.mrb[0].mxu0 %v1647
      %v1763 = vpop.f32.mrb[0].mxu0
      %v1764 = vadd.f32 %v706, %v1763
      %v1765 = vpop.f32.mrb[0].mxu0
      %v1766 = vpop.f32.mrb[0].mxu0
      %v1767 = vadd.f32 %v707, %v1766
      %v1768 = vpop.f32.mrb[0].mxu0
      %1769 = vdwg.mxu0
      %1770 = vmax.xlane.f32.xlu0 %v1708
      %v1771 = vpop.xlane.xlu0 %1770
      %1772 = vmax.xlane.f32.xlu0 %v1711
      %v1773 = vpop.xlane.xlu0 %1772
      %1774 = vmax.xlane.f32.xlu0 %v1716
      %v1775 = vpop.xlane.xlu0 %1774
      %1776 = vmax.xlane.f32.xlu0 %v1719
      %v1777 = vpop.xlane.xlu0 %1776
      %1778 = vmax.xlane.f32.xlu0 %v1724
      %v1779 = vpop.xlane.xlu0 %1778
      %1780 = vmax.xlane.f32.xlu0 %v1727
      %v1781 = vpop.xlane.xlu0 %1780
      %1782 = vmax.xlane.f32.xlu0 %v1732
      %v1783 = vpop.xlane.xlu0 %1782
      %1784 = vmax.xlane.f32.xlu0 %v1735
      %v1785 = vpop.xlane.xlu0 %1784
      %1786 = vmax.xlane.f32.xlu0 %v1740
      %v1787 = vpop.xlane.xlu0 %1786
      %1788 = vmax.xlane.f32.xlu0 %v1743
      %v1789 = vpop.xlane.xlu0 %1788
      %1790 = vmax.xlane.f32.xlu0 %v1748
      %v1791 = vpop.xlane.xlu0 %1790
      %1792 = vmax.xlane.f32.xlu0 %v1751
      %v1793 = vpop.xlane.xlu0 %1792
      %1794 = vmax.xlane.f32.xlu0 %v1756
      %v1795 = vpop.xlane.xlu0 %1794
      %1796 = vmax.xlane.f32.xlu0 %v1759
      %v1797 = vpop.xlane.xlu0 %1796
      %1798 = vmax.xlane.f32.xlu0 %v1764
      %v1799 = vpop.xlane.xlu0 %1798
      %1800 = vmax.xlane.f32.xlu0 %v1767
      %v1801 = vpop.xlane.xlu0 %1800
      %v1802 = vsub.f32 %v1708, %v1771
      %v1803 = vsub.f32 %v1711, %v1773
      %v1804 = vsub.f32 %v1716, %v1775
      %v1805 = vsub.f32 %v1719, %v1777
      %v1806 = vsub.f32 %v1724, %v1779
      %v1807 = vsub.f32 %v1727, %v1781
      %v1808 = vsub.f32 %v1732, %v1783
      %v1809 = vsub.f32 %v1735, %v1785
      %v1810 = vsub.f32 %v1740, %v1787
      %v1811 = vsub.f32 %v1743, %v1789
      %v1812 = vsub.f32 %v1748, %v1791
      %v1813 = vsub.f32 %v1751, %v1793
      %v1814 = vsub.f32 %v1756, %v1795
      %v1815 = vsub.f32 %v1759, %v1797
      %v1816 = vsub.f32 %v1764, %v1799
      %v1817 = vsub.f32 %v1767, %v1801
      %v1818 = vmul.f32 %v1802, 1.442695
      %v1819 = vpow.pop %v1818
      %v1820 = vmul.f32 %v1803, 1.442695
      %v1821 = vpow.pop %v1820
      %v1822 = vmul.f32 %v1804, 1.442695
      %v1823 = vpow.pop %v1822
      %v1824 = vmul.f32 %v1805, 1.442695
      %v1825 = vpow.pop %v1824
      %v1826 = vmul.f32 %v1806, 1.442695
      %v1827 = vpow.pop %v1826
      %v1828 = vmul.f32 %v1807, 1.442695
      %v1829 = vpow.pop %v1828
      %v1830 = vmul.f32 %v1808, 1.442695
      %v1831 = vpow.pop %v1830
      %v1832 = vmul.f32 %v1809, 1.442695
      %v1833 = vpow.pop %v1832
      %v1834 = vmul.f32 %v1810, 1.442695
      %v1835 = vpow.pop %v1834
      %v1836 = vmul.f32 %v1811, 1.442695
      %v1837 = vpow.pop %v1836
      %v1838 = vmul.f32 %v1812, 1.442695
      %v1839 = vpow.pop %v1838
      %v1840 = vmul.f32 %v1813, 1.442695
      %v1841 = vpow.pop %v1840
      %v1842 = vmul.f32 %v1814, 1.442695
      %v1843 = vpow.pop %v1842
      %v1844 = vmul.f32 %v1815, 1.442695
      %v1845 = vpow.pop %v1844
      %v1846 = vmul.f32 %v1816, 1.442695
      %v1847 = vpow.pop %v1846
      %v1848 = vmul.f32 %v1817, 1.442695
      %v1849 = vpow.pop %v1848
      %1850 = vadd.xlane.f32.xlu0 %v1819
      %v1851 = vpop.xlane.xlu0 %1850
      %1852 = vadd.xlane.f32.xlu0 %v1821
      %v1853 = vpop.xlane.xlu0 %1852
      %1854 = vadd.xlane.f32.xlu0 %v1823
      %v1855 = vpop.xlane.xlu0 %1854
      %1856 = vadd.xlane.f32.xlu0 %v1825
      %v1857 = vpop.xlane.xlu0 %1856
      %1858 = vadd.xlane.f32.xlu0 %v1827
      %v1859 = vpop.xlane.xlu0 %1858
      %1860 = vadd.xlane.f32.xlu0 %v1829
      %v1861 = vpop.xlane.xlu0 %1860
      %1862 = vadd.xlane.f32.xlu0 %v1831
      %v1863 = vpop.xlane.xlu0 %1862
      %1864 = vadd.xlane.f32.xlu0 %v1833
      %v1865 = vpop.xlane.xlu0 %1864
      %1866 = vadd.xlane.f32.xlu0 %v1835
      %v1867 = vpop.xlane.xlu0 %1866
      %1868 = vadd.xlane.f32.xlu0 %v1837
      %v1869 = vpop.xlane.xlu0 %1868
      %1870 = vadd.xlane.f32.xlu0 %v1839
      %v1871 = vpop.xlane.xlu0 %1870
      %1872 = vadd.xlane.f32.xlu0 %v1841
      %v1873 = vpop.xlane.xlu0 %1872
      %1874 = vadd.xlane.f32.xlu0 %v1843
      %v1875 = vpop.xlane.xlu0 %1874
      %1876 = vadd.xlane.f32.xlu0 %v1845
      %v1877 = vpop.xlane.xlu0 %1876
      %1878 = vadd.xlane.f32.xlu0 %v1847
      %v1879 = vpop.xlane.xlu0 %1878
      %1880 = vadd.xlane.f32.xlu0 %v1849
      %v1881 = vpop.xlane.xlu0 %1880
      %v1882 = vrcp.pop %v1851
      %v1883 = vrcp.pop %v1853
      %v1884 = vrcp.pop %v1855
      %v1885 = vrcp.pop %v1857
      %v1886 = vrcp.pop %v1859
      %v1887 = vrcp.pop %v1861
      %v1888 = vrcp.pop %v1863
      %v1889 = vrcp.pop %v1865
      %v1890 = vrcp.pop %v1867
      %v1891 = vrcp.pop %v1869
      %v1892 = vrcp.pop %v1871
      %v1893 = vrcp.pop %v1873
      %v1894 = vrcp.pop %v1875
      %v1895 = vrcp.pop %v1877
      %v1896 = vrcp.pop %v1879
      %v1897 = vrcp.pop %v1881
      %v1898 = vmul.f32 %v1819, %v1882
      %v1899 = vmul.f32 %v1821, %v1883
      %v1900 = vmul.f32 %v1823, %v1884
      %v1901 = vmul.f32 %v1825, %v1885
      %v1902 = vmul.f32 %v1827, %v1886
      %v1903 = vmul.f32 %v1829, %v1887
      %v1904 = vmul.f32 %v1831, %v1888
      %v1905 = vmul.f32 %v1833, %v1889
      %v1906 = vmul.f32 %v1835, %v1890
      %v1907 = vmul.f32 %v1837, %v1891
      %v1908 = vmul.f32 %v1839, %v1892
      %v1909 = vmul.f32 %v1841, %v1893
      %v1910 = vmul.f32 %v1843, %v1894
      %v1911 = vmul.f32 %v1845, %v1895
      %v1912 = vmul.f32 %v1847, %v1896
      %v1913 = vmul.f32 %v1849, %v1897
      %v1914 = vpack.c.bf16 %v1899, %v1898
      %v1915 = vpack.c.bf16 %v1901, %v1900
      %v1916 = vpack.c.bf16 %v1903, %v1902
      %v1917 = vpack.c.bf16 %v1905, %v1904
      %v1918 = vpack.c.bf16 %v1907, %v1906
      %v1919 = vpack.c.bf16 %v1909, %v1908
      %v1920 = vpack.c.bf16 %v1911, %v1910
      %v1921 = vpack.c.bf16 %v1913, %v1912
      %1922 = vrot.lane.b32.xlu0 %v684, 120
      %v1923 = vpop.permute.xlu0 %1922
      %1924 = vrot.lane.b32.xlu0 %v685, 120
      %v1925 = vpop.permute.xlu0 %1924
      %1926 = vrot.lane.b32.xlu0 %v686, 120
      %v1927 = vpop.permute.xlu0 %1926
      %1928 = vrot.lane.b32.xlu0 %v687, 120
      %v1929 = vpop.permute.xlu0 %1928
      %1930 = vrot.lane.b32.xlu0 %v688, 120
      %v1931 = vpop.permute.xlu0 %1930
      %1932 = vrot.lane.b32.xlu0 %v689, 120
      %v1933 = vpop.permute.xlu0 %1932
      %1934 = vrot.lane.b32.xlu0 %v690, 120
      %v1935 = vpop.permute.xlu0 %1934
      %1936 = vrot.lane.b32.xlu0 %v691, 120
      %v1937 = vpop.permute.xlu0 %1936
      %1946 = vmatprep.subr.bf16.mxu0 0
      %1947 = vmatpush1.bf16.msra.mxu0 %v1923
      %1948 = vmatprep.subr.bf16.mxu0 0
      %1949 = vmatpush1.bf16.msra.mxu0 %v1925
      %1950 = vmatprep.subr.bf16.mxu0 0
      %1951 = vmatpush1.bf16.msra.mxu0 %v1927
      %1952 = vmatprep.subr.bf16.mxu0 0
      %1953 = vmatpush1.bf16.msra.mxu0 %v1929
      %1954 = vmatprep.subr.bf16.mxu0 0
      %1955 = vmatpush1.bf16.msra.mxu0 %v1931
      %1956 = vmatprep.subr.bf16.mxu0 0
      %1957 = vmatpush1.bf16.msra.mxu0 %v1933
      %1958 = vmatprep.subr.bf16.mxu0 0
      %1959 = vmatpush1.bf16.msra.mxu0 %v1935
      %1960 = vmatprep.subr.bf16.mxu0 0
      %1961 = vmatpush1.bf16.msra.mxu0 %v1937
      %1962 = vmatprep.subr.bf16.mxu0 0
      %1963 = vmatpush1.bf16.msra.mxu0 0
      %1964 = vmatprep.subr.bf16.mxu0 0
      %1965 = vmatpush1.bf16.msra.mxu0 0
      %1966 = vmatprep.subr.bf16.mxu0 0
      %1967 = vmatpush1.bf16.msra.mxu0 0
      %1968 = vmatprep.subr.bf16.mxu0 0
      %1969 = vmatpush1.bf16.msra.mxu0 0
      %1970 = vmatprep.subr.bf16.mxu0 0
      %1971 = vmatpush1.bf16.msra.mxu0 0
      %1972 = vmatprep.subr.bf16.mxu0 0
      %1973 = vmatpush1.bf16.msra.mxu0 0
      %1974 = vmatprep.subr.bf16.mxu0 0
      %1975 = vmatpush1.bf16.msra.mxu0 0
      %1976 = vmatprep.subr.bf16.mxu0 0
      %1977 = vmatpush1.bf16.msra.mxu0 0
      %1978 = vmatprep.mubr.bf16.mxu0 0
      %1979 = vmatmul.mubr.bf16.gmra.mrb[0].mxu0 %v1914
      %v1980 = vpop.f32.mrb[0].mxu0
      %v1981 = vadd.f32 0.0, %v1980
      %v1982 = vpop.f32.mrb[0].mxu0
      %v1983 = vpop.f32.mrb[0].mxu0
      %v1984 = vadd.f32 0.0, %v1983
      %v1985 = vpop.f32.mrb[0].mxu0
      %1986 = vmatprep.mubr.bf16.mxu0 0
      %1987 = vmatmul.mubr.bf16.gmra.mrb[0].mxu0 %v1915
      %v1988 = vpop.f32.mrb[0].mxu0
      %v1989 = vadd.f32 0.0, %v1988
      %v1990 = vpop.f32.mrb[0].mxu0
      %v1991 = vpop.f32.mrb[0].mxu0
      %v1992 = vadd.f32 0.0, %v1991
      %v1993 = vpop.f32.mrb[0].mxu0
      %1994 = vmatprep.mubr.bf16.mxu0 0
      %1995 = vmatmul.mubr.bf16.gmra.mrb[0].mxu0 %v1916
      %v1996 = vpop.f32.mrb[0].mxu0
      %v1997 = vadd.f32 0.0, %v1996
      %v1998 = vpop.f32.mrb[0].mxu0
      %v1999 = vpop.f32.mrb[0].mxu0
      %v2000 = vadd.f32 0.0, %v1999
      %v2001 = vpop.f32.mrb[0].mxu0
      %2002 = vmatprep.mubr.bf16.mxu0 0
      %2003 = vmatmul.mubr.bf16.gmra.mrb[0].mxu0 %v1917
      %v2004 = vpop.f32.mrb[0].mxu0
      %v2005 = vadd.f32 0.0, %v2004
      %v2006 = vpop.f32.mrb[0].mxu0
      %v2007 = vpop.f32.mrb[0].mxu0
      %v2008 = vadd.f32 0.0, %v2007
      %v2009 = vpop.f32.mrb[0].mxu0
      %2010 = vmatprep.mubr.bf16.mxu0 0
      %2011 = vmatmul.mubr.bf16.gmra.mrb[0].mxu0 %v1918
      %v2012 = vpop.f32.mrb[0].mxu0
      %v2013 = vadd.f32 0.0, %v2012
      %v2014 = vpop.f32.mrb[0].mxu0
      %v2015 = vpop.f32.mrb[0].mxu0
      %v2016 = vadd.f32 0.0, %v2015
      %v2017 = vpop.f32.mrb[0].mxu0
      %2018 = vmatprep.mubr.bf16.mxu0 0
      %2019 = vmatmul.mubr.bf16.gmra.mrb[0].mxu0 %v1919
      %v2020 = vpop.f32.mrb[0].mxu0
      %v2021 = vadd.f32 0.0, %v2020
      %v2022 = vpop.f32.mrb[0].mxu0
      %v2023 = vpop.f32.mrb[0].mxu0
      %v2024 = vadd.f32 0.0, %v2023
      %v2025 = vpop.f32.mrb[0].mxu0
      %2026 = vmatprep.mubr.bf16.mxu0 0
      %2027 = vmatmul.mubr.bf16.gmra.mrb[0].mxu0 %v1920
      %v2028 = vpop.f32.mrb[0].mxu0
      %v2029 = vadd.f32 0.0, %v2028
      %v2030 = vpop.f32.mrb[0].mxu0
      %v2031 = vpop.f32.mrb[0].mxu0
      %v2032 = vadd.f32 0.0, %v2031
      %v2033 = vpop.f32.mrb[0].mxu0
      %2034 = vmatprep.mubr.bf16.mxu0 0
      %2035 = vmatmul.mubr.bf16.gmra.mrb[0].mxu0 %v1921
      %v2036 = vpop.f32.mrb[0].mxu0
      %v2037 = vadd.f32 0.0, %v2036
      %v2038 = vpop.f32.mrb[0].mxu0
      %v2039 = vpop.f32.mrb[0].mxu0
      %v2040 = vadd.f32 0.0, %v2039
      %v2041 = vpop.f32.mrb[0].mxu0
      %2042 = vdwg.mxu0
      %2043 = vrot.lane.b32.xlu0 %v668, 116
      %v2044 = vpop.permute.xlu0 %2043
      %2045 = vrot.lane.b32.xlu0 %v669, 116
      %v2046 = vpop.permute.xlu0 %2045
      %2047 = vrot.lane.b32.xlu0 %v670, 116
      %v2048 = vpop.permute.xlu0 %2047
      %2049 = vrot.lane.b32.xlu0 %v671, 116
      %v2050 = vpop.permute.xlu0 %2049
      %2051 = vrot.lane.b32.xlu0 %v672, 116
      %v2052 = vpop.permute.xlu0 %2051
      %2053 = vrot.lane.b32.xlu0 %v673, 116
      %v2054 = vpop.permute.xlu0 %2053
      %2055 = vrot.lane.b32.xlu0 %v674, 116
      %v2056 = vpop.permute.xlu0 %2055
      %2057 = vrot.lane.b32.xlu0 %v675, 116
      %v2058 = vpop.permute.xlu0 %2057
      %2059 = vrot.lane.b32.xlu0 %v676, 52
      %v2060 = vpop.permute.xlu0 %2059
      %2061 = vrot.lane.b32.xlu0 %v677, 52
      %v2062 = vpop.permute.xlu0 %2061
      %2063 = vrot.lane.b32.xlu0 %v678, 52
      %v2064 = vpop.permute.xlu0 %2063
      %2065 = vrot.lane.b32.xlu0 %v679, 52
      %v2066 = vpop.permute.xlu0 %2065
      %2067 = vrot.lane.b32.xlu0 %v680, 52
      %v2068 = vpop.permute.xlu0 %2067
      %2069 = vrot.lane.b32.xlu0 %v681, 52
      %v2070 = vpop.permute.xlu0 %2069
      %2071 = vrot.lane.b32.xlu0 %v682, 52
      %v2072 = vpop.permute.xlu0 %2071
      %2073 = vrot.lane.b32.xlu0 %v683, 52
      %v2074 = vpop.permute.xlu0 %2073
      %v2076 = vsel %vm732, %v2044, 0
      %v2079 = vsel %vm732, %v2046, 0
      %v2082 = vsel %vm732, %v2048, 0
      %v2085 = vsel %vm732, %v2050, 0
      %v2088 = vsel %vm732, %v2052, 0
      %v2091 = vsel %vm732, %v2054, 0
      %v2094 = vsel %vm732, %v2056, 0
      %v2097 = vsel %vm732, %v2058, 0
      %v2100 = vsel %vm732, %v2060, 0
      %v2103 = vsel %vm732, %v2062, 0
      %v2106 = vsel %vm732, %v2064, 0
      %v2109 = vsel %vm732, %v2066, 0
      %v2112 = vsel %vm732, %v2068, 0
      %v2115 = vsel %vm732, %v2070, 0
      %v2118 = vsel %vm732, %v2072, 0
      %v2121 = vsel %vm732, %v2074, 0
      %2123 = vmatprep.subr.bf16.mxu0 0
      %2124 = vmatpush1.bf16.xpose.msra.mxu0 %v2100
      %2125 = vmatprep.subr.bf16.mxu0 0
      %2126 = vmatpush1.bf16.xpose.msra.mxu0 %v2103
      %2127 = vmatprep.subr.bf16.mxu0 0
      %2128 = vmatpush1.bf16.xpose.msra.mxu0 %v2106
      %2129 = vmatprep.subr.bf16.mxu0 0
      %2130 = vmatpush1.bf16.xpose.msra.mxu0 %v2109
      %2131 = vmatprep.subr.bf16.mxu0 0
      %2132 = vmatpush1.bf16.xpose.msra.mxu0 %v2112
      %2133 = vmatprep.subr.bf16.mxu0 0
      %2134 = vmatpush1.bf16.xpose.msra.mxu0 %v2115
      %2135 = vmatprep.subr.bf16.mxu0 0
      %2136 = vmatpush1.bf16.xpose.msra.mxu0 %v2118
      %2137 = vmatprep.subr.bf16.mxu0 0
      %2138 = vmatpush1.bf16.xpose.msra.mxu0 %v2121
      %2139 = vmatprep.subr.bf16.mxu0 0
      %2140 = vmatpush1.bf16.xpose.msra.mxu0 0
      %2141 = vmatprep.subr.bf16.mxu0 0
      %2142 = vmatpush1.bf16.xpose.msra.mxu0 0
      %2143 = vmatprep.subr.bf16.mxu0 0
      %2144 = vmatpush1.bf16.xpose.msra.mxu0 0
      %2145 = vmatprep.subr.bf16.mxu0 0
      %2146 = vmatpush1.bf16.xpose.msra.mxu0 0
      %2147 = vmatprep.subr.bf16.mxu0 0
      %2148 = vmatpush1.bf16.xpose.msra.mxu0 0
      %2149 = vmatprep.subr.bf16.mxu0 0
      %2150 = vmatpush1.bf16.xpose.msra.mxu0 0
      %2151 = vmatprep.subr.bf16.mxu0 0
      %2152 = vmatpush1.bf16.xpose.msra.mxu0 0
      %2153 = vmatprep.subr.bf16.mxu0 0
      %2154 = vmatpush1.bf16.xpose.msra.mxu0 0
      %2155 = vmatprep.mubr.bf16.mxu0 0
      %2156 = vmatmul.mubr.bf16.gmra.mrb[0].mxu0 %v2076
      %v2157 = vpop.f32.mrb[0].mxu0
      %v2158 = vadd.f32 %v692, %v2157
      %v2159 = vpop.f32.mrb[0].mxu0
      %v2160 = vpop.f32.mrb[0].mxu0
      %v2161 = vadd.f32 %v693, %v2160
      %v2162 = vpop.f32.mrb[0].mxu0
      %2163 = vmatprep.mubr.bf16.mxu0 0
      %2164 = vmatmul.mubr.bf16.gmra.mrb[0].mxu0 %v2079
      %v2165 = vpop.f32.mrb[0].mxu0
      %v2166 = vadd.f32 %v694, %v2165
      %v2167 = vpop.f32.mrb[0].mxu0
      %v2168 = vpop.f32.mrb[0].mxu0
      %v2169 = vadd.f32 %v695, %v2168
      %v2170 = vpop.f32.mrb[0].mxu0
      %2171 = vmatprep.mubr.bf16.mxu0 0
      %2172 = vmatmul.mubr.bf16.gmra.mrb[0].mxu0 %v2082
      %v2173 = vpop.f32.mrb[0].mxu0
      %v2174 = vadd.f32 %v696, %v2173
      %v2175 = vpop.f32.mrb[0].mxu0
      %v2176 = vpop.f32.mrb[0].mxu0
      %v2177 = vadd.f32 %v697, %v2176
      %v2178 = vpop.f32.mrb[0].mxu0
      %2179 = vmatprep.mubr.bf16.mxu0 0
      %2180 = vmatmul.mubr.bf16.gmra.mrb[0].mxu0 %v2085
      %v2181 = vpop.f32.mrb[0].mxu0
      %v2182 = vadd.f32 %v698, %v2181
      %v2183 = vpop.f32.mrb[0].mxu0
      %v2184 = vpop.f32.mrb[0].mxu0
      %v2185 = vadd.f32 %v699, %v2184
      %v2186 = vpop.f32.mrb[0].mxu0
      %2187 = vmatprep.mubr.bf16.mxu0 0
      %2188 = vmatmul.mubr.bf16.gmra.mrb[0].mxu0 %v2088
      %v2189 = vpop.f32.mrb[0].mxu0
      %v2190 = vadd.f32 %v700, %v2189
      %v2191 = vpop.f32.mrb[0].mxu0
      %v2192 = vpop.f32.mrb[0].mxu0
      %v2193 = vadd.f32 %v701, %v2192
      %v2194 = vpop.f32.mrb[0].mxu0
      %2195 = vmatprep.mubr.bf16.mxu0 0
      %2196 = vmatmul.mubr.bf16.gmra.mrb[0].mxu0 %v2091
      %v2197 = vpop.f32.mrb[0].mxu0
      %v2198 = vadd.f32 %v702, %v2197
      %v2199 = vpop.f32.mrb[0].mxu0
      %v2200 = vpop.f32.mrb[0].mxu0
      %v2201 = vadd.f32 %v703, %v2200
      %v2202 = vpop.f32.mrb[0].mxu0
      %2203 = vmatprep.mubr.bf16.mxu0 0
      %2204 = vmatmul.mubr.bf16.gmra.mrb[0].mxu0 %v2094
      %v2205 = vpop.f32.mrb[0].mxu0
      %v2206 = vadd.f32 %v704, %v2205
      %v2207 = vpop.f32.mrb[0].mxu0
      %v2208 = vpop.f32.mrb[0].mxu0
      %v2209 = vadd.f32 %v705, %v2208
      %v2210 = vpop.f32.mrb[0].mxu0
      %2211 = vmatprep.mubr.bf16.mxu0 0
      %2212 = vmatmul.mubr.bf16.gmra.mrb[0].mxu0 %v2097
      %v2213 = vpop.f32.mrb[0].mxu0
      %v2214 = vadd.f32 %v706, %v2213
      %v2215 = vpop.f32.mrb[0].mxu0
      %v2216 = vpop.f32.mrb[0].mxu0
      %v2217 = vadd.f32 %v707, %v2216
      %v2218 = vpop.f32.mrb[0].mxu0
      %2219 = vdwg.mxu0
      %2220 = vmax.xlane.f32.xlu0 %v2158
      %v2221 = vpop.xlane.xlu0 %2220
      %2222 = vmax.xlane.f32.xlu0 %v2161
      %v2223 = vpop.xlane.xlu0 %2222
      %2224 = vmax.xlane.f32.xlu0 %v2166
      %v2225 = vpop.xlane.xlu0 %2224
      %2226 = vmax.xlane.f32.xlu0 %v2169
      %v2227 = vpop.xlane.xlu0 %2226
      %2228 = vmax.xlane.f32.xlu0 %v2174
      %v2229 = vpop.xlane.xlu0 %2228
      %2230 = vmax.xlane.f32.xlu0 %v2177
      %v2231 = vpop.xlane.xlu0 %2230
      %2232 = vmax.xlane.f32.xlu0 %v2182
      %v2233 = vpop.xlane.xlu0 %2232
      %2234 = vmax.xlane.f32.xlu0 %v2185
      %v2235 = vpop.xlane.xlu0 %2234
      %2236 = vmax.xlane.f32.xlu0 %v2190
      %v2237 = vpop.xlane.xlu0 %2236
      %2238 = vmax.xlane.f32.xlu0 %v2193
      %v2239 = vpop.xlane.xlu0 %2238
      %2240 = vmax.xlane.f32.xlu0 %v2198
      %v2241 = vpop.xlane.xlu0 %2240
      %2242 = vmax.xlane.f32.xlu0 %v2201
      %v2243 = vpop.xlane.xlu0 %2242
      %2244 = vmax.xlane.f32.xlu0 %v2206
      %v2245 = vpop.xlane.xlu0 %2244
      %2246 = vmax.xlane.f32.xlu0 %v2209
      %v2247 = vpop.xlane.xlu0 %2246
      %2248 = vmax.xlane.f32.xlu0 %v2214
      %v2249 = vpop.xlane.xlu0 %2248
      %2250 = vmax.xlane.f32.xlu0 %v2217
      %v2251 = vpop.xlane.xlu0 %2250
      %v2252 = vsub.f32 %v2158, %v2221
      %v2253 = vsub.f32 %v2161, %v2223
      %v2254 = vsub.f32 %v2166, %v2225
      %v2255 = vsub.f32 %v2169, %v2227
      %v2256 = vsub.f32 %v2174, %v2229
      %v2257 = vsub.f32 %v2177, %v2231
      %v2258 = vsub.f32 %v2182, %v2233
      %v2259 = vsub.f32 %v2185, %v2235
      %v2260 = vsub.f32 %v2190, %v2237
      %v2261 = vsub.f32 %v2193, %v2239
      %v2262 = vsub.f32 %v2198, %v2241
      %v2263 = vsub.f32 %v2201, %v2243
      %v2264 = vsub.f32 %v2206, %v2245
      %v2265 = vsub.f32 %v2209, %v2247
      %v2266 = vsub.f32 %v2214, %v2249
      %v2267 = vsub.f32 %v2217, %v2251
      %v2268 = vmul.f32 %v2252, 1.442695
      %v2269 = vpow.pop %v2268
      %v2270 = vmul.f32 %v2253, 1.442695
      %v2271 = vpow.pop %v2270
      %v2272 = vmul.f32 %v2254, 1.442695
      %v2273 = vpow.pop %v2272
      %v2274 = vmul.f32 %v2255, 1.442695
      %v2275 = vpow.pop %v2274
      %v2276 = vmul.f32 %v2256, 1.442695
      %v2277 = vpow.pop %v2276
      %v2278 = vmul.f32 %v2257, 1.442695
      %v2279 = vpow.pop %v2278
      %v2280 = vmul.f32 %v2258, 1.442695
      %v2281 = vpow.pop %v2280
      %v2282 = vmul.f32 %v2259, 1.442695
      %v2283 = vpow.pop %v2282
      %v2284 = vmul.f32 %v2260, 1.442695
      %v2285 = vpow.pop %v2284
      %v2286 = vmul.f32 %v2261, 1.442695
      %v2287 = vpow.pop %v2286
      %v2288 = vmul.f32 %v2262, 1.442695
      %v2289 = vpow.pop %v2288
      %v2290 = vmul.f32 %v2263, 1.442695
      %v2291 = vpow.pop %v2290
      %v2292 = vmul.f32 %v2264, 1.442695
      %v2293 = vpow.pop %v2292
      %v2294 = vmul.f32 %v2265, 1.442695
      %v2295 = vpow.pop %v2294
      %v2296 = vmul.f32 %v2266, 1.442695
      %v2297 = vpow.pop %v2296
      %v2298 = vmul.f32 %v2267, 1.442695
      %v2299 = vpow.pop %v2298
      %2300 = vadd.xlane.f32.xlu0 %v2269
      %v2301 = vpop.xlane.xlu0 %2300
      %2302 = vadd.xlane.f32.xlu0 %v2271
      %v2303 = vpop.xlane.xlu0 %2302
      %2304 = vadd.xlane.f32.xlu0 %v2273
      %v2305 = vpop.xlane.xlu0 %2304
      %2306 = vadd.xlane.f32.xlu0 %v2275
      %v2307 = vpop.xlane.xlu0 %2306
      %2308 = vadd.xlane.f32.xlu0 %v2277
      %v2309 = vpop.xlane.xlu0 %2308
      %2310 = vadd.xlane.f32.xlu0 %v2279
      %v2311 = vpop.xlane.xlu0 %2310
      %2312 = vadd.xlane.f32.xlu0 %v2281
      %v2313 = vpop.xlane.xlu0 %2312
      %2314 = vadd.xlane.f32.xlu0 %v2283
      %v2315 = vpop.xlane.xlu0 %2314
      %2316 = vadd.xlane.f32.xlu0 %v2285
      %v2317 = vpop.xlane.xlu0 %2316
      %2318 = vadd.xlane.f32.xlu0 %v2287
      %v2319 = vpop.xlane.xlu0 %2318
      %2320 = vadd.xlane.f32.xlu0 %v2289
      %v2321 = vpop.xlane.xlu0 %2320
      %2322 = vadd.xlane.f32.xlu0 %v2291
      %v2323 = vpop.xlane.xlu0 %2322
      %2324 = vadd.xlane.f32.xlu0 %v2293
      %v2325 = vpop.xlane.xlu0 %2324
      %2326 = vadd.xlane.f32.xlu0 %v2295
      %v2327 = vpop.xlane.xlu0 %2326
      %2328 = vadd.xlane.f32.xlu0 %v2297
      %v2329 = vpop.xlane.xlu0 %2328
      %2330 = vadd.xlane.f32.xlu0 %v2299
      %v2331 = vpop.xlane.xlu0 %2330
      %v2332 = vrcp.pop %v2301
      %v2333 = vrcp.pop %v2303
      %v2334 = vrcp.pop %v2305
      %v2335 = vrcp.pop %v2307
      %v2336 = vrcp.pop %v2309
      %v2337 = vrcp.pop %v2311
      %v2338 = vrcp.pop %v2313
      %v2339 = vrcp.pop %v2315
      %v2340 = vrcp.pop %v2317
      %v2341 = vrcp.pop %v2319
      %v2342 = vrcp.pop %v2321
      %v2343 = vrcp.pop %v2323
      %v2344 = vrcp.pop %v2325
      %v2345 = vrcp.pop %v2327
      %v2346 = vrcp.pop %v2329
      %v2347 = vrcp.pop %v2331
      %v2348 = vmul.f32 %v2269, %v2332
      %v2349 = vmul.f32 %v2271, %v2333
      %v2350 = vmul.f32 %v2273, %v2334
      %v2351 = vmul.f32 %v2275, %v2335
      %v2352 = vmul.f32 %v2277, %v2336
      %v2353 = vmul.f32 %v2279, %v2337
      %v2354 = vmul.f32 %v2281, %v2338
      %v2355 = vmul.f32 %v2283, %v2339
      %v2356 = vmul.f32 %v2285, %v2340
      %v2357 = vmul.f32 %v2287, %v2341
      %v2358 = vmul.f32 %v2289, %v2342
      %v2359 = vmul.f32 %v2291, %v2343
      %v2360 = vmul.f32 %v2293, %v2344
      %v2361 = vmul.f32 %v2295, %v2345
      %v2362 = vmul.f32 %v2297, %v2346
      %v2363 = vmul.f32 %v2299, %v2347
      %v2364 = vpack.c.bf16 %v2349, %v2348
      %v2365 = vpack.c.bf16 %v2351, %v2350
      %v2366 = vpack.c.bf16 %v2353, %v2352
      %v2367 = vpack.c.bf16 %v2355, %v2354
      %v2368 = vpack.c.bf16 %v2357, %v2356
      %v2369 = vpack.c.bf16 %v2359, %v2358
      %v2370 = vpack.c.bf16 %v2361, %v2360
      %v2371 = vpack.c.bf16 %v2363, %v2362
      %2372 = vrot.lane.b32.xlu0 %v684, 116
      %v2373 = vpop.permute.xlu0 %2372
      %2374 = vrot.lane.b32.xlu0 %v685, 116
      %v2375 = vpop.permute.xlu0 %2374
      %2376 = vrot.lane.b32.xlu0 %v686, 116
      %v2377 = vpop.permute.xlu0 %2376
      %2378 = vrot.lane.b32.xlu0 %v687, 116
      %v2379 = vpop.permute.xlu0 %2378
      %2380 = vrot.lane.b32.xlu0 %v688, 116
      %v2381 = vpop.permute.xlu0 %2380
      %2382 = vrot.lane.b32.xlu0 %v689, 116
      %v2383 = vpop.permute.xlu0 %2382
      %2384 = vrot.lane.b32.xlu0 %v690, 116
      %v2385 = vpop.permute.xlu0 %2384
      %2386 = vrot.lane.b32.xlu0 %v691, 116
      %v2387 = vpop.permute.xlu0 %2386
      %2396 = vmatprep.subr.bf16.mxu0 0
      %2397 = vmatpush1.bf16.msra.mxu0 %v2373
      %2398 = vmatprep.subr.bf16.mxu0 0
      %2399 = vmatpush1.bf16.msra.mxu0 %v2375
      %2400 = vmatprep.subr.bf16.mxu0 0
      %2401 = vmatpush1.bf16.msra.mxu0 %v2377
      %2402 = vmatprep.subr.bf16.mxu0 0
      %2403 = vmatpush1.bf16.msra.mxu0 %v2379
      %2404 = vmatprep.subr.bf16.mxu0 0
      %2405 = vmatpush1.bf16.msra.mxu0 %v2381
      %2406 = vmatprep.subr.bf16.mxu0 0
      %2407 = vmatpush1.bf16.msra.mxu0 %v2383
      %2408 = vmatprep.subr.bf16.mxu0 0
      %2409 = vmatpush1.bf16.msra.mxu0 %v2385
      %2410 = vmatprep.subr.bf16.mxu0 0
      %2411 = vmatpush1.bf16.msra.mxu0 %v2387
      %2412 = vmatprep.subr.bf16.mxu0 0
      %2413 = vmatpush1.bf16.msra.mxu0 0
      %2414 = vmatprep.subr.bf16.mxu0 0
      %2415 = vmatpush1.bf16.msra.mxu0 0
      %2416 = vmatprep.subr.bf16.mxu0 0
      %2417 = vmatpush1.bf16.msra.mxu0 0
      %2418 = vmatprep.subr.bf16.mxu0 0
      %2419 = vmatpush1.bf16.msra.mxu0 0
      %2420 = vmatprep.subr.bf16.mxu0 0
      %2421 = vmatpush1.bf16.msra.mxu0 0
      %2422 = vmatprep.subr.bf16.mxu0 0
      %2423 = vmatpush1.bf16.msra.mxu0 0
      %2424 = vmatprep.subr.bf16.mxu0 0
      %2425 = vmatpush1.bf16.msra.mxu0 0
      %2426 = vmatprep.subr.bf16.mxu0 0
      %2427 = vmatpush1.bf16.msra.mxu0 0
      %2428 = vmatprep.mubr.bf16.mxu0 0
      %2429 = vmatmul.mubr.bf16.gmra.mrb[0].mxu0 %v2364
      %v2430 = vpop.f32.mrb[0].mxu0
      %v2431 = vadd.f32 0.0, %v2430
      %v2432 = vpop.f32.mrb[0].mxu0
      %v2433 = vpop.f32.mrb[0].mxu0
      %v2434 = vadd.f32 0.0, %v2433
      %v2435 = vpop.f32.mrb[0].mxu0
      %2436 = vmatprep.mubr.bf16.mxu0 0
      %2437 = vmatmul.mubr.bf16.gmra.mrb[0].mxu0 %v2365
      %v2438 = vpop.f32.mrb[0].mxu0
      %v2439 = vadd.f32 0.0, %v2438
      %v2440 = vpop.f32.mrb[0].mxu0
      %v2441 = vpop.f32.mrb[0].mxu0
      %v2442 = vadd.f32 0.0, %v2441
      %v2443 = vpop.f32.mrb[0].mxu0
      %2444 = vmatprep.mubr.bf16.mxu0 0
      %2445 = vmatmul.mubr.bf16.gmra.mrb[0].mxu0 %v2366
      %v2446 = vpop.f32.mrb[0].mxu0
      %v2447 = vadd.f32 0.0, %v2446
      %v2448 = vpop.f32.mrb[0].mxu0
      %v2449 = vpop.f32.mrb[0].mxu0
      %v2450 = vadd.f32 0.0, %v2449
      %v2451 = vpop.f32.mrb[0].mxu0
      %2452 = vmatprep.mubr.bf16.mxu0 0
      %2453 = vmatmul.mubr.bf16.gmra.mrb[0].mxu0 %v2367
      %v2454 = vpop.f32.mrb[0].mxu0
      %v2455 = vadd.f32 0.0, %v2454
      %v2456 = vpop.f32.mrb[0].mxu0
      %v2457 = vpop.f32.mrb[0].mxu0
      %v2458 = vadd.f32 0.0, %v2457
      %v2459 = vpop.f32.mrb[0].mxu0
      %2460 = vmatprep.mubr.bf16.mxu0 0
      %2461 = vmatmul.mubr.bf16.gmra.mrb[0].mxu0 %v2368
      %v2462 = vpop.f32.mrb[0].mxu0
      %v2463 = vadd.f32 0.0, %v2462
      %v2464 = vpop.f32.mrb[0].mxu0
      %v2465 = vpop.f32.mrb[0].mxu0
      %v2466 = vadd.f32 0.0, %v2465
      %v2467 = vpop.f32.mrb[0].mxu0
      %2468 = vmatprep.mubr.bf16.mxu0 0
      %2469 = vmatmul.mubr.bf16.gmra.mrb[0].mxu0 %v2369
      %v2470 = vpop.f32.mrb[0].mxu0
      %v2471 = vadd.f32 0.0, %v2470
      %v2472 = vpop.f32.mrb[0].mxu0
      %v2473 = vpop.f32.mrb[0].mxu0
      %v2474 = vadd.f32 0.0, %v2473
      %v2475 = vpop.f32.mrb[0].mxu0
      %2476 = vmatprep.mubr.bf16.mxu0 0
      %2477 = vmatmul.mubr.bf16.gmra.mrb[0].mxu0 %v2370
      %v2478 = vpop.f32.mrb[0].mxu0
      %v2479 = vadd.f32 0.0, %v2478
      %v2480 = vpop.f32.mrb[0].mxu0
      %v2481 = vpop.f32.mrb[0].mxu0
      %v2482 = vadd.f32 0.0, %v2481
      %v2483 = vpop.f32.mrb[0].mxu0
      %2484 = vmatprep.mubr.bf16.mxu0 0
      %2485 = vmatmul.mubr.bf16.gmra.mrb[0].mxu0 %v2371
      %v2486 = vpop.f32.mrb[0].mxu0
      %v2487 = vadd.f32 0.0, %v2486
      %v2488 = vpop.f32.mrb[0].mxu0
      %v2489 = vpop.f32.mrb[0].mxu0
      %v2490 = vadd.f32 0.0, %v2489
      %v2491 = vpop.f32.mrb[0].mxu0
      %2492 = vdwg.mxu0
      %2493 = vrot.lane.b32.xlu0 %v668, 112
      %v2494 = vpop.permute.xlu0 %2493
      %2495 = vrot.lane.b32.xlu0 %v669, 112
      %v2496 = vpop.permute.xlu0 %2495
      %2497 = vrot.lane.b32.xlu0 %v670, 112
      %v2498 = vpop.permute.xlu0 %2497
      %2499 = vrot.lane.b32.xlu0 %v671, 112
      %v2500 = vpop.permute.xlu0 %2499
      %2501 = vrot.lane.b32.xlu0 %v672, 112
      %v2502 = vpop.permute.xlu0 %2501
      %2503 = vrot.lane.b32.xlu0 %v673, 112
      %v2504 = vpop.permute.xlu0 %2503
      %2505 = vrot.lane.b32.xlu0 %v674, 112
      %v2506 = vpop.permute.xlu0 %2505
      %2507 = vrot.lane.b32.xlu0 %v675, 112
      %v2508 = vpop.permute.xlu0 %2507
      %2509 = vrot.lane.b32.xlu0 %v676, 48
      %v2510 = vpop.permute.xlu0 %2509
      %2511 = vrot.lane.b32.xlu0 %v677, 48
      %v2512 = vpop.permute.xlu0 %2511
      %2513 = vrot.lane.b32.xlu0 %v678, 48
      %v2514 = vpop.permute.xlu0 %2513
      %2515 = vrot.lane.b32.xlu0 %v679, 48
      %v2516 = vpop.permute.xlu0 %2515
      %2517 = vrot.lane.b32.xlu0 %v680, 48
      %v2518 = vpop.permute.xlu0 %2517
      %2519 = vrot.lane.b32.xlu0 %v681, 48
      %v2520 = vpop.permute.xlu0 %2519
      %2521 = vrot.lane.b32.xlu0 %v682, 48
      %v2522 = vpop.permute.xlu0 %2521
      %2523 = vrot.lane.b32.xlu0 %v683, 48
      %v2524 = vpop.permute.xlu0 %2523
      %v2526 = vsel %vm732, %v2494, 0
      %v2529 = vsel %vm732, %v2496, 0
      %v2532 = vsel %vm732, %v2498, 0
      %v2535 = vsel %vm732, %v2500, 0
      %v2538 = vsel %vm732, %v2502, 0
      %v2541 = vsel %vm732, %v2504, 0
      %v2544 = vsel %vm732, %v2506, 0
      %v2547 = vsel %vm732, %v2508, 0
      %v2550 = vsel %vm732, %v2510, 0
      %v2553 = vsel %vm732, %v2512, 0
      %v2556 = vsel %vm732, %v2514, 0
      %v2559 = vsel %vm732, %v2516, 0
      %v2562 = vsel %vm732, %v2518, 0
      %v2565 = vsel %vm732, %v2520, 0
      %v2568 = vsel %vm732, %v2522, 0
      %v2571 = vsel %vm732, %v2524, 0
      %2573 = vmatprep.subr.bf16.mxu0 0
      %2574 = vmatpush1.bf16.xpose.msra.mxu0 %v2550
      %2575 = vmatprep.subr.bf16.mxu0 0
      %2576 = vmatpush1.bf16.xpose.msra.mxu0 %v2553
      %2577 = vmatprep.subr.bf16.mxu0 0
      %2578 = vmatpush1.bf16.xpose.msra.mxu0 %v2556
      %2579 = vmatprep.subr.bf16.mxu0 0
      %2580 = vmatpush1.bf16.xpose.msra.mxu0 %v2559
      %2581 = vmatprep.subr.bf16.mxu0 0
      %2582 = vmatpush1.bf16.xpose.msra.mxu0 %v2562
      %2583 = vmatprep.subr.bf16.mxu0 0
      %2584 = vmatpush1.bf16.xpose.msra.mxu0 %v2565
      %2585 = vmatprep.subr.bf16.mxu0 0
      %2586 = vmatpush1.bf16.xpose.msra.mxu0 %v2568
      %2587 = vmatprep.subr.bf16.mxu0 0
      %2588 = vmatpush1.bf16.xpose.msra.mxu0 %v2571
      %2589 = vmatprep.subr.bf16.mxu0 0
      %2590 = vmatpush1.bf16.xpose.msra.mxu0 0
      %2591 = vmatprep.subr.bf16.mxu0 0
      %2592 = vmatpush1.bf16.xpose.msra.mxu0 0
      %2593 = vmatprep.subr.bf16.mxu0 0
      %2594 = vmatpush1.bf16.xpose.msra.mxu0 0
      %2595 = vmatprep.subr.bf16.mxu0 0
      %2596 = vmatpush1.bf16.xpose.msra.mxu0 0
      %2597 = vmatprep.subr.bf16.mxu0 0
      %2598 = vmatpush1.bf16.xpose.msra.mxu0 0
      %2599 = vmatprep.subr.bf16.mxu0 0
      %2600 = vmatpush1.bf16.xpose.msra.mxu0 0
      %2601 = vmatprep.subr.bf16.mxu0 0
      %2602 = vmatpush1.bf16.xpose.msra.mxu0 0
      %2603 = vmatprep.subr.bf16.mxu0 0
      %2604 = vmatpush1.bf16.xpose.msra.mxu0 0
      %2605 = vmatprep.mubr.bf16.mxu0 0
      %2606 = vmatmul.mubr.bf16.gmra.mrb[0].mxu0 %v2526
      %v2607 = vpop.f32.mrb[0].mxu0
      %v2608 = vadd.f32 %v692, %v2607
      %v2609 = vpop.f32.mrb[0].mxu0
      %v2610 = vpop.f32.mrb[0].mxu0
      %v2611 = vadd.f32 %v693, %v2610
      %v2612 = vpop.f32.mrb[0].mxu0
      %2613 = vmatprep.mubr.bf16.mxu0 0
      %2614 = vmatmul.mubr.bf16.gmra.mrb[0].mxu0 %v2529
      %v2615 = vpop.f32.mrb[0].mxu0
      %v2616 = vadd.f32 %v694, %v2615
      %v2617 = vpop.f32.mrb[0].mxu0
      %v2618 = vpop.f32.mrb[0].mxu0
      %v2619 = vadd.f32 %v695, %v2618
      %v2620 = vpop.f32.mrb[0].mxu0
      %2621 = vmatprep.mubr.bf16.mxu0 0
      %2622 = vmatmul.mubr.bf16.gmra.mrb[0].mxu0 %v2532
      %v2623 = vpop.f32.mrb[0].mxu0
      %v2624 = vadd.f32 %v696, %v2623
      %v2625 = vpop.f32.mrb[0].mxu0
      %v2626 = vpop.f32.mrb[0].mxu0
      %v2627 = vadd.f32 %v697, %v2626
      %v2628 = vpop.f32.mrb[0].mxu0
      %2629 = vmatprep.mubr.bf16.mxu0 0
      %2630 = vmatmul.mubr.bf16.gmra.mrb[0].mxu0 %v2535
      %v2631 = vpop.f32.mrb[0].mxu0
      %v2632 = vadd.f32 %v698, %v2631
      %v2633 = vpop.f32.mrb[0].mxu0
      %v2634 = vpop.f32.mrb[0].mxu0
      %v2635 = vadd.f32 %v699, %v2634
      %v2636 = vpop.f32.mrb[0].mxu0
      %2637 = vmatprep.mubr.bf16.mxu0 0
      %2638 = vmatmul.mubr.bf16.gmra.mrb[0].mxu0 %v2538
      %v2639 = vpop.f32.mrb[0].mxu0
      %v2640 = vadd.f32 %v700, %v2639
      %v2641 = vpop.f32.mrb[0].mxu0
      %v2642 = vpop.f32.mrb[0].mxu0
      %v2643 = vadd.f32 %v701, %v2642
      %v2644 = vpop.f32.mrb[0].mxu0
      %2645 = vmatprep.mubr.bf16.mxu0 0
      %2646 = vmatmul.mubr.bf16.gmra.mrb[0].mxu0 %v2541
      %v2647 = vpop.f32.mrb[0].mxu0
      %v2648 = vadd.f32 %v702, %v2647
      %v2649 = vpop.f32.mrb[0].mxu0
      %v2650 = vpop.f32.mrb[0].mxu0
      %v2651 = vadd.f32 %v703, %v2650
      %v2652 = vpop.f32.mrb[0].mxu0
      %2653 = vmatprep.mubr.bf16.mxu0 0
      %2654 = vmatmul.mubr.bf16.gmra.mrb[0].mxu0 %v2544
      %v2655 = vpop.f32.mrb[0].mxu0
      %v2656 = vadd.f32 %v704, %v2655
      %v2657 = vpop.f32.mrb[0].mxu0
      %v2658 = vpop.f32.mrb[0].mxu0
      %v2659 = vadd.f32 %v705, %v2658
      %v2660 = vpop.f32.mrb[0].mxu0
      %2661 = vmatprep.mubr.bf16.mxu0 0
      %2662 = vmatmul.mubr.bf16.gmra.mrb[0].mxu0 %v2547
      %v2663 = vpop.f32.mrb[0].mxu0
      %v2664 = vadd.f32 %v706, %v2663
      %v2665 = vpop.f32.mrb[0].mxu0
      %v2666 = vpop.f32.mrb[0].mxu0
      %v2667 = vadd.f32 %v707, %v2666
      %v2668 = vpop.f32.mrb[0].mxu0
      %2669 = vdwg.mxu0
      %2670 = vmax.xlane.f32.xlu0 %v2608
      %v2671 = vpop.xlane.xlu0 %2670
      %2672 = vmax.xlane.f32.xlu0 %v2611
      %v2673 = vpop.xlane.xlu0 %2672
      %2674 = vmax.xlane.f32.xlu0 %v2616
      %v2675 = vpop.xlane.xlu0 %2674
      %2676 = vmax.xlane.f32.xlu0 %v2619
      %v2677 = vpop.xlane.xlu0 %2676
      %2678 = vmax.xlane.f32.xlu0 %v2624
      %v2679 = vpop.xlane.xlu0 %2678
      %2680 = vmax.xlane.f32.xlu0 %v2627
      %v2681 = vpop.xlane.xlu0 %2680
      %2682 = vmax.xlane.f32.xlu0 %v2632
      %v2683 = vpop.xlane.xlu0 %2682
      %2684 = vmax.xlane.f32.xlu0 %v2635
      %v2685 = vpop.xlane.xlu0 %2684
      %2686 = vmax.xlane.f32.xlu0 %v2640
      %v2687 = vpop.xlane.xlu0 %2686
      %2688 = vmax.xlane.f32.xlu0 %v2643
      %v2689 = vpop.xlane.xlu0 %2688
      %2690 = vmax.xlane.f32.xlu0 %v2648
      %v2691 = vpop.xlane.xlu0 %2690
      %2692 = vmax.xlane.f32.xlu0 %v2651
      %v2693 = vpop.xlane.xlu0 %2692
      %2694 = vmax.xlane.f32.xlu0 %v2656
      %v2695 = vpop.xlane.xlu0 %2694
      %2696 = vmax.xlane.f32.xlu0 %v2659
      %v2697 = vpop.xlane.xlu0 %2696
      %2698 = vmax.xlane.f32.xlu0 %v2664
      %v2699 = vpop.xlane.xlu0 %2698
      %2700 = vmax.xlane.f32.xlu0 %v2667
      %v2701 = vpop.xlane.xlu0 %2700
      %v2702 = vsub.f32 %v2608, %v2671
      %v2703 = vsub.f32 %v2611, %v2673
      %v2704 = vsub.f32 %v2616, %v2675
      %v2705 = vsub.f32 %v2619, %v2677
      %v2706 = vsub.f32 %v2624, %v2679
      %v2707 = vsub.f32 %v2627, %v2681
      %v2708 = vsub.f32 %v2632, %v2683
      %v2709 = vsub.f32 %v2635, %v2685
      %v2710 = vsub.f32 %v2640, %v2687
      %v2711 = vsub.f32 %v2643, %v2689
      %v2712 = vsub.f32 %v2648, %v2691
      %v2713 = vsub.f32 %v2651, %v2693
      %v2714 = vsub.f32 %v2656, %v2695
      %v2715 = vsub.f32 %v2659, %v2697
      %v2716 = vsub.f32 %v2664, %v2699
      %v2717 = vsub.f32 %v2667, %v2701
      %v2718 = vmul.f32 %v2702, 1.442695
      %v2719 = vpow.pop %v2718
      %v2720 = vmul.f32 %v2703, 1.442695
      %v2721 = vpow.pop %v2720
      %v2722 = vmul.f32 %v2704, 1.442695
      %v2723 = vpow.pop %v2722
      %v2724 = vmul.f32 %v2705, 1.442695
      %v2725 = vpow.pop %v2724
      %v2726 = vmul.f32 %v2706, 1.442695
      %v2727 = vpow.pop %v2726
      %v2728 = vmul.f32 %v2707, 1.442695
      %v2729 = vpow.pop %v2728
      %v2730 = vmul.f32 %v2708, 1.442695
      %v2731 = vpow.pop %v2730
      %v2732 = vmul.f32 %v2709, 1.442695
      %v2733 = vpow.pop %v2732
      %v2734 = vmul.f32 %v2710, 1.442695
      %v2735 = vpow.pop %v2734
      %v2736 = vmul.f32 %v2711, 1.442695
      %v2737 = vpow.pop %v2736
      %v2738 = vmul.f32 %v2712, 1.442695
      %v2739 = vpow.pop %v2738
      %v2740 = vmul.f32 %v2713, 1.442695
      %v2741 = vpow.pop %v2740
      %v2742 = vmul.f32 %v2714, 1.442695
      %v2743 = vpow.pop %v2742
      %v2744 = vmul.f32 %v2715, 1.442695
      %v2745 = vpow.pop %v2744
      %v2746 = vmul.f32 %v2716, 1.442695
      %v2747 = vpow.pop %v2746
      %v2748 = vmul.f32 %v2717, 1.442695
      %v2749 = vpow.pop %v2748
      %2750 = vadd.xlane.f32.xlu0 %v2719
      %v2751 = vpop.xlane.xlu0 %2750
      %2752 = vadd.xlane.f32.xlu0 %v2721
      %v2753 = vpop.xlane.xlu0 %2752
      %2754 = vadd.xlane.f32.xlu0 %v2723
      %v2755 = vpop.xlane.xlu0 %2754
      %2756 = vadd.xlane.f32.xlu0 %v2725
      %v2757 = vpop.xlane.xlu0 %2756
      %2758 = vadd.xlane.f32.xlu0 %v2727
      %v2759 = vpop.xlane.xlu0 %2758
      %2760 = vadd.xlane.f32.xlu0 %v2729
      %v2761 = vpop.xlane.xlu0 %2760
      %2762 = vadd.xlane.f32.xlu0 %v2731
      %v2763 = vpop.xlane.xlu0 %2762
      %2764 = vadd.xlane.f32.xlu0 %v2733
      %v2765 = vpop.xlane.xlu0 %2764
      %2766 = vadd.xlane.f32.xlu0 %v2735
      %v2767 = vpop.xlane.xlu0 %2766
      %2768 = vadd.xlane.f32.xlu0 %v2737
      %v2769 = vpop.xlane.xlu0 %2768
      %2770 = vadd.xlane.f32.xlu0 %v2739
      %v2771 = vpop.xlane.xlu0 %2770
      %2772 = vadd.xlane.f32.xlu0 %v2741
      %v2773 = vpop.xlane.xlu0 %2772
      %2774 = vadd.xlane.f32.xlu0 %v2743
      %v2775 = vpop.xlane.xlu0 %2774
      %2776 = vadd.xlane.f32.xlu0 %v2745
      %v2777 = vpop.xlane.xlu0 %2776
      %2778 = vadd.xlane.f32.xlu0 %v2747
      %v2779 = vpop.xlane.xlu0 %2778
      %2780 = vadd.xlane.f32.xlu0 %v2749
      %v2781 = vpop.xlane.xlu0 %2780
      %v2782 = vrcp.pop %v2751
      %v2783 = vrcp.pop %v2753
      %v2784 = vrcp.pop %v2755
      %v2785 = vrcp.pop %v2757
      %v2786 = vrcp.pop %v2759
      %v2787 = vrcp.pop %v2761
      %v2788 = vrcp.pop %v2763
      %v2789 = vrcp.pop %v2765
      %v2790 = vrcp.pop %v2767
      %v2791 = vrcp.pop %v2769
      %v2792 = vrcp.pop %v2771
      %v2793 = vrcp.pop %v2773
      %v2794 = vrcp.pop %v2775
      %v2795 = vrcp.pop %v2777
      %v2796 = vrcp.pop %v2779
      %v2797 = vrcp.pop %v2781
      %v2798 = vmul.f32 %v2719, %v2782
      %v2799 = vmul.f32 %v2721, %v2783
      %v2800 = vmul.f32 %v2723, %v2784
      %v2801 = vmul.f32 %v2725, %v2785
      %v2802 = vmul.f32 %v2727, %v2786
      %v2803 = vmul.f32 %v2729, %v2787
      %v2804 = vmul.f32 %v2731, %v2788
      %v2805 = vmul.f32 %v2733, %v2789
      %v2806 = vmul.f32 %v2735, %v2790
      %v2807 = vmul.f32 %v2737, %v2791
      %v2808 = vmul.f32 %v2739, %v2792
      %v2809 = vmul.f32 %v2741, %v2793
      %v2810 = vmul.f32 %v2743, %v2794
      %v2811 = vmul.f32 %v2745, %v2795
      %v2812 = vmul.f32 %v2747, %v2796
      %v2813 = vmul.f32 %v2749, %v2797
      %v2814 = vpack.c.bf16 %v2799, %v2798
      %v2815 = vpack.c.bf16 %v2801, %v2800
      %v2816 = vpack.c.bf16 %v2803, %v2802
      %v2817 = vpack.c.bf16 %v2805, %v2804
      %v2818 = vpack.c.bf16 %v2807, %v2806
      %v2819 = vpack.c.bf16 %v2809, %v2808
      %v2820 = vpack.c.bf16 %v2811, %v2810
      %v2821 = vpack.c.bf16 %v2813, %v2812
      %2822 = vrot.lane.b32.xlu0 %v684, 112
      %v2823 = vpop.permute.xlu0 %2822
      %2824 = vrot.lane.b32.xlu0 %v685, 112
      %v2825 = vpop.permute.xlu0 %2824
      %2826 = vrot.lane.b32.xlu0 %v686, 112
      %v2827 = vpop.permute.xlu0 %2826
      %2828 = vrot.lane.b32.xlu0 %v687, 112
      %v2829 = vpop.permute.xlu0 %2828
      %2830 = vrot.lane.b32.xlu0 %v688, 112
      %v2831 = vpop.permute.xlu0 %2830
      %2832 = vrot.lane.b32.xlu0 %v689, 112
      %v2833 = vpop.permute.xlu0 %2832
      %2834 = vrot.lane.b32.xlu0 %v690, 112
      %v2835 = vpop.permute.xlu0 %2834
      %2836 = vrot.lane.b32.xlu0 %v691, 112
      %v2837 = vpop.permute.xlu0 %2836
      %2846 = vmatprep.subr.bf16.mxu0 0
      %2847 = vmatpush1.bf16.msra.mxu0 %v2823
      %2848 = vmatprep.subr.bf16.mxu0 0
      %2849 = vmatpush1.bf16.msra.mxu0 %v2825
      %2850 = vmatprep.subr.bf16.mxu0 0
      %2851 = vmatpush1.bf16.msra.mxu0 %v2827
      %2852 = vmatprep.subr.bf16.mxu0 0
      %2853 = vmatpush1.bf16.msra.mxu0 %v2829
      %2854 = vmatprep.subr.bf16.mxu0 0
      %2855 = vmatpush1.bf16.msra.mxu0 %v2831
      %2856 = vmatprep.subr.bf16.mxu0 0
      %2857 = vmatpush1.bf16.msra.mxu0 %v2833
      %2858 = vmatprep.subr.bf16.mxu0 0
      %2859 = vmatpush1.bf16.msra.mxu0 %v2835
      %2860 = vmatprep.subr.bf16.mxu0 0
      %2861 = vmatpush1.bf16.msra.mxu0 %v2837
      %2862 = vmatprep.subr.bf16.mxu0 0
      %2863 = vmatpush1.bf16.msra.mxu0 0
      %2864 = vmatprep.subr.bf16.mxu0 0
      %2865 = vmatpush1.bf16.msra.mxu0 0
      %2866 = vmatprep.subr.bf16.mxu0 0
      %2867 = vmatpush1.bf16.msra.mxu0 0
      %2868 = vmatprep.subr.bf16.mxu0 0
      %2869 = vmatpush1.bf16.msra.mxu0 0
      %2870 = vmatprep.subr.bf16.mxu0 0
      %2871 = vmatpush1.bf16.msra.mxu0 0
      %2872 = vmatprep.subr.bf16.mxu0 0
      %2873 = vmatpush1.bf16.msra.mxu0 0
      %2874 = vmatprep.subr.bf16.mxu0 0
      %2875 = vmatpush1.bf16.msra.mxu0 0
      %2876 = vmatprep.subr.bf16.mxu0 0
      %2877 = vmatpush1.bf16.msra.mxu0 0
      %2878 = vmatprep.mubr.bf16.mxu0 0
      %2879 = vmatmul.mubr.bf16.gmra.mrb[0].mxu0 %v2814
      %v2880 = vpop.f32.mrb[0].mxu0
      %v2881 = vadd.f32 0.0, %v2880
      %v2882 = vpop.f32.mrb[0].mxu0
      %v2883 = vpop.f32.mrb[0].mxu0
      %v2884 = vadd.f32 0.0, %v2883
      %v2885 = vpop.f32.mrb[0].mxu0
      %2886 = vmatprep.mubr.bf16.mxu0 0
      %2887 = vmatmul.mubr.bf16.gmra.mrb[0].mxu0 %v2815
      %v2888 = vpop.f32.mrb[0].mxu0
      %v2889 = vadd.f32 0.0, %v2888
      %v2890 = vpop.f32.mrb[0].mxu0
      %v2891 = vpop.f32.mrb[0].mxu0
      %v2892 = vadd.f32 0.0, %v2891
      %v2893 = vpop.f32.mrb[0].mxu0
      %2894 = vmatprep.mubr.bf16.mxu0 0
      %2895 = vmatmul.mubr.bf16.gmra.mrb[0].mxu0 %v2816
      %v2896 = vpop.f32.mrb[0].mxu0
      %v2897 = vadd.f32 0.0, %v2896
      %v2898 = vpop.f32.mrb[0].mxu0
      %v2899 = vpop.f32.mrb[0].mxu0
      %v2900 = vadd.f32 0.0, %v2899
      %v2901 = vpop.f32.mrb[0].mxu0
      %2902 = vmatprep.mubr.bf16.mxu0 0
      %2903 = vmatmul.mubr.bf16.gmra.mrb[0].mxu0 %v2817
      %v2904 = vpop.f32.mrb[0].mxu0
      %v2905 = vadd.f32 0.0, %v2904
      %v2906 = vpop.f32.mrb[0].mxu0
      %v2907 = vpop.f32.mrb[0].mxu0
      %v2908 = vadd.f32 0.0, %v2907
      %v2909 = vpop.f32.mrb[0].mxu0
      %2910 = vmatprep.mubr.bf16.mxu0 0
      %2911 = vmatmul.mubr.bf16.gmra.mrb[0].mxu0 %v2818
      %v2912 = vpop.f32.mrb[0].mxu0
      %v2913 = vadd.f32 0.0, %v2912
      %v2914 = vpop.f32.mrb[0].mxu0
      %v2915 = vpop.f32.mrb[0].mxu0
      %v2916 = vadd.f32 0.0, %v2915
      %v2917 = vpop.f32.mrb[0].mxu0
      %2918 = vmatprep.mubr.bf16.mxu0 0
      %2919 = vmatmul.mubr.bf16.gmra.mrb[0].mxu0 %v2819
      %v2920 = vpop.f32.mrb[0].mxu0
      %v2921 = vadd.f32 0.0, %v2920
      %v2922 = vpop.f32.mrb[0].mxu0
      %v2923 = vpop.f32.mrb[0].mxu0
      %v2924 = vadd.f32 0.0, %v2923
      %v2925 = vpop.f32.mrb[0].mxu0
      %2926 = vmatprep.mubr.bf16.mxu0 0
      %2927 = vmatmul.mubr.bf16.gmra.mrb[0].mxu0 %v2820
      %v2928 = vpop.f32.mrb[0].mxu0
      %v2929 = vadd.f32 0.0, %v2928
      %v2930 = vpop.f32.mrb[0].mxu0
      %v2931 = vpop.f32.mrb[0].mxu0
      %v2932 = vadd.f32 0.0, %v2931
      %v2933 = vpop.f32.mrb[0].mxu0
      %2934 = vmatprep.mubr.bf16.mxu0 0
      %2935 = vmatmul.mubr.bf16.gmra.mrb[0].mxu0 %v2821
      %v2936 = vpop.f32.mrb[0].mxu0
      %v2937 = vadd.f32 0.0, %v2936
      %v2938 = vpop.f32.mrb[0].mxu0
      %v2939 = vpop.f32.mrb[0].mxu0
      %v2940 = vadd.f32 0.0, %v2939
      %v2941 = vpop.f32.mrb[0].mxu0
      %2942 = vdwg.mxu0
      %2943 = vrot.lane.b32.xlu0 %v668, 108
      %v2944 = vpop.permute.xlu0 %2943
      %2945 = vrot.lane.b32.xlu0 %v669, 108
      %v2946 = vpop.permute.xlu0 %2945
      %2947 = vrot.lane.b32.xlu0 %v670, 108
      %v2948 = vpop.permute.xlu0 %2947
      %2949 = vrot.lane.b32.xlu0 %v671, 108
      %v2950 = vpop.permute.xlu0 %2949
      %2951 = vrot.lane.b32.xlu0 %v672, 108
      %v2952 = vpop.permute.xlu0 %2951
      %2953 = vrot.lane.b32.xlu0 %v673, 108
      %v2954 = vpop.permute.xlu0 %2953
      %2955 = vrot.lane.b32.xlu0 %v674, 108
      %v2956 = vpop.permute.xlu0 %2955
      %2957 = vrot.lane.b32.xlu0 %v675, 108
      %v2958 = vpop.permute.xlu0 %2957
      %2959 = vrot.lane.b32.xlu0 %v676, 44
      %v2960 = vpop.permute.xlu0 %2959
      %2961 = vrot.lane.b32.xlu0 %v677, 44
      %v2962 = vpop.permute.xlu0 %2961
      %2963 = vrot.lane.b32.xlu0 %v678, 44
      %v2964 = vpop.permute.xlu0 %2963
      %2965 = vrot.lane.b32.xlu0 %v679, 44
      %v2966 = vpop.permute.xlu0 %2965
      %2967 = vrot.lane.b32.xlu0 %v680, 44
      %v2968 = vpop.permute.xlu0 %2967
      %2969 = vrot.lane.b32.xlu0 %v681, 44
      %v2970 = vpop.permute.xlu0 %2969
      %2971 = vrot.lane.b32.xlu0 %v682, 44
      %v2972 = vpop.permute.xlu0 %2971
      %2973 = vrot.lane.b32.xlu0 %v683, 44
      %v2974 = vpop.permute.xlu0 %2973
      %v2976 = vsel %vm732, %v2944, 0
      %v2979 = vsel %vm732, %v2946, 0
      %v2982 = vsel %vm732, %v2948, 0
      %v2985 = vsel %vm732, %v2950, 0
      %v2988 = vsel %vm732, %v2952, 0
      %v2991 = vsel %vm732, %v2954, 0
      %v2994 = vsel %vm732, %v2956, 0
      %v2997 = vsel %vm732, %v2958, 0
      %v3000 = vsel %vm732, %v2960, 0
      %v3003 = vsel %vm732, %v2962, 0
      %v3006 = vsel %vm732, %v2964, 0
      %v3009 = vsel %vm732, %v2966, 0
      %v3012 = vsel %vm732, %v2968, 0
      %v3015 = vsel %vm732, %v2970, 0
      %v3018 = vsel %vm732, %v2972, 0
      %v3021 = vsel %vm732, %v2974, 0
      %3023 = vmatprep.subr.bf16.mxu0 0
      %3024 = vmatpush1.bf16.xpose.msra.mxu0 %v3000
      %3025 = vmatprep.subr.bf16.mxu0 0
      %3026 = vmatpush1.bf16.xpose.msra.mxu0 %v3003
      %3027 = vmatprep.subr.bf16.mxu0 0
      %3028 = vmatpush1.bf16.xpose.msra.mxu0 %v3006
      %3029 = vmatprep.subr.bf16.mxu0 0
      %3030 = vmatpush1.bf16.xpose.msra.mxu0 %v3009
      %3031 = vmatprep.subr.bf16.mxu0 0
      %3032 = vmatpush1.bf16.xpose.msra.mxu0 %v3012
      %3033 = vmatprep.subr.bf16.mxu0 0
      %3034 = vmatpush1.bf16.xpose.msra.mxu0 %v3015
      %3035 = vmatprep.subr.bf16.mxu0 0
      %3036 = vmatpush1.bf16.xpose.msra.mxu0 %v3018
      %3037 = vmatprep.subr.bf16.mxu0 0
      %3038 = vmatpush1.bf16.xpose.msra.mxu0 %v3021
      %3039 = vmatprep.subr.bf16.mxu0 0
      %3040 = vmatpush1.bf16.xpose.msra.mxu0 0
      %3041 = vmatprep.subr.bf16.mxu0 0
      %3042 = vmatpush1.bf16.xpose.msra.mxu0 0
      %3043 = vmatprep.subr.bf16.mxu0 0
      %3044 = vmatpush1.bf16.xpose.msra.mxu0 0
      %3045 = vmatprep.subr.bf16.mxu0 0
      %3046 = vmatpush1.bf16.xpose.msra.mxu0 0
      %3047 = vmatprep.subr.bf16.mxu0 0
      %3048 = vmatpush1.bf16.xpose.msra.mxu0 0
      %3049 = vmatprep.subr.bf16.mxu0 0
      %3050 = vmatpush1.bf16.xpose.msra.mxu0 0
      %3051 = vmatprep.subr.bf16.mxu0 0
      %3052 = vmatpush1.bf16.xpose.msra.mxu0 0
      %3053 = vmatprep.subr.bf16.mxu0 0
      %3054 = vmatpush1.bf16.xpose.msra.mxu0 0
      %3055 = vmatprep.mubr.bf16.mxu0 0
      %3056 = vmatmul.mubr.bf16.gmra.mrb[0].mxu0 %v2976
      %v3057 = vpop.f32.mrb[0].mxu0
      %v3058 = vadd.f32 %v692, %v3057
      %v3059 = vpop.f32.mrb[0].mxu0
      %v3060 = vpop.f32.mrb[0].mxu0
      %v3061 = vadd.f32 %v693, %v3060
      %v3062 = vpop.f32.mrb[0].mxu0
      %3063 = vmatprep.mubr.bf16.mxu0 0
      %3064 = vmatmul.mubr.bf16.gmra.mrb[0].mxu0 %v2979
      %v3065 = vpop.f32.mrb[0].mxu0
      %v3066 = vadd.f32 %v694, %v3065
      %v3067 = vpop.f32.mrb[0].mxu0
      %v3068 = vpop.f32.mrb[0].mxu0
      %v3069 = vadd.f32 %v695, %v3068
      %v3070 = vpop.f32.mrb[0].mxu0
      %3071 = vmatprep.mubr.bf16.mxu0 0
      %3072 = vmatmul.mubr.bf16.gmra.mrb[0].mxu0 %v2982
      %v3073 = vpop.f32.mrb[0].mxu0
      %v3074 = vadd.f32 %v696, %v3073
      %v3075 = vpop.f32.mrb[0].mxu0
      %v3076 = vpop.f32.mrb[0].mxu0
      %v3077 = vadd.f32 %v697, %v3076
      %v3078 = vpop.f32.mrb[0].mxu0
      %3079 = vmatprep.mubr.bf16.mxu0 0
      %3080 = vmatmul.mubr.bf16.gmra.mrb[0].mxu0 %v2985
      %v3081 = vpop.f32.mrb[0].mxu0
      %v3082 = vadd.f32 %v698, %v3081
      %v3083 = vpop.f32.mrb[0].mxu0
      %v3084 = vpop.f32.mrb[0].mxu0
      %v3085 = vadd.f32 %v699, %v3084
      %v3086 = vpop.f32.mrb[0].mxu0
      %3087 = vmatprep.mubr.bf16.mxu0 0
      %3088 = vmatmul.mubr.bf16.gmra.mrb[0].mxu0 %v2988
      %v3089 = vpop.f32.mrb[0].mxu0
      %v3090 = vadd.f32 %v700, %v3089
      %v3091 = vpop.f32.mrb[0].mxu0
      %v3092 = vpop.f32.mrb[0].mxu0
      %v3093 = vadd.f32 %v701, %v3092
      %v3094 = vpop.f32.mrb[0].mxu0
      %3095 = vmatprep.mubr.bf16.mxu0 0
      %3096 = vmatmul.mubr.bf16.gmra.mrb[0].mxu0 %v2991
      %v3097 = vpop.f32.mrb[0].mxu0
      %v3098 = vadd.f32 %v702, %v3097
      %v3099 = vpop.f32.mrb[0].mxu0
      %v3100 = vpop.f32.mrb[0].mxu0
      %v3101 = vadd.f32 %v703, %v3100
      %v3102 = vpop.f32.mrb[0].mxu0
      %3103 = vmatprep.mubr.bf16.mxu0 0
      %3104 = vmatmul.mubr.bf16.gmra.mrb[0].mxu0 %v2994
      %v3105 = vpop.f32.mrb[0].mxu0
      %v3106 = vadd.f32 %v704, %v3105
      %v3107 = vpop.f32.mrb[0].mxu0
      %v3108 = vpop.f32.mrb[0].mxu0
      %v3109 = vadd.f32 %v705, %v3108
      %v3110 = vpop.f32.mrb[0].mxu0
      %3111 = vmatprep.mubr.bf16.mxu0 0
      %3112 = vmatmul.mubr.bf16.gmra.mrb[0].mxu0 %v2997
      %v3113 = vpop.f32.mrb[0].mxu0
      %v3114 = vadd.f32 %v706, %v3113
      %v3115 = vpop.f32.mrb[0].mxu0
      %v3116 = vpop.f32.mrb[0].mxu0
      %v3117 = vadd.f32 %v707, %v3116
      %v3118 = vpop.f32.mrb[0].mxu0
      %3119 = vdwg.mxu0
      %3120 = vmax.xlane.f32.xlu0 %v3058
      %v3121 = vpop.xlane.xlu0 %3120
      %3122 = vmax.xlane.f32.xlu0 %v3061
      %v3123 = vpop.xlane.xlu0 %3122
      %3124 = vmax.xlane.f32.xlu0 %v3066
      %v3125 = vpop.xlane.xlu0 %3124
      %3126 = vmax.xlane.f32.xlu0 %v3069
      %v3127 = vpop.xlane.xlu0 %3126
      %3128 = vmax.xlane.f32.xlu0 %v3074
      %v3129 = vpop.xlane.xlu0 %3128
      %3130 = vmax.xlane.f32.xlu0 %v3077
      %v3131 = vpop.xlane.xlu0 %3130
      %3132 = vmax.xlane.f32.xlu0 %v3082
      %v3133 = vpop.xlane.xlu0 %3132
      %3134 = vmax.xlane.f32.xlu0 %v3085
      %v3135 = vpop.xlane.xlu0 %3134
      %3136 = vmax.xlane.f32.xlu0 %v3090
      %v3137 = vpop.xlane.xlu0 %3136
      %3138 = vmax.xlane.f32.xlu0 %v3093
      %v3139 = vpop.xlane.xlu0 %3138
      %3140 = vmax.xlane.f32.xlu0 %v3098
      %v3141 = vpop.xlane.xlu0 %3140
      %3142 = vmax.xlane.f32.xlu0 %v3101
      %v3143 = vpop.xlane.xlu0 %3142
      %3144 = vmax.xlane.f32.xlu0 %v3106
      %v3145 = vpop.xlane.xlu0 %3144
      %3146 = vmax.xlane.f32.xlu0 %v3109
      %v3147 = vpop.xlane.xlu0 %3146
      %3148 = vmax.xlane.f32.xlu0 %v3114
      %v3149 = vpop.xlane.xlu0 %3148
      %3150 = vmax.xlane.f32.xlu0 %v3117
      %v3151 = vpop.xlane.xlu0 %3150
      %v3152 = vsub.f32 %v3058, %v3121
      %v3153 = vsub.f32 %v3061, %v3123
      %v3154 = vsub.f32 %v3066, %v3125
      %v3155 = vsub.f32 %v3069, %v3127
      %v3156 = vsub.f32 %v3074, %v3129
      %v3157 = vsub.f32 %v3077, %v3131
      %v3158 = vsub.f32 %v3082, %v3133
      %v3159 = vsub.f32 %v3085, %v3135
      %v3160 = vsub.f32 %v3090, %v3137
      %v3161 = vsub.f32 %v3093, %v3139
      %v3162 = vsub.f32 %v3098, %v3141
      %v3163 = vsub.f32 %v3101, %v3143
      %v3164 = vsub.f32 %v3106, %v3145
      %v3165 = vsub.f32 %v3109, %v3147
      %v3166 = vsub.f32 %v3114, %v3149
      %v3167 = vsub.f32 %v3117, %v3151
      %v3168 = vmul.f32 %v3152, 1.442695
      %v3169 = vpow.pop %v3168
      %v3170 = vmul.f32 %v3153, 1.442695
      %v3171 = vpow.pop %v3170
      %v3172 = vmul.f32 %v3154, 1.442695
      %v3173 = vpow.pop %v3172
      %v3174 = vmul.f32 %v3155, 1.442695
      %v3175 = vpow.pop %v3174
      %v3176 = vmul.f32 %v3156, 1.442695
      %v3177 = vpow.pop %v3176
      %v3178 = vmul.f32 %v3157, 1.442695
      %v3179 = vpow.pop %v3178
      %v3180 = vmul.f32 %v3158, 1.442695
      %v3181 = vpow.pop %v3180
      %v3182 = vmul.f32 %v3159, 1.442695
      %v3183 = vpow.pop %v3182
      %v3184 = vmul.f32 %v3160, 1.442695
      %v3185 = vpow.pop %v3184
      %v3186 = vmul.f32 %v3161, 1.442695
      %v3187 = vpow.pop %v3186
      %v3188 = vmul.f32 %v3162, 1.442695
      %v3189 = vpow.pop %v3188
      %v3190 = vmul.f32 %v3163, 1.442695
      %v3191 = vpow.pop %v3190
      %v3192 = vmul.f32 %v3164, 1.442695
      %v3193 = vpow.pop %v3192
      %v3194 = vmul.f32 %v3165, 1.442695
      %v3195 = vpow.pop %v3194
      %v3196 = vmul.f32 %v3166, 1.442695
      %v3197 = vpow.pop %v3196
      %v3198 = vmul.f32 %v3167, 1.442695
      %v3199 = vpow.pop %v3198
      %3200 = vadd.xlane.f32.xlu0 %v3169
      %v3201 = vpop.xlane.xlu0 %3200
      %3202 = vadd.xlane.f32.xlu0 %v3171
      %v3203 = vpop.xlane.xlu0 %3202
      %3204 = vadd.xlane.f32.xlu0 %v3173
      %v3205 = vpop.xlane.xlu0 %3204
      %3206 = vadd.xlane.f32.xlu0 %v3175
      %v3207 = vpop.xlane.xlu0 %3206
      %3208 = vadd.xlane.f32.xlu0 %v3177
      %v3209 = vpop.xlane.xlu0 %3208
      %3210 = vadd.xlane.f32.xlu0 %v3179
      %v3211 = vpop.xlane.xlu0 %3210
      %3212 = vadd.xlane.f32.xlu0 %v3181
      %v3213 = vpop.xlane.xlu0 %3212
      %3214 = vadd.xlane.f32.xlu0 %v3183
      %v3215 = vpop.xlane.xlu0 %3214
      %3216 = vadd.xlane.f32.xlu0 %v3185
      %v3217 = vpop.xlane.xlu0 %3216
      %3218 = vadd.xlane.f32.xlu0 %v3187
      %v3219 = vpop.xlane.xlu0 %3218
      %3220 = vadd.xlane.f32.xlu0 %v3189
      %v3221 = vpop.xlane.xlu0 %3220
      %3222 = vadd.xlane.f32.xlu0 %v3191
      %v3223 = vpop.xlane.xlu0 %3222
      %3224 = vadd.xlane.f32.xlu0 %v3193
      %v3225 = vpop.xlane.xlu0 %3224
      %3226 = vadd.xlane.f32.xlu0 %v3195
      %v3227 = vpop.xlane.xlu0 %3226
      %3228 = vadd.xlane.f32.xlu0 %v3197
      %v3229 = vpop.xlane.xlu0 %3228
      %3230 = vadd.xlane.f32.xlu0 %v3199
      %v3231 = vpop.xlane.xlu0 %3230
      %v3232 = vrcp.pop %v3201
      %v3233 = vrcp.pop %v3203
      %v3234 = vrcp.pop %v3205
      %v3235 = vrcp.pop %v3207
      %v3236 = vrcp.pop %v3209
      %v3237 = vrcp.pop %v3211
      %v3238 = vrcp.pop %v3213
      %v3239 = vrcp.pop %v3215
      %v3240 = vrcp.pop %v3217
      %v3241 = vrcp.pop %v3219
      %v3242 = vrcp.pop %v3221
      %v3243 = vrcp.pop %v3223
      %v3244 = vrcp.pop %v3225
      %v3245 = vrcp.pop %v3227
      %v3246 = vrcp.pop %v3229
      %v3247 = vrcp.pop %v3231
      %v3248 = vmul.f32 %v3169, %v3232
      %v3249 = vmul.f32 %v3171, %v3233
      %v3250 = vmul.f32 %v3173, %v3234
      %v3251 = vmul.f32 %v3175, %v3235
      %v3252 = vmul.f32 %v3177, %v3236
      %v3253 = vmul.f32 %v3179, %v3237
      %v3254 = vmul.f32 %v3181, %v3238
      %v3255 = vmul.f32 %v3183, %v3239
      %v3256 = vmul.f32 %v3185, %v3240
      %v3257 = vmul.f32 %v3187, %v3241
      %v3258 = vmul.f32 %v3189, %v3242
      %v3259 = vmul.f32 %v3191, %v3243
      %v3260 = vmul.f32 %v3193, %v3244
      %v3261 = vmul.f32 %v3195, %v3245
      %v3262 = vmul.f32 %v3197, %v3246
      %v3263 = vmul.f32 %v3199, %v3247
      %v3264 = vpack.c.bf16 %v3249, %v3248
      %v3265 = vpack.c.bf16 %v3251, %v3250
      %v3266 = vpack.c.bf16 %v3253, %v3252
      %v3267 = vpack.c.bf16 %v3255, %v3254
      %v3268 = vpack.c.bf16 %v3257, %v3256
      %v3269 = vpack.c.bf16 %v3259, %v3258
      %v3270 = vpack.c.bf16 %v3261, %v3260
      %v3271 = vpack.c.bf16 %v3263, %v3262
      %3272 = vrot.lane.b32.xlu0 %v684, 108
      %v3273 = vpop.permute.xlu0 %3272
      %3274 = vrot.lane.b32.xlu0 %v685, 108
      %v3275 = vpop.permute.xlu0 %3274
      %3276 = vrot.lane.b32.xlu0 %v686, 108
      %v3277 = vpop.permute.xlu0 %3276
      %3278 = vrot.lane.b32.xlu0 %v687, 108
      %v3279 = vpop.permute.xlu0 %3278
      %3280 = vrot.lane.b32.xlu0 %v688, 108
      %v3281 = vpop.permute.xlu0 %3280
      %3282 = vrot.lane.b32.xlu0 %v689, 108
      %v3283 = vpop.permute.xlu0 %3282
      %3284 = vrot.lane.b32.xlu0 %v690, 108
      %v3285 = vpop.permute.xlu0 %3284
      %3286 = vrot.lane.b32.xlu0 %v691, 108
      %v3287 = vpop.permute.xlu0 %3286
      %3296 = vmatprep.subr.bf16.mxu0 0
      %3297 = vmatpush1.bf16.msra.mxu0 %v3273
      %3298 = vmatprep.subr.bf16.mxu0 0
      %3299 = vmatpush1.bf16.msra.mxu0 %v3275
      %3300 = vmatprep.subr.bf16.mxu0 0
      %3301 = vmatpush1.bf16.msra.mxu0 %v3277
      %3302 = vmatprep.subr.bf16.mxu0 0
      %3303 = vmatpush1.bf16.msra.mxu0 %v3279
      %3304 = vmatprep.subr.bf16.mxu0 0
      %3305 = vmatpush1.bf16.msra.mxu0 %v3281
      %3306 = vmatprep.subr.bf16.mxu0 0
      %3307 = vmatpush1.bf16.msra.mxu0 %v3283
      %3308 = vmatprep.subr.bf16.mxu0 0
      %3309 = vmatpush1.bf16.msra.mxu0 %v3285
      %3310 = vmatprep.subr.bf16.mxu0 0
      %3311 = vmatpush1.bf16.msra.mxu0 %v3287
      %3312 = vmatprep.subr.bf16.mxu0 0
      %3313 = vmatpush1.bf16.msra.mxu0 0
      %3314 = vmatprep.subr.bf16.mxu0 0
      %3315 = vmatpush1.bf16.msra.mxu0 0
      %3316 = vmatprep.subr.bf16.mxu0 0
      %3317 = vmatpush1.bf16.msra.mxu0 0
      %3318 = vmatprep.subr.bf16.mxu0 0
      %3319 = vmatpush1.bf16.msra.mxu0 0
      %3320 = vmatprep.subr.bf16.mxu0 0
      %3321 = vmatpush1.bf16.msra.mxu0 0
      %3322 = vmatprep.subr.bf16.mxu0 0
      %3323 = vmatpush1.bf16.msra.mxu0 0
      %3324 = vmatprep.subr.bf16.mxu0 0
      %3325 = vmatpush1.bf16.msra.mxu0 0
      %3326 = vmatprep.subr.bf16.mxu0 0
      %3327 = vmatpush1.bf16.msra.mxu0 0
      %3328 = vmatprep.mubr.bf16.mxu0 0
      %3329 = vmatmul.mubr.bf16.gmra.mrb[0].mxu0 %v3264
      %v3330 = vpop.f32.mrb[0].mxu0
      %v3331 = vadd.f32 0.0, %v3330
      %v3332 = vpop.f32.mrb[0].mxu0
      %v3333 = vpop.f32.mrb[0].mxu0
      %v3334 = vadd.f32 0.0, %v3333
      %v3335 = vpop.f32.mrb[0].mxu0
      %3336 = vmatprep.mubr.bf16.mxu0 0
      %3337 = vmatmul.mubr.bf16.gmra.mrb[0].mxu0 %v3265
      %v3338 = vpop.f32.mrb[0].mxu0
      %v3339 = vadd.f32 0.0, %v3338
      %v3340 = vpop.f32.mrb[0].mxu0
      %v3341 = vpop.f32.mrb[0].mxu0
      %v3342 = vadd.f32 0.0, %v3341
      %v3343 = vpop.f32.mrb[0].mxu0
      %3344 = vmatprep.mubr.bf16.mxu0 0
      %3345 = vmatmul.mubr.bf16.gmra.mrb[0].mxu0 %v3266
      %v3346 = vpop.f32.mrb[0].mxu0
      %v3347 = vadd.f32 0.0, %v3346
      %v3348 = vpop.f32.mrb[0].mxu0
      %v3349 = vpop.f32.mrb[0].mxu0
      %v3350 = vadd.f32 0.0, %v3349
      %v3351 = vpop.f32.mrb[0].mxu0
      %3352 = vmatprep.mubr.bf16.mxu0 0
      %3353 = vmatmul.mubr.bf16.gmra.mrb[0].mxu0 %v3267
      %v3354 = vpop.f32.mrb[0].mxu0
      %v3355 = vadd.f32 0.0, %v3354
      %v3356 = vpop.f32.mrb[0].mxu0
      %v3357 = vpop.f32.mrb[0].mxu0
      %v3358 = vadd.f32 0.0, %v3357
      %v3359 = vpop.f32.mrb[0].mxu0
      %3360 = vmatprep.mubr.bf16.mxu0 0
      %3361 = vmatmul.mubr.bf16.gmra.mrb[0].mxu0 %v3268
      %v3362 = vpop.f32.mrb[0].mxu0
      %v3363 = vadd.f32 0.0, %v3362
      %v3364 = vpop.f32.mrb[0].mxu0
      %v3365 = vpop.f32.mrb[0].mxu0
      %v3366 = vadd.f32 0.0, %v3365
      %v3367 = vpop.f32.mrb[0].mxu0
      %3368 = vmatprep.mubr.bf16.mxu0 0
      %3369 = vmatmul.mubr.bf16.gmra.mrb[0].mxu0 %v3269
      %v3370 = vpop.f32.mrb[0].mxu0
      %v3371 = vadd.f32 0.0, %v3370
      %v3372 = vpop.f32.mrb[0].mxu0
      %v3373 = vpop.f32.mrb[0].mxu0
      %v3374 = vadd.f32 0.0, %v3373
      %v3375 = vpop.f32.mrb[0].mxu0
      %3376 = vmatprep.mubr.bf16.mxu0 0
      %3377 = vmatmul.mubr.bf16.gmra.mrb[0].mxu0 %v3270
      %v3378 = vpop.f32.mrb[0].mxu0
      %v3379 = vadd.f32 0.0, %v3378
      %v3380 = vpop.f32.mrb[0].mxu0
      %v3381 = vpop.f32.mrb[0].mxu0
      %v3382 = vadd.f32 0.0, %v3381
      %v3383 = vpop.f32.mrb[0].mxu0
      %3384 = vmatprep.mubr.bf16.mxu0 0
      %3385 = vmatmul.mubr.bf16.gmra.mrb[0].mxu0 %v3271
      %v3386 = vpop.f32.mrb[0].mxu0
      %v3387 = vadd.f32 0.0, %v3386
      %v3388 = vpop.f32.mrb[0].mxu0
      %v3389 = vpop.f32.mrb[0].mxu0
      %v3390 = vadd.f32 0.0, %v3389
      %v3391 = vpop.f32.mrb[0].mxu0
      %3392 = vdwg.mxu0
      %3393 = vrot.lane.b32.xlu0 %v668, 104
      %v3394 = vpop.permute.xlu0 %3393
      %3395 = vrot.lane.b32.xlu0 %v669, 104
      %v3396 = vpop.permute.xlu0 %3395
      %3397 = vrot.lane.b32.xlu0 %v670, 104
      %v3398 = vpop.permute.xlu0 %3397
      %3399 = vrot.lane.b32.xlu0 %v671, 104
      %v3400 = vpop.permute.xlu0 %3399
      %3401 = vrot.lane.b32.xlu0 %v672, 104
      %v3402 = vpop.permute.xlu0 %3401
      %3403 = vrot.lane.b32.xlu0 %v673, 104
      %v3404 = vpop.permute.xlu0 %3403
      %3405 = vrot.lane.b32.xlu0 %v674, 104
      %v3406 = vpop.permute.xlu0 %3405
      %3407 = vrot.lane.b32.xlu0 %v675, 104
      %v3408 = vpop.permute.xlu0 %3407
      %3409 = vrot.lane.b32.xlu0 %v676, 40
      %v3410 = vpop.permute.xlu0 %3409
      %3411 = vrot.lane.b32.xlu0 %v677, 40
      %v3412 = vpop.permute.xlu0 %3411
      %3413 = vrot.lane.b32.xlu0 %v678, 40
      %v3414 = vpop.permute.xlu0 %3413
      %3415 = vrot.lane.b32.xlu0 %v679, 40
      %v3416 = vpop.permute.xlu0 %3415
      %3417 = vrot.lane.b32.xlu0 %v680, 40
      %v3418 = vpop.permute.xlu0 %3417
      %3419 = vrot.lane.b32.xlu0 %v681, 40
      %v3420 = vpop.permute.xlu0 %3419
      %3421 = vrot.lane.b32.xlu0 %v682, 40
      %v3422 = vpop.permute.xlu0 %3421
      %3423 = vrot.lane.b32.xlu0 %v683, 40
      %v3424 = vpop.permute.xlu0 %3423
      %v3426 = vsel %vm732, %v3394, 0
      %v3429 = vsel %vm732, %v3396, 0
      %v3432 = vsel %vm732, %v3398, 0
      %v3435 = vsel %vm732, %v3400, 0
      %v3438 = vsel %vm732, %v3402, 0
      %v3441 = vsel %vm732, %v3404, 0
      %v3444 = vsel %vm732, %v3406, 0
      %v3447 = vsel %vm732, %v3408, 0
      %v3450 = vsel %vm732, %v3410, 0
      %v3453 = vsel %vm732, %v3412, 0
      %v3456 = vsel %vm732, %v3414, 0
      %v3459 = vsel %vm732, %v3416, 0
      %v3462 = vsel %vm732, %v3418, 0
      %v3465 = vsel %vm732, %v3420, 0
      %v3468 = vsel %vm732, %v3422, 0
      %v3471 = vsel %vm732, %v3424, 0
      %3473 = vmatprep.subr.bf16.mxu0 0
      %3474 = vmatpush1.bf16.xpose.msra.mxu0 %v3450
      %3475 = vmatprep.subr.bf16.mxu0 0
      %3476 = vmatpush1.bf16.xpose.msra.mxu0 %v3453
      %3477 = vmatprep.subr.bf16.mxu0 0
      %3478 = vmatpush1.bf16.xpose.msra.mxu0 %v3456
      %3479 = vmatprep.subr.bf16.mxu0 0
      %3480 = vmatpush1.bf16.xpose.msra.mxu0 %v3459
      %3481 = vmatprep.subr.bf16.mxu0 0
      %3482 = vmatpush1.bf16.xpose.msra.mxu0 %v3462
      %3483 = vmatprep.subr.bf16.mxu0 0
      %3484 = vmatpush1.bf16.xpose.msra.mxu0 %v3465
      %3485 = vmatprep.subr.bf16.mxu0 0
      %3486 = vmatpush1.bf16.xpose.msra.mxu0 %v3468
      %3487 = vmatprep.subr.bf16.mxu0 0
      %3488 = vmatpush1.bf16.xpose.msra.mxu0 %v3471
      %3489 = vmatprep.subr.bf16.mxu0 0
      %3490 = vmatpush1.bf16.xpose.msra.mxu0 0
      %3491 = vmatprep.subr.bf16.mxu0 0
      %3492 = vmatpush1.bf16.xpose.msra.mxu0 0
      %3493 = vmatprep.subr.bf16.mxu0 0
      %3494 = vmatpush1.bf16.xpose.msra.mxu0 0
      %3495 = vmatprep.subr.bf16.mxu0 0
      %3496 = vmatpush1.bf16.xpose.msra.mxu0 0
      %3497 = vmatprep.subr.bf16.mxu0 0
      %3498 = vmatpush1.bf16.xpose.msra.mxu0 0
      %3499 = vmatprep.subr.bf16.mxu0 0
      %3500 = vmatpush1.bf16.xpose.msra.mxu0 0
      %3501 = vmatprep.subr.bf16.mxu0 0
      %3502 = vmatpush1.bf16.xpose.msra.mxu0 0
      %3503 = vmatprep.subr.bf16.mxu0 0
      %3504 = vmatpush1.bf16.xpose.msra.mxu0 0
      %3505 = vmatprep.mubr.bf16.mxu0 0
      %3506 = vmatmul.mubr.bf16.gmra.mrb[0].mxu0 %v3426
      %v3507 = vpop.f32.mrb[0].mxu0
      %v3508 = vadd.f32 %v692, %v3507
      %v3509 = vpop.f32.mrb[0].mxu0
      %v3510 = vpop.f32.mrb[0].mxu0
      %v3511 = vadd.f32 %v693, %v3510
      %v3512 = vpop.f32.mrb[0].mxu0
      %3513 = vmatprep.mubr.bf16.mxu0 0
      %3514 = vmatmul.mubr.bf16.gmra.mrb[0].mxu0 %v3429
      %v3515 = vpop.f32.mrb[0].mxu0
      %v3516 = vadd.f32 %v694, %v3515
      %v3517 = vpop.f32.mrb[0].mxu0
      %v3518 = vpop.f32.mrb[0].mxu0
      %v3519 = vadd.f32 %v695, %v3518
      %v3520 = vpop.f32.mrb[0].mxu0
      %3521 = vmatprep.mubr.bf16.mxu0 0
      %3522 = vmatmul.mubr.bf16.gmra.mrb[0].mxu0 %v3432
      %v3523 = vpop.f32.mrb[0].mxu0
      %v3524 = vadd.f32 %v696, %v3523
      %v3525 = vpop.f32.mrb[0].mxu0
      %v3526 = vpop.f32.mrb[0].mxu0
      %v3527 = vadd.f32 %v697, %v3526
      %v3528 = vpop.f32.mrb[0].mxu0
      %3529 = vmatprep.mubr.bf16.mxu0 0
      %3530 = vmatmul.mubr.bf16.gmra.mrb[0].mxu0 %v3435
      %v3531 = vpop.f32.mrb[0].mxu0
      %v3532 = vadd.f32 %v698, %v3531
      %v3533 = vpop.f32.mrb[0].mxu0
      %v3534 = vpop.f32.mrb[0].mxu0
      %v3535 = vadd.f32 %v699, %v3534
      %v3536 = vpop.f32.mrb[0].mxu0
      %3537 = vmatprep.mubr.bf16.mxu0 0
      %3538 = vmatmul.mubr.bf16.gmra.mrb[0].mxu0 %v3438
      %v3539 = vpop.f32.mrb[0].mxu0
      %v3540 = vadd.f32 %v700, %v3539
      %v3541 = vpop.f32.mrb[0].mxu0
      %v3542 = vpop.f32.mrb[0].mxu0
      %v3543 = vadd.f32 %v701, %v3542
      %v3544 = vpop.f32.mrb[0].mxu0
      %3545 = vmatprep.mubr.bf16.mxu0 0
      %3546 = vmatmul.mubr.bf16.gmra.mrb[0].mxu0 %v3441
      %v3547 = vpop.f32.mrb[0].mxu0
      %v3548 = vadd.f32 %v702, %v3547
      %v3549 = vpop.f32.mrb[0].mxu0
      %v3550 = vpop.f32.mrb[0].mxu0
      %v3551 = vadd.f32 %v703, %v3550
      %v3552 = vpop.f32.mrb[0].mxu0
      %3553 = vmatprep.mubr.bf16.mxu0 0
      %3554 = vmatmul.mubr.bf16.gmra.mrb[0].mxu0 %v3444
      %v3555 = vpop.f32.mrb[0].mxu0
      %v3556 = vadd.f32 %v704, %v3555
      %v3557 = vpop.f32.mrb[0].mxu0
      %v3558 = vpop.f32.mrb[0].mxu0
      %v3559 = vadd.f32 %v705, %v3558
      %v3560 = vpop.f32.mrb[0].mxu0
      %3561 = vmatprep.mubr.bf16.mxu0 0
      %3562 = vmatmul.mubr.bf16.gmra.mrb[0].mxu0 %v3447
      %v3563 = vpop.f32.mrb[0].mxu0
      %v3564 = vadd.f32 %v706, %v3563
      %v3565 = vpop.f32.mrb[0].mxu0
      %v3566 = vpop.f32.mrb[0].mxu0
      %v3567 = vadd.f32 %v707, %v3566
      %v3568 = vpop.f32.mrb[0].mxu0
      %3569 = vdwg.mxu0
      %3570 = vmax.xlane.f32.xlu0 %v3508
      %v3571 = vpop.xlane.xlu0 %3570
      %3572 = vmax.xlane.f32.xlu0 %v3511
      %v3573 = vpop.xlane.xlu0 %3572
      %3574 = vmax.xlane.f32.xlu0 %v3516
      %v3575 = vpop.xlane.xlu0 %3574
      %3576 = vmax.xlane.f32.xlu0 %v3519
      %v3577 = vpop.xlane.xlu0 %3576
      %3578 = vmax.xlane.f32.xlu0 %v3524
      %v3579 = vpop.xlane.xlu0 %3578
      %3580 = vmax.xlane.f32.xlu0 %v3527
      %v3581 = vpop.xlane.xlu0 %3580
      %3582 = vmax.xlane.f32.xlu0 %v3532
      %v3583 = vpop.xlane.xlu0 %3582
      %3584 = vmax.xlane.f32.xlu0 %v3535
      %v3585 = vpop.xlane.xlu0 %3584
      %3586 = vmax.xlane.f32.xlu0 %v3540
      %v3587 = vpop.xlane.xlu0 %3586
      %3588 = vmax.xlane.f32.xlu0 %v3543
      %v3589 = vpop.xlane.xlu0 %3588
      %3590 = vmax.xlane.f32.xlu0 %v3548
      %v3591 = vpop.xlane.xlu0 %3590
      %3592 = vmax.xlane.f32.xlu0 %v3551
      %v3593 = vpop.xlane.xlu0 %3592
      %3594 = vmax.xlane.f32.xlu0 %v3556
      %v3595 = vpop.xlane.xlu0 %3594
      %3596 = vmax.xlane.f32.xlu0 %v3559
      %v3597 = vpop.xlane.xlu0 %3596
      %3598 = vmax.xlane.f32.xlu0 %v3564
      %v3599 = vpop.xlane.xlu0 %3598
      %3600 = vmax.xlane.f32.xlu0 %v3567
      %v3601 = vpop.xlane.xlu0 %3600
      %v3602 = vsub.f32 %v3508, %v3571
      %v3603 = vsub.f32 %v3511, %v3573
      %v3604 = vsub.f32 %v3516, %v3575
      %v3605 = vsub.f32 %v3519, %v3577
      %v3606 = vsub.f32 %v3524, %v3579
      %v3607 = vsub.f32 %v3527, %v3581
      %v3608 = vsub.f32 %v3532, %v3583
      %v3609 = vsub.f32 %v3535, %v3585
      %v3610 = vsub.f32 %v3540, %v3587
      %v3611 = vsub.f32 %v3543, %v3589
      %v3612 = vsub.f32 %v3548, %v3591
      %v3613 = vsub.f32 %v3551, %v3593
      %v3614 = vsub.f32 %v3556, %v3595
      %v3615 = vsub.f32 %v3559, %v3597
      %v3616 = vsub.f32 %v3564, %v3599
      %v3617 = vsub.f32 %v3567, %v3601
      %v3618 = vmul.f32 %v3602, 1.442695
      %v3619 = vpow.pop %v3618
      %v3620 = vmul.f32 %v3603, 1.442695
      %v3621 = vpow.pop %v3620
      %v3622 = vmul.f32 %v3604, 1.442695
      %v3623 = vpow.pop %v3622
      %v3624 = vmul.f32 %v3605, 1.442695
      %v3625 = vpow.pop %v3624
      %v3626 = vmul.f32 %v3606, 1.442695
      %v3627 = vpow.pop %v3626
      %v3628 = vmul.f32 %v3607, 1.442695
      %v3629 = vpow.pop %v3628
      %v3630 = vmul.f32 %v3608, 1.442695
      %v3631 = vpow.pop %v3630
      %v3632 = vmul.f32 %v3609, 1.442695
      %v3633 = vpow.pop %v3632
      %v3634 = vmul.f32 %v3610, 1.442695
      %v3635 = vpow.pop %v3634
      %v3636 = vmul.f32 %v3611, 1.442695
      %v3637 = vpow.pop %v3636
      %v3638 = vmul.f32 %v3612, 1.442695
      %v3639 = vpow.pop %v3638
      %v3640 = vmul.f32 %v3613, 1.442695
      %v3641 = vpow.pop %v3640
      %v3642 = vmul.f32 %v3614, 1.442695
      %v3643 = vpow.pop %v3642
      %v3644 = vmul.f32 %v3615, 1.442695
      %v3645 = vpow.pop %v3644
      %v3646 = vmul.f32 %v3616, 1.442695
      %v3647 = vpow.pop %v3646
      %v3648 = vmul.f32 %v3617, 1.442695
      %v3649 = vpow.pop %v3648
      %3650 = vadd.xlane.f32.xlu0 %v3619
      %v3651 = vpop.xlane.xlu0 %3650
      %3652 = vadd.xlane.f32.xlu0 %v3621
      %v3653 = vpop.xlane.xlu0 %3652
      %3654 = vadd.xlane.f32.xlu0 %v3623
      %v3655 = vpop.xlane.xlu0 %3654
      %3656 = vadd.xlane.f32.xlu0 %v3625
      %v3657 = vpop.xlane.xlu0 %3656
      %3658 = vadd.xlane.f32.xlu0 %v3627
      %v3659 = vpop.xlane.xlu0 %3658
      %3660 = vadd.xlane.f32.xlu0 %v3629
      %v3661 = vpop.xlane.xlu0 %3660
      %3662 = vadd.xlane.f32.xlu0 %v3631
      %v3663 = vpop.xlane.xlu0 %3662
      %3664 = vadd.xlane.f32.xlu0 %v3633
      %v3665 = vpop.xlane.xlu0 %3664
      %3666 = vadd.xlane.f32.xlu0 %v3635
      %v3667 = vpop.xlane.xlu0 %3666
      %3668 = vadd.xlane.f32.xlu0 %v3637
      %v3669 = vpop.xlane.xlu0 %3668
      %3670 = vadd.xlane.f32.xlu0 %v3639
      %v3671 = vpop.xlane.xlu0 %3670
      %3672 = vadd.xlane.f32.xlu0 %v3641
      %v3673 = vpop.xlane.xlu0 %3672
      %3674 = vadd.xlane.f32.xlu0 %v3643
      %v3675 = vpop.xlane.xlu0 %3674
      %3676 = vadd.xlane.f32.xlu0 %v3645
      %v3677 = vpop.xlane.xlu0 %3676
      %3678 = vadd.xlane.f32.xlu0 %v3647
      %v3679 = vpop.xlane.xlu0 %3678
      %3680 = vadd.xlane.f32.xlu0 %v3649
      %v3681 = vpop.xlane.xlu0 %3680
      %v3682 = vrcp.pop %v3651
      %v3683 = vrcp.pop %v3653
      %v3684 = vrcp.pop %v3655
      %v3685 = vrcp.pop %v3657
      %v3686 = vrcp.pop %v3659
      %v3687 = vrcp.pop %v3661
      %v3688 = vrcp.pop %v3663
      %v3689 = vrcp.pop %v3665
      %v3690 = vrcp.pop %v3667
      %v3691 = vrcp.pop %v3669
      %v3692 = vrcp.pop %v3671
      %v3693 = vrcp.pop %v3673
      %v3694 = vrcp.pop %v3675
      %v3695 = vrcp.pop %v3677
      %v3696 = vrcp.pop %v3679
      %v3697 = vrcp.pop %v3681
      %v3698 = vmul.f32 %v3619, %v3682
      %v3699 = vmul.f32 %v3621, %v3683
      %v3700 = vmul.f32 %v3623, %v3684
      %v3701 = vmul.f32 %v3625, %v3685
      %v3702 = vmul.f32 %v3627, %v3686
      %v3703 = vmul.f32 %v3629, %v3687
      %v3704 = vmul.f32 %v3631, %v3688
      %v3705 = vmul.f32 %v3633, %v3689
      %v3706 = vmul.f32 %v3635, %v3690
      %v3707 = vmul.f32 %v3637, %v3691
      %v3708 = vmul.f32 %v3639, %v3692
      %v3709 = vmul.f32 %v3641, %v3693
      %v3710 = vmul.f32 %v3643, %v3694
      %v3711 = vmul.f32 %v3645, %v3695
      %v3712 = vmul.f32 %v3647, %v3696
      %v3713 = vmul.f32 %v3649, %v3697
      %v3714 = vpack.c.bf16 %v3699, %v3698
      %v3715 = vpack.c.bf16 %v3701, %v3700
      %v3716 = vpack.c.bf16 %v3703, %v3702
      %v3717 = vpack.c.bf16 %v3705, %v3704
      %v3718 = vpack.c.bf16 %v3707, %v3706
      %v3719 = vpack.c.bf16 %v3709, %v3708
      %v3720 = vpack.c.bf16 %v3711, %v3710
      %v3721 = vpack.c.bf16 %v3713, %v3712
      %3722 = vrot.lane.b32.xlu0 %v684, 104
      %v3723 = vpop.permute.xlu0 %3722
      %3724 = vrot.lane.b32.xlu0 %v685, 104
      %v3725 = vpop.permute.xlu0 %3724
      %3726 = vrot.lane.b32.xlu0 %v686, 104
      %v3727 = vpop.permute.xlu0 %3726
      %3728 = vrot.lane.b32.xlu0 %v687, 104
      %v3729 = vpop.permute.xlu0 %3728
      %3730 = vrot.lane.b32.xlu0 %v688, 104
      %v3731 = vpop.permute.xlu0 %3730
      %3732 = vrot.lane.b32.xlu0 %v689, 104
      %v3733 = vpop.permute.xlu0 %3732
      %3734 = vrot.lane.b32.xlu0 %v690, 104
      %v3735 = vpop.permute.xlu0 %3734
      %3736 = vrot.lane.b32.xlu0 %v691, 104
      %v3737 = vpop.permute.xlu0 %3736
      %3746 = vmatprep.subr.bf16.mxu0 0
      %3747 = vmatpush1.bf16.msra.mxu0 %v3723
      %3748 = vmatprep.subr.bf16.mxu0 0
      %3749 = vmatpush1.bf16.msra.mxu0 %v3725
      %3750 = vmatprep.subr.bf16.mxu0 0
      %3751 = vmatpush1.bf16.msra.mxu0 %v3727
      %3752 = vmatprep.subr.bf16.mxu0 0
      %3753 = vmatpush1.bf16.msra.mxu0 %v3729
      %3754 = vmatprep.subr.bf16.mxu0 0
      %3755 = vmatpush1.bf16.msra.mxu0 %v3731
      %3756 = vmatprep.subr.bf16.mxu0 0
      %3757 = vmatpush1.bf16.msra.mxu0 %v3733
      %3758 = vmatprep.subr.bf16.mxu0 0
      %3759 = vmatpush1.bf16.msra.mxu0 %v3735
      %3760 = vmatprep.subr.bf16.mxu0 0
      %3761 = vmatpush1.bf16.msra.mxu0 %v3737
      %3762 = vmatprep.subr.bf16.mxu0 0
      %3763 = vmatpush1.bf16.msra.mxu0 0
      %3764 = vmatprep.subr.bf16.mxu0 0
      %3765 = vmatpush1.bf16.msra.mxu0 0
      %3766 = vmatprep.subr.bf16.mxu0 0
      %3767 = vmatpush1.bf16.msra.mxu0 0
      %3768 = vmatprep.subr.bf16.mxu0 0
      %3769 = vmatpush1.bf16.msra.mxu0 0
      %3770 = vmatprep.subr.bf16.mxu0 0
      %3771 = vmatpush1.bf16.msra.mxu0 0
      %3772 = vmatprep.subr.bf16.mxu0 0
      %3773 = vmatpush1.bf16.msra.mxu0 0
      %3774 = vmatprep.subr.bf16.mxu0 0
      %3775 = vmatpush1.bf16.msra.mxu0 0
      %3776 = vmatprep.subr.bf16.mxu0 0
      %3777 = vmatpush1.bf16.msra.mxu0 0
      %3778 = vmatprep.mubr.bf16.mxu0 0
      %3779 = vmatmul.mubr.bf16.gmra.mrb[0].mxu0 %v3714
      %v3780 = vpop.f32.mrb[0].mxu0
      %v3781 = vadd.f32 0.0, %v3780
      %v3782 = vpop.f32.mrb[0].mxu0
      %v3783 = vpop.f32.mrb[0].mxu0
      %v3784 = vadd.f32 0.0, %v3783
      %v3785 = vpop.f32.mrb[0].mxu0
      %3786 = vmatprep.mubr.bf16.mxu0 0
      %3787 = vmatmul.mubr.bf16.gmra.mrb[0].mxu0 %v3715
      %v3788 = vpop.f32.mrb[0].mxu0
      %v3789 = vadd.f32 0.0, %v3788
      %v3790 = vpop.f32.mrb[0].mxu0
      %v3791 = vpop.f32.mrb[0].mxu0
      %v3792 = vadd.f32 0.0, %v3791
      %v3793 = vpop.f32.mrb[0].mxu0
      %3794 = vmatprep.mubr.bf16.mxu0 0
      %3795 = vmatmul.mubr.bf16.gmra.mrb[0].mxu0 %v3716
      %v3796 = vpop.f32.mrb[0].mxu0
      %v3797 = vadd.f32 0.0, %v3796
      %v3798 = vpop.f32.mrb[0].mxu0
      %v3799 = vpop.f32.mrb[0].mxu0
      %v3800 = vadd.f32 0.0, %v3799
      %v3801 = vpop.f32.mrb[0].mxu0
      %3802 = vmatprep.mubr.bf16.mxu0 0
      %3803 = vmatmul.mubr.bf16.gmra.mrb[0].mxu0 %v3717
      %v3804 = vpop.f32.mrb[0].mxu0
      %v3805 = vadd.f32 0.0, %v3804
      %v3806 = vpop.f32.mrb[0].mxu0
      %v3807 = vpop.f32.mrb[0].mxu0
      %v3808 = vadd.f32 0.0, %v3807
      %v3809 = vpop.f32.mrb[0].mxu0
      %3810 = vmatprep.mubr.bf16.mxu0 0
      %3811 = vmatmul.mubr.bf16.gmra.mrb[0].mxu0 %v3718
      %v3812 = vpop.f32.mrb[0].mxu0
      %v3813 = vadd.f32 0.0, %v3812
      %v3814 = vpop.f32.mrb[0].mxu0
      %v3815 = vpop.f32.mrb[0].mxu0
      %v3816 = vadd.f32 0.0, %v3815
      %v3817 = vpop.f32.mrb[0].mxu0
      %3818 = vmatprep.mubr.bf16.mxu0 0
      %3819 = vmatmul.mubr.bf16.gmra.mrb[0].mxu0 %v3719
      %v3820 = vpop.f32.mrb[0].mxu0
      %v3821 = vadd.f32 0.0, %v3820
      %v3822 = vpop.f32.mrb[0].mxu0
      %v3823 = vpop.f32.mrb[0].mxu0
      %v3824 = vadd.f32 0.0, %v3823
      %v3825 = vpop.f32.mrb[0].mxu0
      %3826 = vmatprep.mubr.bf16.mxu0 0
      %3827 = vmatmul.mubr.bf16.gmra.mrb[0].mxu0 %v3720
      %v3828 = vpop.f32.mrb[0].mxu0
      %v3829 = vadd.f32 0.0, %v3828
      %v3830 = vpop.f32.mrb[0].mxu0
      %v3831 = vpop.f32.mrb[0].mxu0
      %v3832 = vadd.f32 0.0, %v3831
      %v3833 = vpop.f32.mrb[0].mxu0
      %3834 = vmatprep.mubr.bf16.mxu0 0
      %3835 = vmatmul.mubr.bf16.gmra.mrb[0].mxu0 %v3721
      %v3836 = vpop.f32.mrb[0].mxu0
      %v3837 = vadd.f32 0.0, %v3836
      %v3838 = vpop.f32.mrb[0].mxu0
      %v3839 = vpop.f32.mrb[0].mxu0
      %v3840 = vadd.f32 0.0, %v3839
      %v3841 = vpop.f32.mrb[0].mxu0
      %3842 = vdwg.mxu0
      %3843 = vrot.lane.b32.xlu0 %v668, 100
      %v3844 = vpop.permute.xlu0 %3843
      %3845 = vrot.lane.b32.xlu0 %v669, 100
      %v3846 = vpop.permute.xlu0 %3845
      %3847 = vrot.lane.b32.xlu0 %v670, 100
      %v3848 = vpop.permute.xlu0 %3847
      %3849 = vrot.lane.b32.xlu0 %v671, 100
      %v3850 = vpop.permute.xlu0 %3849
      %3851 = vrot.lane.b32.xlu0 %v672, 100
      %v3852 = vpop.permute.xlu0 %3851
      %3853 = vrot.lane.b32.xlu0 %v673, 100
      %v3854 = vpop.permute.xlu0 %3853
      %3855 = vrot.lane.b32.xlu0 %v674, 100
      %v3856 = vpop.permute.xlu0 %3855
      %3857 = vrot.lane.b32.xlu0 %v675, 100
      %v3858 = vpop.permute.xlu0 %3857
      %3859 = vrot.lane.b32.xlu0 %v676, 36
      %v3860 = vpop.permute.xlu0 %3859
      %3861 = vrot.lane.b32.xlu0 %v677, 36
      %v3862 = vpop.permute.xlu0 %3861
      %3863 = vrot.lane.b32.xlu0 %v678, 36
      %v3864 = vpop.permute.xlu0 %3863
      %3865 = vrot.lane.b32.xlu0 %v679, 36
      %v3866 = vpop.permute.xlu0 %3865
      %3867 = vrot.lane.b32.xlu0 %v680, 36
      %v3868 = vpop.permute.xlu0 %3867
      %3869 = vrot.lane.b32.xlu0 %v681, 36
      %v3870 = vpop.permute.xlu0 %3869
      %3871 = vrot.lane.b32.xlu0 %v682, 36
      %v3872 = vpop.permute.xlu0 %3871
      %3873 = vrot.lane.b32.xlu0 %v683, 36
      %v3874 = vpop.permute.xlu0 %3873
      %v3876 = vsel %vm732, %v3844, 0
      %v3879 = vsel %vm732, %v3846, 0
      %v3882 = vsel %vm732, %v3848, 0
      %v3885 = vsel %vm732, %v3850, 0
      %v3888 = vsel %vm732, %v3852, 0
      %v3891 = vsel %vm732, %v3854, 0
      %v3894 = vsel %vm732, %v3856, 0
      %v3897 = vsel %vm732, %v3858, 0
      %v3900 = vsel %vm732, %v3860, 0
      %v3903 = vsel %vm732, %v3862, 0
      %v3906 = vsel %vm732, %v3864, 0
      %v3909 = vsel %vm732, %v3866, 0
      %v3912 = vsel %vm732, %v3868, 0
      %v3915 = vsel %vm732, %v3870, 0
      %v3918 = vsel %vm732, %v3872, 0
      %v3921 = vsel %vm732, %v3874, 0
      %3923 = vmatprep.subr.bf16.mxu0 0
      %3924 = vmatpush1.bf16.xpose.msra.mxu0 %v3900
      %3925 = vmatprep.subr.bf16.mxu0 0
      %3926 = vmatpush1.bf16.xpose.msra.mxu0 %v3903
      %3927 = vmatprep.subr.bf16.mxu0 0
      %3928 = vmatpush1.bf16.xpose.msra.mxu0 %v3906
      %3929 = vmatprep.subr.bf16.mxu0 0
      %3930 = vmatpush1.bf16.xpose.msra.mxu0 %v3909
      %3931 = vmatprep.subr.bf16.mxu0 0
      %3932 = vmatpush1.bf16.xpose.msra.mxu0 %v3912
      %3933 = vmatprep.subr.bf16.mxu0 0
      %3934 = vmatpush1.bf16.xpose.msra.mxu0 %v3915
      %3935 = vmatprep.subr.bf16.mxu0 0
      %3936 = vmatpush1.bf16.xpose.msra.mxu0 %v3918
      %3937 = vmatprep.subr.bf16.mxu0 0
      %3938 = vmatpush1.bf16.xpose.msra.mxu0 %v3921
      %3939 = vmatprep.subr.bf16.mxu0 0
      %3940 = vmatpush1.bf16.xpose.msra.mxu0 0
      %3941 = vmatprep.subr.bf16.mxu0 0
      %3942 = vmatpush1.bf16.xpose.msra.mxu0 0
      %3943 = vmatprep.subr.bf16.mxu0 0
      %3944 = vmatpush1.bf16.xpose.msra.mxu0 0
      %3945 = vmatprep.subr.bf16.mxu0 0
      %3946 = vmatpush1.bf16.xpose.msra.mxu0 0
      %3947 = vmatprep.subr.bf16.mxu0 0
      %3948 = vmatpush1.bf16.xpose.msra.mxu0 0
      %3949 = vmatprep.subr.bf16.mxu0 0
      %3950 = vmatpush1.bf16.xpose.msra.mxu0 0
      %3951 = vmatprep.subr.bf16.mxu0 0
      %3952 = vmatpush1.bf16.xpose.msra.mxu0 0
      %3953 = vmatprep.subr.bf16.mxu0 0
      %3954 = vmatpush1.bf16.xpose.msra.mxu0 0
      %3955 = vmatprep.mubr.bf16.mxu0 0
      %3956 = vmatmul.mubr.bf16.gmra.mrb[0].mxu0 %v3876
      %v3957 = vpop.f32.mrb[0].mxu0
      %v3958 = vadd.f32 %v692, %v3957
      %v3959 = vpop.f32.mrb[0].mxu0
      %v3960 = vpop.f32.mrb[0].mxu0
      %v3961 = vadd.f32 %v693, %v3960
      %v3962 = vpop.f32.mrb[0].mxu0
      %3963 = vmatprep.mubr.bf16.mxu0 0
      %3964 = vmatmul.mubr.bf16.gmra.mrb[0].mxu0 %v3879
      %v3965 = vpop.f32.mrb[0].mxu0
      %v3966 = vadd.f32 %v694, %v3965
      %v3967 = vpop.f32.mrb[0].mxu0
      %v3968 = vpop.f32.mrb[0].mxu0
      %v3969 = vadd.f32 %v695, %v3968
      %v3970 = vpop.f32.mrb[0].mxu0
      %3971 = vmatprep.mubr.bf16.mxu0 0
      %3972 = vmatmul.mubr.bf16.gmra.mrb[0].mxu0 %v3882
      %v3973 = vpop.f32.mrb[0].mxu0
      %v3974 = vadd.f32 %v696, %v3973
      %v3975 = vpop.f32.mrb[0].mxu0
      %v3976 = vpop.f32.mrb[0].mxu0
      %v3977 = vadd.f32 %v697, %v3976
      %v3978 = vpop.f32.mrb[0].mxu0
      %3979 = vmatprep.mubr.bf16.mxu0 0
      %3980 = vmatmul.mubr.bf16.gmra.mrb[0].mxu0 %v3885
      %v3981 = vpop.f32.mrb[0].mxu0
      %v3982 = vadd.f32 %v698, %v3981
      %v3983 = vpop.f32.mrb[0].mxu0
      %v3984 = vpop.f32.mrb[0].mxu0
      %v3985 = vadd.f32 %v699, %v3984
      %v3986 = vpop.f32.mrb[0].mxu0
      %3987 = vmatprep.mubr.bf16.mxu0 0
      %3988 = vmatmul.mubr.bf16.gmra.mrb[0].mxu0 %v3888
      %v3989 = vpop.f32.mrb[0].mxu0
      %v3990 = vadd.f32 %v700, %v3989
      %v3991 = vpop.f32.mrb[0].mxu0
      %v3992 = vpop.f32.mrb[0].mxu0
      %v3993 = vadd.f32 %v701, %v3992
      %v3994 = vpop.f32.mrb[0].mxu0
      %3995 = vmatprep.mubr.bf16.mxu0 0
      %3996 = vmatmul.mubr.bf16.gmra.mrb[0].mxu0 %v3891
      %v3997 = vpop.f32.mrb[0].mxu0
      %v3998 = vadd.f32 %v702, %v3997
      %v3999 = vpop.f32.mrb[0].mxu0
      %v4000 = vpop.f32.mrb[0].mxu0
      %v4001 = vadd.f32 %v703, %v4000
      %v4002 = vpop.f32.mrb[0].mxu0
      %4003 = vmatprep.mubr.bf16.mxu0 0
      %4004 = vmatmul.mubr.bf16.gmra.mrb[0].mxu0 %v3894
      %v4005 = vpop.f32.mrb[0].mxu0
      %v4006 = vadd.f32 %v704, %v4005
      %v4007 = vpop.f32.mrb[0].mxu0
      %v4008 = vpop.f32.mrb[0].mxu0
      %v4009 = vadd.f32 %v705, %v4008
      %v4010 = vpop.f32.mrb[0].mxu0
      %4011 = vmatprep.mubr.bf16.mxu0 0
      %4012 = vmatmul.mubr.bf16.gmra.mrb[0].mxu0 %v3897
      %v4013 = vpop.f32.mrb[0].mxu0
      %v4014 = vadd.f32 %v706, %v4013
      %v4015 = vpop.f32.mrb[0].mxu0
      %v4016 = vpop.f32.mrb[0].mxu0
      %v4017 = vadd.f32 %v707, %v4016
      %v4018 = vpop.f32.mrb[0].mxu0
      %4019 = vdwg.mxu0
      %4020 = vmax.xlane.f32.xlu0 %v3958
      %v4021 = vpop.xlane.xlu0 %4020
      %4022 = vmax.xlane.f32.xlu0 %v3961
      %v4023 = vpop.xlane.xlu0 %4022
      %4024 = vmax.xlane.f32.xlu0 %v3966
      %v4025 = vpop.xlane.xlu0 %4024
      %4026 = vmax.xlane.f32.xlu0 %v3969
      %v4027 = vpop.xlane.xlu0 %4026
      %4028 = vmax.xlane.f32.xlu0 %v3974
      %v4029 = vpop.xlane.xlu0 %4028
      %4030 = vmax.xlane.f32.xlu0 %v3977
      %v4031 = vpop.xlane.xlu0 %4030
      %4032 = vmax.xlane.f32.xlu0 %v3982
      %v4033 = vpop.xlane.xlu0 %4032
      %4034 = vmax.xlane.f32.xlu0 %v3985
      %v4035 = vpop.xlane.xlu0 %4034
      %4036 = vmax.xlane.f32.xlu0 %v3990
      %v4037 = vpop.xlane.xlu0 %4036
      %4038 = vmax.xlane.f32.xlu0 %v3993
      %v4039 = vpop.xlane.xlu0 %4038
      %4040 = vmax.xlane.f32.xlu0 %v3998
      %v4041 = vpop.xlane.xlu0 %4040
      %4042 = vmax.xlane.f32.xlu0 %v4001
      %v4043 = vpop.xlane.xlu0 %4042
      %4044 = vmax.xlane.f32.xlu0 %v4006
      %v4045 = vpop.xlane.xlu0 %4044
      %4046 = vmax.xlane.f32.xlu0 %v4009
      %v4047 = vpop.xlane.xlu0 %4046
      %4048 = vmax.xlane.f32.xlu0 %v4014
      %v4049 = vpop.xlane.xlu0 %4048
      %4050 = vmax.xlane.f32.xlu0 %v4017
      %v4051 = vpop.xlane.xlu0 %4050
      %v4052 = vsub.f32 %v3958, %v4021
      %v4053 = vsub.f32 %v3961, %v4023
      %v4054 = vsub.f32 %v3966, %v4025
      %v4055 = vsub.f32 %v3969, %v4027
      %v4056 = vsub.f32 %v3974, %v4029
      %v4057 = vsub.f32 %v3977, %v4031
      %v4058 = vsub.f32 %v3982, %v4033
      %v4059 = vsub.f32 %v3985, %v4035
      %v4060 = vsub.f32 %v3990, %v4037
      %v4061 = vsub.f32 %v3993, %v4039
      %v4062 = vsub.f32 %v3998, %v4041
      %v4063 = vsub.f32 %v4001, %v4043
      %v4064 = vsub.f32 %v4006, %v4045
      %v4065 = vsub.f32 %v4009, %v4047
      %v4066 = vsub.f32 %v4014, %v4049
      %v4067 = vsub.f32 %v4017, %v4051
      %v4068 = vmul.f32 %v4052, 1.442695
      %v4069 = vpow.pop %v4068
      %v4070 = vmul.f32 %v4053, 1.442695
      %v4071 = vpow.pop %v4070
      %v4072 = vmul.f32 %v4054, 1.442695
      %v4073 = vpow.pop %v4072
      %v4074 = vmul.f32 %v4055, 1.442695
      %v4075 = vpow.pop %v4074
      %v4076 = vmul.f32 %v4056, 1.442695
      %v4077 = vpow.pop %v4076
      %v4078 = vmul.f32 %v4057, 1.442695
      %v4079 = vpow.pop %v4078
      %v4080 = vmul.f32 %v4058, 1.442695
      %v4081 = vpow.pop %v4080
      %v4082 = vmul.f32 %v4059, 1.442695
      %v4083 = vpow.pop %v4082
      %v4084 = vmul.f32 %v4060, 1.442695
      %v4085 = vpow.pop %v4084
      %v4086 = vmul.f32 %v4061, 1.442695
      %v4087 = vpow.pop %v4086
      %v4088 = vmul.f32 %v4062, 1.442695
      %v4089 = vpow.pop %v4088
      %v4090 = vmul.f32 %v4063, 1.442695
      %v4091 = vpow.pop %v4090
      %v4092 = vmul.f32 %v4064, 1.442695
      %v4093 = vpow.pop %v4092
      %v4094 = vmul.f32 %v4065, 1.442695
      %v4095 = vpow.pop %v4094
      %v4096 = vmul.f32 %v4066, 1.442695
      %v4097 = vpow.pop %v4096
      %v4098 = vmul.f32 %v4067, 1.442695
      %v4099 = vpow.pop %v4098
      %4100 = vadd.xlane.f32.xlu0 %v4069
      %v4101 = vpop.xlane.xlu0 %4100
      %4102 = vadd.xlane.f32.xlu0 %v4071
      %v4103 = vpop.xlane.xlu0 %4102
      %4104 = vadd.xlane.f32.xlu0 %v4073
      %v4105 = vpop.xlane.xlu0 %4104
      %4106 = vadd.xlane.f32.xlu0 %v4075
      %v4107 = vpop.xlane.xlu0 %4106
      %4108 = vadd.xlane.f32.xlu0 %v4077
      %v4109 = vpop.xlane.xlu0 %4108
      %4110 = vadd.xlane.f32.xlu0 %v4079
      %v4111 = vpop.xlane.xlu0 %4110
      %4112 = vadd.xlane.f32.xlu0 %v4081
      %v4113 = vpop.xlane.xlu0 %4112
      %4114 = vadd.xlane.f32.xlu0 %v4083
      %v4115 = vpop.xlane.xlu0 %4114
      %4116 = vadd.xlane.f32.xlu0 %v4085
      %v4117 = vpop.xlane.xlu0 %4116
      %4118 = vadd.xlane.f32.xlu0 %v4087
      %v4119 = vpop.xlane.xlu0 %4118
      %4120 = vadd.xlane.f32.xlu0 %v4089
      %v4121 = vpop.xlane.xlu0 %4120
      %4122 = vadd.xlane.f32.xlu0 %v4091
      %v4123 = vpop.xlane.xlu0 %4122
      %4124 = vadd.xlane.f32.xlu0 %v4093
      %v4125 = vpop.xlane.xlu0 %4124
      %4126 = vadd.xlane.f32.xlu0 %v4095
      %v4127 = vpop.xlane.xlu0 %4126
      %4128 = vadd.xlane.f32.xlu0 %v4097
      %v4129 = vpop.xlane.xlu0 %4128
      %4130 = vadd.xlane.f32.xlu0 %v4099
      %v4131 = vpop.xlane.xlu0 %4130
      %v4132 = vrcp.pop %v4101
      %v4133 = vrcp.pop %v4103
      %v4134 = vrcp.pop %v4105
      %v4135 = vrcp.pop %v4107
      %v4136 = vrcp.pop %v4109
      %v4137 = vrcp.pop %v4111
      %v4138 = vrcp.pop %v4113
      %v4139 = vrcp.pop %v4115
      %v4140 = vrcp.pop %v4117
      %v4141 = vrcp.pop %v4119
      %v4142 = vrcp.pop %v4121
      %v4143 = vrcp.pop %v4123
      %v4144 = vrcp.pop %v4125
      %v4145 = vrcp.pop %v4127
      %v4146 = vrcp.pop %v4129
      %v4147 = vrcp.pop %v4131
      %v4148 = vmul.f32 %v4069, %v4132
      %v4149 = vmul.f32 %v4071, %v4133
      %v4150 = vmul.f32 %v4073, %v4134
      %v4151 = vmul.f32 %v4075, %v4135
      %v4152 = vmul.f32 %v4077, %v4136
      %v4153 = vmul.f32 %v4079, %v4137
      %v4154 = vmul.f32 %v4081, %v4138
      %v4155 = vmul.f32 %v4083, %v4139
      %v4156 = vmul.f32 %v4085, %v4140
      %v4157 = vmul.f32 %v4087, %v4141
      %v4158 = vmul.f32 %v4089, %v4142
      %v4159 = vmul.f32 %v4091, %v4143
      %v4160 = vmul.f32 %v4093, %v4144
      %v4161 = vmul.f32 %v4095, %v4145
      %v4162 = vmul.f32 %v4097, %v4146
      %v4163 = vmul.f32 %v4099, %v4147
      %v4164 = vpack.c.bf16 %v4149, %v4148
      %v4165 = vpack.c.bf16 %v4151, %v4150
      %v4166 = vpack.c.bf16 %v4153, %v4152
      %v4167 = vpack.c.bf16 %v4155, %v4154
      %v4168 = vpack.c.bf16 %v4157, %v4156
      %v4169 = vpack.c.bf16 %v4159, %v4158
      %v4170 = vpack.c.bf16 %v4161, %v4160
      %v4171 = vpack.c.bf16 %v4163, %v4162
      %4172 = vrot.lane.b32.xlu0 %v684, 100
      %v4173 = vpop.permute.xlu0 %4172
      %4174 = vrot.lane.b32.xlu0 %v685, 100
      %v4175 = vpop.permute.xlu0 %4174
      %4176 = vrot.lane.b32.xlu0 %v686, 100
      %v4177 = vpop.permute.xlu0 %4176
      %4178 = vrot.lane.b32.xlu0 %v687, 100
      %v4179 = vpop.permute.xlu0 %4178
      %4180 = vrot.lane.b32.xlu0 %v688, 100
      %v4181 = vpop.permute.xlu0 %4180
      %4182 = vrot.lane.b32.xlu0 %v689, 100
      %v4183 = vpop.permute.xlu0 %4182
      %4184 = vrot.lane.b32.xlu0 %v690, 100
      %v4185 = vpop.permute.xlu0 %4184
      %4186 = vrot.lane.b32.xlu0 %v691, 100
      %v4187 = vpop.permute.xlu0 %4186
      %4196 = vmatprep.subr.bf16.mxu0 0
      %4197 = vmatpush1.bf16.msra.mxu0 %v4173
      %4198 = vmatprep.subr.bf16.mxu0 0
      %4199 = vmatpush1.bf16.msra.mxu0 %v4175
      %4200 = vmatprep.subr.bf16.mxu0 0
      %4201 = vmatpush1.bf16.msra.mxu0 %v4177
      %4202 = vmatprep.subr.bf16.mxu0 0
      %4203 = vmatpush1.bf16.msra.mxu0 %v4179
      %4204 = vmatprep.subr.bf16.mxu0 0
      %4205 = vmatpush1.bf16.msra.mxu0 %v4181
      %4206 = vmatprep.subr.bf16.mxu0 0
      %4207 = vmatpush1.bf16.msra.mxu0 %v4183
      %4208 = vmatprep.subr.bf16.mxu0 0
      %4209 = vmatpush1.bf16.msra.mxu0 %v4185
      %4210 = vmatprep.subr.bf16.mxu0 0
      %4211 = vmatpush1.bf16.msra.mxu0 %v4187
      %4212 = vmatprep.subr.bf16.mxu0 0
      %4213 = vmatpush1.bf16.msra.mxu0 0
      %4214 = vmatprep.subr.bf16.mxu0 0
      %4215 = vmatpush1.bf16.msra.mxu0 0
      %4216 = vmatprep.subr.bf16.mxu0 0
      %4217 = vmatpush1.bf16.msra.mxu0 0
      %4218 = vmatprep.subr.bf16.mxu0 0
      %4219 = vmatpush1.bf16.msra.mxu0 0
      %4220 = vmatprep.subr.bf16.mxu0 0
      %4221 = vmatpush1.bf16.msra.mxu0 0
      %4222 = vmatprep.subr.bf16.mxu0 0
      %4223 = vmatpush1.bf16.msra.mxu0 0
      %4224 = vmatprep.subr.bf16.mxu0 0
      %4225 = vmatpush1.bf16.msra.mxu0 0
      %4226 = vmatprep.subr.bf16.mxu0 0
      %4227 = vmatpush1.bf16.msra.mxu0 0
      %4228 = vmatprep.mubr.bf16.mxu0 0
      %4229 = vmatmul.mubr.bf16.gmra.mrb[0].mxu0 %v4164
      %v4230 = vpop.f32.mrb[0].mxu0
      %v4231 = vadd.f32 0.0, %v4230
      %v4232 = vpop.f32.mrb[0].mxu0
      %v4233 = vpop.f32.mrb[0].mxu0
      %v4234 = vadd.f32 0.0, %v4233
      %v4235 = vpop.f32.mrb[0].mxu0
      %4236 = vmatprep.mubr.bf16.mxu0 0
      %4237 = vmatmul.mubr.bf16.gmra.mrb[0].mxu0 %v4165
      %v4238 = vpop.f32.mrb[0].mxu0
      %v4239 = vadd.f32 0.0, %v4238
      %v4240 = vpop.f32.mrb[0].mxu0
      %v4241 = vpop.f32.mrb[0].mxu0
      %v4242 = vadd.f32 0.0, %v4241
      %v4243 = vpop.f32.mrb[0].mxu0
      %4244 = vmatprep.mubr.bf16.mxu0 0
      %4245 = vmatmul.mubr.bf16.gmra.mrb[0].mxu0 %v4166
      %v4246 = vpop.f32.mrb[0].mxu0
      %v4247 = vadd.f32 0.0, %v4246
      %v4248 = vpop.f32.mrb[0].mxu0
      %v4249 = vpop.f32.mrb[0].mxu0
      %v4250 = vadd.f32 0.0, %v4249
      %v4251 = vpop.f32.mrb[0].mxu0
      %4252 = vmatprep.mubr.bf16.mxu0 0
      %4253 = vmatmul.mubr.bf16.gmra.mrb[0].mxu0 %v4167
      %v4254 = vpop.f32.mrb[0].mxu0
      %v4255 = vadd.f32 0.0, %v4254
      %v4256 = vpop.f32.mrb[0].mxu0
      %v4257 = vpop.f32.mrb[0].mxu0
      %v4258 = vadd.f32 0.0, %v4257
      %v4259 = vpop.f32.mrb[0].mxu0
      %4260 = vmatprep.mubr.bf16.mxu0 0
      %4261 = vmatmul.mubr.bf16.gmra.mrb[0].mxu0 %v4168
      %v4262 = vpop.f32.mrb[0].mxu0
      %v4263 = vadd.f32 0.0, %v4262
      %v4264 = vpop.f32.mrb[0].mxu0
      %v4265 = vpop.f32.mrb[0].mxu0
      %v4266 = vadd.f32 0.0, %v4265
      %v4267 = vpop.f32.mrb[0].mxu0
      %4268 = vmatprep.mubr.bf16.mxu0 0
      %4269 = vmatmul.mubr.bf16.gmra.mrb[0].mxu0 %v4169
      %v4270 = vpop.f32.mrb[0].mxu0
      %v4271 = vadd.f32 0.0, %v4270
      %v4272 = vpop.f32.mrb[0].mxu0
      %v4273 = vpop.f32.mrb[0].mxu0
      %v4274 = vadd.f32 0.0, %v4273
      %v4275 = vpop.f32.mrb[0].mxu0
      %4276 = vmatprep.mubr.bf16.mxu0 0
      %4277 = vmatmul.mubr.bf16.gmra.mrb[0].mxu0 %v4170
      %v4278 = vpop.f32.mrb[0].mxu0
      %v4279 = vadd.f32 0.0, %v4278
      %v4280 = vpop.f32.mrb[0].mxu0
      %v4281 = vpop.f32.mrb[0].mxu0
      %v4282 = vadd.f32 0.0, %v4281
      %v4283 = vpop.f32.mrb[0].mxu0
      %4284 = vmatprep.mubr.bf16.mxu0 0
      %4285 = vmatmul.mubr.bf16.gmra.mrb[0].mxu0 %v4171
      %v4286 = vpop.f32.mrb[0].mxu0
      %v4287 = vadd.f32 0.0, %v4286
      %v4288 = vpop.f32.mrb[0].mxu0
      %v4289 = vpop.f32.mrb[0].mxu0
      %v4290 = vadd.f32 0.0, %v4289
      %v4291 = vpop.f32.mrb[0].mxu0
      %4292 = vdwg.mxu0
      %4293 = vrot.lane.b32.xlu0 %v668, 96
      %v4294 = vpop.permute.xlu0 %4293
      %4295 = vrot.lane.b32.xlu0 %v669, 96
      %v4296 = vpop.permute.xlu0 %4295
      %4297 = vrot.lane.b32.xlu0 %v670, 96
      %v4298 = vpop.permute.xlu0 %4297
      %4299 = vrot.lane.b32.xlu0 %v671, 96
      %v4300 = vpop.permute.xlu0 %4299
      %4301 = vrot.lane.b32.xlu0 %v672, 96
      %v4302 = vpop.permute.xlu0 %4301
      %4303 = vrot.lane.b32.xlu0 %v673, 96
      %v4304 = vpop.permute.xlu0 %4303
      %4305 = vrot.lane.b32.xlu0 %v674, 96
      %v4306 = vpop.permute.xlu0 %4305
      %4307 = vrot.lane.b32.xlu0 %v675, 96
      %v4308 = vpop.permute.xlu0 %4307
      %4309 = vrot.lane.b32.xlu0 %v676, 32
      %v4310 = vpop.permute.xlu0 %4309
      %4311 = vrot.lane.b32.xlu0 %v677, 32
      %v4312 = vpop.permute.xlu0 %4311
      %4313 = vrot.lane.b32.xlu0 %v678, 32
      %v4314 = vpop.permute.xlu0 %4313
      %4315 = vrot.lane.b32.xlu0 %v679, 32
      %v4316 = vpop.permute.xlu0 %4315
      %4317 = vrot.lane.b32.xlu0 %v680, 32
      %v4318 = vpop.permute.xlu0 %4317
      %4319 = vrot.lane.b32.xlu0 %v681, 32
      %v4320 = vpop.permute.xlu0 %4319
      %4321 = vrot.lane.b32.xlu0 %v682, 32
      %v4322 = vpop.permute.xlu0 %4321
      %4323 = vrot.lane.b32.xlu0 %v683, 32
      %v4324 = vpop.permute.xlu0 %4323
      %v4326 = vsel %vm732, %v4294, 0
      %v4329 = vsel %vm732, %v4296, 0
      %v4332 = vsel %vm732, %v4298, 0
      %v4335 = vsel %vm732, %v4300, 0
      %v4338 = vsel %vm732, %v4302, 0
      %v4341 = vsel %vm732, %v4304, 0
      %v4344 = vsel %vm732, %v4306, 0
      %v4347 = vsel %vm732, %v4308, 0
      %v4350 = vsel %vm732, %v4310, 0
      %v4353 = vsel %vm732, %v4312, 0
      %v4356 = vsel %vm732, %v4314, 0
      %v4359 = vsel %vm732, %v4316, 0
      %v4362 = vsel %vm732, %v4318, 0
      %v4365 = vsel %vm732, %v4320, 0
      %v4368 = vsel %vm732, %v4322, 0
      %v4371 = vsel %vm732, %v4324, 0
      %4373 = vmatprep.subr.bf16.mxu0 0
      %4374 = vmatpush1.bf16.xpose.msra.mxu0 %v4350
      %4375 = vmatprep.subr.bf16.mxu0 0
      %4376 = vmatpush1.bf16.xpose.msra.mxu0 %v4353
      %4377 = vmatprep.subr.bf16.mxu0 0
      %4378 = vmatpush1.bf16.xpose.msra.mxu0 %v4356
      %4379 = vmatprep.subr.bf16.mxu0 0
      %4380 = vmatpush1.bf16.xpose.msra.mxu0 %v4359
      %4381 = vmatprep.subr.bf16.mxu0 0
      %4382 = vmatpush1.bf16.xpose.msra.mxu0 %v4362
      %4383 = vmatprep.subr.bf16.mxu0 0
      %4384 = vmatpush1.bf16.xpose.msra.mxu0 %v4365
      %4385 = vmatprep.subr.bf16.mxu0 0
      %4386 = vmatpush1.bf16.xpose.msra.mxu0 %v4368
      %4387 = vmatprep.subr.bf16.mxu0 0
      %4388 = vmatpush1.bf16.xpose.msra.mxu0 %v4371
      %4389 = vmatprep.subr.bf16.mxu0 0
      %4390 = vmatpush1.bf16.xpose.msra.mxu0 0
      %4391 = vmatprep.subr.bf16.mxu0 0
      %4392 = vmatpush1.bf16.xpose.msra.mxu0 0
      %4393 = vmatprep.subr.bf16.mxu0 0
      %4394 = vmatpush1.bf16.xpose.msra.mxu0 0
      %4395 = vmatprep.subr.bf16.mxu0 0
      %4396 = vmatpush1.bf16.xpose.msra.mxu0 0
      %4397 = vmatprep.subr.bf16.mxu0 0
      %4398 = vmatpush1.bf16.xpose.msra.mxu0 0
      %4399 = vmatprep.subr.bf16.mxu0 0
      %4400 = vmatpush1.bf16.xpose.msra.mxu0 0
      %4401 = vmatprep.subr.bf16.mxu0 0
      %4402 = vmatpush1.bf16.xpose.msra.mxu0 0
      %4403 = vmatprep.subr.bf16.mxu0 0
      %4404 = vmatpush1.bf16.xpose.msra.mxu0 0
      %4405 = vmatprep.mubr.bf16.mxu0 0
      %4406 = vmatmul.mubr.bf16.gmra.mrb[0].mxu0 %v4326
      %v4407 = vpop.f32.mrb[0].mxu0
      %v4408 = vadd.f32 %v692, %v4407
      %v4409 = vpop.f32.mrb[0].mxu0
      %v4410 = vpop.f32.mrb[0].mxu0
      %v4411 = vadd.f32 %v693, %v4410
      %v4412 = vpop.f32.mrb[0].mxu0
      %4413 = vmatprep.mubr.bf16.mxu0 0
      %4414 = vmatmul.mubr.bf16.gmra.mrb[0].mxu0 %v4329
      %v4415 = vpop.f32.mrb[0].mxu0
      %v4416 = vadd.f32 %v694, %v4415
      %v4417 = vpop.f32.mrb[0].mxu0
      %v4418 = vpop.f32.mrb[0].mxu0
      %v4419 = vadd.f32 %v695, %v4418
      %v4420 = vpop.f32.mrb[0].mxu0
      %4421 = vmatprep.mubr.bf16.mxu0 0
      %4422 = vmatmul.mubr.bf16.gmra.mrb[0].mxu0 %v4332
      %v4423 = vpop.f32.mrb[0].mxu0
      %v4424 = vadd.f32 %v696, %v4423
      %v4425 = vpop.f32.mrb[0].mxu0
      %v4426 = vpop.f32.mrb[0].mxu0
      %v4427 = vadd.f32 %v697, %v4426
      %v4428 = vpop.f32.mrb[0].mxu0
      %4429 = vmatprep.mubr.bf16.mxu0 0
      %4430 = vmatmul.mubr.bf16.gmra.mrb[0].mxu0 %v4335
      %v4431 = vpop.f32.mrb[0].mxu0
      %v4432 = vadd.f32 %v698, %v4431
      %v4433 = vpop.f32.mrb[0].mxu0
      %v4434 = vpop.f32.mrb[0].mxu0
      %v4435 = vadd.f32 %v699, %v4434
      %v4436 = vpop.f32.mrb[0].mxu0
      %4437 = vmatprep.mubr.bf16.mxu0 0
      %4438 = vmatmul.mubr.bf16.gmra.mrb[0].mxu0 %v4338
      %v4439 = vpop.f32.mrb[0].mxu0
      %v4440 = vadd.f32 %v700, %v4439
      %v4441 = vpop.f32.mrb[0].mxu0
      %v4442 = vpop.f32.mrb[0].mxu0
      %v4443 = vadd.f32 %v701, %v4442
      %v4444 = vpop.f32.mrb[0].mxu0
      %4445 = vmatprep.mubr.bf16.mxu0 0
      %4446 = vmatmul.mubr.bf16.gmra.mrb[0].mxu0 %v4341
      %v4447 = vpop.f32.mrb[0].mxu0
      %v4448 = vadd.f32 %v702, %v4447
      %v4449 = vpop.f32.mrb[0].mxu0
      %v4450 = vpop.f32.mrb[0].mxu0
      %v4451 = vadd.f32 %v703, %v4450
      %v4452 = vpop.f32.mrb[0].mxu0
      %4453 = vmatprep.mubr.bf16.mxu0 0
      %4454 = vmatmul.mubr.bf16.gmra.mrb[0].mxu0 %v4344
      %v4455 = vpop.f32.mrb[0].mxu0
      %v4456 = vadd.f32 %v704, %v4455
      %v4457 = vpop.f32.mrb[0].mxu0
      %v4458 = vpop.f32.mrb[0].mxu0
      %v4459 = vadd.f32 %v705, %v4458
      %v4460 = vpop.f32.mrb[0].mxu0
      %4461 = vmatprep.mubr.bf16.mxu0 0
      %4462 = vmatmul.mubr.bf16.gmra.mrb[0].mxu0 %v4347
      %v4463 = vpop.f32.mrb[0].mxu0
      %v4464 = vadd.f32 %v706, %v4463
      %v4465 = vpop.f32.mrb[0].mxu0
      %v4466 = vpop.f32.mrb[0].mxu0
      %v4467 = vadd.f32 %v707, %v4466
      %v4468 = vpop.f32.mrb[0].mxu0
      %4469 = vdwg.mxu0
      %4470 = vmax.xlane.f32.xlu0 %v4408
      %v4471 = vpop.xlane.xlu0 %4470
      %4472 = vmax.xlane.f32.xlu0 %v4411
      %v4473 = vpop.xlane.xlu0 %4472
      %4474 = vmax.xlane.f32.xlu0 %v4416
      %v4475 = vpop.xlane.xlu0 %4474
      %4476 = vmax.xlane.f32.xlu0 %v4419
      %v4477 = vpop.xlane.xlu0 %4476
      %4478 = vmax.xlane.f32.xlu0 %v4424
      %v4479 = vpop.xlane.xlu0 %4478
      %4480 = vmax.xlane.f32.xlu0 %v4427
      %v4481 = vpop.xlane.xlu0 %4480
      %4482 = vmax.xlane.f32.xlu0 %v4432
      %v4483 = vpop.xlane.xlu0 %4482
      %4484 = vmax.xlane.f32.xlu0 %v4435
      %v4485 = vpop.xlane.xlu0 %4484
      %4486 = vmax.xlane.f32.xlu0 %v4440
      %v4487 = vpop.xlane.xlu0 %4486
      %4488 = vmax.xlane.f32.xlu0 %v4443
      %v4489 = vpop.xlane.xlu0 %4488
      %4490 = vmax.xlane.f32.xlu0 %v4448
      %v4491 = vpop.xlane.xlu0 %4490
      %4492 = vmax.xlane.f32.xlu0 %v4451
      %v4493 = vpop.xlane.xlu0 %4492
      %4494 = vmax.xlane.f32.xlu0 %v4456
      %v4495 = vpop.xlane.xlu0 %4494
      %4496 = vmax.xlane.f32.xlu0 %v4459
      %v4497 = vpop.xlane.xlu0 %4496
      %4498 = vmax.xlane.f32.xlu0 %v4464
      %v4499 = vpop.xlane.xlu0 %4498
      %4500 = vmax.xlane.f32.xlu0 %v4467
      %v4501 = vpop.xlane.xlu0 %4500
      %v4502 = vsub.f32 %v4408, %v4471
      %v4503 = vsub.f32 %v4411, %v4473
      %v4504 = vsub.f32 %v4416, %v4475
      %v4505 = vsub.f32 %v4419, %v4477
      %v4506 = vsub.f32 %v4424, %v4479
      %v4507 = vsub.f32 %v4427, %v4481
      %v4508 = vsub.f32 %v4432, %v4483
      %v4509 = vsub.f32 %v4435, %v4485
      %v4510 = vsub.f32 %v4440, %v4487
      %v4511 = vsub.f32 %v4443, %v4489
      %v4512 = vsub.f32 %v4448, %v4491
      %v4513 = vsub.f32 %v4451, %v4493
      %v4514 = vsub.f32 %v4456, %v4495
      %v4515 = vsub.f32 %v4459, %v4497
      %v4516 = vsub.f32 %v4464, %v4499
      %v4517 = vsub.f32 %v4467, %v4501
      %v4518 = vmul.f32 %v4502, 1.442695
      %v4519 = vpow.pop %v4518
      %v4520 = vmul.f32 %v4503, 1.442695
      %v4521 = vpow.pop %v4520
      %v4522 = vmul.f32 %v4504, 1.442695
      %v4523 = vpow.pop %v4522
      %v4524 = vmul.f32 %v4505, 1.442695
      %v4525 = vpow.pop %v4524
      %v4526 = vmul.f32 %v4506, 1.442695
      %v4527 = vpow.pop %v4526
      %v4528 = vmul.f32 %v4507, 1.442695
      %v4529 = vpow.pop %v4528
      %v4530 = vmul.f32 %v4508, 1.442695
      %v4531 = vpow.pop %v4530
      %v4532 = vmul.f32 %v4509, 1.442695
      %v4533 = vpow.pop %v4532
      %v4534 = vmul.f32 %v4510, 1.442695
      %v4535 = vpow.pop %v4534
      %v4536 = vmul.f32 %v4511, 1.442695
      %v4537 = vpow.pop %v4536
      %v4538 = vmul.f32 %v4512, 1.442695
      %v4539 = vpow.pop %v4538
      %v4540 = vmul.f32 %v4513, 1.442695
      %v4541 = vpow.pop %v4540
      %v4542 = vmul.f32 %v4514, 1.442695
      %v4543 = vpow.pop %v4542
      %v4544 = vmul.f32 %v4515, 1.442695
      %v4545 = vpow.pop %v4544
      %v4546 = vmul.f32 %v4516, 1.442695
      %v4547 = vpow.pop %v4546
      %v4548 = vmul.f32 %v4517, 1.442695
      %v4549 = vpow.pop %v4548
      %4550 = vadd.xlane.f32.xlu0 %v4519
      %v4551 = vpop.xlane.xlu0 %4550
      %4552 = vadd.xlane.f32.xlu0 %v4521
      %v4553 = vpop.xlane.xlu0 %4552
      %4554 = vadd.xlane.f32.xlu0 %v4523
      %v4555 = vpop.xlane.xlu0 %4554
      %4556 = vadd.xlane.f32.xlu0 %v4525
      %v4557 = vpop.xlane.xlu0 %4556
      %4558 = vadd.xlane.f32.xlu0 %v4527
      %v4559 = vpop.xlane.xlu0 %4558
      %4560 = vadd.xlane.f32.xlu0 %v4529
      %v4561 = vpop.xlane.xlu0 %4560
      %4562 = vadd.xlane.f32.xlu0 %v4531
      %v4563 = vpop.xlane.xlu0 %4562
      %4564 = vadd.xlane.f32.xlu0 %v4533
      %v4565 = vpop.xlane.xlu0 %4564
      %4566 = vadd.xlane.f32.xlu0 %v4535
      %v4567 = vpop.xlane.xlu0 %4566
      %4568 = vadd.xlane.f32.xlu0 %v4537
      %v4569 = vpop.xlane.xlu0 %4568
      %4570 = vadd.xlane.f32.xlu0 %v4539
      %v4571 = vpop.xlane.xlu0 %4570
      %4572 = vadd.xlane.f32.xlu0 %v4541
      %v4573 = vpop.xlane.xlu0 %4572
      %4574 = vadd.xlane.f32.xlu0 %v4543
      %v4575 = vpop.xlane.xlu0 %4574
      %4576 = vadd.xlane.f32.xlu0 %v4545
      %v4577 = vpop.xlane.xlu0 %4576
      %4578 = vadd.xlane.f32.xlu0 %v4547
      %v4579 = vpop.xlane.xlu0 %4578
      %4580 = vadd.xlane.f32.xlu0 %v4549
      %v4581 = vpop.xlane.xlu0 %4580
      %v4582 = vrcp.pop %v4551
      %v4583 = vrcp.pop %v4553
      %v4584 = vrcp.pop %v4555
      %v4585 = vrcp.pop %v4557
      %v4586 = vrcp.pop %v4559
      %v4587 = vrcp.pop %v4561
      %v4588 = vrcp.pop %v4563
      %v4589 = vrcp.pop %v4565
      %v4590 = vrcp.pop %v4567
      %v4591 = vrcp.pop %v4569
      %v4592 = vrcp.pop %v4571
      %v4593 = vrcp.pop %v4573
      %v4594 = vrcp.pop %v4575
      %v4595 = vrcp.pop %v4577
      %v4596 = vrcp.pop %v4579
      %v4597 = vrcp.pop %v4581
      %v4598 = vmul.f32 %v4519, %v4582
      %v4599 = vmul.f32 %v4521, %v4583
      %v4600 = vmul.f32 %v4523, %v4584
      %v4601 = vmul.f32 %v4525, %v4585
      %v4602 = vmul.f32 %v4527, %v4586
      %v4603 = vmul.f32 %v4529, %v4587
      %v4604 = vmul.f32 %v4531, %v4588
      %v4605 = vmul.f32 %v4533, %v4589
      %v4606 = vmul.f32 %v4535, %v4590
      %v4607 = vmul.f32 %v4537, %v4591
      %v4608 = vmul.f32 %v4539, %v4592
      %v4609 = vmul.f32 %v4541, %v4593
      %v4610 = vmul.f32 %v4543, %v4594
      %v4611 = vmul.f32 %v4545, %v4595
      %v4612 = vmul.f32 %v4547, %v4596
      %v4613 = vmul.f32 %v4549, %v4597
      %v4614 = vpack.c.bf16 %v4599, %v4598
      %v4615 = vpack.c.bf16 %v4601, %v4600
      %v4616 = vpack.c.bf16 %v4603, %v4602
      %v4617 = vpack.c.bf16 %v4605, %v4604
      %v4618 = vpack.c.bf16 %v4607, %v4606
      %v4619 = vpack.c.bf16 %v4609, %v4608
      %v4620 = vpack.c.bf16 %v4611, %v4610
      %v4621 = vpack.c.bf16 %v4613, %v4612
      %4622 = vrot.lane.b32.xlu0 %v684, 96
      %v4623 = vpop.permute.xlu0 %4622
      %4624 = vrot.lane.b32.xlu0 %v685, 96
      %v4625 = vpop.permute.xlu0 %4624
      %4626 = vrot.lane.b32.xlu0 %v686, 96
      %v4627 = vpop.permute.xlu0 %4626
      %4628 = vrot.lane.b32.xlu0 %v687, 96
      %v4629 = vpop.permute.xlu0 %4628
      %4630 = vrot.lane.b32.xlu0 %v688, 96
      %v4631 = vpop.permute.xlu0 %4630
      %4632 = vrot.lane.b32.xlu0 %v689, 96
      %v4633 = vpop.permute.xlu0 %4632
      %4634 = vrot.lane.b32.xlu0 %v690, 96
      %v4635 = vpop.permute.xlu0 %4634
      %4636 = vrot.lane.b32.xlu0 %v691, 96
      %v4637 = vpop.permute.xlu0 %4636
      %4646 = vmatprep.subr.bf16.mxu0 0
      %4647 = vmatpush1.bf16.msra.mxu0 %v4623
      %4648 = vmatprep.subr.bf16.mxu0 0
      %4649 = vmatpush1.bf16.msra.mxu0 %v4625
      %4650 = vmatprep.subr.bf16.mxu0 0
      %4651 = vmatpush1.bf16.msra.mxu0 %v4627
      %4652 = vmatprep.subr.bf16.mxu0 0
      %4653 = vmatpush1.bf16.msra.mxu0 %v4629
      %4654 = vmatprep.subr.bf16.mxu0 0
      %4655 = vmatpush1.bf16.msra.mxu0 %v4631
      %4656 = vmatprep.subr.bf16.mxu0 0
      %4657 = vmatpush1.bf16.msra.mxu0 %v4633
      %4658 = vmatprep.subr.bf16.mxu0 0
      %4659 = vmatpush1.bf16.msra.mxu0 %v4635
      %4660 = vmatprep.subr.bf16.mxu0 0
      %4661 = vmatpush1.bf16.msra.mxu0 %v4637
      %4662 = vmatprep.subr.bf16.mxu0 0
      %4663 = vmatpush1.bf16.msra.mxu0 0
      %4664 = vmatprep.subr.bf16.mxu0 0
      %4665 = vmatpush1.bf16.msra.mxu0 0
      %4666 = vmatprep.subr.bf16.mxu0 0
      %4667 = vmatpush1.bf16.msra.mxu0 0
      %4668 = vmatprep.subr.bf16.mxu0 0
      %4669 = vmatpush1.bf16.msra.mxu0 0
      %4670 = vmatprep.subr.bf16.mxu0 0
      %4671 = vmatpush1.bf16.msra.mxu0 0
      %4672 = vmatprep.subr.bf16.mxu0 0
      %4673 = vmatpush1.bf16.msra.mxu0 0
      %4674 = vmatprep.subr.bf16.mxu0 0
      %4675 = vmatpush1.bf16.msra.mxu0 0
      %4676 = vmatprep.subr.bf16.mxu0 0
      %4677 = vmatpush1.bf16.msra.mxu0 0
      %4678 = vmatprep.mubr.bf16.mxu0 0
      %4679 = vmatmul.mubr.bf16.gmra.mrb[0].mxu0 %v4614
      %v4680 = vpop.f32.mrb[0].mxu0
      %v4681 = vadd.f32 0.0, %v4680
      %v4682 = vpop.f32.mrb[0].mxu0
      %v4683 = vpop.f32.mrb[0].mxu0
      %v4684 = vadd.f32 0.0, %v4683
      %v4685 = vpop.f32.mrb[0].mxu0
      %4686 = vmatprep.mubr.bf16.mxu0 0
      %4687 = vmatmul.mubr.bf16.gmra.mrb[0].mxu0 %v4615
      %v4688 = vpop.f32.mrb[0].mxu0
      %v4689 = vadd.f32 0.0, %v4688
      %v4690 = vpop.f32.mrb[0].mxu0
      %v4691 = vpop.f32.mrb[0].mxu0
      %v4692 = vadd.f32 0.0, %v4691
      %v4693 = vpop.f32.mrb[0].mxu0
      %4694 = vmatprep.mubr.bf16.mxu0 0
      %4695 = vmatmul.mubr.bf16.gmra.mrb[0].mxu0 %v4616
      %v4696 = vpop.f32.mrb[0].mxu0
      %v4697 = vadd.f32 0.0, %v4696
      %v4698 = vpop.f32.mrb[0].mxu0
      %v4699 = vpop.f32.mrb[0].mxu0
      %v4700 = vadd.f32 0.0, %v4699
      %v4701 = vpop.f32.mrb[0].mxu0
      %4702 = vmatprep.mubr.bf16.mxu0 0
      %4703 = vmatmul.mubr.bf16.gmra.mrb[0].mxu0 %v4617
      %v4704 = vpop.f32.mrb[0].mxu0
      %v4705 = vadd.f32 0.0, %v4704
      %v4706 = vpop.f32.mrb[0].mxu0
      %v4707 = vpop.f32.mrb[0].mxu0
      %v4708 = vadd.f32 0.0, %v4707
      %v4709 = vpop.f32.mrb[0].mxu0
      %4710 = vmatprep.mubr.bf16.mxu0 0
      %4711 = vmatmul.mubr.bf16.gmra.mrb[0].mxu0 %v4618
      %v4712 = vpop.f32.mrb[0].mxu0
      %v4713 = vadd.f32 0.0, %v4712
      %v4714 = vpop.f32.mrb[0].mxu0
      %v4715 = vpop.f32.mrb[0].mxu0
      %v4716 = vadd.f32 0.0, %v4715
      %v4717 = vpop.f32.mrb[0].mxu0
      %4718 = vmatprep.mubr.bf16.mxu0 0
      %4719 = vmatmul.mubr.bf16.gmra.mrb[0].mxu0 %v4619
      %v4720 = vpop.f32.mrb[0].mxu0
      %v4721 = vadd.f32 0.0, %v4720
      %v4722 = vpop.f32.mrb[0].mxu0
      %v4723 = vpop.f32.mrb[0].mxu0
      %v4724 = vadd.f32 0.0, %v4723
      %v4725 = vpop.f32.mrb[0].mxu0
      %4726 = vmatprep.mubr.bf16.mxu0 0
      %4727 = vmatmul.mubr.bf16.gmra.mrb[0].mxu0 %v4620
      %v4728 = vpop.f32.mrb[0].mxu0
      %v4729 = vadd.f32 0.0, %v4728
      %v4730 = vpop.f32.mrb[0].mxu0
      %v4731 = vpop.f32.mrb[0].mxu0
      %v4732 = vadd.f32 0.0, %v4731
      %v4733 = vpop.f32.mrb[0].mxu0
      %4734 = vmatprep.mubr.bf16.mxu0 0
      %4735 = vmatmul.mubr.bf16.gmra.mrb[0].mxu0 %v4621
      %v4736 = vpop.f32.mrb[0].mxu0
      %v4737 = vadd.f32 0.0, %v4736
      %v4738 = vpop.f32.mrb[0].mxu0
      %v4739 = vpop.f32.mrb[0].mxu0
      %v4740 = vadd.f32 0.0, %v4739
      %v4741 = vpop.f32.mrb[0].mxu0
      %4742 = vdwg.mxu0
      %4743 = vrot.lane.b32.xlu0 %v668, 92
      %v4744 = vpop.permute.xlu0 %4743
      %4745 = vrot.lane.b32.xlu0 %v669, 92
      %v4746 = vpop.permute.xlu0 %4745
      %4747 = vrot.lane.b32.xlu0 %v670, 92
      %v4748 = vpop.permute.xlu0 %4747
      %4749 = vrot.lane.b32.xlu0 %v671, 92
      %v4750 = vpop.permute.xlu0 %4749
      %4751 = vrot.lane.b32.xlu0 %v672, 92
      %v4752 = vpop.permute.xlu0 %4751
      %4753 = vrot.lane.b32.xlu0 %v673, 92
      %v4754 = vpop.permute.xlu0 %4753
      %4755 = vrot.lane.b32.xlu0 %v674, 92
      %v4756 = vpop.permute.xlu0 %4755
      %4757 = vrot.lane.b32.xlu0 %v675, 92
      %v4758 = vpop.permute.xlu0 %4757
      %4759 = vrot.lane.b32.xlu0 %v676, 28
      %v4760 = vpop.permute.xlu0 %4759
      %4761 = vrot.lane.b32.xlu0 %v677, 28
      %v4762 = vpop.permute.xlu0 %4761
      %4763 = vrot.lane.b32.xlu0 %v678, 28
      %v4764 = vpop.permute.xlu0 %4763
      %4765 = vrot.lane.b32.xlu0 %v679, 28
      %v4766 = vpop.permute.xlu0 %4765
      %4767 = vrot.lane.b32.xlu0 %v680, 28
      %v4768 = vpop.permute.xlu0 %4767
      %4769 = vrot.lane.b32.xlu0 %v681, 28
      %v4770 = vpop.permute.xlu0 %4769
      %4771 = vrot.lane.b32.xlu0 %v682, 28
      %v4772 = vpop.permute.xlu0 %4771
      %4773 = vrot.lane.b32.xlu0 %v683, 28
      %v4774 = vpop.permute.xlu0 %4773
      %v4776 = vsel %vm732, %v4744, 0
      %v4779 = vsel %vm732, %v4746, 0
      %v4782 = vsel %vm732, %v4748, 0
      %v4785 = vsel %vm732, %v4750, 0
      %v4788 = vsel %vm732, %v4752, 0
      %v4791 = vsel %vm732, %v4754, 0
      %v4794 = vsel %vm732, %v4756, 0
      %v4797 = vsel %vm732, %v4758, 0
      %v4800 = vsel %vm732, %v4760, 0
      %v4803 = vsel %vm732, %v4762, 0
      %v4806 = vsel %vm732, %v4764, 0
      %v4809 = vsel %vm732, %v4766, 0
      %v4812 = vsel %vm732, %v4768, 0
      %v4815 = vsel %vm732, %v4770, 0
      %v4818 = vsel %vm732, %v4772, 0
      %v4821 = vsel %vm732, %v4774, 0
      %4823 = vmatprep.subr.bf16.mxu0 0
      %4824 = vmatpush1.bf16.xpose.msra.mxu0 %v4800
      %4825 = vmatprep.subr.bf16.mxu0 0
      %4826 = vmatpush1.bf16.xpose.msra.mxu0 %v4803
      %4827 = vmatprep.subr.bf16.mxu0 0
      %4828 = vmatpush1.bf16.xpose.msra.mxu0 %v4806
      %4829 = vmatprep.subr.bf16.mxu0 0
      %4830 = vmatpush1.bf16.xpose.msra.mxu0 %v4809
      %4831 = vmatprep.subr.bf16.mxu0 0
      %4832 = vmatpush1.bf16.xpose.msra.mxu0 %v4812
      %4833 = vmatprep.subr.bf16.mxu0 0
      %4834 = vmatpush1.bf16.xpose.msra.mxu0 %v4815
      %4835 = vmatprep.subr.bf16.mxu0 0
      %4836 = vmatpush1.bf16.xpose.msra.mxu0 %v4818
      %4837 = vmatprep.subr.bf16.mxu0 0
      %4838 = vmatpush1.bf16.xpose.msra.mxu0 %v4821
      %4839 = vmatprep.subr.bf16.mxu0 0
      %4840 = vmatpush1.bf16.xpose.msra.mxu0 0
      %4841 = vmatprep.subr.bf16.mxu0 0
      %4842 = vmatpush1.bf16.xpose.msra.mxu0 0
      %4843 = vmatprep.subr.bf16.mxu0 0
      %4844 = vmatpush1.bf16.xpose.msra.mxu0 0
      %4845 = vmatprep.subr.bf16.mxu0 0
      %4846 = vmatpush1.bf16.xpose.msra.mxu0 0
      %4847 = vmatprep.subr.bf16.mxu0 0
      %4848 = vmatpush1.bf16.xpose.msra.mxu0 0
      %4849 = vmatprep.subr.bf16.mxu0 0
      %4850 = vmatpush1.bf16.xpose.msra.mxu0 0
      %4851 = vmatprep.subr.bf16.mxu0 0
      %4852 = vmatpush1.bf16.xpose.msra.mxu0 0
      %4853 = vmatprep.subr.bf16.mxu0 0
      %4854 = vmatpush1.bf16.xpose.msra.mxu0 0
      %4855 = vmatprep.mubr.bf16.mxu0 0
      %4856 = vmatmul.mubr.bf16.gmra.mrb[0].mxu0 %v4776
      %v4857 = vpop.f32.mrb[0].mxu0
      %v4858 = vadd.f32 %v692, %v4857
      %v4859 = vpop.f32.mrb[0].mxu0
      %v4860 = vpop.f32.mrb[0].mxu0
      %v4861 = vadd.f32 %v693, %v4860
      %v4862 = vpop.f32.mrb[0].mxu0
      %4863 = vmatprep.mubr.bf16.mxu0 0
      %4864 = vmatmul.mubr.bf16.gmra.mrb[0].mxu0 %v4779
      %v4865 = vpop.f32.mrb[0].mxu0
      %v4866 = vadd.f32 %v694, %v4865
      %v4867 = vpop.f32.mrb[0].mxu0
      %v4868 = vpop.f32.mrb[0].mxu0
      %v4869 = vadd.f32 %v695, %v4868
      %v4870 = vpop.f32.mrb[0].mxu0
      %4871 = vmatprep.mubr.bf16.mxu0 0
      %4872 = vmatmul.mubr.bf16.gmra.mrb[0].mxu0 %v4782
      %v4873 = vpop.f32.mrb[0].mxu0
      %v4874 = vadd.f32 %v696, %v4873
      %v4875 = vpop.f32.mrb[0].mxu0
      %v4876 = vpop.f32.mrb[0].mxu0
      %v4877 = vadd.f32 %v697, %v4876
      %v4878 = vpop.f32.mrb[0].mxu0
      %4879 = vmatprep.mubr.bf16.mxu0 0
      %4880 = vmatmul.mubr.bf16.gmra.mrb[0].mxu0 %v4785
      %v4881 = vpop.f32.mrb[0].mxu0
      %v4882 = vadd.f32 %v698, %v4881
      %v4883 = vpop.f32.mrb[0].mxu0
      %v4884 = vpop.f32.mrb[0].mxu0
      %v4885 = vadd.f32 %v699, %v4884
      %v4886 = vpop.f32.mrb[0].mxu0
      %4887 = vmatprep.mubr.bf16.mxu0 0
      %4888 = vmatmul.mubr.bf16.gmra.mrb[0].mxu0 %v4788
      %v4889 = vpop.f32.mrb[0].mxu0
      %v4890 = vadd.f32 %v700, %v4889
      %v4891 = vpop.f32.mrb[0].mxu0
      %v4892 = vpop.f32.mrb[0].mxu0
      %v4893 = vadd.f32 %v701, %v4892
      %v4894 = vpop.f32.mrb[0].mxu0
      %4895 = vmatprep.mubr.bf16.mxu0 0
      %4896 = vmatmul.mubr.bf16.gmra.mrb[0].mxu0 %v4791
      %v4897 = vpop.f32.mrb[0].mxu0
      %v4898 = vadd.f32 %v702, %v4897
      %v4899 = vpop.f32.mrb[0].mxu0
      %v4900 = vpop.f32.mrb[0].mxu0
      %v4901 = vadd.f32 %v703, %v4900
      %v4902 = vpop.f32.mrb[0].mxu0
      %4903 = vmatprep.mubr.bf16.mxu0 0
      %4904 = vmatmul.mubr.bf16.gmra.mrb[0].mxu0 %v4794
      %v4905 = vpop.f32.mrb[0].mxu0
      %v4906 = vadd.f32 %v704, %v4905
      %v4907 = vpop.f32.mrb[0].mxu0
      %v4908 = vpop.f32.mrb[0].mxu0
      %v4909 = vadd.f32 %v705, %v4908
      %v4910 = vpop.f32.mrb[0].mxu0
      %4911 = vmatprep.mubr.bf16.mxu0 0
      %4912 = vmatmul.mubr.bf16.gmra.mrb[0].mxu0 %v4797
      %v4913 = vpop.f32.mrb[0].mxu0
      %v4914 = vadd.f32 %v706, %v4913
      %v4915 = vpop.f32.mrb[0].mxu0
      %v4916 = vpop.f32.mrb[0].mxu0
      %v4917 = vadd.f32 %v707, %v4916
      %v4918 = vpop.f32.mrb[0].mxu0
      %4919 = vdwg.mxu0
      %4920 = vmax.xlane.f32.xlu0 %v4858
      %v4921 = vpop.xlane.xlu0 %4920
      %4922 = vmax.xlane.f32.xlu0 %v4861
      %v4923 = vpop.xlane.xlu0 %4922
      %4924 = vmax.xlane.f32.xlu0 %v4866
      %v4925 = vpop.xlane.xlu0 %4924
      %4926 = vmax.xlane.f32.xlu0 %v4869
      %v4927 = vpop.xlane.xlu0 %4926
      %4928 = vmax.xlane.f32.xlu0 %v4874
      %v4929 = vpop.xlane.xlu0 %4928
      %4930 = vmax.xlane.f32.xlu0 %v4877
      %v4931 = vpop.xlane.xlu0 %4930
      %4932 = vmax.xlane.f32.xlu0 %v4882
      %v4933 = vpop.xlane.xlu0 %4932
      %4934 = vmax.xlane.f32.xlu0 %v4885
      %v4935 = vpop.xlane.xlu0 %4934
      %4936 = vmax.xlane.f32.xlu0 %v4890
      %v4937 = vpop.xlane.xlu0 %4936
      %4938 = vmax.xlane.f32.xlu0 %v4893
      %v4939 = vpop.xlane.xlu0 %4938
      %4940 = vmax.xlane.f32.xlu0 %v4898
      %v4941 = vpop.xlane.xlu0 %4940
      %4942 = vmax.xlane.f32.xlu0 %v4901
      %v4943 = vpop.xlane.xlu0 %4942
      %4944 = vmax.xlane.f32.xlu0 %v4906
      %v4945 = vpop.xlane.xlu0 %4944
      %4946 = vmax.xlane.f32.xlu0 %v4909
      %v4947 = vpop.xlane.xlu0 %4946
      %4948 = vmax.xlane.f32.xlu0 %v4914
      %v4949 = vpop.xlane.xlu0 %4948
      %4950 = vmax.xlane.f32.xlu0 %v4917
      %v4951 = vpop.xlane.xlu0 %4950
      %v4952 = vsub.f32 %v4858, %v4921
      %v4953 = vsub.f32 %v4861, %v4923
      %v4954 = vsub.f32 %v4866, %v4925
      %v4955 = vsub.f32 %v4869, %v4927
      %v4956 = vsub.f32 %v4874, %v4929
      %v4957 = vsub.f32 %v4877, %v4931
      %v4958 = vsub.f32 %v4882, %v4933
      %v4959 = vsub.f32 %v4885, %v4935
      %v4960 = vsub.f32 %v4890, %v4937
      %v4961 = vsub.f32 %v4893, %v4939
      %v4962 = vsub.f32 %v4898, %v4941
      %v4963 = vsub.f32 %v4901, %v4943
      %v4964 = vsub.f32 %v4906, %v4945
      %v4965 = vsub.f32 %v4909, %v4947
      %v4966 = vsub.f32 %v4914, %v4949
      %v4967 = vsub.f32 %v4917, %v4951
      %v4968 = vmul.f32 %v4952, 1.442695
      %v4969 = vpow.pop %v4968
      %v4970 = vmul.f32 %v4953, 1.442695
      %v4971 = vpow.pop %v4970
      %v4972 = vmul.f32 %v4954, 1.442695
      %v4973 = vpow.pop %v4972
      %v4974 = vmul.f32 %v4955, 1.442695
      %v4975 = vpow.pop %v4974
      %v4976 = vmul.f32 %v4956, 1.442695
      %v4977 = vpow.pop %v4976
      %v4978 = vmul.f32 %v4957, 1.442695
      %v4979 = vpow.pop %v4978
      %v4980 = vmul.f32 %v4958, 1.442695
      %v4981 = vpow.pop %v4980
      %v4982 = vmul.f32 %v4959, 1.442695
      %v4983 = vpow.pop %v4982
      %v4984 = vmul.f32 %v4960, 1.442695
      %v4985 = vpow.pop %v4984
      %v4986 = vmul.f32 %v4961, 1.442695
      %v4987 = vpow.pop %v4986
      %v4988 = vmul.f32 %v4962, 1.442695
      %v4989 = vpow.pop %v4988
      %v4990 = vmul.f32 %v4963, 1.442695
      %v4991 = vpow.pop %v4990
      %v4992 = vmul.f32 %v4964, 1.442695
      %v4993 = vpow.pop %v4992
      %v4994 = vmul.f32 %v4965, 1.442695
      %v4995 = vpow.pop %v4994
      %v4996 = vmul.f32 %v4966, 1.442695
      %v4997 = vpow.pop %v4996
      %v4998 = vmul.f32 %v4967, 1.442695
      %v4999 = vpow.pop %v4998
      %5000 = vadd.xlane.f32.xlu0 %v4969
      %v5001 = vpop.xlane.xlu0 %5000
      %5002 = vadd.xlane.f32.xlu0 %v4971
      %v5003 = vpop.xlane.xlu0 %5002
      %5004 = vadd.xlane.f32.xlu0 %v4973
      %v5005 = vpop.xlane.xlu0 %5004
      %5006 = vadd.xlane.f32.xlu0 %v4975
      %v5007 = vpop.xlane.xlu0 %5006
      %5008 = vadd.xlane.f32.xlu0 %v4977
      %v5009 = vpop.xlane.xlu0 %5008
      %5010 = vadd.xlane.f32.xlu0 %v4979
      %v5011 = vpop.xlane.xlu0 %5010
      %5012 = vadd.xlane.f32.xlu0 %v4981
      %v5013 = vpop.xlane.xlu0 %5012
      %5014 = vadd.xlane.f32.xlu0 %v4983
      %v5015 = vpop.xlane.xlu0 %5014
      %5016 = vadd.xlane.f32.xlu0 %v4985
      %v5017 = vpop.xlane.xlu0 %5016
      %5018 = vadd.xlane.f32.xlu0 %v4987
      %v5019 = vpop.xlane.xlu0 %5018
      %5020 = vadd.xlane.f32.xlu0 %v4989
      %v5021 = vpop.xlane.xlu0 %5020
      %5022 = vadd.xlane.f32.xlu0 %v4991
      %v5023 = vpop.xlane.xlu0 %5022
      %5024 = vadd.xlane.f32.xlu0 %v4993
      %v5025 = vpop.xlane.xlu0 %5024
      %5026 = vadd.xlane.f32.xlu0 %v4995
      %v5027 = vpop.xlane.xlu0 %5026
      %5028 = vadd.xlane.f32.xlu0 %v4997
      %v5029 = vpop.xlane.xlu0 %5028
      %5030 = vadd.xlane.f32.xlu0 %v4999
      %v5031 = vpop.xlane.xlu0 %5030
      %v5032 = vrcp.pop %v5001
      %v5033 = vrcp.pop %v5003
      %v5034 = vrcp.pop %v5005
      %v5035 = vrcp.pop %v5007
      %v5036 = vrcp.pop %v5009
      %v5037 = vrcp.pop %v5011
      %v5038 = vrcp.pop %v5013
      %v5039 = vrcp.pop %v5015
      %v5040 = vrcp.pop %v5017
      %v5041 = vrcp.pop %v5019
      %v5042 = vrcp.pop %v5021
      %v5043 = vrcp.pop %v5023
      %v5044 = vrcp.pop %v5025
      %v5045 = vrcp.pop %v5027
      %v5046 = vrcp.pop %v5029
      %v5047 = vrcp.pop %v5031
      %v5048 = vmul.f32 %v4969, %v5032
      %v5049 = vmul.f32 %v4971, %v5033
      %v5050 = vmul.f32 %v4973, %v5034
      %v5051 = vmul.f32 %v4975, %v5035
      %v5052 = vmul.f32 %v4977, %v5036
      %v5053 = vmul.f32 %v4979, %v5037
      %v5054 = vmul.f32 %v4981, %v5038
      %v5055 = vmul.f32 %v4983, %v5039
      %v5056 = vmul.f32 %v4985, %v5040
      %v5057 = vmul.f32 %v4987, %v5041
      %v5058 = vmul.f32 %v4989, %v5042
      %v5059 = vmul.f32 %v4991, %v5043
      %v5060 = vmul.f32 %v4993, %v5044
      %v5061 = vmul.f32 %v4995, %v5045
      %v5062 = vmul.f32 %v4997, %v5046
      %v5063 = vmul.f32 %v4999, %v5047
      %v5064 = vpack.c.bf16 %v5049, %v5048
      %v5065 = vpack.c.bf16 %v5051, %v5050
      %v5066 = vpack.c.bf16 %v5053, %v5052
      %v5067 = vpack.c.bf16 %v5055, %v5054
      %v5068 = vpack.c.bf16 %v5057, %v5056
      %v5069 = vpack.c.bf16 %v5059, %v5058
      %v5070 = vpack.c.bf16 %v5061, %v5060
      %v5071 = vpack.c.bf16 %v5063, %v5062
      %5072 = vrot.lane.b32.xlu0 %v684, 92
      %v5073 = vpop.permute.xlu0 %5072
      %5074 = vrot.lane.b32.xlu0 %v685, 92
      %v5075 = vpop.permute.xlu0 %5074
      %5076 = vrot.lane.b32.xlu0 %v686, 92
      %v5077 = vpop.permute.xlu0 %5076
      %5078 = vrot.lane.b32.xlu0 %v687, 92
      %v5079 = vpop.permute.xlu0 %5078
      %5080 = vrot.lane.b32.xlu0 %v688, 92
      %v5081 = vpop.permute.xlu0 %5080
      %5082 = vrot.lane.b32.xlu0 %v689, 92
      %v5083 = vpop.permute.xlu0 %5082
      %5084 = vrot.lane.b32.xlu0 %v690, 92
      %v5085 = vpop.permute.xlu0 %5084
      %5086 = vrot.lane.b32.xlu0 %v691, 92
      %v5087 = vpop.permute.xlu0 %5086
      %5096 = vmatprep.subr.bf16.mxu0 0
      %5097 = vmatpush1.bf16.msra.mxu0 %v5073
      %5098 = vmatprep.subr.bf16.mxu0 0
      %5099 = vmatpush1.bf16.msra.mxu0 %v5075
      %5100 = vmatprep.subr.bf16.mxu0 0
      %5101 = vmatpush1.bf16.msra.mxu0 %v5077
      %5102 = vmatprep.subr.bf16.mxu0 0
      %5103 = vmatpush1.bf16.msra.mxu0 %v5079
      %5104 = vmatprep.subr.bf16.mxu0 0
      %5105 = vmatpush1.bf16.msra.mxu0 %v5081
      %5106 = vmatprep.subr.bf16.mxu0 0
      %5107 = vmatpush1.bf16.msra.mxu0 %v5083
      %5108 = vmatprep.subr.bf16.mxu0 0
      %5109 = vmatpush1.bf16.msra.mxu0 %v5085
      %5110 = vmatprep.subr.bf16.mxu0 0
      %5111 = vmatpush1.bf16.msra.mxu0 %v5087
      %5112 = vmatprep.subr.bf16.mxu0 0
      %5113 = vmatpush1.bf16.msra.mxu0 0
      %5114 = vmatprep.subr.bf16.mxu0 0
      %5115 = vmatpush1.bf16.msra.mxu0 0
      %5116 = vmatprep.subr.bf16.mxu0 0
      %5117 = vmatpush1.bf16.msra.mxu0 0
      %5118 = vmatprep.subr.bf16.mxu0 0
      %5119 = vmatpush1.bf16.msra.mxu0 0
      %5120 = vmatprep.subr.bf16.mxu0 0
      %5121 = vmatpush1.bf16.msra.mxu0 0
      %5122 = vmatprep.subr.bf16.mxu0 0
      %5123 = vmatpush1.bf16.msra.mxu0 0
      %5124 = vmatprep.subr.bf16.mxu0 0
      %5125 = vmatpush1.bf16.msra.mxu0 0
      %5126 = vmatprep.subr.bf16.mxu0 0
      %5127 = vmatpush1.bf16.msra.mxu0 0
      %5128 = vmatprep.mubr.bf16.mxu0 0
      %5129 = vmatmul.mubr.bf16.gmra.mrb[0].mxu0 %v5064
      %v5130 = vpop.f32.mrb[0].mxu0
      %v5131 = vadd.f32 0.0, %v5130
      %v5132 = vpop.f32.mrb[0].mxu0
      %v5133 = vpop.f32.mrb[0].mxu0
      %v5134 = vadd.f32 0.0, %v5133
      %v5135 = vpop.f32.mrb[0].mxu0
      %5136 = vmatprep.mubr.bf16.mxu0 0
      %5137 = vmatmul.mubr.bf16.gmra.mrb[0].mxu0 %v5065
      %v5138 = vpop.f32.mrb[0].mxu0
      %v5139 = vadd.f32 0.0, %v5138
      %v5140 = vpop.f32.mrb[0].mxu0
      %v5141 = vpop.f32.mrb[0].mxu0
      %v5142 = vadd.f32 0.0, %v5141
      %v5143 = vpop.f32.mrb[0].mxu0
      %5144 = vmatprep.mubr.bf16.mxu0 0
      %5145 = vmatmul.mubr.bf16.gmra.mrb[0].mxu0 %v5066
      %v5146 = vpop.f32.mrb[0].mxu0
      %v5147 = vadd.f32 0.0, %v5146
      %v5148 = vpop.f32.mrb[0].mxu0
      %v5149 = vpop.f32.mrb[0].mxu0
      %v5150 = vadd.f32 0.0, %v5149
      %v5151 = vpop.f32.mrb[0].mxu0
      %5152 = vmatprep.mubr.bf16.mxu0 0
      %5153 = vmatmul.mubr.bf16.gmra.mrb[0].mxu0 %v5067
      %v5154 = vpop.f32.mrb[0].mxu0
      %v5155 = vadd.f32 0.0, %v5154
      %v5156 = vpop.f32.mrb[0].mxu0
      %v5157 = vpop.f32.mrb[0].mxu0
      %v5158 = vadd.f32 0.0, %v5157
      %v5159 = vpop.f32.mrb[0].mxu0
      %5160 = vmatprep.mubr.bf16.mxu0 0
      %5161 = vmatmul.mubr.bf16.gmra.mrb[0].mxu0 %v5068
      %v5162 = vpop.f32.mrb[0].mxu0
      %v5163 = vadd.f32 0.0, %v5162
      %v5164 = vpop.f32.mrb[0].mxu0
      %v5165 = vpop.f32.mrb[0].mxu0
      %v5166 = vadd.f32 0.0, %v5165
      %v5167 = vpop.f32.mrb[0].mxu0
      %5168 = vmatprep.mubr.bf16.mxu0 0
      %5169 = vmatmul.mubr.bf16.gmra.mrb[0].mxu0 %v5069
      %v5170 = vpop.f32.mrb[0].mxu0
      %v5171 = vadd.f32 0.0, %v5170
      %v5172 = vpop.f32.mrb[0].mxu0
      %v5173 = vpop.f32.mrb[0].mxu0
      %v5174 = vadd.f32 0.0, %v5173
      %v5175 = vpop.f32.mrb[0].mxu0
      %5176 = vmatprep.mubr.bf16.mxu0 0
      %5177 = vmatmul.mubr.bf16.gmra.mrb[0].mxu0 %v5070
      %v5178 = vpop.f32.mrb[0].mxu0
      %v5179 = vadd.f32 0.0, %v5178
      %v5180 = vpop.f32.mrb[0].mxu0
      %v5181 = vpop.f32.mrb[0].mxu0
      %v5182 = vadd.f32 0.0, %v5181
      %v5183 = vpop.f32.mrb[0].mxu0
      %5184 = vmatprep.mubr.bf16.mxu0 0
      %5185 = vmatmul.mubr.bf16.gmra.mrb[0].mxu0 %v5071
      %v5186 = vpop.f32.mrb[0].mxu0
      %v5187 = vadd.f32 0.0, %v5186
      %v5188 = vpop.f32.mrb[0].mxu0
      %v5189 = vpop.f32.mrb[0].mxu0
      %v5190 = vadd.f32 0.0, %v5189
      %v5191 = vpop.f32.mrb[0].mxu0
      %5192 = vdwg.mxu0
      %5193 = vrot.lane.b32.xlu0 %v668, 88
      %v5194 = vpop.permute.xlu0 %5193
      %5195 = vrot.lane.b32.xlu0 %v669, 88
      %v5196 = vpop.permute.xlu0 %5195
      %5197 = vrot.lane.b32.xlu0 %v670, 88
      %v5198 = vpop.permute.xlu0 %5197
      %5199 = vrot.lane.b32.xlu0 %v671, 88
      %v5200 = vpop.permute.xlu0 %5199
      %5201 = vrot.lane.b32.xlu0 %v672, 88
      %v5202 = vpop.permute.xlu0 %5201
      %5203 = vrot.lane.b32.xlu0 %v673, 88
      %v5204 = vpop.permute.xlu0 %5203
      %5205 = vrot.lane.b32.xlu0 %v674, 88
      %v5206 = vpop.permute.xlu0 %5205
      %5207 = vrot.lane.b32.xlu0 %v675, 88
      %v5208 = vpop.permute.xlu0 %5207
      %5209 = vrot.lane.b32.xlu0 %v676, 24
      %v5210 = vpop.permute.xlu0 %5209
      %5211 = vrot.lane.b32.xlu0 %v677, 24
      %v5212 = vpop.permute.xlu0 %5211
      %5213 = vrot.lane.b32.xlu0 %v678, 24
      %v5214 = vpop.permute.xlu0 %5213
      %5215 = vrot.lane.b32.xlu0 %v679, 24
      %v5216 = vpop.permute.xlu0 %5215
      %5217 = vrot.lane.b32.xlu0 %v680, 24
      %v5218 = vpop.permute.xlu0 %5217
      %5219 = vrot.lane.b32.xlu0 %v681, 24
      %v5220 = vpop.permute.xlu0 %5219
      %5221 = vrot.lane.b32.xlu0 %v682, 24
      %v5222 = vpop.permute.xlu0 %5221
      %5223 = vrot.lane.b32.xlu0 %v683, 24
      %v5224 = vpop.permute.xlu0 %5223
      %v5226 = vsel %vm732, %v5194, 0
      %v5229 = vsel %vm732, %v5196, 0
      %v5232 = vsel %vm732, %v5198, 0
      %v5235 = vsel %vm732, %v5200, 0
      %v5238 = vsel %vm732, %v5202, 0
      %v5241 = vsel %vm732, %v5204, 0
      %v5244 = vsel %vm732, %v5206, 0
      %v5247 = vsel %vm732, %v5208, 0
      %v5250 = vsel %vm732, %v5210, 0
      %v5253 = vsel %vm732, %v5212, 0
      %v5256 = vsel %vm732, %v5214, 0
      %v5259 = vsel %vm732, %v5216, 0
      %v5262 = vsel %vm732, %v5218, 0
      %v5265 = vsel %vm732, %v5220, 0
      %v5268 = vsel %vm732, %v5222, 0
      %v5271 = vsel %vm732, %v5224, 0
      %5273 = vmatprep.subr.bf16.mxu0 0
      %5274 = vmatpush1.bf16.xpose.msra.mxu0 %v5250
      %5275 = vmatprep.subr.bf16.mxu0 0
      %5276 = vmatpush1.bf16.xpose.msra.mxu0 %v5253
      %5277 = vmatprep.subr.bf16.mxu0 0
      %5278 = vmatpush1.bf16.xpose.msra.mxu0 %v5256
      %5279 = vmatprep.subr.bf16.mxu0 0
      %5280 = vmatpush1.bf16.xpose.msra.mxu0 %v5259
      %5281 = vmatprep.subr.bf16.mxu0 0
      %5282 = vmatpush1.bf16.xpose.msra.mxu0 %v5262
      %5283 = vmatprep.subr.bf16.mxu0 0
      %5284 = vmatpush1.bf16.xpose.msra.mxu0 %v5265
      %5285 = vmatprep.subr.bf16.mxu0 0
      %5286 = vmatpush1.bf16.xpose.msra.mxu0 %v5268
      %5287 = vmatprep.subr.bf16.mxu0 0
      %5288 = vmatpush1.bf16.xpose.msra.mxu0 %v5271
      %5289 = vmatprep.subr.bf16.mxu0 0
      %5290 = vmatpush1.bf16.xpose.msra.mxu0 0
      %5291 = vmatprep.subr.bf16.mxu0 0
      %5292 = vmatpush1.bf16.xpose.msra.mxu0 0
      %5293 = vmatprep.subr.bf16.mxu0 0
      %5294 = vmatpush1.bf16.xpose.msra.mxu0 0
      %5295 = vmatprep.subr.bf16.mxu0 0
      %5296 = vmatpush1.bf16.xpose.msra.mxu0 0
      %5297 = vmatprep.subr.bf16.mxu0 0
      %5298 = vmatpush1.bf16.xpose.msra.mxu0 0
      %5299 = vmatprep.subr.bf16.mxu0 0
      %5300 = vmatpush1.bf16.xpose.msra.mxu0 0
      %5301 = vmatprep.subr.bf16.mxu0 0
      %5302 = vmatpush1.bf16.xpose.msra.mxu0 0
      %5303 = vmatprep.subr.bf16.mxu0 0
      %5304 = vmatpush1.bf16.xpose.msra.mxu0 0
      %5305 = vmatprep.mubr.bf16.mxu0 0
      %5306 = vmatmul.mubr.bf16.gmra.mrb[0].mxu0 %v5226
      %v5307 = vpop.f32.mrb[0].mxu0
      %v5308 = vadd.f32 %v692, %v5307
      %v5309 = vpop.f32.mrb[0].mxu0
      %v5310 = vpop.f32.mrb[0].mxu0
      %v5311 = vadd.f32 %v693, %v5310
      %v5312 = vpop.f32.mrb[0].mxu0
      %5313 = vmatprep.mubr.bf16.mxu0 0
      %5314 = vmatmul.mubr.bf16.gmra.mrb[0].mxu0 %v5229
      %v5315 = vpop.f32.mrb[0].mxu0
      %v5316 = vadd.f32 %v694, %v5315
      %v5317 = vpop.f32.mrb[0].mxu0
      %v5318 = vpop.f32.mrb[0].mxu0
      %v5319 = vadd.f32 %v695, %v5318
      %v5320 = vpop.f32.mrb[0].mxu0
      %5321 = vmatprep.mubr.bf16.mxu0 0
      %5322 = vmatmul.mubr.bf16.gmra.mrb[0].mxu0 %v5232
      %v5323 = vpop.f32.mrb[0].mxu0
      %v5324 = vadd.f32 %v696, %v5323
      %v5325 = vpop.f32.mrb[0].mxu0
      %v5326 = vpop.f32.mrb[0].mxu0
      %v5327 = vadd.f32 %v697, %v5326
      %v5328 = vpop.f32.mrb[0].mxu0
      %5329 = vmatprep.mubr.bf16.mxu0 0
      %5330 = vmatmul.mubr.bf16.gmra.mrb[0].mxu0 %v5235
      %v5331 = vpop.f32.mrb[0].mxu0
      %v5332 = vadd.f32 %v698, %v5331
      %v5333 = vpop.f32.mrb[0].mxu0
      %v5334 = vpop.f32.mrb[0].mxu0
      %v5335 = vadd.f32 %v699, %v5334
      %v5336 = vpop.f32.mrb[0].mxu0
      %5337 = vmatprep.mubr.bf16.mxu0 0
      %5338 = vmatmul.mubr.bf16.gmra.mrb[0].mxu0 %v5238
      %v5339 = vpop.f32.mrb[0].mxu0
      %v5340 = vadd.f32 %v700, %v5339
      %v5341 = vpop.f32.mrb[0].mxu0
      %v5342 = vpop.f32.mrb[0].mxu0
      %v5343 = vadd.f32 %v701, %v5342
      %v5344 = vpop.f32.mrb[0].mxu0
      %5345 = vmatprep.mubr.bf16.mxu0 0
      %5346 = vmatmul.mubr.bf16.gmra.mrb[0].mxu0 %v5241
      %v5347 = vpop.f32.mrb[0].mxu0
      %v5348 = vadd.f32 %v702, %v5347
      %v5349 = vpop.f32.mrb[0].mxu0
      %v5350 = vpop.f32.mrb[0].mxu0
      %v5351 = vadd.f32 %v703, %v5350
      %v5352 = vpop.f32.mrb[0].mxu0
      %5353 = vmatprep.mubr.bf16.mxu0 0
      %5354 = vmatmul.mubr.bf16.gmra.mrb[0].mxu0 %v5244
      %v5355 = vpop.f32.mrb[0].mxu0
      %v5356 = vadd.f32 %v704, %v5355
      %v5357 = vpop.f32.mrb[0].mxu0
      %v5358 = vpop.f32.mrb[0].mxu0
      %v5359 = vadd.f32 %v705, %v5358
      %v5360 = vpop.f32.mrb[0].mxu0
      %5361 = vmatprep.mubr.bf16.mxu0 0
      %5362 = vmatmul.mubr.bf16.gmra.mrb[0].mxu0 %v5247
      %v5363 = vpop.f32.mrb[0].mxu0
      %v5364 = vadd.f32 %v706, %v5363
      %v5365 = vpop.f32.mrb[0].mxu0
      %v5366 = vpop.f32.mrb[0].mxu0
      %v5367 = vadd.f32 %v707, %v5366
      %v5368 = vpop.f32.mrb[0].mxu0
      %5369 = vdwg.mxu0
      %5370 = vmax.xlane.f32.xlu0 %v5308
      %v5371 = vpop.xlane.xlu0 %5370
      %5372 = vmax.xlane.f32.xlu0 %v5311
      %v5373 = vpop.xlane.xlu0 %5372
      %5374 = vmax.xlane.f32.xlu0 %v5316
      %v5375 = vpop.xlane.xlu0 %5374
      %5376 = vmax.xlane.f32.xlu0 %v5319
      %v5377 = vpop.xlane.xlu0 %5376
      %5378 = vmax.xlane.f32.xlu0 %v5324
      %v5379 = vpop.xlane.xlu0 %5378
      %5380 = vmax.xlane.f32.xlu0 %v5327
      %v5381 = vpop.xlane.xlu0 %5380
      %5382 = vmax.xlane.f32.xlu0 %v5332
      %v5383 = vpop.xlane.xlu0 %5382
      %5384 = vmax.xlane.f32.xlu0 %v5335
      %v5385 = vpop.xlane.xlu0 %5384
      %5386 = vmax.xlane.f32.xlu0 %v5340
      %v5387 = vpop.xlane.xlu0 %5386
      %5388 = vmax.xlane.f32.xlu0 %v5343
      %v5389 = vpop.xlane.xlu0 %5388
      %5390 = vmax.xlane.f32.xlu0 %v5348
      %v5391 = vpop.xlane.xlu0 %5390
      %5392 = vmax.xlane.f32.xlu0 %v5351
      %v5393 = vpop.xlane.xlu0 %5392
      %5394 = vmax.xlane.f32.xlu0 %v5356
      %v5395 = vpop.xlane.xlu0 %5394
      %5396 = vmax.xlane.f32.xlu0 %v5359
      %v5397 = vpop.xlane.xlu0 %5396
      %5398 = vmax.xlane.f32.xlu0 %v5364
      %v5399 = vpop.xlane.xlu0 %5398
      %5400 = vmax.xlane.f32.xlu0 %v5367
      %v5401 = vpop.xlane.xlu0 %5400
      %v5402 = vsub.f32 %v5308, %v5371
      %v5403 = vsub.f32 %v5311, %v5373
      %v5404 = vsub.f32 %v5316, %v5375
      %v5405 = vsub.f32 %v5319, %v5377
      %v5406 = vsub.f32 %v5324, %v5379
      %v5407 = vsub.f32 %v5327, %v5381
      %v5408 = vsub.f32 %v5332, %v5383
      %v5409 = vsub.f32 %v5335, %v5385
      %v5410 = vsub.f32 %v5340, %v5387
      %v5411 = vsub.f32 %v5343, %v5389
      %v5412 = vsub.f32 %v5348, %v5391
      %v5413 = vsub.f32 %v5351, %v5393
      %v5414 = vsub.f32 %v5356, %v5395
      %v5415 = vsub.f32 %v5359, %v5397
      %v5416 = vsub.f32 %v5364, %v5399
      %v5417 = vsub.f32 %v5367, %v5401
      %v5418 = vmul.f32 %v5402, 1.442695
      %v5419 = vpow.pop %v5418
      %v5420 = vmul.f32 %v5403, 1.442695
      %v5421 = vpow.pop %v5420
      %v5422 = vmul.f32 %v5404, 1.442695
      %v5423 = vpow.pop %v5422
      %v5424 = vmul.f32 %v5405, 1.442695
      %v5425 = vpow.pop %v5424
      %v5426 = vmul.f32 %v5406, 1.442695
      %v5427 = vpow.pop %v5426
      %v5428 = vmul.f32 %v5407, 1.442695
      %v5429 = vpow.pop %v5428
      %v5430 = vmul.f32 %v5408, 1.442695
      %v5431 = vpow.pop %v5430
      %v5432 = vmul.f32 %v5409, 1.442695
      %v5433 = vpow.pop %v5432
      %v5434 = vmul.f32 %v5410, 1.442695
      %v5435 = vpow.pop %v5434
      %v5436 = vmul.f32 %v5411, 1.442695
      %v5437 = vpow.pop %v5436
      %v5438 = vmul.f32 %v5412, 1.442695
      %v5439 = vpow.pop %v5438
      %v5440 = vmul.f32 %v5413, 1.442695
      %v5441 = vpow.pop %v5440
      %v5442 = vmul.f32 %v5414, 1.442695
      %v5443 = vpow.pop %v5442
      %v5444 = vmul.f32 %v5415, 1.442695
      %v5445 = vpow.pop %v5444
      %v5446 = vmul.f32 %v5416, 1.442695
      %v5447 = vpow.pop %v5446
      %v5448 = vmul.f32 %v5417, 1.442695
      %v5449 = vpow.pop %v5448
      %5450 = vadd.xlane.f32.xlu0 %v5419
      %v5451 = vpop.xlane.xlu0 %5450
      %5452 = vadd.xlane.f32.xlu0 %v5421
      %v5453 = vpop.xlane.xlu0 %5452
      %5454 = vadd.xlane.f32.xlu0 %v5423
      %v5455 = vpop.xlane.xlu0 %5454
      %5456 = vadd.xlane.f32.xlu0 %v5425
      %v5457 = vpop.xlane.xlu0 %5456
      %5458 = vadd.xlane.f32.xlu0 %v5427
      %v5459 = vpop.xlane.xlu0 %5458
      %5460 = vadd.xlane.f32.xlu0 %v5429
      %v5461 = vpop.xlane.xlu0 %5460
      %5462 = vadd.xlane.f32.xlu0 %v5431
      %v5463 = vpop.xlane.xlu0 %5462
      %5464 = vadd.xlane.f32.xlu0 %v5433
      %v5465 = vpop.xlane.xlu0 %5464
      %5466 = vadd.xlane.f32.xlu0 %v5435
      %v5467 = vpop.xlane.xlu0 %5466
      %5468 = vadd.xlane.f32.xlu0 %v5437
      %v5469 = vpop.xlane.xlu0 %5468
      %5470 = vadd.xlane.f32.xlu0 %v5439
      %v5471 = vpop.xlane.xlu0 %5470
      %5472 = vadd.xlane.f32.xlu0 %v5441
      %v5473 = vpop.xlane.xlu0 %5472
      %5474 = vadd.xlane.f32.xlu0 %v5443
      %v5475 = vpop.xlane.xlu0 %5474
      %5476 = vadd.xlane.f32.xlu0 %v5445
      %v5477 = vpop.xlane.xlu0 %5476
      %5478 = vadd.xlane.f32.xlu0 %v5447
      %v5479 = vpop.xlane.xlu0 %5478
      %5480 = vadd.xlane.f32.xlu0 %v5449
      %v5481 = vpop.xlane.xlu0 %5480
      %v5482 = vrcp.pop %v5451
      %v5483 = vrcp.pop %v5453
      %v5484 = vrcp.pop %v5455
      %v5485 = vrcp.pop %v5457
      %v5486 = vrcp.pop %v5459
      %v5487 = vrcp.pop %v5461
      %v5488 = vrcp.pop %v5463
      %v5489 = vrcp.pop %v5465
      %v5490 = vrcp.pop %v5467
      %v5491 = vrcp.pop %v5469
      %v5492 = vrcp.pop %v5471
      %v5493 = vrcp.pop %v5473
      %v5494 = vrcp.pop %v5475
      %v5495 = vrcp.pop %v5477
      %v5496 = vrcp.pop %v5479
      %v5497 = vrcp.pop %v5481
      %v5498 = vmul.f32 %v5419, %v5482
      %v5499 = vmul.f32 %v5421, %v5483
      %v5500 = vmul.f32 %v5423, %v5484
      %v5501 = vmul.f32 %v5425, %v5485
      %v5502 = vmul.f32 %v5427, %v5486
      %v5503 = vmul.f32 %v5429, %v5487
      %v5504 = vmul.f32 %v5431, %v5488
      %v5505 = vmul.f32 %v5433, %v5489
      %v5506 = vmul.f32 %v5435, %v5490
      %v5507 = vmul.f32 %v5437, %v5491
      %v5508 = vmul.f32 %v5439, %v5492
      %v5509 = vmul.f32 %v5441, %v5493
      %v5510 = vmul.f32 %v5443, %v5494
      %v5511 = vmul.f32 %v5445, %v5495
      %v5512 = vmul.f32 %v5447, %v5496
      %v5513 = vmul.f32 %v5449, %v5497
      %v5514 = vpack.c.bf16 %v5499, %v5498
      %v5515 = vpack.c.bf16 %v5501, %v5500
      %v5516 = vpack.c.bf16 %v5503, %v5502
      %v5517 = vpack.c.bf16 %v5505, %v5504
      %v5518 = vpack.c.bf16 %v5507, %v5506
      %v5519 = vpack.c.bf16 %v5509, %v5508
      %v5520 = vpack.c.bf16 %v5511, %v5510
      %v5521 = vpack.c.bf16 %v5513, %v5512
      %5522 = vrot.lane.b32.xlu0 %v684, 88
      %v5523 = vpop.permute.xlu0 %5522
      %5524 = vrot.lane.b32.xlu0 %v685, 88
      %v5525 = vpop.permute.xlu0 %5524
      %5526 = vrot.lane.b32.xlu0 %v686, 88
      %v5527 = vpop.permute.xlu0 %5526
      %5528 = vrot.lane.b32.xlu0 %v687, 88
      %v5529 = vpop.permute.xlu0 %5528
      %5530 = vrot.lane.b32.xlu0 %v688, 88
      %v5531 = vpop.permute.xlu0 %5530
      %5532 = vrot.lane.b32.xlu0 %v689, 88
      %v5533 = vpop.permute.xlu0 %5532
      %5534 = vrot.lane.b32.xlu0 %v690, 88
      %v5535 = vpop.permute.xlu0 %5534
      %5536 = vrot.lane.b32.xlu0 %v691, 88
      %v5537 = vpop.permute.xlu0 %5536
      %5546 = vmatprep.subr.bf16.mxu0 0
      %5547 = vmatpush1.bf16.msra.mxu0 %v5523
      %5548 = vmatprep.subr.bf16.mxu0 0
      %5549 = vmatpush1.bf16.msra.mxu0 %v5525
      %5550 = vmatprep.subr.bf16.mxu0 0
      %5551 = vmatpush1.bf16.msra.mxu0 %v5527
      %5552 = vmatprep.subr.bf16.mxu0 0
      %5553 = vmatpush1.bf16.msra.mxu0 %v5529
      %5554 = vmatprep.subr.bf16.mxu0 0
      %5555 = vmatpush1.bf16.msra.mxu0 %v5531
      %5556 = vmatprep.subr.bf16.mxu0 0
      %5557 = vmatpush1.bf16.msra.mxu0 %v5533
      %5558 = vmatprep.subr.bf16.mxu0 0
      %5559 = vmatpush1.bf16.msra.mxu0 %v5535
      %5560 = vmatprep.subr.bf16.mxu0 0
      %5561 = vmatpush1.bf16.msra.mxu0 %v5537
      %5562 = vmatprep.subr.bf16.mxu0 0
      %5563 = vmatpush1.bf16.msra.mxu0 0
      %5564 = vmatprep.subr.bf16.mxu0 0
      %5565 = vmatpush1.bf16.msra.mxu0 0
      %5566 = vmatprep.subr.bf16.mxu0 0
      %5567 = vmatpush1.bf16.msra.mxu0 0
      %5568 = vmatprep.subr.bf16.mxu0 0
      %5569 = vmatpush1.bf16.msra.mxu0 0
      %5570 = vmatprep.subr.bf16.mxu0 0
      %5571 = vmatpush1.bf16.msra.mxu0 0
      %5572 = vmatprep.subr.bf16.mxu0 0
      %5573 = vmatpush1.bf16.msra.mxu0 0
      %5574 = vmatprep.subr.bf16.mxu0 0
      %5575 = vmatpush1.bf16.msra.mxu0 0
      %5576 = vmatprep.subr.bf16.mxu0 0
      %5577 = vmatpush1.bf16.msra.mxu0 0
      %5578 = vmatprep.mubr.bf16.mxu0 0
      %5579 = vmatmul.mubr.bf16.gmra.mrb[0].mxu0 %v5514
      %v5580 = vpop.f32.mrb[0].mxu0
      %v5581 = vadd.f32 0.0, %v5580
      %v5582 = vpop.f32.mrb[0].mxu0
      %v5583 = vpop.f32.mrb[0].mxu0
      %v5584 = vadd.f32 0.0, %v5583
      %v5585 = vpop.f32.mrb[0].mxu0
      %5586 = vmatprep.mubr.bf16.mxu0 0
      %5587 = vmatmul.mubr.bf16.gmra.mrb[0].mxu0 %v5515
      %v5588 = vpop.f32.mrb[0].mxu0
      %v5589 = vadd.f32 0.0, %v5588
      %v5590 = vpop.f32.mrb[0].mxu0
      %v5591 = vpop.f32.mrb[0].mxu0
      %v5592 = vadd.f32 0.0, %v5591
      %v5593 = vpop.f32.mrb[0].mxu0
      %5594 = vmatprep.mubr.bf16.mxu0 0
      %5595 = vmatmul.mubr.bf16.gmra.mrb[0].mxu0 %v5516
      %v5596 = vpop.f32.mrb[0].mxu0
      %v5597 = vadd.f32 0.0, %v5596
      %v5598 = vpop.f32.mrb[0].mxu0
      %v5599 = vpop.f32.mrb[0].mxu0
      %v5600 = vadd.f32 0.0, %v5599
      %v5601 = vpop.f32.mrb[0].mxu0
      %5602 = vmatprep.mubr.bf16.mxu0 0
      %5603 = vmatmul.mubr.bf16.gmra.mrb[0].mxu0 %v5517
      %v5604 = vpop.f32.mrb[0].mxu0
      %v5605 = vadd.f32 0.0, %v5604
      %v5606 = vpop.f32.mrb[0].mxu0
      %v5607 = vpop.f32.mrb[0].mxu0
      %v5608 = vadd.f32 0.0, %v5607
      %v5609 = vpop.f32.mrb[0].mxu0
      %5610 = vmatprep.mubr.bf16.mxu0 0
      %5611 = vmatmul.mubr.bf16.gmra.mrb[0].mxu0 %v5518
      %v5612 = vpop.f32.mrb[0].mxu0
      %v5613 = vadd.f32 0.0, %v5612
      %v5614 = vpop.f32.mrb[0].mxu0
      %v5615 = vpop.f32.mrb[0].mxu0
      %v5616 = vadd.f32 0.0, %v5615
      %v5617 = vpop.f32.mrb[0].mxu0
      %5618 = vmatprep.mubr.bf16.mxu0 0
      %5619 = vmatmul.mubr.bf16.gmra.mrb[0].mxu0 %v5519
      %v5620 = vpop.f32.mrb[0].mxu0
      %v5621 = vadd.f32 0.0, %v5620
      %v5622 = vpop.f32.mrb[0].mxu0
      %v5623 = vpop.f32.mrb[0].mxu0
      %v5624 = vadd.f32 0.0, %v5623
      %v5625 = vpop.f32.mrb[0].mxu0
      %5626 = vmatprep.mubr.bf16.mxu0 0
      %5627 = vmatmul.mubr.bf16.gmra.mrb[0].mxu0 %v5520
      %v5628 = vpop.f32.mrb[0].mxu0
      %v5629 = vadd.f32 0.0, %v5628
      %v5630 = vpop.f32.mrb[0].mxu0
      %v5631 = vpop.f32.mrb[0].mxu0
      %v5632 = vadd.f32 0.0, %v5631
      %v5633 = vpop.f32.mrb[0].mxu0
      %5634 = vmatprep.mubr.bf16.mxu0 0
      %5635 = vmatmul.mubr.bf16.gmra.mrb[0].mxu0 %v5521
      %v5636 = vpop.f32.mrb[0].mxu0
      %v5637 = vadd.f32 0.0, %v5636
      %v5638 = vpop.f32.mrb[0].mxu0
      %v5639 = vpop.f32.mrb[0].mxu0
      %v5640 = vadd.f32 0.0, %v5639
      %v5641 = vpop.f32.mrb[0].mxu0
      %5642 = vdwg.mxu0
      %5643 = vrot.lane.b32.xlu0 %v668, 84
      %v5644 = vpop.permute.xlu0 %5643
      %5645 = vrot.lane.b32.xlu0 %v669, 84
      %v5646 = vpop.permute.xlu0 %5645
      %5647 = vrot.lane.b32.xlu0 %v670, 84
      %v5648 = vpop.permute.xlu0 %5647
      %5649 = vrot.lane.b32.xlu0 %v671, 84
      %v5650 = vpop.permute.xlu0 %5649
      %5651 = vrot.lane.b32.xlu0 %v672, 84
      %v5652 = vpop.permute.xlu0 %5651
      %5653 = vrot.lane.b32.xlu0 %v673, 84
      %v5654 = vpop.permute.xlu0 %5653
      %5655 = vrot.lane.b32.xlu0 %v674, 84
      %v5656 = vpop.permute.xlu0 %5655
      %5657 = vrot.lane.b32.xlu0 %v675, 84
      %v5658 = vpop.permute.xlu0 %5657
      %5659 = vrot.lane.b32.xlu0 %v676, 20
      %v5660 = vpop.permute.xlu0 %5659
      %5661 = vrot.lane.b32.xlu0 %v677, 20
      %v5662 = vpop.permute.xlu0 %5661
      %5663 = vrot.lane.b32.xlu0 %v678, 20
      %v5664 = vpop.permute.xlu0 %5663
      %5665 = vrot.lane.b32.xlu0 %v679, 20
      %v5666 = vpop.permute.xlu0 %5665
      %5667 = vrot.lane.b32.xlu0 %v680, 20
      %v5668 = vpop.permute.xlu0 %5667
      %5669 = vrot.lane.b32.xlu0 %v681, 20
      %v5670 = vpop.permute.xlu0 %5669
      %5671 = vrot.lane.b32.xlu0 %v682, 20
      %v5672 = vpop.permute.xlu0 %5671
      %5673 = vrot.lane.b32.xlu0 %v683, 20
      %v5674 = vpop.permute.xlu0 %5673
      %v5676 = vsel %vm732, %v5644, 0
      %v5679 = vsel %vm732, %v5646, 0
      %v5682 = vsel %vm732, %v5648, 0
      %v5685 = vsel %vm732, %v5650, 0
      %v5688 = vsel %vm732, %v5652, 0
      %v5691 = vsel %vm732, %v5654, 0
      %v5694 = vsel %vm732, %v5656, 0
      %v5697 = vsel %vm732, %v5658, 0
      %v5700 = vsel %vm732, %v5660, 0
      %v5703 = vsel %vm732, %v5662, 0
      %v5706 = vsel %vm732, %v5664, 0
      %v5709 = vsel %vm732, %v5666, 0
      %v5712 = vsel %vm732, %v5668, 0
      %v5715 = vsel %vm732, %v5670, 0
      %v5718 = vsel %vm732, %v5672, 0
      %v5721 = vsel %vm732, %v5674, 0
      %5723 = vmatprep.subr.bf16.mxu0 0
      %5724 = vmatpush1.bf16.xpose.msra.mxu0 %v5700
      %5725 = vmatprep.subr.bf16.mxu0 0
      %5726 = vmatpush1.bf16.xpose.msra.mxu0 %v5703
      %5727 = vmatprep.subr.bf16.mxu0 0
      %5728 = vmatpush1.bf16.xpose.msra.mxu0 %v5706
      %5729 = vmatprep.subr.bf16.mxu0 0
      %5730 = vmatpush1.bf16.xpose.msra.mxu0 %v5709
      %5731 = vmatprep.subr.bf16.mxu0 0
      %5732 = vmatpush1.bf16.xpose.msra.mxu0 %v5712
      %5733 = vmatprep.subr.bf16.mxu0 0
      %5734 = vmatpush1.bf16.xpose.msra.mxu0 %v5715
      %5735 = vmatprep.subr.bf16.mxu0 0
      %5736 = vmatpush1.bf16.xpose.msra.mxu0 %v5718
      %5737 = vmatprep.subr.bf16.mxu0 0
      %5738 = vmatpush1.bf16.xpose.msra.mxu0 %v5721
      %5739 = vmatprep.subr.bf16.mxu0 0
      %5740 = vmatpush1.bf16.xpose.msra.mxu0 0
      %5741 = vmatprep.subr.bf16.mxu0 0
      %5742 = vmatpush1.bf16.xpose.msra.mxu0 0
      %5743 = vmatprep.subr.bf16.mxu0 0
      %5744 = vmatpush1.bf16.xpose.msra.mxu0 0
      %5745 = vmatprep.subr.bf16.mxu0 0
      %5746 = vmatpush1.bf16.xpose.msra.mxu0 0
      %5747 = vmatprep.subr.bf16.mxu0 0
      %5748 = vmatpush1.bf16.xpose.msra.mxu0 0
      %5749 = vmatprep.subr.bf16.mxu0 0
      %5750 = vmatpush1.bf16.xpose.msra.mxu0 0
      %5751 = vmatprep.subr.bf16.mxu0 0
      %5752 = vmatpush1.bf16.xpose.msra.mxu0 0
      %5753 = vmatprep.subr.bf16.mxu0 0
      %5754 = vmatpush1.bf16.xpose.msra.mxu0 0
      %5755 = vmatprep.mubr.bf16.mxu0 0
      %5756 = vmatmul.mubr.bf16.gmra.mrb[0].mxu0 %v5676
      %v5757 = vpop.f32.mrb[0].mxu0
      %v5758 = vadd.f32 %v692, %v5757
      %v5759 = vpop.f32.mrb[0].mxu0
      %v5760 = vpop.f32.mrb[0].mxu0
      %v5761 = vadd.f32 %v693, %v5760
      %v5762 = vpop.f32.mrb[0].mxu0
      %5763 = vmatprep.mubr.bf16.mxu0 0
      %5764 = vmatmul.mubr.bf16.gmra.mrb[0].mxu0 %v5679
      %v5765 = vpop.f32.mrb[0].mxu0
      %v5766 = vadd.f32 %v694, %v5765
      %v5767 = vpop.f32.mrb[0].mxu0
      %v5768 = vpop.f32.mrb[0].mxu0
      %v5769 = vadd.f32 %v695, %v5768
      %v5770 = vpop.f32.mrb[0].mxu0
      %5771 = vmatprep.mubr.bf16.mxu0 0
      %5772 = vmatmul.mubr.bf16.gmra.mrb[0].mxu0 %v5682
      %v5773 = vpop.f32.mrb[0].mxu0
      %v5774 = vadd.f32 %v696, %v5773
      %v5775 = vpop.f32.mrb[0].mxu0
      %v5776 = vpop.f32.mrb[0].mxu0
      %v5777 = vadd.f32 %v697, %v5776
      %v5778 = vpop.f32.mrb[0].mxu0
      %5779 = vmatprep.mubr.bf16.mxu0 0
      %5780 = vmatmul.mubr.bf16.gmra.mrb[0].mxu0 %v5685
      %v5781 = vpop.f32.mrb[0].mxu0
      %v5782 = vadd.f32 %v698, %v5781
      %v5783 = vpop.f32.mrb[0].mxu0
      %v5784 = vpop.f32.mrb[0].mxu0
      %v5785 = vadd.f32 %v699, %v5784
      %v5786 = vpop.f32.mrb[0].mxu0
      %5787 = vmatprep.mubr.bf16.mxu0 0
      %5788 = vmatmul.mubr.bf16.gmra.mrb[0].mxu0 %v5688
      %v5789 = vpop.f32.mrb[0].mxu0
      %v5790 = vadd.f32 %v700, %v5789
      %v5791 = vpop.f32.mrb[0].mxu0
      %v5792 = vpop.f32.mrb[0].mxu0
      %v5793 = vadd.f32 %v701, %v5792
      %v5794 = vpop.f32.mrb[0].mxu0
      %5795 = vmatprep.mubr.bf16.mxu0 0
      %5796 = vmatmul.mubr.bf16.gmra.mrb[0].mxu0 %v5691
      %v5797 = vpop.f32.mrb[0].mxu0
      %v5798 = vadd.f32 %v702, %v5797
      %v5799 = vpop.f32.mrb[0].mxu0
      %v5800 = vpop.f32.mrb[0].mxu0
      %v5801 = vadd.f32 %v703, %v5800
      %v5802 = vpop.f32.mrb[0].mxu0
      %5803 = vmatprep.mubr.bf16.mxu0 0
      %5804 = vmatmul.mubr.bf16.gmra.mrb[0].mxu0 %v5694
      %v5805 = vpop.f32.mrb[0].mxu0
      %v5806 = vadd.f32 %v704, %v5805
      %v5807 = vpop.f32.mrb[0].mxu0
      %v5808 = vpop.f32.mrb[0].mxu0
      %v5809 = vadd.f32 %v705, %v5808
      %v5810 = vpop.f32.mrb[0].mxu0
      %5811 = vmatprep.mubr.bf16.mxu0 0
      %5812 = vmatmul.mubr.bf16.gmra.mrb[0].mxu0 %v5697
      %v5813 = vpop.f32.mrb[0].mxu0
      %v5814 = vadd.f32 %v706, %v5813
      %v5815 = vpop.f32.mrb[0].mxu0
      %v5816 = vpop.f32.mrb[0].mxu0
      %v5817 = vadd.f32 %v707, %v5816
      %v5818 = vpop.f32.mrb[0].mxu0
      %5819 = vdwg.mxu0
      %5820 = vmax.xlane.f32.xlu0 %v5758
      %v5821 = vpop.xlane.xlu0 %5820
      %5822 = vmax.xlane.f32.xlu0 %v5761
      %v5823 = vpop.xlane.xlu0 %5822
      %5824 = vmax.xlane.f32.xlu0 %v5766
      %v5825 = vpop.xlane.xlu0 %5824
      %5826 = vmax.xlane.f32.xlu0 %v5769
      %v5827 = vpop.xlane.xlu0 %5826
      %5828 = vmax.xlane.f32.xlu0 %v5774
      %v5829 = vpop.xlane.xlu0 %5828
      %5830 = vmax.xlane.f32.xlu0 %v5777
      %v5831 = vpop.xlane.xlu0 %5830
      %5832 = vmax.xlane.f32.xlu0 %v5782
      %v5833 = vpop.xlane.xlu0 %5832
      %5834 = vmax.xlane.f32.xlu0 %v5785
      %v5835 = vpop.xlane.xlu0 %5834
      %5836 = vmax.xlane.f32.xlu0 %v5790
      %v5837 = vpop.xlane.xlu0 %5836
      %5838 = vmax.xlane.f32.xlu0 %v5793
      %v5839 = vpop.xlane.xlu0 %5838
      %5840 = vmax.xlane.f32.xlu0 %v5798
      %v5841 = vpop.xlane.xlu0 %5840
      %5842 = vmax.xlane.f32.xlu0 %v5801
      %v5843 = vpop.xlane.xlu0 %5842
      %5844 = vmax.xlane.f32.xlu0 %v5806
      %v5845 = vpop.xlane.xlu0 %5844
      %5846 = vmax.xlane.f32.xlu0 %v5809
      %v5847 = vpop.xlane.xlu0 %5846
      %5848 = vmax.xlane.f32.xlu0 %v5814
      %v5849 = vpop.xlane.xlu0 %5848
      %5850 = vmax.xlane.f32.xlu0 %v5817
      %v5851 = vpop.xlane.xlu0 %5850
      %v5852 = vsub.f32 %v5758, %v5821
      %v5853 = vsub.f32 %v5761, %v5823
      %v5854 = vsub.f32 %v5766, %v5825
      %v5855 = vsub.f32 %v5769, %v5827
      %v5856 = vsub.f32 %v5774, %v5829
      %v5857 = vsub.f32 %v5777, %v5831
      %v5858 = vsub.f32 %v5782, %v5833
      %v5859 = vsub.f32 %v5785, %v5835
      %v5860 = vsub.f32 %v5790, %v5837
      %v5861 = vsub.f32 %v5793, %v5839
      %v5862 = vsub.f32 %v5798, %v5841
      %v5863 = vsub.f32 %v5801, %v5843
      %v5864 = vsub.f32 %v5806, %v5845
      %v5865 = vsub.f32 %v5809, %v5847
      %v5866 = vsub.f32 %v5814, %v5849
      %v5867 = vsub.f32 %v5817, %v5851
      %v5868 = vmul.f32 %v5852, 1.442695
      %v5869 = vpow.pop %v5868
      %v5870 = vmul.f32 %v5853, 1.442695
      %v5871 = vpow.pop %v5870
      %v5872 = vmul.f32 %v5854, 1.442695
      %v5873 = vpow.pop %v5872
      %v5874 = vmul.f32 %v5855, 1.442695
      %v5875 = vpow.pop %v5874
      %v5876 = vmul.f32 %v5856, 1.442695
      %v5877 = vpow.pop %v5876
      %v5878 = vmul.f32 %v5857, 1.442695
      %v5879 = vpow.pop %v5878
      %v5880 = vmul.f32 %v5858, 1.442695
      %v5881 = vpow.pop %v5880
      %v5882 = vmul.f32 %v5859, 1.442695
      %v5883 = vpow.pop %v5882
      %v5884 = vmul.f32 %v5860, 1.442695
      %v5885 = vpow.pop %v5884
      %v5886 = vmul.f32 %v5861, 1.442695
      %v5887 = vpow.pop %v5886
      %v5888 = vmul.f32 %v5862, 1.442695
      %v5889 = vpow.pop %v5888
      %v5890 = vmul.f32 %v5863, 1.442695
      %v5891 = vpow.pop %v5890
      %v5892 = vmul.f32 %v5864, 1.442695
      %v5893 = vpow.pop %v5892
      %v5894 = vmul.f32 %v5865, 1.442695
      %v5895 = vpow.pop %v5894
      %v5896 = vmul.f32 %v5866, 1.442695
      %v5897 = vpow.pop %v5896
      %v5898 = vmul.f32 %v5867, 1.442695
      %v5899 = vpow.pop %v5898
      %5900 = vadd.xlane.f32.xlu0 %v5869
      %v5901 = vpop.xlane.xlu0 %5900
      %5902 = vadd.xlane.f32.xlu0 %v5871
      %v5903 = vpop.xlane.xlu0 %5902
      %5904 = vadd.xlane.f32.xlu0 %v5873
      %v5905 = vpop.xlane.xlu0 %5904
      %5906 = vadd.xlane.f32.xlu0 %v5875
      %v5907 = vpop.xlane.xlu0 %5906
      %5908 = vadd.xlane.f32.xlu0 %v5877
      %v5909 = vpop.xlane.xlu0 %5908
      %5910 = vadd.xlane.f32.xlu0 %v5879
      %v5911 = vpop.xlane.xlu0 %5910
      %5912 = vadd.xlane.f32.xlu0 %v5881
      %v5913 = vpop.xlane.xlu0 %5912
      %5914 = vadd.xlane.f32.xlu0 %v5883
      %v5915 = vpop.xlane.xlu0 %5914
      %5916 = vadd.xlane.f32.xlu0 %v5885
      %v5917 = vpop.xlane.xlu0 %5916
      %5918 = vadd.xlane.f32.xlu0 %v5887
      %v5919 = vpop.xlane.xlu0 %5918
      %5920 = vadd.xlane.f32.xlu0 %v5889
      %v5921 = vpop.xlane.xlu0 %5920
      %5922 = vadd.xlane.f32.xlu0 %v5891
      %v5923 = vpop.xlane.xlu0 %5922
      %5924 = vadd.xlane.f32.xlu0 %v5893
      %v5925 = vpop.xlane.xlu0 %5924
      %5926 = vadd.xlane.f32.xlu0 %v5895
      %v5927 = vpop.xlane.xlu0 %5926
      %5928 = vadd.xlane.f32.xlu0 %v5897
      %v5929 = vpop.xlane.xlu0 %5928
      %5930 = vadd.xlane.f32.xlu0 %v5899
      %v5931 = vpop.xlane.xlu0 %5930
      %v5932 = vrcp.pop %v5901
      %v5933 = vrcp.pop %v5903
      %v5934 = vrcp.pop %v5905
      %v5935 = vrcp.pop %v5907
      %v5936 = vrcp.pop %v5909
      %v5937 = vrcp.pop %v5911
      %v5938 = vrcp.pop %v5913
      %v5939 = vrcp.pop %v5915
      %v5940 = vrcp.pop %v5917
      %v5941 = vrcp.pop %v5919
      %v5942 = vrcp.pop %v5921
      %v5943 = vrcp.pop %v5923
      %v5944 = vrcp.pop %v5925
      %v5945 = vrcp.pop %v5927
      %v5946 = vrcp.pop %v5929
      %v5947 = vrcp.pop %v5931
      %v5948 = vmul.f32 %v5869, %v5932
      %v5949 = vmul.f32 %v5871, %v5933
      %v5950 = vmul.f32 %v5873, %v5934
      %v5951 = vmul.f32 %v5875, %v5935
      %v5952 = vmul.f32 %v5877, %v5936
      %v5953 = vmul.f32 %v5879, %v5937
      %v5954 = vmul.f32 %v5881, %v5938
      %v5955 = vmul.f32 %v5883, %v5939
      %v5956 = vmul.f32 %v5885, %v5940
      %v5957 = vmul.f32 %v5887, %v5941
      %v5958 = vmul.f32 %v5889, %v5942
      %v5959 = vmul.f32 %v5891, %v5943
      %v5960 = vmul.f32 %v5893, %v5944
      %v5961 = vmul.f32 %v5895, %v5945
      %v5962 = vmul.f32 %v5897, %v5946
      %v5963 = vmul.f32 %v5899, %v5947
      %v5964 = vpack.c.bf16 %v5949, %v5948
      %v5965 = vpack.c.bf16 %v5951, %v5950
      %v5966 = vpack.c.bf16 %v5953, %v5952
      %v5967 = vpack.c.bf16 %v5955, %v5954
      %v5968 = vpack.c.bf16 %v5957, %v5956
      %v5969 = vpack.c.bf16 %v5959, %v5958
      %v5970 = vpack.c.bf16 %v5961, %v5960
      %v5971 = vpack.c.bf16 %v5963, %v5962
      %5972 = vrot.lane.b32.xlu0 %v684, 84
      %v5973 = vpop.permute.xlu0 %5972
      %5974 = vrot.lane.b32.xlu0 %v685, 84
      %v5975 = vpop.permute.xlu0 %5974
      %5976 = vrot.lane.b32.xlu0 %v686, 84
      %v5977 = vpop.permute.xlu0 %5976
      %5978 = vrot.lane.b32.xlu0 %v687, 84
      %v5979 = vpop.permute.xlu0 %5978
      %5980 = vrot.lane.b32.xlu0 %v688, 84
      %v5981 = vpop.permute.xlu0 %5980
      %5982 = vrot.lane.b32.xlu0 %v689, 84
      %v5983 = vpop.permute.xlu0 %5982
      %5984 = vrot.lane.b32.xlu0 %v690, 84
      %v5985 = vpop.permute.xlu0 %5984
      %5986 = vrot.lane.b32.xlu0 %v691, 84
      %v5987 = vpop.permute.xlu0 %5986
      %5996 = vmatprep.subr.bf16.mxu0 0
      %5997 = vmatpush1.bf16.msra.mxu0 %v5973
      %5998 = vmatprep.subr.bf16.mxu0 0
      %5999 = vmatpush1.bf16.msra.mxu0 %v5975
      %6000 = vmatprep.subr.bf16.mxu0 0
      %6001 = vmatpush1.bf16.msra.mxu0 %v5977
      %6002 = vmatprep.subr.bf16.mxu0 0
      %6003 = vmatpush1.bf16.msra.mxu0 %v5979
      %6004 = vmatprep.subr.bf16.mxu0 0
      %6005 = vmatpush1.bf16.msra.mxu0 %v5981
      %6006 = vmatprep.subr.bf16.mxu0 0
      %6007 = vmatpush1.bf16.msra.mxu0 %v5983
      %6008 = vmatprep.subr.bf16.mxu0 0
      %6009 = vmatpush1.bf16.msra.mxu0 %v5985
      %6010 = vmatprep.subr.bf16.mxu0 0
      %6011 = vmatpush1.bf16.msra.mxu0 %v5987
      %6012 = vmatprep.subr.bf16.mxu0 0
      %6013 = vmatpush1.bf16.msra.mxu0 0
      %6014 = vmatprep.subr.bf16.mxu0 0
      %6015 = vmatpush1.bf16.msra.mxu0 0
      %6016 = vmatprep.subr.bf16.mxu0 0
      %6017 = vmatpush1.bf16.msra.mxu0 0
      %6018 = vmatprep.subr.bf16.mxu0 0
      %6019 = vmatpush1.bf16.msra.mxu0 0
      %6020 = vmatprep.subr.bf16.mxu0 0
      %6021 = vmatpush1.bf16.msra.mxu0 0
      %6022 = vmatprep.subr.bf16.mxu0 0
      %6023 = vmatpush1.bf16.msra.mxu0 0
      %6024 = vmatprep.subr.bf16.mxu0 0
      %6025 = vmatpush1.bf16.msra.mxu0 0
      %6026 = vmatprep.subr.bf16.mxu0 0
      %6027 = vmatpush1.bf16.msra.mxu0 0
      %6028 = vmatprep.mubr.bf16.mxu0 0
      %6029 = vmatmul.mubr.bf16.gmra.mrb[0].mxu0 %v5964
      %v6030 = vpop.f32.mrb[0].mxu0
      %v6031 = vadd.f32 0.0, %v6030
      %v6032 = vpop.f32.mrb[0].mxu0
      %v6033 = vpop.f32.mrb[0].mxu0
      %v6034 = vadd.f32 0.0, %v6033
      %v6035 = vpop.f32.mrb[0].mxu0
      %6036 = vmatprep.mubr.bf16.mxu0 0
      %6037 = vmatmul.mubr.bf16.gmra.mrb[0].mxu0 %v5965
      %v6038 = vpop.f32.mrb[0].mxu0
      %v6039 = vadd.f32 0.0, %v6038
      %v6040 = vpop.f32.mrb[0].mxu0
      %v6041 = vpop.f32.mrb[0].mxu0
      %v6042 = vadd.f32 0.0, %v6041
      %v6043 = vpop.f32.mrb[0].mxu0
      %6044 = vmatprep.mubr.bf16.mxu0 0
      %6045 = vmatmul.mubr.bf16.gmra.mrb[0].mxu0 %v5966
      %v6046 = vpop.f32.mrb[0].mxu0
      %v6047 = vadd.f32 0.0, %v6046
      %v6048 = vpop.f32.mrb[0].mxu0
      %v6049 = vpop.f32.mrb[0].mxu0
      %v6050 = vadd.f32 0.0, %v6049
      %v6051 = vpop.f32.mrb[0].mxu0
      %6052 = vmatprep.mubr.bf16.mxu0 0
      %6053 = vmatmul.mubr.bf16.gmra.mrb[0].mxu0 %v5967
      %v6054 = vpop.f32.mrb[0].mxu0
      %v6055 = vadd.f32 0.0, %v6054
      %v6056 = vpop.f32.mrb[0].mxu0
      %v6057 = vpop.f32.mrb[0].mxu0
      %v6058 = vadd.f32 0.0, %v6057
      %v6059 = vpop.f32.mrb[0].mxu0
      %6060 = vmatprep.mubr.bf16.mxu0 0
      %6061 = vmatmul.mubr.bf16.gmra.mrb[0].mxu0 %v5968
      %v6062 = vpop.f32.mrb[0].mxu0
      %v6063 = vadd.f32 0.0, %v6062
      %v6064 = vpop.f32.mrb[0].mxu0
      %v6065 = vpop.f32.mrb[0].mxu0
      %v6066 = vadd.f32 0.0, %v6065
      %v6067 = vpop.f32.mrb[0].mxu0
      %6068 = vmatprep.mubr.bf16.mxu0 0
      %6069 = vmatmul.mubr.bf16.gmra.mrb[0].mxu0 %v5969
      %v6070 = vpop.f32.mrb[0].mxu0
      %v6071 = vadd.f32 0.0, %v6070
      %v6072 = vpop.f32.mrb[0].mxu0
      %v6073 = vpop.f32.mrb[0].mxu0
      %v6074 = vadd.f32 0.0, %v6073
      %v6075 = vpop.f32.mrb[0].mxu0
      %6076 = vmatprep.mubr.bf16.mxu0 0
      %6077 = vmatmul.mubr.bf16.gmra.mrb[0].mxu0 %v5970
      %v6078 = vpop.f32.mrb[0].mxu0
      %v6079 = vadd.f32 0.0, %v6078
      %v6080 = vpop.f32.mrb[0].mxu0
      %v6081 = vpop.f32.mrb[0].mxu0
      %v6082 = vadd.f32 0.0, %v6081
      %v6083 = vpop.f32.mrb[0].mxu0
      %6084 = vmatprep.mubr.bf16.mxu0 0
      %6085 = vmatmul.mubr.bf16.gmra.mrb[0].mxu0 %v5971
      %v6086 = vpop.f32.mrb[0].mxu0
      %v6087 = vadd.f32 0.0, %v6086
      %v6088 = vpop.f32.mrb[0].mxu0
      %v6089 = vpop.f32.mrb[0].mxu0
      %v6090 = vadd.f32 0.0, %v6089
      %v6091 = vpop.f32.mrb[0].mxu0
      %6092 = vdwg.mxu0
      %6093 = vrot.lane.b32.xlu0 %v668, 80
      %v6094 = vpop.permute.xlu0 %6093
      %6095 = vrot.lane.b32.xlu0 %v669, 80
      %v6096 = vpop.permute.xlu0 %6095
      %6097 = vrot.lane.b32.xlu0 %v670, 80
      %v6098 = vpop.permute.xlu0 %6097
      %6099 = vrot.lane.b32.xlu0 %v671, 80
      %v6100 = vpop.permute.xlu0 %6099
      %6101 = vrot.lane.b32.xlu0 %v672, 80
      %v6102 = vpop.permute.xlu0 %6101
      %6103 = vrot.lane.b32.xlu0 %v673, 80
      %v6104 = vpop.permute.xlu0 %6103
      %6105 = vrot.lane.b32.xlu0 %v674, 80
      %v6106 = vpop.permute.xlu0 %6105
      %6107 = vrot.lane.b32.xlu0 %v675, 80
      %v6108 = vpop.permute.xlu0 %6107
      %6109 = vrot.lane.b32.xlu0 %v676, 16
      %v6110 = vpop.permute.xlu0 %6109
      %6111 = vrot.lane.b32.xlu0 %v677, 16
      %v6112 = vpop.permute.xlu0 %6111
      %6113 = vrot.lane.b32.xlu0 %v678, 16
      %v6114 = vpop.permute.xlu0 %6113
      %6115 = vrot.lane.b32.xlu0 %v679, 16
      %v6116 = vpop.permute.xlu0 %6115
      %6117 = vrot.lane.b32.xlu0 %v680, 16
      %v6118 = vpop.permute.xlu0 %6117
      %6119 = vrot.lane.b32.xlu0 %v681, 16
      %v6120 = vpop.permute.xlu0 %6119
      %6121 = vrot.lane.b32.xlu0 %v682, 16
      %v6122 = vpop.permute.xlu0 %6121
      %6123 = vrot.lane.b32.xlu0 %v683, 16
      %v6124 = vpop.permute.xlu0 %6123
      %v6126 = vsel %vm732, %v6094, 0
      %v6129 = vsel %vm732, %v6096, 0
      %v6132 = vsel %vm732, %v6098, 0
      %v6135 = vsel %vm732, %v6100, 0
      %v6138 = vsel %vm732, %v6102, 0
      %v6141 = vsel %vm732, %v6104, 0
      %v6144 = vsel %vm732, %v6106, 0
      %v6147 = vsel %vm732, %v6108, 0
      %v6150 = vsel %vm732, %v6110, 0
      %v6153 = vsel %vm732, %v6112, 0
      %v6156 = vsel %vm732, %v6114, 0
      %v6159 = vsel %vm732, %v6116, 0
      %v6162 = vsel %vm732, %v6118, 0
      %v6165 = vsel %vm732, %v6120, 0
      %v6168 = vsel %vm732, %v6122, 0
      %v6171 = vsel %vm732, %v6124, 0
      %6173 = vmatprep.subr.bf16.mxu0 0
      %6174 = vmatpush1.bf16.xpose.msra.mxu0 %v6150
      %6175 = vmatprep.subr.bf16.mxu0 0
      %6176 = vmatpush1.bf16.xpose.msra.mxu0 %v6153
      %6177 = vmatprep.subr.bf16.mxu0 0
      %6178 = vmatpush1.bf16.xpose.msra.mxu0 %v6156
      %6179 = vmatprep.subr.bf16.mxu0 0
      %6180 = vmatpush1.bf16.xpose.msra.mxu0 %v6159
      %6181 = vmatprep.subr.bf16.mxu0 0
      %6182 = vmatpush1.bf16.xpose.msra.mxu0 %v6162
      %6183 = vmatprep.subr.bf16.mxu0 0
      %6184 = vmatpush1.bf16.xpose.msra.mxu0 %v6165
      %6185 = vmatprep.subr.bf16.mxu0 0
      %6186 = vmatpush1.bf16.xpose.msra.mxu0 %v6168
      %6187 = vmatprep.subr.bf16.mxu0 0
      %6188 = vmatpush1.bf16.xpose.msra.mxu0 %v6171
      %6189 = vmatprep.subr.bf16.mxu0 0
      %6190 = vmatpush1.bf16.xpose.msra.mxu0 0
      %6191 = vmatprep.subr.bf16.mxu0 0
      %6192 = vmatpush1.bf16.xpose.msra.mxu0 0
      %6193 = vmatprep.subr.bf16.mxu0 0
      %6194 = vmatpush1.bf16.xpose.msra.mxu0 0
      %6195 = vmatprep.subr.bf16.mxu0 0
      %6196 = vmatpush1.bf16.xpose.msra.mxu0 0
      %6197 = vmatprep.subr.bf16.mxu0 0
      %6198 = vmatpush1.bf16.xpose.msra.mxu0 0
      %6199 = vmatprep.subr.bf16.mxu0 0
      %6200 = vmatpush1.bf16.xpose.msra.mxu0 0
      %6201 = vmatprep.subr.bf16.mxu0 0
      %6202 = vmatpush1.bf16.xpose.msra.mxu0 0
      %6203 = vmatprep.subr.bf16.mxu0 0
      %6204 = vmatpush1.bf16.xpose.msra.mxu0 0
      %6205 = vmatprep.mubr.bf16.mxu0 0
      %6206 = vmatmul.mubr.bf16.gmra.mrb[0].mxu0 %v6126
      %v6207 = vpop.f32.mrb[0].mxu0
      %v6208 = vadd.f32 %v692, %v6207
      %v6209 = vpop.f32.mrb[0].mxu0
      %v6210 = vpop.f32.mrb[0].mxu0
      %v6211 = vadd.f32 %v693, %v6210
      %v6212 = vpop.f32.mrb[0].mxu0
      %6213 = vmatprep.mubr.bf16.mxu0 0
      %6214 = vmatmul.mubr.bf16.gmra.mrb[0].mxu0 %v6129
      %v6215 = vpop.f32.mrb[0].mxu0
      %v6216 = vadd.f32 %v694, %v6215
      %v6217 = vpop.f32.mrb[0].mxu0
      %v6218 = vpop.f32.mrb[0].mxu0
      %v6219 = vadd.f32 %v695, %v6218
      %v6220 = vpop.f32.mrb[0].mxu0
      %6221 = vmatprep.mubr.bf16.mxu0 0
      %6222 = vmatmul.mubr.bf16.gmra.mrb[0].mxu0 %v6132
      %v6223 = vpop.f32.mrb[0].mxu0
      %v6224 = vadd.f32 %v696, %v6223
      %v6225 = vpop.f32.mrb[0].mxu0
      %v6226 = vpop.f32.mrb[0].mxu0
      %v6227 = vadd.f32 %v697, %v6226
      %v6228 = vpop.f32.mrb[0].mxu0
      %6229 = vmatprep.mubr.bf16.mxu0 0
      %6230 = vmatmul.mubr.bf16.gmra.mrb[0].mxu0 %v6135
      %v6231 = vpop.f32.mrb[0].mxu0
      %v6232 = vadd.f32 %v698, %v6231
      %v6233 = vpop.f32.mrb[0].mxu0
      %v6234 = vpop.f32.mrb[0].mxu0
      %v6235 = vadd.f32 %v699, %v6234
      %v6236 = vpop.f32.mrb[0].mxu0
      %6237 = vmatprep.mubr.bf16.mxu0 0
      %6238 = vmatmul.mubr.bf16.gmra.mrb[0].mxu0 %v6138
      %v6239 = vpop.f32.mrb[0].mxu0
      %v6240 = vadd.f32 %v700, %v6239
      %v6241 = vpop.f32.mrb[0].mxu0
      %v6242 = vpop.f32.mrb[0].mxu0
      %v6243 = vadd.f32 %v701, %v6242
      %v6244 = vpop.f32.mrb[0].mxu0
      %6245 = vmatprep.mubr.bf16.mxu0 0
      %6246 = vmatmul.mubr.bf16.gmra.mrb[0].mxu0 %v6141
      %v6247 = vpop.f32.mrb[0].mxu0
      %v6248 = vadd.f32 %v702, %v6247
      %v6249 = vpop.f32.mrb[0].mxu0
      %v6250 = vpop.f32.mrb[0].mxu0
      %v6251 = vadd.f32 %v703, %v6250
      %v6252 = vpop.f32.mrb[0].mxu0
      %6253 = vmatprep.mubr.bf16.mxu0 0
      %6254 = vmatmul.mubr.bf16.gmra.mrb[0].mxu0 %v6144
      %v6255 = vpop.f32.mrb[0].mxu0
      %v6256 = vadd.f32 %v704, %v6255
      %v6257 = vpop.f32.mrb[0].mxu0
      %v6258 = vpop.f32.mrb[0].mxu0
      %v6259 = vadd.f32 %v705, %v6258
      %v6260 = vpop.f32.mrb[0].mxu0
      %6261 = vmatprep.mubr.bf16.mxu0 0
      %6262 = vmatmul.mubr.bf16.gmra.mrb[0].mxu0 %v6147
      %v6263 = vpop.f32.mrb[0].mxu0
      %v6264 = vadd.f32 %v706, %v6263
      %v6265 = vpop.f32.mrb[0].mxu0
      %v6266 = vpop.f32.mrb[0].mxu0
      %v6267 = vadd.f32 %v707, %v6266
      %v6268 = vpop.f32.mrb[0].mxu0
      %6269 = vdwg.mxu0
      %6270 = vmax.xlane.f32.xlu0 %v6208
      %v6271 = vpop.xlane.xlu0 %6270
      %6272 = vmax.xlane.f32.xlu0 %v6211
      %v6273 = vpop.xlane.xlu0 %6272
      %6274 = vmax.xlane.f32.xlu0 %v6216
      %v6275 = vpop.xlane.xlu0 %6274
      %6276 = vmax.xlane.f32.xlu0 %v6219
      %v6277 = vpop.xlane.xlu0 %6276
      %6278 = vmax.xlane.f32.xlu0 %v6224
      %v6279 = vpop.xlane.xlu0 %6278
      %6280 = vmax.xlane.f32.xlu0 %v6227
      %v6281 = vpop.xlane.xlu0 %6280
      %6282 = vmax.xlane.f32.xlu0 %v6232
      %v6283 = vpop.xlane.xlu0 %6282
      %6284 = vmax.xlane.f32.xlu0 %v6235
      %v6285 = vpop.xlane.xlu0 %6284
      %6286 = vmax.xlane.f32.xlu0 %v6240
      %v6287 = vpop.xlane.xlu0 %6286
      %6288 = vmax.xlane.f32.xlu0 %v6243
      %v6289 = vpop.xlane.xlu0 %6288
      %6290 = vmax.xlane.f32.xlu0 %v6248
      %v6291 = vpop.xlane.xlu0 %6290
      %6292 = vmax.xlane.f32.xlu0 %v6251
      %v6293 = vpop.xlane.xlu0 %6292
      %6294 = vmax.xlane.f32.xlu0 %v6256
      %v6295 = vpop.xlane.xlu0 %6294
      %6296 = vmax.xlane.f32.xlu0 %v6259
      %v6297 = vpop.xlane.xlu0 %6296
      %6298 = vmax.xlane.f32.xlu0 %v6264
      %v6299 = vpop.xlane.xlu0 %6298
      %6300 = vmax.xlane.f32.xlu0 %v6267
      %v6301 = vpop.xlane.xlu0 %6300
      %v6302 = vsub.f32 %v6208, %v6271
      %v6303 = vsub.f32 %v6211, %v6273
      %v6304 = vsub.f32 %v6216, %v6275
      %v6305 = vsub.f32 %v6219, %v6277
      %v6306 = vsub.f32 %v6224, %v6279
      %v6307 = vsub.f32 %v6227, %v6281
      %v6308 = vsub.f32 %v6232, %v6283
      %v6309 = vsub.f32 %v6235, %v6285
      %v6310 = vsub.f32 %v6240, %v6287
      %v6311 = vsub.f32 %v6243, %v6289
      %v6312 = vsub.f32 %v6248, %v6291
      %v6313 = vsub.f32 %v6251, %v6293
      %v6314 = vsub.f32 %v6256, %v6295
      %v6315 = vsub.f32 %v6259, %v6297
      %v6316 = vsub.f32 %v6264, %v6299
      %v6317 = vsub.f32 %v6267, %v6301
      %v6318 = vmul.f32 %v6302, 1.442695
      %v6319 = vpow.pop %v6318
      %v6320 = vmul.f32 %v6303, 1.442695
      %v6321 = vpow.pop %v6320
      %v6322 = vmul.f32 %v6304, 1.442695
      %v6323 = vpow.pop %v6322
      %v6324 = vmul.f32 %v6305, 1.442695
      %v6325 = vpow.pop %v6324
      %v6326 = vmul.f32 %v6306, 1.442695
      %v6327 = vpow.pop %v6326
      %v6328 = vmul.f32 %v6307, 1.442695
      %v6329 = vpow.pop %v6328
      %v6330 = vmul.f32 %v6308, 1.442695
      %v6331 = vpow.pop %v6330
      %v6332 = vmul.f32 %v6309, 1.442695
      %v6333 = vpow.pop %v6332
      %v6334 = vmul.f32 %v6310, 1.442695
      %v6335 = vpow.pop %v6334
      %v6336 = vmul.f32 %v6311, 1.442695
      %v6337 = vpow.pop %v6336
      %v6338 = vmul.f32 %v6312, 1.442695
      %v6339 = vpow.pop %v6338
      %v6340 = vmul.f32 %v6313, 1.442695
      %v6341 = vpow.pop %v6340
      %v6342 = vmul.f32 %v6314, 1.442695
      %v6343 = vpow.pop %v6342
      %v6344 = vmul.f32 %v6315, 1.442695
      %v6345 = vpow.pop %v6344
      %v6346 = vmul.f32 %v6316, 1.442695
      %v6347 = vpow.pop %v6346
      %v6348 = vmul.f32 %v6317, 1.442695
      %v6349 = vpow.pop %v6348
      %6350 = vadd.xlane.f32.xlu0 %v6319
      %v6351 = vpop.xlane.xlu0 %6350
      %6352 = vadd.xlane.f32.xlu0 %v6321
      %v6353 = vpop.xlane.xlu0 %6352
      %6354 = vadd.xlane.f32.xlu0 %v6323
      %v6355 = vpop.xlane.xlu0 %6354
      %6356 = vadd.xlane.f32.xlu0 %v6325
      %v6357 = vpop.xlane.xlu0 %6356
      %6358 = vadd.xlane.f32.xlu0 %v6327
      %v6359 = vpop.xlane.xlu0 %6358
      %6360 = vadd.xlane.f32.xlu0 %v6329
      %v6361 = vpop.xlane.xlu0 %6360
      %6362 = vadd.xlane.f32.xlu0 %v6331
      %v6363 = vpop.xlane.xlu0 %6362
      %6364 = vadd.xlane.f32.xlu0 %v6333
      %v6365 = vpop.xlane.xlu0 %6364
      %6366 = vadd.xlane.f32.xlu0 %v6335
      %v6367 = vpop.xlane.xlu0 %6366
      %6368 = vadd.xlane.f32.xlu0 %v6337
      %v6369 = vpop.xlane.xlu0 %6368
      %6370 = vadd.xlane.f32.xlu0 %v6339
      %v6371 = vpop.xlane.xlu0 %6370
      %6372 = vadd.xlane.f32.xlu0 %v6341
      %v6373 = vpop.xlane.xlu0 %6372
      %6374 = vadd.xlane.f32.xlu0 %v6343
      %v6375 = vpop.xlane.xlu0 %6374
      %6376 = vadd.xlane.f32.xlu0 %v6345
      %v6377 = vpop.xlane.xlu0 %6376
      %6378 = vadd.xlane.f32.xlu0 %v6347
      %v6379 = vpop.xlane.xlu0 %6378
      %6380 = vadd.xlane.f32.xlu0 %v6349
      %v6381 = vpop.xlane.xlu0 %6380
      %v6382 = vrcp.pop %v6351
      %v6383 = vrcp.pop %v6353
      %v6384 = vrcp.pop %v6355
      %v6385 = vrcp.pop %v6357
      %v6386 = vrcp.pop %v6359
      %v6387 = vrcp.pop %v6361
      %v6388 = vrcp.pop %v6363
      %v6389 = vrcp.pop %v6365
      %v6390 = vrcp.pop %v6367
      %v6391 = vrcp.pop %v6369
      %v6392 = vrcp.pop %v6371
      %v6393 = vrcp.pop %v6373
      %v6394 = vrcp.pop %v6375
      %v6395 = vrcp.pop %v6377
      %v6396 = vrcp.pop %v6379
      %v6397 = vrcp.pop %v6381
      %v6398 = vmul.f32 %v6319, %v6382
      %v6399 = vmul.f32 %v6321, %v6383
      %v6400 = vmul.f32 %v6323, %v6384
      %v6401 = vmul.f32 %v6325, %v6385
      %v6402 = vmul.f32 %v6327, %v6386
      %v6403 = vmul.f32 %v6329, %v6387
      %v6404 = vmul.f32 %v6331, %v6388
      %v6405 = vmul.f32 %v6333, %v6389
      %v6406 = vmul.f32 %v6335, %v6390
      %v6407 = vmul.f32 %v6337, %v6391
      %v6408 = vmul.f32 %v6339, %v6392
      %v6409 = vmul.f32 %v6341, %v6393
      %v6410 = vmul.f32 %v6343, %v6394
      %v6411 = vmul.f32 %v6345, %v6395
      %v6412 = vmul.f32 %v6347, %v6396
      %v6413 = vmul.f32 %v6349, %v6397
      %v6414 = vpack.c.bf16 %v6399, %v6398
      %v6415 = vpack.c.bf16 %v6401, %v6400
      %v6416 = vpack.c.bf16 %v6403, %v6402
      %v6417 = vpack.c.bf16 %v6405, %v6404
      %v6418 = vpack.c.bf16 %v6407, %v6406
      %v6419 = vpack.c.bf16 %v6409, %v6408
      %v6420 = vpack.c.bf16 %v6411, %v6410
      %v6421 = vpack.c.bf16 %v6413, %v6412
      %6422 = vrot.lane.b32.xlu0 %v684, 80
      %v6423 = vpop.permute.xlu0 %6422
      %6424 = vrot.lane.b32.xlu0 %v685, 80
      %v6425 = vpop.permute.xlu0 %6424
      %6426 = vrot.lane.b32.xlu0 %v686, 80
      %v6427 = vpop.permute.xlu0 %6426
      %6428 = vrot.lane.b32.xlu0 %v687, 80
      %v6429 = vpop.permute.xlu0 %6428
      %6430 = vrot.lane.b32.xlu0 %v688, 80
      %v6431 = vpop.permute.xlu0 %6430
      %6432 = vrot.lane.b32.xlu0 %v689, 80
      %v6433 = vpop.permute.xlu0 %6432
      %6434 = vrot.lane.b32.xlu0 %v690, 80
      %v6435 = vpop.permute.xlu0 %6434
      %6436 = vrot.lane.b32.xlu0 %v691, 80
      %v6437 = vpop.permute.xlu0 %6436
      %6446 = vmatprep.subr.bf16.mxu0 0
      %6447 = vmatpush1.bf16.msra.mxu0 %v6423
      %6448 = vmatprep.subr.bf16.mxu0 0
      %6449 = vmatpush1.bf16.msra.mxu0 %v6425
      %6450 = vmatprep.subr.bf16.mxu0 0
      %6451 = vmatpush1.bf16.msra.mxu0 %v6427
      %6452 = vmatprep.subr.bf16.mxu0 0
      %6453 = vmatpush1.bf16.msra.mxu0 %v6429
      %6454 = vmatprep.subr.bf16.mxu0 0
      %6455 = vmatpush1.bf16.msra.mxu0 %v6431
      %6456 = vmatprep.subr.bf16.mxu0 0
      %6457 = vmatpush1.bf16.msra.mxu0 %v6433
      %6458 = vmatprep.subr.bf16.mxu0 0
      %6459 = vmatpush1.bf16.msra.mxu0 %v6435
      %6460 = vmatprep.subr.bf16.mxu0 0
      %6461 = vmatpush1.bf16.msra.mxu0 %v6437
      %6462 = vmatprep.subr.bf16.mxu0 0
      %6463 = vmatpush1.bf16.msra.mxu0 0
      %6464 = vmatprep.subr.bf16.mxu0 0
      %6465 = vmatpush1.bf16.msra.mxu0 0
      %6466 = vmatprep.subr.bf16.mxu0 0
      %6467 = vmatpush1.bf16.msra.mxu0 0
      %6468 = vmatprep.subr.bf16.mxu0 0
      %6469 = vmatpush1.bf16.msra.mxu0 0
      %6470 = vmatprep.subr.bf16.mxu0 0
      %6471 = vmatpush1.bf16.msra.mxu0 0
      %6472 = vmatprep.subr.bf16.mxu0 0
      %6473 = vmatpush1.bf16.msra.mxu0 0
      %6474 = vmatprep.subr.bf16.mxu0 0
      %6475 = vmatpush1.bf16.msra.mxu0 0
      %6476 = vmatprep.subr.bf16.mxu0 0
      %6477 = vmatpush1.bf16.msra.mxu0 0
      %6478 = vmatprep.mubr.bf16.mxu0 0
      %6479 = vmatmul.mubr.bf16.gmra.mrb[0].mxu0 %v6414
      %v6480 = vpop.f32.mrb[0].mxu0
      %v6481 = vadd.f32 0.0, %v6480
      %v6482 = vpop.f32.mrb[0].mxu0
      %v6483 = vpop.f32.mrb[0].mxu0
      %v6484 = vadd.f32 0.0, %v6483
      %v6485 = vpop.f32.mrb[0].mxu0
      %6486 = vmatprep.mubr.bf16.mxu0 0
      %6487 = vmatmul.mubr.bf16.gmra.mrb[0].mxu0 %v6415
      %v6488 = vpop.f32.mrb[0].mxu0
      %v6489 = vadd.f32 0.0, %v6488
      %v6490 = vpop.f32.mrb[0].mxu0
      %v6491 = vpop.f32.mrb[0].mxu0
      %v6492 = vadd.f32 0.0, %v6491
      %v6493 = vpop.f32.mrb[0].mxu0
      %6494 = vmatprep.mubr.bf16.mxu0 0
      %6495 = vmatmul.mubr.bf16.gmra.mrb[0].mxu0 %v6416
      %v6496 = vpop.f32.mrb[0].mxu0
      %v6497 = vadd.f32 0.0, %v6496
      %v6498 = vpop.f32.mrb[0].mxu0
      %v6499 = vpop.f32.mrb[0].mxu0
      %v6500 = vadd.f32 0.0, %v6499
      %v6501 = vpop.f32.mrb[0].mxu0
      %6502 = vmatprep.mubr.bf16.mxu0 0
      %6503 = vmatmul.mubr.bf16.gmra.mrb[0].mxu0 %v6417
      %v6504 = vpop.f32.mrb[0].mxu0
      %v6505 = vadd.f32 0.0, %v6504
      %v6506 = vpop.f32.mrb[0].mxu0
      %v6507 = vpop.f32.mrb[0].mxu0
      %v6508 = vadd.f32 0.0, %v6507
      %v6509 = vpop.f32.mrb[0].mxu0
      %6510 = vmatprep.mubr.bf16.mxu0 0
      %6511 = vmatmul.mubr.bf16.gmra.mrb[0].mxu0 %v6418
      %v6512 = vpop.f32.mrb[0].mxu0
      %v6513 = vadd.f32 0.0, %v6512
      %v6514 = vpop.f32.mrb[0].mxu0
      %v6515 = vpop.f32.mrb[0].mxu0
      %v6516 = vadd.f32 0.0, %v6515
      %v6517 = vpop.f32.mrb[0].mxu0
      %6518 = vmatprep.mubr.bf16.mxu0 0
      %6519 = vmatmul.mubr.bf16.gmra.mrb[0].mxu0 %v6419
      %v6520 = vpop.f32.mrb[0].mxu0
      %v6521 = vadd.f32 0.0, %v6520
      %v6522 = vpop.f32.mrb[0].mxu0
      %v6523 = vpop.f32.mrb[0].mxu0
      %v6524 = vadd.f32 0.0, %v6523
      %v6525 = vpop.f32.mrb[0].mxu0
      %6526 = vmatprep.mubr.bf16.mxu0 0
      %6527 = vmatmul.mubr.bf16.gmra.mrb[0].mxu0 %v6420
      %v6528 = vpop.f32.mrb[0].mxu0
      %v6529 = vadd.f32 0.0, %v6528
      %v6530 = vpop.f32.mrb[0].mxu0
      %v6531 = vpop.f32.mrb[0].mxu0
      %v6532 = vadd.f32 0.0, %v6531
      %v6533 = vpop.f32.mrb[0].mxu0
      %6534 = vmatprep.mubr.bf16.mxu0 0
      %6535 = vmatmul.mubr.bf16.gmra.mrb[0].mxu0 %v6421
      %v6536 = vpop.f32.mrb[0].mxu0
      %v6537 = vadd.f32 0.0, %v6536
      %v6538 = vpop.f32.mrb[0].mxu0
      %v6539 = vpop.f32.mrb[0].mxu0
      %v6540 = vadd.f32 0.0, %v6539
      %v6541 = vpop.f32.mrb[0].mxu0
      %6542 = vdwg.mxu0
      %6543 = vrot.lane.b32.xlu0 %v668, 76
      %v6544 = vpop.permute.xlu0 %6543
      %6545 = vrot.lane.b32.xlu0 %v669, 76
      %v6546 = vpop.permute.xlu0 %6545
      %6547 = vrot.lane.b32.xlu0 %v670, 76
      %v6548 = vpop.permute.xlu0 %6547
      %6549 = vrot.lane.b32.xlu0 %v671, 76
      %v6550 = vpop.permute.xlu0 %6549
      %6551 = vrot.lane.b32.xlu0 %v672, 76
      %v6552 = vpop.permute.xlu0 %6551
      %6553 = vrot.lane.b32.xlu0 %v673, 76
      %v6554 = vpop.permute.xlu0 %6553
      %6555 = vrot.lane.b32.xlu0 %v674, 76
      %v6556 = vpop.permute.xlu0 %6555
      %6557 = vrot.lane.b32.xlu0 %v675, 76
      %v6558 = vpop.permute.xlu0 %6557
      %6559 = vrot.lane.b32.xlu0 %v676, 12
      %v6560 = vpop.permute.xlu0 %6559
      %6561 = vrot.lane.b32.xlu0 %v677, 12
      %v6562 = vpop.permute.xlu0 %6561
      %6563 = vrot.lane.b32.xlu0 %v678, 12
      %v6564 = vpop.permute.xlu0 %6563
      %6565 = vrot.lane.b32.xlu0 %v679, 12
      %v6566 = vpop.permute.xlu0 %6565
      %6567 = vrot.lane.b32.xlu0 %v680, 12
      %v6568 = vpop.permute.xlu0 %6567
      %6569 = vrot.lane.b32.xlu0 %v681, 12
      %v6570 = vpop.permute.xlu0 %6569
      %6571 = vrot.lane.b32.xlu0 %v682, 12
      %v6572 = vpop.permute.xlu0 %6571
      %6573 = vrot.lane.b32.xlu0 %v683, 12
      %v6574 = vpop.permute.xlu0 %6573
      %v6576 = vsel %vm732, %v6544, 0
      %v6579 = vsel %vm732, %v6546, 0
      %v6582 = vsel %vm732, %v6548, 0
      %v6585 = vsel %vm732, %v6550, 0
      %v6588 = vsel %vm732, %v6552, 0
      %v6591 = vsel %vm732, %v6554, 0
      %v6594 = vsel %vm732, %v6556, 0
      %v6597 = vsel %vm732, %v6558, 0
      %v6600 = vsel %vm732, %v6560, 0
      %v6603 = vsel %vm732, %v6562, 0
      %v6606 = vsel %vm732, %v6564, 0
      %v6609 = vsel %vm732, %v6566, 0
      %v6612 = vsel %vm732, %v6568, 0
      %v6615 = vsel %vm732, %v6570, 0
      %v6618 = vsel %vm732, %v6572, 0
      %v6621 = vsel %vm732, %v6574, 0
      %6623 = vmatprep.subr.bf16.mxu0 0
      %6624 = vmatpush1.bf16.xpose.msra.mxu0 %v6600
      %6625 = vmatprep.subr.bf16.mxu0 0
      %6626 = vmatpush1.bf16.xpose.msra.mxu0 %v6603
      %6627 = vmatprep.subr.bf16.mxu0 0
      %6628 = vmatpush1.bf16.xpose.msra.mxu0 %v6606
      %6629 = vmatprep.subr.bf16.mxu0 0
      %6630 = vmatpush1.bf16.xpose.msra.mxu0 %v6609
      %6631 = vmatprep.subr.bf16.mxu0 0
      %6632 = vmatpush1.bf16.xpose.msra.mxu0 %v6612
      %6633 = vmatprep.subr.bf16.mxu0 0
      %6634 = vmatpush1.bf16.xpose.msra.mxu0 %v6615
      %6635 = vmatprep.subr.bf16.mxu0 0
      %6636 = vmatpush1.bf16.xpose.msra.mxu0 %v6618
      %6637 = vmatprep.subr.bf16.mxu0 0
      %6638 = vmatpush1.bf16.xpose.msra.mxu0 %v6621
      %6639 = vmatprep.subr.bf16.mxu0 0
      %6640 = vmatpush1.bf16.xpose.msra.mxu0 0
      %6641 = vmatprep.subr.bf16.mxu0 0
      %6642 = vmatpush1.bf16.xpose.msra.mxu0 0
      %6643 = vmatprep.subr.bf16.mxu0 0
      %6644 = vmatpush1.bf16.xpose.msra.mxu0 0
      %6645 = vmatprep.subr.bf16.mxu0 0
      %6646 = vmatpush1.bf16.xpose.msra.mxu0 0
      %6647 = vmatprep.subr.bf16.mxu0 0
      %6648 = vmatpush1.bf16.xpose.msra.mxu0 0
      %6649 = vmatprep.subr.bf16.mxu0 0
      %6650 = vmatpush1.bf16.xpose.msra.mxu0 0
      %6651 = vmatprep.subr.bf16.mxu0 0
      %6652 = vmatpush1.bf16.xpose.msra.mxu0 0
      %6653 = vmatprep.subr.bf16.mxu0 0
      %6654 = vmatpush1.bf16.xpose.msra.mxu0 0
      %6655 = vmatprep.mubr.bf16.mxu0 0
      %6656 = vmatmul.mubr.bf16.gmra.mrb[0].mxu0 %v6576
      %v6657 = vpop.f32.mrb[0].mxu0
      %v6658 = vadd.f32 %v692, %v6657
      %v6659 = vpop.f32.mrb[0].mxu0
      %v6660 = vpop.f32.mrb[0].mxu0
      %v6661 = vadd.f32 %v693, %v6660
      %v6662 = vpop.f32.mrb[0].mxu0
      %6663 = vmatprep.mubr.bf16.mxu0 0
      %6664 = vmatmul.mubr.bf16.gmra.mrb[0].mxu0 %v6579
      %v6665 = vpop.f32.mrb[0].mxu0
      %v6666 = vadd.f32 %v694, %v6665
      %v6667 = vpop.f32.mrb[0].mxu0
      %v6668 = vpop.f32.mrb[0].mxu0
      %v6669 = vadd.f32 %v695, %v6668
      %v6670 = vpop.f32.mrb[0].mxu0
      %6671 = vmatprep.mubr.bf16.mxu0 0
      %6672 = vmatmul.mubr.bf16.gmra.mrb[0].mxu0 %v6582
      %v6673 = vpop.f32.mrb[0].mxu0
      %v6674 = vadd.f32 %v696, %v6673
      %v6675 = vpop.f32.mrb[0].mxu0
      %v6676 = vpop.f32.mrb[0].mxu0
      %v6677 = vadd.f32 %v697, %v6676
      %v6678 = vpop.f32.mrb[0].mxu0
      %6679 = vmatprep.mubr.bf16.mxu0 0
      %6680 = vmatmul.mubr.bf16.gmra.mrb[0].mxu0 %v6585
      %v6681 = vpop.f32.mrb[0].mxu0
      %v6682 = vadd.f32 %v698, %v6681
      %v6683 = vpop.f32.mrb[0].mxu0
      %v6684 = vpop.f32.mrb[0].mxu0
      %v6685 = vadd.f32 %v699, %v6684
      %v6686 = vpop.f32.mrb[0].mxu0
      %6687 = vmatprep.mubr.bf16.mxu0 0
      %6688 = vmatmul.mubr.bf16.gmra.mrb[0].mxu0 %v6588
      %v6689 = vpop.f32.mrb[0].mxu0
      %v6690 = vadd.f32 %v700, %v6689
      %v6691 = vpop.f32.mrb[0].mxu0
      %v6692 = vpop.f32.mrb[0].mxu0
      %v6693 = vadd.f32 %v701, %v6692
      %v6694 = vpop.f32.mrb[0].mxu0
      %6695 = vmatprep.mubr.bf16.mxu0 0
      %6696 = vmatmul.mubr.bf16.gmra.mrb[0].mxu0 %v6591
      %v6697 = vpop.f32.mrb[0].mxu0
      %v6698 = vadd.f32 %v702, %v6697
      %v6699 = vpop.f32.mrb[0].mxu0
      %v6700 = vpop.f32.mrb[0].mxu0
      %v6701 = vadd.f32 %v703, %v6700
      %v6702 = vpop.f32.mrb[0].mxu0
      %6703 = vmatprep.mubr.bf16.mxu0 0
      %6704 = vmatmul.mubr.bf16.gmra.mrb[0].mxu0 %v6594
      %v6705 = vpop.f32.mrb[0].mxu0
      %v6706 = vadd.f32 %v704, %v6705
      %v6707 = vpop.f32.mrb[0].mxu0
      %v6708 = vpop.f32.mrb[0].mxu0
      %v6709 = vadd.f32 %v705, %v6708
      %v6710 = vpop.f32.mrb[0].mxu0
      %6711 = vmatprep.mubr.bf16.mxu0 0
      %6712 = vmatmul.mubr.bf16.gmra.mrb[0].mxu0 %v6597
      %v6713 = vpop.f32.mrb[0].mxu0
      %v6714 = vadd.f32 %v706, %v6713
      %v6715 = vpop.f32.mrb[0].mxu0
      %v6716 = vpop.f32.mrb[0].mxu0
      %v6717 = vadd.f32 %v707, %v6716
      %v6718 = vpop.f32.mrb[0].mxu0
      %6719 = vdwg.mxu0
      %6720 = vmax.xlane.f32.xlu0 %v6658
      %v6721 = vpop.xlane.xlu0 %6720
      %6722 = vmax.xlane.f32.xlu0 %v6661
      %v6723 = vpop.xlane.xlu0 %6722
      %6724 = vmax.xlane.f32.xlu0 %v6666
      %v6725 = vpop.xlane.xlu0 %6724
      %6726 = vmax.xlane.f32.xlu0 %v6669
      %v6727 = vpop.xlane.xlu0 %6726
      %6728 = vmax.xlane.f32.xlu0 %v6674
      %v6729 = vpop.xlane.xlu0 %6728
      %6730 = vmax.xlane.f32.xlu0 %v6677
      %v6731 = vpop.xlane.xlu0 %6730
      %6732 = vmax.xlane.f32.xlu0 %v6682
      %v6733 = vpop.xlane.xlu0 %6732
      %6734 = vmax.xlane.f32.xlu0 %v6685
      %v6735 = vpop.xlane.xlu0 %6734
      %6736 = vmax.xlane.f32.xlu0 %v6690
      %v6737 = vpop.xlane.xlu0 %6736
      %6738 = vmax.xlane.f32.xlu0 %v6693
      %v6739 = vpop.xlane.xlu0 %6738
      %6740 = vmax.xlane.f32.xlu0 %v6698
      %v6741 = vpop.xlane.xlu0 %6740
      %6742 = vmax.xlane.f32.xlu0 %v6701
      %v6743 = vpop.xlane.xlu0 %6742
      %6744 = vmax.xlane.f32.xlu0 %v6706
      %v6745 = vpop.xlane.xlu0 %6744
      %6746 = vmax.xlane.f32.xlu0 %v6709
      %v6747 = vpop.xlane.xlu0 %6746
      %6748 = vmax.xlane.f32.xlu0 %v6714
      %v6749 = vpop.xlane.xlu0 %6748
      %6750 = vmax.xlane.f32.xlu0 %v6717
      %v6751 = vpop.xlane.xlu0 %6750
      %v6752 = vsub.f32 %v6658, %v6721
      %v6753 = vsub.f32 %v6661, %v6723
      %v6754 = vsub.f32 %v6666, %v6725
      %v6755 = vsub.f32 %v6669, %v6727
      %v6756 = vsub.f32 %v6674, %v6729
      %v6757 = vsub.f32 %v6677, %v6731
      %v6758 = vsub.f32 %v6682, %v6733
      %v6759 = vsub.f32 %v6685, %v6735
      %v6760 = vsub.f32 %v6690, %v6737
      %v6761 = vsub.f32 %v6693, %v6739
      %v6762 = vsub.f32 %v6698, %v6741
      %v6763 = vsub.f32 %v6701, %v6743
      %v6764 = vsub.f32 %v6706, %v6745
      %v6765 = vsub.f32 %v6709, %v6747
      %v6766 = vsub.f32 %v6714, %v6749
      %v6767 = vsub.f32 %v6717, %v6751
      %v6768 = vmul.f32 %v6752, 1.442695
      %v6769 = vpow.pop %v6768
      %v6770 = vmul.f32 %v6753, 1.442695
      %v6771 = vpow.pop %v6770
      %v6772 = vmul.f32 %v6754, 1.442695
      %v6773 = vpow.pop %v6772
      %v6774 = vmul.f32 %v6755, 1.442695
      %v6775 = vpow.pop %v6774
      %v6776 = vmul.f32 %v6756, 1.442695
      %v6777 = vpow.pop %v6776
      %v6778 = vmul.f32 %v6757, 1.442695
      %v6779 = vpow.pop %v6778
      %v6780 = vmul.f32 %v6758, 1.442695
      %v6781 = vpow.pop %v6780
      %v6782 = vmul.f32 %v6759, 1.442695
      %v6783 = vpow.pop %v6782
      %v6784 = vmul.f32 %v6760, 1.442695
      %v6785 = vpow.pop %v6784
      %v6786 = vmul.f32 %v6761, 1.442695
      %v6787 = vpow.pop %v6786
      %v6788 = vmul.f32 %v6762, 1.442695
      %v6789 = vpow.pop %v6788
      %v6790 = vmul.f32 %v6763, 1.442695
      %v6791 = vpow.pop %v6790
      %v6792 = vmul.f32 %v6764, 1.442695
      %v6793 = vpow.pop %v6792
      %v6794 = vmul.f32 %v6765, 1.442695
      %v6795 = vpow.pop %v6794
      %v6796 = vmul.f32 %v6766, 1.442695
      %v6797 = vpow.pop %v6796
      %v6798 = vmul.f32 %v6767, 1.442695
      %v6799 = vpow.pop %v6798
      %6800 = vadd.xlane.f32.xlu0 %v6769
      %v6801 = vpop.xlane.xlu0 %6800
      %6802 = vadd.xlane.f32.xlu0 %v6771
      %v6803 = vpop.xlane.xlu0 %6802
      %6804 = vadd.xlane.f32.xlu0 %v6773
      %v6805 = vpop.xlane.xlu0 %6804
      %6806 = vadd.xlane.f32.xlu0 %v6775
      %v6807 = vpop.xlane.xlu0 %6806
      %6808 = vadd.xlane.f32.xlu0 %v6777
      %v6809 = vpop.xlane.xlu0 %6808
      %6810 = vadd.xlane.f32.xlu0 %v6779
      %v6811 = vpop.xlane.xlu0 %6810
      %6812 = vadd.xlane.f32.xlu0 %v6781
      %v6813 = vpop.xlane.xlu0 %6812
      %6814 = vadd.xlane.f32.xlu0 %v6783
      %v6815 = vpop.xlane.xlu0 %6814
      %6816 = vadd.xlane.f32.xlu0 %v6785
      %v6817 = vpop.xlane.xlu0 %6816
      %6818 = vadd.xlane.f32.xlu0 %v6787
      %v6819 = vpop.xlane.xlu0 %6818
      %6820 = vadd.xlane.f32.xlu0 %v6789
      %v6821 = vpop.xlane.xlu0 %6820
      %6822 = vadd.xlane.f32.xlu0 %v6791
      %v6823 = vpop.xlane.xlu0 %6822
      %6824 = vadd.xlane.f32.xlu0 %v6793
      %v6825 = vpop.xlane.xlu0 %6824
      %6826 = vadd.xlane.f32.xlu0 %v6795
      %v6827 = vpop.xlane.xlu0 %6826
      %6828 = vadd.xlane.f32.xlu0 %v6797
      %v6829 = vpop.xlane.xlu0 %6828
      %6830 = vadd.xlane.f32.xlu0 %v6799
      %v6831 = vpop.xlane.xlu0 %6830
      %v6832 = vrcp.pop %v6801
      %v6833 = vrcp.pop %v6803
      %v6834 = vrcp.pop %v6805
      %v6835 = vrcp.pop %v6807
      %v6836 = vrcp.pop %v6809
      %v6837 = vrcp.pop %v6811
      %v6838 = vrcp.pop %v6813
      %v6839 = vrcp.pop %v6815
      %v6840 = vrcp.pop %v6817
      %v6841 = vrcp.pop %v6819
      %v6842 = vrcp.pop %v6821
      %v6843 = vrcp.pop %v6823
      %v6844 = vrcp.pop %v6825
      %v6845 = vrcp.pop %v6827
      %v6846 = vrcp.pop %v6829
      %v6847 = vrcp.pop %v6831
      %v6848 = vmul.f32 %v6769, %v6832
      %v6849 = vmul.f32 %v6771, %v6833
      %v6850 = vmul.f32 %v6773, %v6834
      %v6851 = vmul.f32 %v6775, %v6835
      %v6852 = vmul.f32 %v6777, %v6836
      %v6853 = vmul.f32 %v6779, %v6837
      %v6854 = vmul.f32 %v6781, %v6838
      %v6855 = vmul.f32 %v6783, %v6839
      %v6856 = vmul.f32 %v6785, %v6840
      %v6857 = vmul.f32 %v6787, %v6841
      %v6858 = vmul.f32 %v6789, %v6842
      %v6859 = vmul.f32 %v6791, %v6843
      %v6860 = vmul.f32 %v6793, %v6844
      %v6861 = vmul.f32 %v6795, %v6845
      %v6862 = vmul.f32 %v6797, %v6846
      %v6863 = vmul.f32 %v6799, %v6847
      %v6864 = vpack.c.bf16 %v6849, %v6848
      %v6865 = vpack.c.bf16 %v6851, %v6850
      %v6866 = vpack.c.bf16 %v6853, %v6852
      %v6867 = vpack.c.bf16 %v6855, %v6854
      %v6868 = vpack.c.bf16 %v6857, %v6856
      %v6869 = vpack.c.bf16 %v6859, %v6858
      %v6870 = vpack.c.bf16 %v6861, %v6860
      %v6871 = vpack.c.bf16 %v6863, %v6862
      %6872 = vrot.lane.b32.xlu0 %v684, 76
      %v6873 = vpop.permute.xlu0 %6872
      %6874 = vrot.lane.b32.xlu0 %v685, 76
      %v6875 = vpop.permute.xlu0 %6874
      %6876 = vrot.lane.b32.xlu0 %v686, 76
      %v6877 = vpop.permute.xlu0 %6876
      %6878 = vrot.lane.b32.xlu0 %v687, 76
      %v6879 = vpop.permute.xlu0 %6878
      %6880 = vrot.lane.b32.xlu0 %v688, 76
      %v6881 = vpop.permute.xlu0 %6880
      %6882 = vrot.lane.b32.xlu0 %v689, 76
      %v6883 = vpop.permute.xlu0 %6882
      %6884 = vrot.lane.b32.xlu0 %v690, 76
      %v6885 = vpop.permute.xlu0 %6884
      %6886 = vrot.lane.b32.xlu0 %v691, 76
      %v6887 = vpop.permute.xlu0 %6886
      %6896 = vmatprep.subr.bf16.mxu0 0
      %6897 = vmatpush1.bf16.msra.mxu0 %v6873
      %6898 = vmatprep.subr.bf16.mxu0 0
      %6899 = vmatpush1.bf16.msra.mxu0 %v6875
      %6900 = vmatprep.subr.bf16.mxu0 0
      %6901 = vmatpush1.bf16.msra.mxu0 %v6877
      %6902 = vmatprep.subr.bf16.mxu0 0
      %6903 = vmatpush1.bf16.msra.mxu0 %v6879
      %6904 = vmatprep.subr.bf16.mxu0 0
      %6905 = vmatpush1.bf16.msra.mxu0 %v6881
      %6906 = vmatprep.subr.bf16.mxu0 0
      %6907 = vmatpush1.bf16.msra.mxu0 %v6883
      %6908 = vmatprep.subr.bf16.mxu0 0
      %6909 = vmatpush1.bf16.msra.mxu0 %v6885
      %6910 = vmatprep.subr.bf16.mxu0 0
      %6911 = vmatpush1.bf16.msra.mxu0 %v6887
      %6912 = vmatprep.subr.bf16.mxu0 0
      %6913 = vmatpush1.bf16.msra.mxu0 0
      %6914 = vmatprep.subr.bf16.mxu0 0
      %6915 = vmatpush1.bf16.msra.mxu0 0
      %6916 = vmatprep.subr.bf16.mxu0 0
      %6917 = vmatpush1.bf16.msra.mxu0 0
      %6918 = vmatprep.subr.bf16.mxu0 0
      %6919 = vmatpush1.bf16.msra.mxu0 0
      %6920 = vmatprep.subr.bf16.mxu0 0
      %6921 = vmatpush1.bf16.msra.mxu0 0
      %6922 = vmatprep.subr.bf16.mxu0 0
      %6923 = vmatpush1.bf16.msra.mxu0 0
      %6924 = vmatprep.subr.bf16.mxu0 0
      %6925 = vmatpush1.bf16.msra.mxu0 0
      %6926 = vmatprep.subr.bf16.mxu0 0
      %6927 = vmatpush1.bf16.msra.mxu0 0
      %6928 = vmatprep.mubr.bf16.mxu0 0
      %6929 = vmatmul.mubr.bf16.gmra.mrb[0].mxu0 %v6864
      %v6930 = vpop.f32.mrb[0].mxu0
      %v6931 = vadd.f32 0.0, %v6930
      %v6932 = vpop.f32.mrb[0].mxu0
      %v6933 = vpop.f32.mrb[0].mxu0
      %v6934 = vadd.f32 0.0, %v6933
      %v6935 = vpop.f32.mrb[0].mxu0
      %6936 = vmatprep.mubr.bf16.mxu0 0
      %6937 = vmatmul.mubr.bf16.gmra.mrb[0].mxu0 %v6865
      %v6938 = vpop.f32.mrb[0].mxu0
      %v6939 = vadd.f32 0.0, %v6938
      %v6940 = vpop.f32.mrb[0].mxu0
      %v6941 = vpop.f32.mrb[0].mxu0
      %v6942 = vadd.f32 0.0, %v6941
      %v6943 = vpop.f32.mrb[0].mxu0
      %6944 = vmatprep.mubr.bf16.mxu0 0
      %6945 = vmatmul.mubr.bf16.gmra.mrb[0].mxu0 %v6866
      %v6946 = vpop.f32.mrb[0].mxu0
      %v6947 = vadd.f32 0.0, %v6946
      %v6948 = vpop.f32.mrb[0].mxu0
      %v6949 = vpop.f32.mrb[0].mxu0
      %v6950 = vadd.f32 0.0, %v6949
      %v6951 = vpop.f32.mrb[0].mxu0
      %6952 = vmatprep.mubr.bf16.mxu0 0
      %6953 = vmatmul.mubr.bf16.gmra.mrb[0].mxu0 %v6867
      %v6954 = vpop.f32.mrb[0].mxu0
      %v6955 = vadd.f32 0.0, %v6954
      %v6956 = vpop.f32.mrb[0].mxu0
      %v6957 = vpop.f32.mrb[0].mxu0
      %v6958 = vadd.f32 0.0, %v6957
      %v6959 = vpop.f32.mrb[0].mxu0
      %6960 = vmatprep.mubr.bf16.mxu0 0
      %6961 = vmatmul.mubr.bf16.gmra.mrb[0].mxu0 %v6868
      %v6962 = vpop.f32.mrb[0].mxu0
      %v6963 = vadd.f32 0.0, %v6962
      %v6964 = vpop.f32.mrb[0].mxu0
      %v6965 = vpop.f32.mrb[0].mxu0
      %v6966 = vadd.f32 0.0, %v6965
      %v6967 = vpop.f32.mrb[0].mxu0
      %6968 = vmatprep.mubr.bf16.mxu0 0
      %6969 = vmatmul.mubr.bf16.gmra.mrb[0].mxu0 %v6869
      %v6970 = vpop.f32.mrb[0].mxu0
      %v6971 = vadd.f32 0.0, %v6970
      %v6972 = vpop.f32.mrb[0].mxu0
      %v6973 = vpop.f32.mrb[0].mxu0
      %v6974 = vadd.f32 0.0, %v6973
      %v6975 = vpop.f32.mrb[0].mxu0
      %6976 = vmatprep.mubr.bf16.mxu0 0
      %6977 = vmatmul.mubr.bf16.gmra.mrb[0].mxu0 %v6870
      %v6978 = vpop.f32.mrb[0].mxu0
      %v6979 = vadd.f32 0.0, %v6978
      %v6980 = vpop.f32.mrb[0].mxu0
      %v6981 = vpop.f32.mrb[0].mxu0
      %v6982 = vadd.f32 0.0, %v6981
      %v6983 = vpop.f32.mrb[0].mxu0
      %6984 = vmatprep.mubr.bf16.mxu0 0
      %6985 = vmatmul.mubr.bf16.gmra.mrb[0].mxu0 %v6871
      %v6986 = vpop.f32.mrb[0].mxu0
      %v6987 = vadd.f32 0.0, %v6986
      %v6988 = vpop.f32.mrb[0].mxu0
      %v6989 = vpop.f32.mrb[0].mxu0
      %v6990 = vadd.f32 0.0, %v6989
      %v6991 = vpop.f32.mrb[0].mxu0
      %6992 = vdwg.mxu0
      %6993 = vrot.lane.b32.xlu0 %v668, 72
      %v6994 = vpop.permute.xlu0 %6993
      %6995 = vrot.lane.b32.xlu0 %v669, 72
      %v6996 = vpop.permute.xlu0 %6995
      %6997 = vrot.lane.b32.xlu0 %v670, 72
      %v6998 = vpop.permute.xlu0 %6997
      %6999 = vrot.lane.b32.xlu0 %v671, 72
      %v7000 = vpop.permute.xlu0 %6999
      %7001 = vrot.lane.b32.xlu0 %v672, 72
      %v7002 = vpop.permute.xlu0 %7001
      %7003 = vrot.lane.b32.xlu0 %v673, 72
      %v7004 = vpop.permute.xlu0 %7003
      %7005 = vrot.lane.b32.xlu0 %v674, 72
      %v7006 = vpop.permute.xlu0 %7005
      %7007 = vrot.lane.b32.xlu0 %v675, 72
      %v7008 = vpop.permute.xlu0 %7007
      %7009 = vrot.lane.b32.xlu0 %v676, 8
      %v7010 = vpop.permute.xlu0 %7009
      %7011 = vrot.lane.b32.xlu0 %v677, 8
      %v7012 = vpop.permute.xlu0 %7011
      %7013 = vrot.lane.b32.xlu0 %v678, 8
      %v7014 = vpop.permute.xlu0 %7013
      %7015 = vrot.lane.b32.xlu0 %v679, 8
      %v7016 = vpop.permute.xlu0 %7015
      %7017 = vrot.lane.b32.xlu0 %v680, 8
      %v7018 = vpop.permute.xlu0 %7017
      %7019 = vrot.lane.b32.xlu0 %v681, 8
      %v7020 = vpop.permute.xlu0 %7019
      %7021 = vrot.lane.b32.xlu0 %v682, 8
      %v7022 = vpop.permute.xlu0 %7021
      %7023 = vrot.lane.b32.xlu0 %v683, 8
      %v7024 = vpop.permute.xlu0 %7023
      %v7026 = vsel %vm732, %v6994, 0
      %v7029 = vsel %vm732, %v6996, 0
      %v7032 = vsel %vm732, %v6998, 0
      %v7035 = vsel %vm732, %v7000, 0
      %v7038 = vsel %vm732, %v7002, 0
      %v7041 = vsel %vm732, %v7004, 0
      %v7044 = vsel %vm732, %v7006, 0
      %v7047 = vsel %vm732, %v7008, 0
      %v7050 = vsel %vm732, %v7010, 0
      %v7053 = vsel %vm732, %v7012, 0
      %v7056 = vsel %vm732, %v7014, 0
      %v7059 = vsel %vm732, %v7016, 0
      %v7062 = vsel %vm732, %v7018, 0
      %v7065 = vsel %vm732, %v7020, 0
      %v7068 = vsel %vm732, %v7022, 0
      %v7071 = vsel %vm732, %v7024, 0
      %7073 = vmatprep.subr.bf16.mxu0 0
      %7074 = vmatpush1.bf16.xpose.msra.mxu0 %v7050
      %7075 = vmatprep.subr.bf16.mxu0 0
      %7076 = vmatpush1.bf16.xpose.msra.mxu0 %v7053
      %7077 = vmatprep.subr.bf16.mxu0 0
      %7078 = vmatpush1.bf16.xpose.msra.mxu0 %v7056
      %7079 = vmatprep.subr.bf16.mxu0 0
      %7080 = vmatpush1.bf16.xpose.msra.mxu0 %v7059
      %7081 = vmatprep.subr.bf16.mxu0 0
      %7082 = vmatpush1.bf16.xpose.msra.mxu0 %v7062
      %7083 = vmatprep.subr.bf16.mxu0 0
      %7084 = vmatpush1.bf16.xpose.msra.mxu0 %v7065
      %7085 = vmatprep.subr.bf16.mxu0 0
      %7086 = vmatpush1.bf16.xpose.msra.mxu0 %v7068
      %7087 = vmatprep.subr.bf16.mxu0 0
      %7088 = vmatpush1.bf16.xpose.msra.mxu0 %v7071
      %7089 = vmatprep.subr.bf16.mxu0 0
      %7090 = vmatpush1.bf16.xpose.msra.mxu0 0
      %7091 = vmatprep.subr.bf16.mxu0 0
      %7092 = vmatpush1.bf16.xpose.msra.mxu0 0
      %7093 = vmatprep.subr.bf16.mxu0 0
      %7094 = vmatpush1.bf16.xpose.msra.mxu0 0
      %7095 = vmatprep.subr.bf16.mxu0 0
      %7096 = vmatpush1.bf16.xpose.msra.mxu0 0
      %7097 = vmatprep.subr.bf16.mxu0 0
      %7098 = vmatpush1.bf16.xpose.msra.mxu0 0
      %7099 = vmatprep.subr.bf16.mxu0 0
      %7100 = vmatpush1.bf16.xpose.msra.mxu0 0
      %7101 = vmatprep.subr.bf16.mxu0 0
      %7102 = vmatpush1.bf16.xpose.msra.mxu0 0
      %7103 = vmatprep.subr.bf16.mxu0 0
      %7104 = vmatpush1.bf16.xpose.msra.mxu0 0
      %7105 = vmatprep.mubr.bf16.mxu0 0
      %7106 = vmatmul.mubr.bf16.gmra.mrb[0].mxu0 %v7026
      %v7107 = vpop.f32.mrb[0].mxu0
      %v7108 = vadd.f32 %v692, %v7107
      %v7109 = vpop.f32.mrb[0].mxu0
      %v7110 = vpop.f32.mrb[0].mxu0
      %v7111 = vadd.f32 %v693, %v7110
      %v7112 = vpop.f32.mrb[0].mxu0
      %7113 = vmatprep.mubr.bf16.mxu0 0
      %7114 = vmatmul.mubr.bf16.gmra.mrb[0].mxu0 %v7029
      %v7115 = vpop.f32.mrb[0].mxu0
      %v7116 = vadd.f32 %v694, %v7115
      %v7117 = vpop.f32.mrb[0].mxu0
      %v7118 = vpop.f32.mrb[0].mxu0
      %v7119 = vadd.f32 %v695, %v7118
      %v7120 = vpop.f32.mrb[0].mxu0
      %7121 = vmatprep.mubr.bf16.mxu0 0
      %7122 = vmatmul.mubr.bf16.gmra.mrb[0].mxu0 %v7032
      %v7123 = vpop.f32.mrb[0].mxu0
      %v7124 = vadd.f32 %v696, %v7123
      %v7125 = vpop.f32.mrb[0].mxu0
      %v7126 = vpop.f32.mrb[0].mxu0
      %v7127 = vadd.f32 %v697, %v7126
      %v7128 = vpop.f32.mrb[0].mxu0
      %7129 = vmatprep.mubr.bf16.mxu0 0
      %7130 = vmatmul.mubr.bf16.gmra.mrb[0].mxu0 %v7035
      %v7131 = vpop.f32.mrb[0].mxu0
      %v7132 = vadd.f32 %v698, %v7131
      %v7133 = vpop.f32.mrb[0].mxu0
      %v7134 = vpop.f32.mrb[0].mxu0
      %v7135 = vadd.f32 %v699, %v7134
      %v7136 = vpop.f32.mrb[0].mxu0
      %7137 = vmatprep.mubr.bf16.mxu0 0
      %7138 = vmatmul.mubr.bf16.gmra.mrb[0].mxu0 %v7038
      %v7139 = vpop.f32.mrb[0].mxu0
      %v7140 = vadd.f32 %v700, %v7139
      %v7141 = vpop.f32.mrb[0].mxu0
      %v7142 = vpop.f32.mrb[0].mxu0
      %v7143 = vadd.f32 %v701, %v7142
      %v7144 = vpop.f32.mrb[0].mxu0
      %7145 = vmatprep.mubr.bf16.mxu0 0
      %7146 = vmatmul.mubr.bf16.gmra.mrb[0].mxu0 %v7041
      %v7147 = vpop.f32.mrb[0].mxu0
      %v7148 = vadd.f32 %v702, %v7147
      %v7149 = vpop.f32.mrb[0].mxu0
      %v7150 = vpop.f32.mrb[0].mxu0
      %v7151 = vadd.f32 %v703, %v7150
      %v7152 = vpop.f32.mrb[0].mxu0
      %7153 = vmatprep.mubr.bf16.mxu0 0
      %7154 = vmatmul.mubr.bf16.gmra.mrb[0].mxu0 %v7044
      %v7155 = vpop.f32.mrb[0].mxu0
      %v7156 = vadd.f32 %v704, %v7155
      %v7157 = vpop.f32.mrb[0].mxu0
      %v7158 = vpop.f32.mrb[0].mxu0
      %v7159 = vadd.f32 %v705, %v7158
      %v7160 = vpop.f32.mrb[0].mxu0
      %7161 = vmatprep.mubr.bf16.mxu0 0
      %7162 = vmatmul.mubr.bf16.gmra.mrb[0].mxu0 %v7047
      %v7163 = vpop.f32.mrb[0].mxu0
      %v7164 = vadd.f32 %v706, %v7163
      %v7165 = vpop.f32.mrb[0].mxu0
      %v7166 = vpop.f32.mrb[0].mxu0
      %v7167 = vadd.f32 %v707, %v7166
      %v7168 = vpop.f32.mrb[0].mxu0
      %7169 = vdwg.mxu0
      %7170 = vmax.xlane.f32.xlu0 %v7108
      %v7171 = vpop.xlane.xlu0 %7170
      %7172 = vmax.xlane.f32.xlu0 %v7111
      %v7173 = vpop.xlane.xlu0 %7172
      %7174 = vmax.xlane.f32.xlu0 %v7116
      %v7175 = vpop.xlane.xlu0 %7174
      %7176 = vmax.xlane.f32.xlu0 %v7119
      %v7177 = vpop.xlane.xlu0 %7176
      %7178 = vmax.xlane.f32.xlu0 %v7124
      %v7179 = vpop.xlane.xlu0 %7178
      %7180 = vmax.xlane.f32.xlu0 %v7127
      %v7181 = vpop.xlane.xlu0 %7180
      %7182 = vmax.xlane.f32.xlu0 %v7132
      %v7183 = vpop.xlane.xlu0 %7182
      %7184 = vmax.xlane.f32.xlu0 %v7135
      %v7185 = vpop.xlane.xlu0 %7184
      %7186 = vmax.xlane.f32.xlu0 %v7140
      %v7187 = vpop.xlane.xlu0 %7186
      %7188 = vmax.xlane.f32.xlu0 %v7143
      %v7189 = vpop.xlane.xlu0 %7188
      %7190 = vmax.xlane.f32.xlu0 %v7148
      %v7191 = vpop.xlane.xlu0 %7190
      %7192 = vmax.xlane.f32.xlu0 %v7151
      %v7193 = vpop.xlane.xlu0 %7192
      %7194 = vmax.xlane.f32.xlu0 %v7156
      %v7195 = vpop.xlane.xlu0 %7194
      %7196 = vmax.xlane.f32.xlu0 %v7159
      %v7197 = vpop.xlane.xlu0 %7196
      %7198 = vmax.xlane.f32.xlu0 %v7164
      %v7199 = vpop.xlane.xlu0 %7198
      %7200 = vmax.xlane.f32.xlu0 %v7167
      %v7201 = vpop.xlane.xlu0 %7200
      %v7202 = vsub.f32 %v7108, %v7171
      %v7203 = vsub.f32 %v7111, %v7173
      %v7204 = vsub.f32 %v7116, %v7175
      %v7205 = vsub.f32 %v7119, %v7177
      %v7206 = vsub.f32 %v7124, %v7179
      %v7207 = vsub.f32 %v7127, %v7181
      %v7208 = vsub.f32 %v7132, %v7183
      %v7209 = vsub.f32 %v7135, %v7185
      %v7210 = vsub.f32 %v7140, %v7187
      %v7211 = vsub.f32 %v7143, %v7189
      %v7212 = vsub.f32 %v7148, %v7191
      %v7213 = vsub.f32 %v7151, %v7193
      %v7214 = vsub.f32 %v7156, %v7195
      %v7215 = vsub.f32 %v7159, %v7197
      %v7216 = vsub.f32 %v7164, %v7199
      %v7217 = vsub.f32 %v7167, %v7201
      %v7218 = vmul.f32 %v7202, 1.442695
      %v7219 = vpow.pop %v7218
      %v7220 = vmul.f32 %v7203, 1.442695
      %v7221 = vpow.pop %v7220
      %v7222 = vmul.f32 %v7204, 1.442695
      %v7223 = vpow.pop %v7222
      %v7224 = vmul.f32 %v7205, 1.442695
      %v7225 = vpow.pop %v7224
      %v7226 = vmul.f32 %v7206, 1.442695
      %v7227 = vpow.pop %v7226
      %v7228 = vmul.f32 %v7207, 1.442695
      %v7229 = vpow.pop %v7228
      %v7230 = vmul.f32 %v7208, 1.442695
      %v7231 = vpow.pop %v7230
      %v7232 = vmul.f32 %v7209, 1.442695
      %v7233 = vpow.pop %v7232
      %v7234 = vmul.f32 %v7210, 1.442695
      %v7235 = vpow.pop %v7234
      %v7236 = vmul.f32 %v7211, 1.442695
      %v7237 = vpow.pop %v7236
      %v7238 = vmul.f32 %v7212, 1.442695
      %v7239 = vpow.pop %v7238
      %v7240 = vmul.f32 %v7213, 1.442695
      %v7241 = vpow.pop %v7240
      %v7242 = vmul.f32 %v7214, 1.442695
      %v7243 = vpow.pop %v7242
      %v7244 = vmul.f32 %v7215, 1.442695
      %v7245 = vpow.pop %v7244
      %v7246 = vmul.f32 %v7216, 1.442695
      %v7247 = vpow.pop %v7246
      %v7248 = vmul.f32 %v7217, 1.442695
      %v7249 = vpow.pop %v7248
      %7250 = vadd.xlane.f32.xlu0 %v7219
      %v7251 = vpop.xlane.xlu0 %7250
      %7252 = vadd.xlane.f32.xlu0 %v7221
      %v7253 = vpop.xlane.xlu0 %7252
      %7254 = vadd.xlane.f32.xlu0 %v7223
      %v7255 = vpop.xlane.xlu0 %7254
      %7256 = vadd.xlane.f32.xlu0 %v7225
      %v7257 = vpop.xlane.xlu0 %7256
      %7258 = vadd.xlane.f32.xlu0 %v7227
      %v7259 = vpop.xlane.xlu0 %7258
      %7260 = vadd.xlane.f32.xlu0 %v7229
      %v7261 = vpop.xlane.xlu0 %7260
      %7262 = vadd.xlane.f32.xlu0 %v7231
      %v7263 = vpop.xlane.xlu0 %7262
      %7264 = vadd.xlane.f32.xlu0 %v7233
      %v7265 = vpop.xlane.xlu0 %7264
      %7266 = vadd.xlane.f32.xlu0 %v7235
      %v7267 = vpop.xlane.xlu0 %7266
      %7268 = vadd.xlane.f32.xlu0 %v7237
      %v7269 = vpop.xlane.xlu0 %7268
      %7270 = vadd.xlane.f32.xlu0 %v7239
      %v7271 = vpop.xlane.xlu0 %7270
      %7272 = vadd.xlane.f32.xlu0 %v7241
      %v7273 = vpop.xlane.xlu0 %7272
      %7274 = vadd.xlane.f32.xlu0 %v7243
      %v7275 = vpop.xlane.xlu0 %7274
      %7276 = vadd.xlane.f32.xlu0 %v7245
      %v7277 = vpop.xlane.xlu0 %7276
      %7278 = vadd.xlane.f32.xlu0 %v7247
      %v7279 = vpop.xlane.xlu0 %7278
      %7280 = vadd.xlane.f32.xlu0 %v7249
      %v7281 = vpop.xlane.xlu0 %7280
      %v7282 = vrcp.pop %v7251
      %v7283 = vrcp.pop %v7253
      %v7284 = vrcp.pop %v7255
      %v7285 = vrcp.pop %v7257
      %v7286 = vrcp.pop %v7259
      %v7287 = vrcp.pop %v7261
      %v7288 = vrcp.pop %v7263
      %v7289 = vrcp.pop %v7265
      %v7290 = vrcp.pop %v7267
      %v7291 = vrcp.pop %v7269
      %v7292 = vrcp.pop %v7271
      %v7293 = vrcp.pop %v7273
      %v7294 = vrcp.pop %v7275
      %v7295 = vrcp.pop %v7277
      %v7296 = vrcp.pop %v7279
      %v7297 = vrcp.pop %v7281
      %v7298 = vmul.f32 %v7219, %v7282
      %v7299 = vmul.f32 %v7221, %v7283
      %v7300 = vmul.f32 %v7223, %v7284
      %v7301 = vmul.f32 %v7225, %v7285
      %v7302 = vmul.f32 %v7227, %v7286
      %v7303 = vmul.f32 %v7229, %v7287
      %v7304 = vmul.f32 %v7231, %v7288
      %v7305 = vmul.f32 %v7233, %v7289
      %v7306 = vmul.f32 %v7235, %v7290
      %v7307 = vmul.f32 %v7237, %v7291
      %v7308 = vmul.f32 %v7239, %v7292
      %v7309 = vmul.f32 %v7241, %v7293
      %v7310 = vmul.f32 %v7243, %v7294
      %v7311 = vmul.f32 %v7245, %v7295
      %v7312 = vmul.f32 %v7247, %v7296
      %v7313 = vmul.f32 %v7249, %v7297
      %v7314 = vpack.c.bf16 %v7299, %v7298
      %v7315 = vpack.c.bf16 %v7301, %v7300
      %v7316 = vpack.c.bf16 %v7303, %v7302
      %v7317 = vpack.c.bf16 %v7305, %v7304
      %v7318 = vpack.c.bf16 %v7307, %v7306
      %v7319 = vpack.c.bf16 %v7309, %v7308
      %v7320 = vpack.c.bf16 %v7311, %v7310
      %v7321 = vpack.c.bf16 %v7313, %v7312
      %7322 = vrot.lane.b32.xlu0 %v684, 72
      %v7323 = vpop.permute.xlu0 %7322
      %7324 = vrot.lane.b32.xlu0 %v685, 72
      %v7325 = vpop.permute.xlu0 %7324
      %7326 = vrot.lane.b32.xlu0 %v686, 72
      %v7327 = vpop.permute.xlu0 %7326
      %7328 = vrot.lane.b32.xlu0 %v687, 72
      %v7329 = vpop.permute.xlu0 %7328
      %7330 = vrot.lane.b32.xlu0 %v688, 72
      %v7331 = vpop.permute.xlu0 %7330
      %7332 = vrot.lane.b32.xlu0 %v689, 72
      %v7333 = vpop.permute.xlu0 %7332
      %7334 = vrot.lane.b32.xlu0 %v690, 72
      %v7335 = vpop.permute.xlu0 %7334
      %7336 = vrot.lane.b32.xlu0 %v691, 72
      %v7337 = vpop.permute.xlu0 %7336
      %7346 = vmatprep.subr.bf16.mxu0 0
      %7347 = vmatpush1.bf16.msra.mxu0 %v7323
      %7348 = vmatprep.subr.bf16.mxu0 0
      %7349 = vmatpush1.bf16.msra.mxu0 %v7325
      %7350 = vmatprep.subr.bf16.mxu0 0
      %7351 = vmatpush1.bf16.msra.mxu0 %v7327
      %7352 = vmatprep.subr.bf16.mxu0 0
      %7353 = vmatpush1.bf16.msra.mxu0 %v7329
      %7354 = vmatprep.subr.bf16.mxu0 0
      %7355 = vmatpush1.bf16.msra.mxu0 %v7331
      %7356 = vmatprep.subr.bf16.mxu0 0
      %7357 = vmatpush1.bf16.msra.mxu0 %v7333
      %7358 = vmatprep.subr.bf16.mxu0 0
      %7359 = vmatpush1.bf16.msra.mxu0 %v7335
      %7360 = vmatprep.subr.bf16.mxu0 0
      %7361 = vmatpush1.bf16.msra.mxu0 %v7337
      %7362 = vmatprep.subr.bf16.mxu0 0
      %7363 = vmatpush1.bf16.msra.mxu0 0
      %7364 = vmatprep.subr.bf16.mxu0 0
      %7365 = vmatpush1.bf16.msra.mxu0 0
      %7366 = vmatprep.subr.bf16.mxu0 0
      %7367 = vmatpush1.bf16.msra.mxu0 0
      %7368 = vmatprep.subr.bf16.mxu0 0
      %7369 = vmatpush1.bf16.msra.mxu0 0
      %7370 = vmatprep.subr.bf16.mxu0 0
      %7371 = vmatpush1.bf16.msra.mxu0 0
      %7372 = vmatprep.subr.bf16.mxu0 0
      %7373 = vmatpush1.bf16.msra.mxu0 0
      %7374 = vmatprep.subr.bf16.mxu0 0
      %7375 = vmatpush1.bf16.msra.mxu0 0
      %7376 = vmatprep.subr.bf16.mxu0 0
      %7377 = vmatpush1.bf16.msra.mxu0 0
      %7378 = vmatprep.mubr.bf16.mxu0 0
      %7379 = vmatmul.mubr.bf16.gmra.mrb[0].mxu0 %v7314
      %v7380 = vpop.f32.mrb[0].mxu0
      %v7381 = vadd.f32 0.0, %v7380
      %v7382 = vpop.f32.mrb[0].mxu0
      %v7383 = vpop.f32.mrb[0].mxu0
      %v7384 = vadd.f32 0.0, %v7383
      %v7385 = vpop.f32.mrb[0].mxu0
      %7386 = vmatprep.mubr.bf16.mxu0 0
      %7387 = vmatmul.mubr.bf16.gmra.mrb[0].mxu0 %v7315
      %v7388 = vpop.f32.mrb[0].mxu0
      %v7389 = vadd.f32 0.0, %v7388
      %v7390 = vpop.f32.mrb[0].mxu0
      %v7391 = vpop.f32.mrb[0].mxu0
      %v7392 = vadd.f32 0.0, %v7391
      %v7393 = vpop.f32.mrb[0].mxu0
      %7394 = vmatprep.mubr.bf16.mxu0 0
      %7395 = vmatmul.mubr.bf16.gmra.mrb[0].mxu0 %v7316
      %v7396 = vpop.f32.mrb[0].mxu0
      %v7397 = vadd.f32 0.0, %v7396
      %v7398 = vpop.f32.mrb[0].mxu0
      %v7399 = vpop.f32.mrb[0].mxu0
      %v7400 = vadd.f32 0.0, %v7399
      %v7401 = vpop.f32.mrb[0].mxu0
      %7402 = vmatprep.mubr.bf16.mxu0 0
      %7403 = vmatmul.mubr.bf16.gmra.mrb[0].mxu0 %v7317
      %v7404 = vpop.f32.mrb[0].mxu0
      %v7405 = vadd.f32 0.0, %v7404
      %v7406 = vpop.f32.mrb[0].mxu0
      %v7407 = vpop.f32.mrb[0].mxu0
      %v7408 = vadd.f32 0.0, %v7407
      %v7409 = vpop.f32.mrb[0].mxu0
      %7410 = vmatprep.mubr.bf16.mxu0 0
      %7411 = vmatmul.mubr.bf16.gmra.mrb[0].mxu0 %v7318
      %v7412 = vpop.f32.mrb[0].mxu0
      %v7413 = vadd.f32 0.0, %v7412
      %v7414 = vpop.f32.mrb[0].mxu0
      %v7415 = vpop.f32.mrb[0].mxu0
      %v7416 = vadd.f32 0.0, %v7415
      %v7417 = vpop.f32.mrb[0].mxu0
      %7418 = vmatprep.mubr.bf16.mxu0 0
      %7419 = vmatmul.mubr.bf16.gmra.mrb[0].mxu0 %v7319
      %v7420 = vpop.f32.mrb[0].mxu0
      %v7421 = vadd.f32 0.0, %v7420
      %v7422 = vpop.f32.mrb[0].mxu0
      %v7423 = vpop.f32.mrb[0].mxu0
      %v7424 = vadd.f32 0.0, %v7423
      %v7425 = vpop.f32.mrb[0].mxu0
      %7426 = vmatprep.mubr.bf16.mxu0 0
      %7427 = vmatmul.mubr.bf16.gmra.mrb[0].mxu0 %v7320
      %v7428 = vpop.f32.mrb[0].mxu0
      %v7429 = vadd.f32 0.0, %v7428
      %v7430 = vpop.f32.mrb[0].mxu0
      %v7431 = vpop.f32.mrb[0].mxu0
      %v7432 = vadd.f32 0.0, %v7431
      %v7433 = vpop.f32.mrb[0].mxu0
      %7434 = vmatprep.mubr.bf16.mxu0 0
      %7435 = vmatmul.mubr.bf16.gmra.mrb[0].mxu0 %v7321
      %v7436 = vpop.f32.mrb[0].mxu0
      %v7437 = vadd.f32 0.0, %v7436
      %v7438 = vpop.f32.mrb[0].mxu0
      %v7439 = vpop.f32.mrb[0].mxu0
      %v7440 = vadd.f32 0.0, %v7439
      %v7441 = vpop.f32.mrb[0].mxu0
      %7442 = vdwg.mxu0
      %7443 = vrot.lane.b32.xlu0 %v668, 68
      %v7444 = vpop.permute.xlu0 %7443
      %7445 = vrot.lane.b32.xlu0 %v669, 68
      %v7446 = vpop.permute.xlu0 %7445
      %7447 = vrot.lane.b32.xlu0 %v670, 68
      %v7448 = vpop.permute.xlu0 %7447
      %7449 = vrot.lane.b32.xlu0 %v671, 68
      %v7450 = vpop.permute.xlu0 %7449
      %7451 = vrot.lane.b32.xlu0 %v672, 68
      %v7452 = vpop.permute.xlu0 %7451
      %7453 = vrot.lane.b32.xlu0 %v673, 68
      %v7454 = vpop.permute.xlu0 %7453
      %7455 = vrot.lane.b32.xlu0 %v674, 68
      %v7456 = vpop.permute.xlu0 %7455
      %7457 = vrot.lane.b32.xlu0 %v675, 68
      %v7458 = vpop.permute.xlu0 %7457
      %7459 = vrot.lane.b32.xlu0 %v676, 4
      %v7460 = vpop.permute.xlu0 %7459
      %7461 = vrot.lane.b32.xlu0 %v677, 4
      %v7462 = vpop.permute.xlu0 %7461
      %7463 = vrot.lane.b32.xlu0 %v678, 4
      %v7464 = vpop.permute.xlu0 %7463
      %7465 = vrot.lane.b32.xlu0 %v679, 4
      %v7466 = vpop.permute.xlu0 %7465
      %7467 = vrot.lane.b32.xlu0 %v680, 4
      %v7468 = vpop.permute.xlu0 %7467
      %7469 = vrot.lane.b32.xlu0 %v681, 4
      %v7470 = vpop.permute.xlu0 %7469
      %7471 = vrot.lane.b32.xlu0 %v682, 4
      %v7472 = vpop.permute.xlu0 %7471
      %7473 = vrot.lane.b32.xlu0 %v683, 4
      %v7474 = vpop.permute.xlu0 %7473
      %v7476 = vsel %vm732, %v7444, 0
      %v7479 = vsel %vm732, %v7446, 0
      %v7482 = vsel %vm732, %v7448, 0
      %v7485 = vsel %vm732, %v7450, 0
      %v7488 = vsel %vm732, %v7452, 0
      %v7491 = vsel %vm732, %v7454, 0
      %v7494 = vsel %vm732, %v7456, 0
      %v7497 = vsel %vm732, %v7458, 0
      %v7500 = vsel %vm732, %v7460, 0
      %v7503 = vsel %vm732, %v7462, 0
      %v7506 = vsel %vm732, %v7464, 0
      %v7509 = vsel %vm732, %v7466, 0
      %v7512 = vsel %vm732, %v7468, 0
      %v7515 = vsel %vm732, %v7470, 0
      %v7518 = vsel %vm732, %v7472, 0
      %v7521 = vsel %vm732, %v7474, 0
      %7523 = vmatprep.subr.bf16.mxu0 0
      %7524 = vmatpush1.bf16.xpose.msra.mxu0 %v7500
      %7525 = vmatprep.subr.bf16.mxu0 0
      %7526 = vmatpush1.bf16.xpose.msra.mxu0 %v7503
      %7527 = vmatprep.subr.bf16.mxu0 0
      %7528 = vmatpush1.bf16.xpose.msra.mxu0 %v7506
      %7529 = vmatprep.subr.bf16.mxu0 0
      %7530 = vmatpush1.bf16.xpose.msra.mxu0 %v7509
      %7531 = vmatprep.subr.bf16.mxu0 0
      %7532 = vmatpush1.bf16.xpose.msra.mxu0 %v7512
      %7533 = vmatprep.subr.bf16.mxu0 0
      %7534 = vmatpush1.bf16.xpose.msra.mxu0 %v7515
      %7535 = vmatprep.subr.bf16.mxu0 0
      %7536 = vmatpush1.bf16.xpose.msra.mxu0 %v7518
      %7537 = vmatprep.subr.bf16.mxu0 0
      %7538 = vmatpush1.bf16.xpose.msra.mxu0 %v7521
      %7539 = vmatprep.subr.bf16.mxu0 0
      %7540 = vmatpush1.bf16.xpose.msra.mxu0 0
      %7541 = vmatprep.subr.bf16.mxu0 0
      %7542 = vmatpush1.bf16.xpose.msra.mxu0 0
      %7543 = vmatprep.subr.bf16.mxu0 0
      %7544 = vmatpush1.bf16.xpose.msra.mxu0 0
      %7545 = vmatprep.subr.bf16.mxu0 0
      %7546 = vmatpush1.bf16.xpose.msra.mxu0 0
      %7547 = vmatprep.subr.bf16.mxu0 0
      %7548 = vmatpush1.bf16.xpose.msra.mxu0 0
      %7549 = vmatprep.subr.bf16.mxu0 0
      %7550 = vmatpush1.bf16.xpose.msra.mxu0 0
      %7551 = vmatprep.subr.bf16.mxu0 0
      %7552 = vmatpush1.bf16.xpose.msra.mxu0 0
      %7553 = vmatprep.subr.bf16.mxu0 0
      %7554 = vmatpush1.bf16.xpose.msra.mxu0 0
      %7555 = vmatprep.mubr.bf16.mxu0 0
      %7556 = vmatmul.mubr.bf16.gmra.mrb[0].mxu0 %v7476
      %v7557 = vpop.f32.mrb[0].mxu0
      %v7558 = vadd.f32 %v692, %v7557
      %v7559 = vpop.f32.mrb[0].mxu0
      %v7560 = vpop.f32.mrb[0].mxu0
      %v7561 = vadd.f32 %v693, %v7560
      %v7562 = vpop.f32.mrb[0].mxu0
      %7563 = vmatprep.mubr.bf16.mxu0 0
      %7564 = vmatmul.mubr.bf16.gmra.mrb[0].mxu0 %v7479
      %v7565 = vpop.f32.mrb[0].mxu0
      %v7566 = vadd.f32 %v694, %v7565
      %v7567 = vpop.f32.mrb[0].mxu0
      %v7568 = vpop.f32.mrb[0].mxu0
      %v7569 = vadd.f32 %v695, %v7568
      %v7570 = vpop.f32.mrb[0].mxu0
      %7571 = vmatprep.mubr.bf16.mxu0 0
      %7572 = vmatmul.mubr.bf16.gmra.mrb[0].mxu0 %v7482
      %v7573 = vpop.f32.mrb[0].mxu0
      %v7574 = vadd.f32 %v696, %v7573
      %v7575 = vpop.f32.mrb[0].mxu0
      %v7576 = vpop.f32.mrb[0].mxu0
      %v7577 = vadd.f32 %v697, %v7576
      %v7578 = vpop.f32.mrb[0].mxu0
      %7579 = vmatprep.mubr.bf16.mxu0 0
      %7580 = vmatmul.mubr.bf16.gmra.mrb[0].mxu0 %v7485
      %v7581 = vpop.f32.mrb[0].mxu0
      %v7582 = vadd.f32 %v698, %v7581
      %v7583 = vpop.f32.mrb[0].mxu0
      %v7584 = vpop.f32.mrb[0].mxu0
      %v7585 = vadd.f32 %v699, %v7584
      %v7586 = vpop.f32.mrb[0].mxu0
      %7587 = vmatprep.mubr.bf16.mxu0 0
      %7588 = vmatmul.mubr.bf16.gmra.mrb[0].mxu0 %v7488
      %v7589 = vpop.f32.mrb[0].mxu0
      %v7590 = vadd.f32 %v700, %v7589
      %v7591 = vpop.f32.mrb[0].mxu0
      %v7592 = vpop.f32.mrb[0].mxu0
      %v7593 = vadd.f32 %v701, %v7592
      %v7594 = vpop.f32.mrb[0].mxu0
      %7595 = vmatprep.mubr.bf16.mxu0 0
      %7596 = vmatmul.mubr.bf16.gmra.mrb[0].mxu0 %v7491
      %v7597 = vpop.f32.mrb[0].mxu0
      %v7598 = vadd.f32 %v702, %v7597
      %v7599 = vpop.f32.mrb[0].mxu0
      %v7600 = vpop.f32.mrb[0].mxu0
      %v7601 = vadd.f32 %v703, %v7600
      %v7602 = vpop.f32.mrb[0].mxu0
      %7603 = vmatprep.mubr.bf16.mxu0 0
      %7604 = vmatmul.mubr.bf16.gmra.mrb[0].mxu0 %v7494
      %v7605 = vpop.f32.mrb[0].mxu0
      %v7606 = vadd.f32 %v704, %v7605
      %v7607 = vpop.f32.mrb[0].mxu0
      %v7608 = vpop.f32.mrb[0].mxu0
      %v7609 = vadd.f32 %v705, %v7608
      %v7610 = vpop.f32.mrb[0].mxu0
      %7611 = vmatprep.mubr.bf16.mxu0 0
      %7612 = vmatmul.mubr.bf16.gmra.mrb[0].mxu0 %v7497
      %v7613 = vpop.f32.mrb[0].mxu0
      %v7614 = vadd.f32 %v706, %v7613
      %v7615 = vpop.f32.mrb[0].mxu0
      %v7616 = vpop.f32.mrb[0].mxu0
      %v7617 = vadd.f32 %v707, %v7616
      %v7618 = vpop.f32.mrb[0].mxu0
      %7619 = vdwg.mxu0
      %7620 = vmax.xlane.f32.xlu0 %v7558
      %v7621 = vpop.xlane.xlu0 %7620
      %7622 = vmax.xlane.f32.xlu0 %v7561
      %v7623 = vpop.xlane.xlu0 %7622
      %7624 = vmax.xlane.f32.xlu0 %v7566
      %v7625 = vpop.xlane.xlu0 %7624
      %7626 = vmax.xlane.f32.xlu0 %v7569
      %v7627 = vpop.xlane.xlu0 %7626
      %7628 = vmax.xlane.f32.xlu0 %v7574
      %v7629 = vpop.xlane.xlu0 %7628
      %7630 = vmax.xlane.f32.xlu0 %v7577
      %v7631 = vpop.xlane.xlu0 %7630
      %7632 = vmax.xlane.f32.xlu0 %v7582
      %v7633 = vpop.xlane.xlu0 %7632
      %7634 = vmax.xlane.f32.xlu0 %v7585
      %v7635 = vpop.xlane.xlu0 %7634
      %7636 = vmax.xlane.f32.xlu0 %v7590
      %v7637 = vpop.xlane.xlu0 %7636
      %7638 = vmax.xlane.f32.xlu0 %v7593
      %v7639 = vpop.xlane.xlu0 %7638
      %7640 = vmax.xlane.f32.xlu0 %v7598
      %v7641 = vpop.xlane.xlu0 %7640
      %7642 = vmax.xlane.f32.xlu0 %v7601
      %v7643 = vpop.xlane.xlu0 %7642
      %7644 = vmax.xlane.f32.xlu0 %v7606
      %v7645 = vpop.xlane.xlu0 %7644
      %7646 = vmax.xlane.f32.xlu0 %v7609
      %v7647 = vpop.xlane.xlu0 %7646
      %7648 = vmax.xlane.f32.xlu0 %v7614
      %v7649 = vpop.xlane.xlu0 %7648
      %7650 = vmax.xlane.f32.xlu0 %v7617
      %v7651 = vpop.xlane.xlu0 %7650
      %v7652 = vsub.f32 %v7558, %v7621
      %v7653 = vsub.f32 %v7561, %v7623
      %v7654 = vsub.f32 %v7566, %v7625
      %v7655 = vsub.f32 %v7569, %v7627
      %v7656 = vsub.f32 %v7574, %v7629
      %v7657 = vsub.f32 %v7577, %v7631
      %v7658 = vsub.f32 %v7582, %v7633
      %v7659 = vsub.f32 %v7585, %v7635
      %v7660 = vsub.f32 %v7590, %v7637
      %v7661 = vsub.f32 %v7593, %v7639
      %v7662 = vsub.f32 %v7598, %v7641
      %v7663 = vsub.f32 %v7601, %v7643
      %v7664 = vsub.f32 %v7606, %v7645
      %v7665 = vsub.f32 %v7609, %v7647
      %v7666 = vsub.f32 %v7614, %v7649
      %v7667 = vsub.f32 %v7617, %v7651
      %v7668 = vmul.f32 %v7652, 1.442695
      %v7669 = vpow.pop %v7668
      %v7670 = vmul.f32 %v7653, 1.442695
      %v7671 = vpow.pop %v7670
      %v7672 = vmul.f32 %v7654, 1.442695
      %v7673 = vpow.pop %v7672
      %v7674 = vmul.f32 %v7655, 1.442695
      %v7675 = vpow.pop %v7674
      %v7676 = vmul.f32 %v7656, 1.442695
      %v7677 = vpow.pop %v7676
      %v7678 = vmul.f32 %v7657, 1.442695
      %v7679 = vpow.pop %v7678
      %v7680 = vmul.f32 %v7658, 1.442695
      %v7681 = vpow.pop %v7680
      %v7682 = vmul.f32 %v7659, 1.442695
      %v7683 = vpow.pop %v7682
      %v7684 = vmul.f32 %v7660, 1.442695
      %v7685 = vpow.pop %v7684
      %v7686 = vmul.f32 %v7661, 1.442695
      %v7687 = vpow.pop %v7686
      %v7688 = vmul.f32 %v7662, 1.442695
      %v7689 = vpow.pop %v7688
      %v7690 = vmul.f32 %v7663, 1.442695
      %v7691 = vpow.pop %v7690
      %v7692 = vmul.f32 %v7664, 1.442695
      %v7693 = vpow.pop %v7692
      %v7694 = vmul.f32 %v7665, 1.442695
      %v7695 = vpow.pop %v7694
      %v7696 = vmul.f32 %v7666, 1.442695
      %v7697 = vpow.pop %v7696
      %v7698 = vmul.f32 %v7667, 1.442695
      %v7699 = vpow.pop %v7698
      %7700 = vadd.xlane.f32.xlu0 %v7669
      %v7701 = vpop.xlane.xlu0 %7700
      %7702 = vadd.xlane.f32.xlu0 %v7671
      %v7703 = vpop.xlane.xlu0 %7702
      %7704 = vadd.xlane.f32.xlu0 %v7673
      %v7705 = vpop.xlane.xlu0 %7704
      %7706 = vadd.xlane.f32.xlu0 %v7675
      %v7707 = vpop.xlane.xlu0 %7706
      %7708 = vadd.xlane.f32.xlu0 %v7677
      %v7709 = vpop.xlane.xlu0 %7708
      %7710 = vadd.xlane.f32.xlu0 %v7679
      %v7711 = vpop.xlane.xlu0 %7710
      %7712 = vadd.xlane.f32.xlu0 %v7681
      %v7713 = vpop.xlane.xlu0 %7712
      %7714 = vadd.xlane.f32.xlu0 %v7683
      %v7715 = vpop.xlane.xlu0 %7714
      %7716 = vadd.xlane.f32.xlu0 %v7685
      %v7717 = vpop.xlane.xlu0 %7716
      %7718 = vadd.xlane.f32.xlu0 %v7687
      %v7719 = vpop.xlane.xlu0 %7718
      %7720 = vadd.xlane.f32.xlu0 %v7689
      %v7721 = vpop.xlane.xlu0 %7720
      %7722 = vadd.xlane.f32.xlu0 %v7691
      %v7723 = vpop.xlane.xlu0 %7722
      %7724 = vadd.xlane.f32.xlu0 %v7693
      %v7725 = vpop.xlane.xlu0 %7724
      %7726 = vadd.xlane.f32.xlu0 %v7695
      %v7727 = vpop.xlane.xlu0 %7726
      %7728 = vadd.xlane.f32.xlu0 %v7697
      %v7729 = vpop.xlane.xlu0 %7728
      %7730 = vadd.xlane.f32.xlu0 %v7699
      %v7731 = vpop.xlane.xlu0 %7730
      %v7732 = vrcp.pop %v7701
      %v7733 = vrcp.pop %v7703
      %v7734 = vrcp.pop %v7705
      %v7735 = vrcp.pop %v7707
      %v7736 = vrcp.pop %v7709
      %v7737 = vrcp.pop %v7711
      %v7738 = vrcp.pop %v7713
      %v7739 = vrcp.pop %v7715
      %v7740 = vrcp.pop %v7717
      %v7741 = vrcp.pop %v7719
      %v7742 = vrcp.pop %v7721
      %v7743 = vrcp.pop %v7723
      %v7744 = vrcp.pop %v7725
      %v7745 = vrcp.pop %v7727
      %v7746 = vrcp.pop %v7729
      %v7747 = vrcp.pop %v7731
      %v7748 = vmul.f32 %v7669, %v7732
      %v7749 = vmul.f32 %v7671, %v7733
      %v7750 = vmul.f32 %v7673, %v7734
      %v7751 = vmul.f32 %v7675, %v7735
      %v7752 = vmul.f32 %v7677, %v7736
      %v7753 = vmul.f32 %v7679, %v7737
      %v7754 = vmul.f32 %v7681, %v7738
      %v7755 = vmul.f32 %v7683, %v7739
      %v7756 = vmul.f32 %v7685, %v7740
      %v7757 = vmul.f32 %v7687, %v7741
      %v7758 = vmul.f32 %v7689, %v7742
      %v7759 = vmul.f32 %v7691, %v7743
      %v7760 = vmul.f32 %v7693, %v7744
      %v7761 = vmul.f32 %v7695, %v7745
      %v7762 = vmul.f32 %v7697, %v7746
      %v7763 = vmul.f32 %v7699, %v7747
      %v7764 = vpack.c.bf16 %v7749, %v7748
      %v7765 = vpack.c.bf16 %v7751, %v7750
      %v7766 = vpack.c.bf16 %v7753, %v7752
      %v7767 = vpack.c.bf16 %v7755, %v7754
      %v7768 = vpack.c.bf16 %v7757, %v7756
      %v7769 = vpack.c.bf16 %v7759, %v7758
      %v7770 = vpack.c.bf16 %v7761, %v7760
      %v7771 = vpack.c.bf16 %v7763, %v7762
      %7772 = vrot.lane.b32.xlu0 %v684, 68
      %v7773 = vpop.permute.xlu0 %7772
      %7774 = vrot.lane.b32.xlu0 %v685, 68
      %v7775 = vpop.permute.xlu0 %7774
      %7776 = vrot.lane.b32.xlu0 %v686, 68
      %v7777 = vpop.permute.xlu0 %7776
      %7778 = vrot.lane.b32.xlu0 %v687, 68
      %v7779 = vpop.permute.xlu0 %7778
      %7780 = vrot.lane.b32.xlu0 %v688, 68
      %v7781 = vpop.permute.xlu0 %7780
      %7782 = vrot.lane.b32.xlu0 %v689, 68
      %v7783 = vpop.permute.xlu0 %7782
      %7784 = vrot.lane.b32.xlu0 %v690, 68
      %v7785 = vpop.permute.xlu0 %7784
      %7786 = vrot.lane.b32.xlu0 %v691, 68
      %v7787 = vpop.permute.xlu0 %7786
      %7796 = vmatprep.subr.bf16.mxu0 0
      %7797 = vmatpush1.bf16.msra.mxu0 %v7773
      %7798 = vmatprep.subr.bf16.mxu0 0
      %7799 = vmatpush1.bf16.msra.mxu0 %v7775
      %7800 = vmatprep.subr.bf16.mxu0 0
      %7801 = vmatpush1.bf16.msra.mxu0 %v7777
      %7802 = vmatprep.subr.bf16.mxu0 0
      %7803 = vmatpush1.bf16.msra.mxu0 %v7779
      %7804 = vmatprep.subr.bf16.mxu0 0
      %7805 = vmatpush1.bf16.msra.mxu0 %v7781
      %7806 = vmatprep.subr.bf16.mxu0 0
      %7807 = vmatpush1.bf16.msra.mxu0 %v7783
      %7808 = vmatprep.subr.bf16.mxu0 0
      %7809 = vmatpush1.bf16.msra.mxu0 %v7785
      %7810 = vmatprep.subr.bf16.mxu0 0
      %7811 = vmatpush1.bf16.msra.mxu0 %v7787
      %7812 = vmatprep.subr.bf16.mxu0 0
      %7813 = vmatpush1.bf16.msra.mxu0 0
      %7814 = vmatprep.subr.bf16.mxu0 0
      %7815 = vmatpush1.bf16.msra.mxu0 0
      %7816 = vmatprep.subr.bf16.mxu0 0
      %7817 = vmatpush1.bf16.msra.mxu0 0
      %7818 = vmatprep.subr.bf16.mxu0 0
      %7819 = vmatpush1.bf16.msra.mxu0 0
      %7820 = vmatprep.subr.bf16.mxu0 0
      %7821 = vmatpush1.bf16.msra.mxu0 0
      %7822 = vmatprep.subr.bf16.mxu0 0
      %7823 = vmatpush1.bf16.msra.mxu0 0
      %7824 = vmatprep.subr.bf16.mxu0 0
      %7825 = vmatpush1.bf16.msra.mxu0 0
      %7826 = vmatprep.subr.bf16.mxu0 0
      %7827 = vmatpush1.bf16.msra.mxu0 0
      %7828 = vmatprep.mubr.bf16.mxu0 0
      %7829 = vmatmul.mubr.bf16.gmra.mrb[0].mxu0 %v7764
      %v7830 = vpop.f32.mrb[0].mxu0
      %v7831 = vadd.f32 0.0, %v7830
      %v7832 = vpop.f32.mrb[0].mxu0
      %v7833 = vpop.f32.mrb[0].mxu0
      %v7834 = vadd.f32 0.0, %v7833
      %v7835 = vpop.f32.mrb[0].mxu0
      %7836 = vmatprep.mubr.bf16.mxu0 0
      %7837 = vmatmul.mubr.bf16.gmra.mrb[0].mxu0 %v7765
      %v7838 = vpop.f32.mrb[0].mxu0
      %v7839 = vadd.f32 0.0, %v7838
      %v7840 = vpop.f32.mrb[0].mxu0
      %v7841 = vpop.f32.mrb[0].mxu0
      %v7842 = vadd.f32 0.0, %v7841
      %v7843 = vpop.f32.mrb[0].mxu0
      %7844 = vmatprep.mubr.bf16.mxu0 0
      %7845 = vmatmul.mubr.bf16.gmra.mrb[0].mxu0 %v7766
      %v7846 = vpop.f32.mrb[0].mxu0
      %v7847 = vadd.f32 0.0, %v7846
      %v7848 = vpop.f32.mrb[0].mxu0
      %v7849 = vpop.f32.mrb[0].mxu0
      %v7850 = vadd.f32 0.0, %v7849
      %v7851 = vpop.f32.mrb[0].mxu0
      %7852 = vmatprep.mubr.bf16.mxu0 0
      %7853 = vmatmul.mubr.bf16.gmra.mrb[0].mxu0 %v7767
      %v7854 = vpop.f32.mrb[0].mxu0
      %v7855 = vadd.f32 0.0, %v7854
      %v7856 = vpop.f32.mrb[0].mxu0
      %v7857 = vpop.f32.mrb[0].mxu0
      %v7858 = vadd.f32 0.0, %v7857
      %v7859 = vpop.f32.mrb[0].mxu0
      %7860 = vmatprep.mubr.bf16.mxu0 0
      %7861 = vmatmul.mubr.bf16.gmra.mrb[0].mxu0 %v7768
      %v7862 = vpop.f32.mrb[0].mxu0
      %v7863 = vadd.f32 0.0, %v7862
      %v7864 = vpop.f32.mrb[0].mxu0
      %v7865 = vpop.f32.mrb[0].mxu0
      %v7866 = vadd.f32 0.0, %v7865
      %v7867 = vpop.f32.mrb[0].mxu0
      %7868 = vmatprep.mubr.bf16.mxu0 0
      %7869 = vmatmul.mubr.bf16.gmra.mrb[0].mxu0 %v7769
      %v7870 = vpop.f32.mrb[0].mxu0
      %v7871 = vadd.f32 0.0, %v7870
      %v7872 = vpop.f32.mrb[0].mxu0
      %v7873 = vpop.f32.mrb[0].mxu0
      %v7874 = vadd.f32 0.0, %v7873
      %v7875 = vpop.f32.mrb[0].mxu0
      %7876 = vmatprep.mubr.bf16.mxu0 0
      %7877 = vmatmul.mubr.bf16.gmra.mrb[0].mxu0 %v7770
      %v7878 = vpop.f32.mrb[0].mxu0
      %v7879 = vadd.f32 0.0, %v7878
      %v7880 = vpop.f32.mrb[0].mxu0
      %v7881 = vpop.f32.mrb[0].mxu0
      %v7882 = vadd.f32 0.0, %v7881
      %v7883 = vpop.f32.mrb[0].mxu0
      %7884 = vmatprep.mubr.bf16.mxu0 0
      %7885 = vmatmul.mubr.bf16.gmra.mrb[0].mxu0 %v7771
      %v7886 = vpop.f32.mrb[0].mxu0
      %v7887 = vadd.f32 0.0, %v7886
      %v7888 = vpop.f32.mrb[0].mxu0
      %v7889 = vpop.f32.mrb[0].mxu0
      %v7890 = vadd.f32 0.0, %v7889
      %v7891 = vpop.f32.mrb[0].mxu0
      %7892 = vdwg.mxu0
      %7909 = vrot.lane.b32.xlu0 %v1531, 4
      %v7910 = vpop.permute.xlu0 %7909
      %7911 = vrot.lane.b32.xlu0 %v1534, 4
      %v7912 = vpop.permute.xlu0 %7911
      %7913 = vrot.lane.b32.xlu0 %v1539, 4
      %v7914 = vpop.permute.xlu0 %7913
      %7915 = vrot.lane.b32.xlu0 %v1542, 4
      %v7916 = vpop.permute.xlu0 %7915
      %7917 = vrot.lane.b32.xlu0 %v1547, 4
      %v7918 = vpop.permute.xlu0 %7917
      %7919 = vrot.lane.b32.xlu0 %v1550, 4
      %v7920 = vpop.permute.xlu0 %7919
      %7921 = vrot.lane.b32.xlu0 %v1555, 4
      %v7922 = vpop.permute.xlu0 %7921
      %7923 = vrot.lane.b32.xlu0 %v1558, 4
      %v7924 = vpop.permute.xlu0 %7923
      %7925 = vrot.lane.b32.xlu0 %v1563, 4
      %v7926 = vpop.permute.xlu0 %7925
      %7927 = vrot.lane.b32.xlu0 %v1566, 4
      %v7928 = vpop.permute.xlu0 %7927
      %7929 = vrot.lane.b32.xlu0 %v1571, 4
      %v7930 = vpop.permute.xlu0 %7929
      %7931 = vrot.lane.b32.xlu0 %v1574, 4
      %v7932 = vpop.permute.xlu0 %7931
      %7933 = vrot.lane.b32.xlu0 %v1579, 4
      %v7934 = vpop.permute.xlu0 %7933
      %7935 = vrot.lane.b32.xlu0 %v1582, 4
      %v7936 = vpop.permute.xlu0 %7935
      %7937 = vrot.lane.b32.xlu0 %v1587, 4
      %v7938 = vpop.permute.xlu0 %7937
      %7939 = vrot.lane.b32.xlu0 %v1590, 4
      %v7940 = vpop.permute.xlu0 %7939
      %7973 = vrot.lane.b32.xlu0 %v1981, 8
      %v7974 = vpop.permute.xlu0 %7973
      %7975 = vrot.lane.b32.xlu0 %v1984, 8
      %v7976 = vpop.permute.xlu0 %7975
      %7977 = vrot.lane.b32.xlu0 %v1989, 8
      %v7978 = vpop.permute.xlu0 %7977
      %7979 = vrot.lane.b32.xlu0 %v1992, 8
      %v7980 = vpop.permute.xlu0 %7979
      %7981 = vrot.lane.b32.xlu0 %v1997, 8
      %v7982 = vpop.permute.xlu0 %7981
      %7983 = vrot.lane.b32.xlu0 %v2000, 8
      %v7984 = vpop.permute.xlu0 %7983
      %7985 = vrot.lane.b32.xlu0 %v2005, 8
      %v7986 = vpop.permute.xlu0 %7985
      %7987 = vrot.lane.b32.xlu0 %v2008, 8
      %v7988 = vpop.permute.xlu0 %7987
      %7989 = vrot.lane.b32.xlu0 %v2013, 8
      %v7990 = vpop.permute.xlu0 %7989
      %7991 = vrot.lane.b32.xlu0 %v2016, 8
      %v7992 = vpop.permute.xlu0 %7991
      %7993 = vrot.lane.b32.xlu0 %v2021, 8
      %v7994 = vpop.permute.xlu0 %7993
      %7995 = vrot.lane.b32.xlu0 %v2024, 8
      %v7996 = vpop.permute.xlu0 %7995
      %7997 = vrot.lane.b32.xlu0 %v2029, 8
      %v7998 = vpop.permute.xlu0 %7997
      %7999 = vrot.lane.b32.xlu0 %v2032, 8
      %v8000 = vpop.permute.xlu0 %7999
      %8001 = vrot.lane.b32.xlu0 %v2037, 8
      %v8002 = vpop.permute.xlu0 %8001
      %8003 = vrot.lane.b32.xlu0 %v2040, 8
      %v8004 = vpop.permute.xlu0 %8003
      %8037 = vrot.lane.b32.xlu0 %v2431, 12
      %v8038 = vpop.permute.xlu0 %8037
      %8039 = vrot.lane.b32.xlu0 %v2434, 12
      %v8040 = vpop.permute.xlu0 %8039
      %8041 = vrot.lane.b32.xlu0 %v2439, 12
      %v8042 = vpop.permute.xlu0 %8041
      %8043 = vrot.lane.b32.xlu0 %v2442, 12
      %v8044 = vpop.permute.xlu0 %8043
      %8045 = vrot.lane.b32.xlu0 %v2447, 12
      %v8046 = vpop.permute.xlu0 %8045
      %8047 = vrot.lane.b32.xlu0 %v2450, 12
      %v8048 = vpop.permute.xlu0 %8047
      %8049 = vrot.lane.b32.xlu0 %v2455, 12
      %v8050 = vpop.permute.xlu0 %8049
      %8051 = vrot.lane.b32.xlu0 %v2458, 12
      %v8052 = vpop.permute.xlu0 %8051
      %8053 = vrot.lane.b32.xlu0 %v2463, 12
      %v8054 = vpop.permute.xlu0 %8053
      %8055 = vrot.lane.b32.xlu0 %v2466, 12
      %v8056 = vpop.permute.xlu0 %8055
      %8057 = vrot.lane.b32.xlu0 %v2471, 12
      %v8058 = vpop.permute.xlu0 %8057
      %8059 = vrot.lane.b32.xlu0 %v2474, 12
      %v8060 = vpop.permute.xlu0 %8059
      %8061 = vrot.lane.b32.xlu0 %v2479, 12
      %v8062 = vpop.permute.xlu0 %8061
      %8063 = vrot.lane.b32.xlu0 %v2482, 12
      %v8064 = vpop.permute.xlu0 %8063
      %8065 = vrot.lane.b32.xlu0 %v2487, 12
      %v8066 = vpop.permute.xlu0 %8065
      %8067 = vrot.lane.b32.xlu0 %v2490, 12
      %v8068 = vpop.permute.xlu0 %8067
      %8101 = vrot.lane.b32.xlu0 %v2881, 16
      %v8102 = vpop.permute.xlu0 %8101
      %8103 = vrot.lane.b32.xlu0 %v2884, 16
      %v8104 = vpop.permute.xlu0 %8103
      %8105 = vrot.lane.b32.xlu0 %v2889, 16
      %v8106 = vpop.permute.xlu0 %8105
      %8107 = vrot.lane.b32.xlu0 %v2892, 16
      %v8108 = vpop.permute.xlu0 %8107
      %8109 = vrot.lane.b32.xlu0 %v2897, 16
      %v8110 = vpop.permute.xlu0 %8109
      %8111 = vrot.lane.b32.xlu0 %v2900, 16
      %v8112 = vpop.permute.xlu0 %8111
      %8113 = vrot.lane.b32.xlu0 %v2905, 16
      %v8114 = vpop.permute.xlu0 %8113
      %8115 = vrot.lane.b32.xlu0 %v2908, 16
      %v8116 = vpop.permute.xlu0 %8115
      %8117 = vrot.lane.b32.xlu0 %v2913, 16
      %v8118 = vpop.permute.xlu0 %8117
      %8119 = vrot.lane.b32.xlu0 %v2916, 16
      %v8120 = vpop.permute.xlu0 %8119
      %8121 = vrot.lane.b32.xlu0 %v2921, 16
      %v8122 = vpop.permute.xlu0 %8121
      %8123 = vrot.lane.b32.xlu0 %v2924, 16
      %v8124 = vpop.permute.xlu0 %8123
      %8125 = vrot.lane.b32.xlu0 %v2929, 16
      %v8126 = vpop.permute.xlu0 %8125
      %8127 = vrot.lane.b32.xlu0 %v2932, 16
      %v8128 = vpop.permute.xlu0 %8127
      %8129 = vrot.lane.b32.xlu0 %v2937, 16
      %v8130 = vpop.permute.xlu0 %8129
      %8131 = vrot.lane.b32.xlu0 %v2940, 16
      %v8132 = vpop.permute.xlu0 %8131
      %8165 = vrot.lane.b32.xlu0 %v3331, 20
      %v8166 = vpop.permute.xlu0 %8165
      %8167 = vrot.lane.b32.xlu0 %v3334, 20
      %v8168 = vpop.permute.xlu0 %8167
      %8169 = vrot.lane.b32.xlu0 %v3339, 20
      %v8170 = vpop.permute.xlu0 %8169
      %8171 = vrot.lane.b32.xlu0 %v3342, 20
      %v8172 = vpop.permute.xlu0 %8171
      %8173 = vrot.lane.b32.xlu0 %v3347, 20
      %v8174 = vpop.permute.xlu0 %8173
      %8175 = vrot.lane.b32.xlu0 %v3350, 20
      %v8176 = vpop.permute.xlu0 %8175
      %8177 = vrot.lane.b32.xlu0 %v3355, 20
      %v8178 = vpop.permute.xlu0 %8177
      %8179 = vrot.lane.b32.xlu0 %v3358, 20
      %v8180 = vpop.permute.xlu0 %8179
      %8181 = vrot.lane.b32.xlu0 %v3363, 20
      %v8182 = vpop.permute.xlu0 %8181
      %8183 = vrot.lane.b32.xlu0 %v3366, 20
      %v8184 = vpop.permute.xlu0 %8183
      %8185 = vrot.lane.b32.xlu0 %v3371, 20
      %v8186 = vpop.permute.xlu0 %8185
      %8187 = vrot.lane.b32.xlu0 %v3374, 20
      %v8188 = vpop.permute.xlu0 %8187
      %8189 = vrot.lane.b32.xlu0 %v3379, 20
      %v8190 = vpop.permute.xlu0 %8189
      %8191 = vrot.lane.b32.xlu0 %v3382, 20
      %v8192 = vpop.permute.xlu0 %8191
      %8193 = vrot.lane.b32.xlu0 %v3387, 20
      %v8194 = vpop.permute.xlu0 %8193
      %8195 = vrot.lane.b32.xlu0 %v3390, 20
      %v8196 = vpop.permute.xlu0 %8195
      %8229 = vrot.lane.b32.xlu0 %v3781, 24
      %v8230 = vpop.permute.xlu0 %8229
      %8231 = vrot.lane.b32.xlu0 %v3784, 24
      %v8232 = vpop.permute.xlu0 %8231
      %8233 = vrot.lane.b32.xlu0 %v3789, 24
      %v8234 = vpop.permute.xlu0 %8233
      %8235 = vrot.lane.b32.xlu0 %v3792, 24
      %v8236 = vpop.permute.xlu0 %8235
      %8237 = vrot.lane.b32.xlu0 %v3797, 24
      %v8238 = vpop.permute.xlu0 %8237
      %8239 = vrot.lane.b32.xlu0 %v3800, 24
      %v8240 = vpop.permute.xlu0 %8239
      %8241 = vrot.lane.b32.xlu0 %v3805, 24
      %v8242 = vpop.permute.xlu0 %8241
      %8243 = vrot.lane.b32.xlu0 %v3808, 24
      %v8244 = vpop.permute.xlu0 %8243
      %8245 = vrot.lane.b32.xlu0 %v3813, 24
      %v8246 = vpop.permute.xlu0 %8245
      %8247 = vrot.lane.b32.xlu0 %v3816, 24
      %v8248 = vpop.permute.xlu0 %8247
      %8249 = vrot.lane.b32.xlu0 %v3821, 24
      %v8250 = vpop.permute.xlu0 %8249
      %8251 = vrot.lane.b32.xlu0 %v3824, 24
      %v8252 = vpop.permute.xlu0 %8251
      %8253 = vrot.lane.b32.xlu0 %v3829, 24
      %v8254 = vpop.permute.xlu0 %8253
      %8255 = vrot.lane.b32.xlu0 %v3832, 24
      %v8256 = vpop.permute.xlu0 %8255
      %8257 = vrot.lane.b32.xlu0 %v3837, 24
      %v8258 = vpop.permute.xlu0 %8257
      %8259 = vrot.lane.b32.xlu0 %v3840, 24
      %v8260 = vpop.permute.xlu0 %8259
      %8293 = vrot.lane.b32.xlu0 %v4231, 28
      %v8294 = vpop.permute.xlu0 %8293
      %8295 = vrot.lane.b32.xlu0 %v4234, 28
      %v8296 = vpop.permute.xlu0 %8295
      %8297 = vrot.lane.b32.xlu0 %v4239, 28
      %v8298 = vpop.permute.xlu0 %8297
      %8299 = vrot.lane.b32.xlu0 %v4242, 28
      %v8300 = vpop.permute.xlu0 %8299
      %8301 = vrot.lane.b32.xlu0 %v4247, 28
      %v8302 = vpop.permute.xlu0 %8301
      %8303 = vrot.lane.b32.xlu0 %v4250, 28
      %v8304 = vpop.permute.xlu0 %8303
      %8305 = vrot.lane.b32.xlu0 %v4255, 28
      %v8306 = vpop.permute.xlu0 %8305
      %8307 = vrot.lane.b32.xlu0 %v4258, 28
      %v8308 = vpop.permute.xlu0 %8307
      %8309 = vrot.lane.b32.xlu0 %v4263, 28
      %v8310 = vpop.permute.xlu0 %8309
      %8311 = vrot.lane.b32.xlu0 %v4266, 28
      %v8312 = vpop.permute.xlu0 %8311
      %8313 = vrot.lane.b32.xlu0 %v4271, 28
      %v8314 = vpop.permute.xlu0 %8313
      %8315 = vrot.lane.b32.xlu0 %v4274, 28
      %v8316 = vpop.permute.xlu0 %8315
      %8317 = vrot.lane.b32.xlu0 %v4279, 28
      %v8318 = vpop.permute.xlu0 %8317
      %8319 = vrot.lane.b32.xlu0 %v4282, 28
      %v8320 = vpop.permute.xlu0 %8319
      %8321 = vrot.lane.b32.xlu0 %v4287, 28
      %v8322 = vpop.permute.xlu0 %8321
      %8323 = vrot.lane.b32.xlu0 %v4290, 28
      %v8324 = vpop.permute.xlu0 %8323
      %8357 = vrot.lane.b32.xlu0 %v4681, 32
      %v8358 = vpop.permute.xlu0 %8357
      %8359 = vrot.lane.b32.xlu0 %v4684, 32
      %v8360 = vpop.permute.xlu0 %8359
      %8361 = vrot.lane.b32.xlu0 %v4689, 32
      %v8362 = vpop.permute.xlu0 %8361
      %8363 = vrot.lane.b32.xlu0 %v4692, 32
      %v8364 = vpop.permute.xlu0 %8363
      %8365 = vrot.lane.b32.xlu0 %v4697, 32
      %v8366 = vpop.permute.xlu0 %8365
      %8367 = vrot.lane.b32.xlu0 %v4700, 32
      %v8368 = vpop.permute.xlu0 %8367
      %8369 = vrot.lane.b32.xlu0 %v4705, 32
      %v8370 = vpop.permute.xlu0 %8369
      %8371 = vrot.lane.b32.xlu0 %v4708, 32
      %v8372 = vpop.permute.xlu0 %8371
      %8373 = vrot.lane.b32.xlu0 %v4713, 32
      %v8374 = vpop.permute.xlu0 %8373
      %8375 = vrot.lane.b32.xlu0 %v4716, 32
      %v8376 = vpop.permute.xlu0 %8375
      %8377 = vrot.lane.b32.xlu0 %v4721, 32
      %v8378 = vpop.permute.xlu0 %8377
      %8379 = vrot.lane.b32.xlu0 %v4724, 32
      %v8380 = vpop.permute.xlu0 %8379
      %8381 = vrot.lane.b32.xlu0 %v4729, 32
      %v8382 = vpop.permute.xlu0 %8381
      %8383 = vrot.lane.b32.xlu0 %v4732, 32
      %v8384 = vpop.permute.xlu0 %8383
      %8385 = vrot.lane.b32.xlu0 %v4737, 32
      %v8386 = vpop.permute.xlu0 %8385
      %8387 = vrot.lane.b32.xlu0 %v4740, 32
      %v8388 = vpop.permute.xlu0 %8387
      %8421 = vrot.lane.b32.xlu0 %v5131, 36
      %v8422 = vpop.permute.xlu0 %8421
      %8423 = vrot.lane.b32.xlu0 %v5134, 36
      %v8424 = vpop.permute.xlu0 %8423
      %8425 = vrot.lane.b32.xlu0 %v5139, 36
      %v8426 = vpop.permute.xlu0 %8425
      %8427 = vrot.lane.b32.xlu0 %v5142, 36
      %v8428 = vpop.permute.xlu0 %8427
      %8429 = vrot.lane.b32.xlu0 %v5147, 36
      %v8430 = vpop.permute.xlu0 %8429
      %8431 = vrot.lane.b32.xlu0 %v5150, 36
      %v8432 = vpop.permute.xlu0 %8431
      %8433 = vrot.lane.b32.xlu0 %v5155, 36
      %v8434 = vpop.permute.xlu0 %8433
      %8435 = vrot.lane.b32.xlu0 %v5158, 36
      %v8436 = vpop.permute.xlu0 %8435
      %8437 = vrot.lane.b32.xlu0 %v5163, 36
      %v8438 = vpop.permute.xlu0 %8437
      %8439 = vrot.lane.b32.xlu0 %v5166, 36
      %v8440 = vpop.permute.xlu0 %8439
      %8441 = vrot.lane.b32.xlu0 %v5171, 36
      %v8442 = vpop.permute.xlu0 %8441
      %8443 = vrot.lane.b32.xlu0 %v5174, 36
      %v8444 = vpop.permute.xlu0 %8443
      %8445 = vrot.lane.b32.xlu0 %v5179, 36
      %v8446 = vpop.permute.xlu0 %8445
      %8447 = vrot.lane.b32.xlu0 %v5182, 36
      %v8448 = vpop.permute.xlu0 %8447
      %8449 = vrot.lane.b32.xlu0 %v5187, 36
      %v8450 = vpop.permute.xlu0 %8449
      %8451 = vrot.lane.b32.xlu0 %v5190, 36
      %v8452 = vpop.permute.xlu0 %8451
      %8485 = vrot.lane.b32.xlu0 %v5581, 40
      %v8486 = vpop.permute.xlu0 %8485
      %8487 = vrot.lane.b32.xlu0 %v5584, 40
      %v8488 = vpop.permute.xlu0 %8487
      %8489 = vrot.lane.b32.xlu0 %v5589, 40
      %v8490 = vpop.permute.xlu0 %8489
      %8491 = vrot.lane.b32.xlu0 %v5592, 40
      %v8492 = vpop.permute.xlu0 %8491
      %8493 = vrot.lane.b32.xlu0 %v5597, 40
      %v8494 = vpop.permute.xlu0 %8493
      %8495 = vrot.lane.b32.xlu0 %v5600, 40
      %v8496 = vpop.permute.xlu0 %8495
      %8497 = vrot.lane.b32.xlu0 %v5605, 40
      %v8498 = vpop.permute.xlu0 %8497
      %8499 = vrot.lane.b32.xlu0 %v5608, 40
      %v8500 = vpop.permute.xlu0 %8499
      %8501 = vrot.lane.b32.xlu0 %v5613, 40
      %v8502 = vpop.permute.xlu0 %8501
      %8503 = vrot.lane.b32.xlu0 %v5616, 40
      %v8504 = vpop.permute.xlu0 %8503
      %8505 = vrot.lane.b32.xlu0 %v5621, 40
      %v8506 = vpop.permute.xlu0 %8505
      %8507 = vrot.lane.b32.xlu0 %v5624, 40
      %v8508 = vpop.permute.xlu0 %8507
      %8509 = vrot.lane.b32.xlu0 %v5629, 40
      %v8510 = vpop.permute.xlu0 %8509
      %8511 = vrot.lane.b32.xlu0 %v5632, 40
      %v8512 = vpop.permute.xlu0 %8511
      %8513 = vrot.lane.b32.xlu0 %v5637, 40
      %v8514 = vpop.permute.xlu0 %8513
      %8515 = vrot.lane.b32.xlu0 %v5640, 40
      %v8516 = vpop.permute.xlu0 %8515
      %8549 = vrot.lane.b32.xlu0 %v6031, 44
      %v8550 = vpop.permute.xlu0 %8549
      %8551 = vrot.lane.b32.xlu0 %v6034, 44
      %v8552 = vpop.permute.xlu0 %8551
      %8553 = vrot.lane.b32.xlu0 %v6039, 44
      %v8554 = vpop.permute.xlu0 %8553
      %8555 = vrot.lane.b32.xlu0 %v6042, 44
      %v8556 = vpop.permute.xlu0 %8555
      %8557 = vrot.lane.b32.xlu0 %v6047, 44
      %v8558 = vpop.permute.xlu0 %8557
      %8559 = vrot.lane.b32.xlu0 %v6050, 44
      %v8560 = vpop.permute.xlu0 %8559
      %8561 = vrot.lane.b32.xlu0 %v6055, 44
      %v8562 = vpop.permute.xlu0 %8561
      %8563 = vrot.lane.b32.xlu0 %v6058, 44
      %v8564 = vpop.permute.xlu0 %8563
      %8565 = vrot.lane.b32.xlu0 %v6063, 44
      %v8566 = vpop.permute.xlu0 %8565
      %8567 = vrot.lane.b32.xlu0 %v6066, 44
      %v8568 = vpop.permute.xlu0 %8567
      %8569 = vrot.lane.b32.xlu0 %v6071, 44
      %v8570 = vpop.permute.xlu0 %8569
      %8571 = vrot.lane.b32.xlu0 %v6074, 44
      %v8572 = vpop.permute.xlu0 %8571
      %8573 = vrot.lane.b32.xlu0 %v6079, 44
      %v8574 = vpop.permute.xlu0 %8573
      %8575 = vrot.lane.b32.xlu0 %v6082, 44
      %v8576 = vpop.permute.xlu0 %8575
      %8577 = vrot.lane.b32.xlu0 %v6087, 44
      %v8578 = vpop.permute.xlu0 %8577
      %8579 = vrot.lane.b32.xlu0 %v6090, 44
      %v8580 = vpop.permute.xlu0 %8579
      %8613 = vrot.lane.b32.xlu0 %v6481, 48
      %v8614 = vpop.permute.xlu0 %8613
      %8615 = vrot.lane.b32.xlu0 %v6484, 48
      %v8616 = vpop.permute.xlu0 %8615
      %8617 = vrot.lane.b32.xlu0 %v6489, 48
      %v8618 = vpop.permute.xlu0 %8617
      %8619 = vrot.lane.b32.xlu0 %v6492, 48
      %v8620 = vpop.permute.xlu0 %8619
      %8621 = vrot.lane.b32.xlu0 %v6497, 48
      %v8622 = vpop.permute.xlu0 %8621
      %8623 = vrot.lane.b32.xlu0 %v6500, 48
      %v8624 = vpop.permute.xlu0 %8623
      %8625 = vrot.lane.b32.xlu0 %v6505, 48
      %v8626 = vpop.permute.xlu0 %8625
      %8627 = vrot.lane.b32.xlu0 %v6508, 48
      %v8628 = vpop.permute.xlu0 %8627
      %8629 = vrot.lane.b32.xlu0 %v6513, 48
      %v8630 = vpop.permute.xlu0 %8629
      %8631 = vrot.lane.b32.xlu0 %v6516, 48
      %v8632 = vpop.permute.xlu0 %8631
      %8633 = vrot.lane.b32.xlu0 %v6521, 48
      %v8634 = vpop.permute.xlu0 %8633
      %8635 = vrot.lane.b32.xlu0 %v6524, 48
      %v8636 = vpop.permute.xlu0 %8635
      %8637 = vrot.lane.b32.xlu0 %v6529, 48
      %v8638 = vpop.permute.xlu0 %8637
      %8639 = vrot.lane.b32.xlu0 %v6532, 48
      %v8640 = vpop.permute.xlu0 %8639
      %8641 = vrot.lane.b32.xlu0 %v6537, 48
      %v8642 = vpop.permute.xlu0 %8641
      %8643 = vrot.lane.b32.xlu0 %v6540, 48
      %v8644 = vpop.permute.xlu0 %8643
      %8677 = vrot.lane.b32.xlu0 %v6931, 52
      %v8678 = vpop.permute.xlu0 %8677
      %8679 = vrot.lane.b32.xlu0 %v6934, 52
      %v8680 = vpop.permute.xlu0 %8679
      %8681 = vrot.lane.b32.xlu0 %v6939, 52
      %v8682 = vpop.permute.xlu0 %8681
      %8683 = vrot.lane.b32.xlu0 %v6942, 52
      %v8684 = vpop.permute.xlu0 %8683
      %8685 = vrot.lane.b32.xlu0 %v6947, 52
      %v8686 = vpop.permute.xlu0 %8685
      %8687 = vrot.lane.b32.xlu0 %v6950, 52
      %v8688 = vpop.permute.xlu0 %8687
      %8689 = vrot.lane.b32.xlu0 %v6955, 52
      %v8690 = vpop.permute.xlu0 %8689
      %8691 = vrot.lane.b32.xlu0 %v6958, 52
      %v8692 = vpop.permute.xlu0 %8691
      %8693 = vrot.lane.b32.xlu0 %v6963, 52
      %v8694 = vpop.permute.xlu0 %8693
      %8695 = vrot.lane.b32.xlu0 %v6966, 52
      %v8696 = vpop.permute.xlu0 %8695
      %8697 = vrot.lane.b32.xlu0 %v6971, 52
      %v8698 = vpop.permute.xlu0 %8697
      %8699 = vrot.lane.b32.xlu0 %v6974, 52
      %v8700 = vpop.permute.xlu0 %8699
      %8701 = vrot.lane.b32.xlu0 %v6979, 52
      %v8702 = vpop.permute.xlu0 %8701
      %8703 = vrot.lane.b32.xlu0 %v6982, 52
      %v8704 = vpop.permute.xlu0 %8703
      %8705 = vrot.lane.b32.xlu0 %v6987, 52
      %v8706 = vpop.permute.xlu0 %8705
      %8707 = vrot.lane.b32.xlu0 %v6990, 52
      %v8708 = vpop.permute.xlu0 %8707
      %8741 = vrot.lane.b32.xlu0 %v7381, 56
      %v8742 = vpop.permute.xlu0 %8741
      %8743 = vrot.lane.b32.xlu0 %v7384, 56
      %v8744 = vpop.permute.xlu0 %8743
      %8745 = vrot.lane.b32.xlu0 %v7389, 56
      %v8746 = vpop.permute.xlu0 %8745
      %8747 = vrot.lane.b32.xlu0 %v7392, 56
      %v8748 = vpop.permute.xlu0 %8747
      %8749 = vrot.lane.b32.xlu0 %v7397, 56
      %v8750 = vpop.permute.xlu0 %8749
      %8751 = vrot.lane.b32.xlu0 %v7400, 56
      %v8752 = vpop.permute.xlu0 %8751
      %8753 = vrot.lane.b32.xlu0 %v7405, 56
      %v8754 = vpop.permute.xlu0 %8753
      %8755 = vrot.lane.b32.xlu0 %v7408, 56
      %v8756 = vpop.permute.xlu0 %8755
      %8757 = vrot.lane.b32.xlu0 %v7413, 56
      %v8758 = vpop.permute.xlu0 %8757
      %8759 = vrot.lane.b32.xlu0 %v7416, 56
      %v8760 = vpop.permute.xlu0 %8759
      %8761 = vrot.lane.b32.xlu0 %v7421, 56
      %v8762 = vpop.permute.xlu0 %8761
      %8763 = vrot.lane.b32.xlu0 %v7424, 56
      %v8764 = vpop.permute.xlu0 %8763
      %8765 = vrot.lane.b32.xlu0 %v7429, 56
      %v8766 = vpop.permute.xlu0 %8765
      %8767 = vrot.lane.b32.xlu0 %v7432, 56
      %v8768 = vpop.permute.xlu0 %8767
      %8769 = vrot.lane.b32.xlu0 %v7437, 56
      %v8770 = vpop.permute.xlu0 %8769
      %8771 = vrot.lane.b32.xlu0 %v7440, 56
      %v8772 = vpop.permute.xlu0 %8771
      %8805 = vrot.lane.b32.xlu0 %v7831, 60
      %v8806 = vpop.permute.xlu0 %8805
      %8807 = vrot.lane.b32.xlu0 %v7834, 60
      %v8808 = vpop.permute.xlu0 %8807
      %8809 = vrot.lane.b32.xlu0 %v7839, 60
      %v8810 = vpop.permute.xlu0 %8809
      %8811 = vrot.lane.b32.xlu0 %v7842, 60
      %v8812 = vpop.permute.xlu0 %8811
      %8813 = vrot.lane.b32.xlu0 %v7847, 60
      %v8814 = vpop.permute.xlu0 %8813
      %8815 = vrot.lane.b32.xlu0 %v7850, 60
      %v8816 = vpop.permute.xlu0 %8815
      %8817 = vrot.lane.b32.xlu0 %v7855, 60
      %v8818 = vpop.permute.xlu0 %8817
      %8819 = vrot.lane.b32.xlu0 %v7858, 60
      %v8820 = vpop.permute.xlu0 %8819
      %8821 = vrot.lane.b32.xlu0 %v7863, 60
      %v8822 = vpop.permute.xlu0 %8821
      %8823 = vrot.lane.b32.xlu0 %v7866, 60
      %v8824 = vpop.permute.xlu0 %8823
      %8825 = vrot.lane.b32.xlu0 %v7871, 60
      %v8826 = vpop.permute.xlu0 %8825
      %8827 = vrot.lane.b32.xlu0 %v7874, 60
      %v8828 = vpop.permute.xlu0 %8827
      %8829 = vrot.lane.b32.xlu0 %v7879, 60
      %v8830 = vpop.permute.xlu0 %8829
      %8831 = vrot.lane.b32.xlu0 %v7882, 60
      %v8832 = vpop.permute.xlu0 %8831
      %8833 = vrot.lane.b32.xlu0 %v7887, 60
      %v8834 = vpop.permute.xlu0 %8833
      %8835 = vrot.lane.b32.xlu0 %v7890, 60
      %v8836 = vpop.permute.xlu0 %8835
      %v8853 = vsel %vm732, %v1065, %v7910
      %v8854 = vsel %vm732, %v1068, %v7912
      %v8855 = vsel %vm732, %v1073, %v7914
      %v8856 = vsel %vm732, %v1076, %v7916
      %v8857 = vsel %vm732, %v1081, %v7918
      %v8858 = vsel %vm732, %v1084, %v7920
      %v8859 = vsel %vm732, %v1089, %v7922
      %v8860 = vsel %vm732, %v1092, %v7924
      %v8861 = vsel %vm732, %v1097, %v7926
      %v8862 = vsel %vm732, %v1100, %v7928
      %v8863 = vsel %vm732, %v1105, %v7930
      %v8864 = vsel %vm732, %v1108, %v7932
      %v8865 = vsel %vm732, %v1113, %v7934
      %v8866 = vsel %vm732, %v1116, %v7936
      %v8867 = vsel %vm732, %v1121, %v7938
      %v8868 = vsel %vm732, %v1124, %v7940
      %vm8869 = vcmask 64512
      %v8870 = vsel %vm8869, %v8853, %v7974
      %v8871 = vsel %vm8869, %v8854, %v7976
      %v8872 = vsel %vm8869, %v8855, %v7978
      %v8873 = vsel %vm8869, %v8856, %v7980
      %v8874 = vsel %vm8869, %v8857, %v7982
      %v8875 = vsel %vm8869, %v8858, %v7984
      %v8876 = vsel %vm8869, %v8859, %v7986
      %v8877 = vsel %vm8869, %v8860, %v7988
      %v8878 = vsel %vm8869, %v8861, %v7990
      %v8879 = vsel %vm8869, %v8862, %v7992
      %v8880 = vsel %vm8869, %v8863, %v7994
      %v8881 = vsel %vm8869, %v8864, %v7996
      %v8882 = vsel %vm8869, %v8865, %v7998
      %v8883 = vsel %vm8869, %v8866, %v8000
      %v8884 = vsel %vm8869, %v8867, %v8002
      %v8885 = vsel %vm8869, %v8868, %v8004
      %vm8886 = vcmask 97280
      %v8887 = vsel %vm8886, %v8870, %v8038
      %v8888 = vsel %vm8886, %v8871, %v8040
      %v8889 = vsel %vm8886, %v8872, %v8042
      %v8890 = vsel %vm8886, %v8873, %v8044
      %v8891 = vsel %vm8886, %v8874, %v8046
      %v8892 = vsel %vm8886, %v8875, %v8048
      %v8893 = vsel %vm8886, %v8876, %v8050
      %v8894 = vsel %vm8886, %v8877, %v8052
      %v8895 = vsel %vm8886, %v8878, %v8054
      %v8896 = vsel %vm8886, %v8879, %v8056
      %v8897 = vsel %vm8886, %v8880, %v8058
      %v8898 = vsel %vm8886, %v8881, %v8060
      %v8899 = vsel %vm8886, %v8882, %v8062
      %v8900 = vsel %vm8886, %v8883, %v8064
      %v8901 = vsel %vm8886, %v8884, %v8066
      %v8902 = vsel %vm8886, %v8885, %v8068
      %vm8903 = vcmask 130048
      %v8904 = vsel %vm8903, %v8887, %v8102
      %v8905 = vsel %vm8903, %v8888, %v8104
      %v8906 = vsel %vm8903, %v8889, %v8106
      %v8907 = vsel %vm8903, %v8890, %v8108
      %v8908 = vsel %vm8903, %v8891, %v8110
      %v8909 = vsel %vm8903, %v8892, %v8112
      %v8910 = vsel %vm8903, %v8893, %v8114
      %v8911 = vsel %vm8903, %v8894, %v8116
      %v8912 = vsel %vm8903, %v8895, %v8118
      %v8913 = vsel %vm8903, %v8896, %v8120
      %v8914 = vsel %vm8903, %v8897, %v8122
      %v8915 = vsel %vm8903, %v8898, %v8124
      %v8916 = vsel %vm8903, %v8899, %v8126
      %v8917 = vsel %vm8903, %v8900, %v8128
      %v8918 = vsel %vm8903, %v8901, %v8130
      %v8919 = vsel %vm8903, %v8902, %v8132
      %vm8920 = vcmask 162816
      %v8921 = vsel %vm8920, %v8904, %v8166
      %v8922 = vsel %vm8920, %v8905, %v8168
      %v8923 = vsel %vm8920, %v8906, %v8170
      %v8924 = vsel %vm8920, %v8907, %v8172
      %v8925 = vsel %vm8920, %v8908, %v8174
      %v8926 = vsel %vm8920, %v8909, %v8176
      %v8927 = vsel %vm8920, %v8910, %v8178
      %v8928 = vsel %vm8920, %v8911, %v8180
      %v8929 = vsel %vm8920, %v8912, %v8182
      %v8930 = vsel %vm8920, %v8913, %v8184
      %v8931 = vsel %vm8920, %v8914, %v8186
      %v8932 = vsel %vm8920, %v8915, %v8188
      %v8933 = vsel %vm8920, %v8916, %v8190
      %v8934 = vsel %vm8920, %v8917, %v8192
      %v8935 = vsel %vm8920, %v8918, %v8194
      %v8936 = vsel %vm8920, %v8919, %v8196
      %vm8937 = vcmask 195584
      %v8938 = vsel %vm8937, %v8921, %v8230
      %v8939 = vsel %vm8937, %v8922, %v8232
      %v8940 = vsel %vm8937, %v8923, %v8234
      %v8941 = vsel %vm8937, %v8924, %v8236
      %v8942 = vsel %vm8937, %v8925, %v8238
      %v8943 = vsel %vm8937, %v8926, %v8240
      %v8944 = vsel %vm8937, %v8927, %v8242
      %v8945 = vsel %vm8937, %v8928, %v8244
      %v8946 = vsel %vm8937, %v8929, %v8246
      %v8947 = vsel %vm8937, %v8930, %v8248
      %v8948 = vsel %vm8937, %v8931, %v8250
      %v8949 = vsel %vm8937, %v8932, %v8252
      %v8950 = vsel %vm8937, %v8933, %v8254
      %v8951 = vsel %vm8937, %v8934, %v8256
      %v8952 = vsel %vm8937, %v8935, %v8258
      %v8953 = vsel %vm8937, %v8936, %v8260
      %vm8954 = vcmask 228352
      %v8955 = vsel %vm8954, %v8938, %v8294
      %v8956 = vsel %vm8954, %v8939, %v8296
      %v8957 = vsel %vm8954, %v8940, %v8298
      %v8958 = vsel %vm8954, %v8941, %v8300
      %v8959 = vsel %vm8954, %v8942, %v8302
      %v8960 = vsel %vm8954, %v8943, %v8304
      %v8961 = vsel %vm8954, %v8944, %v8306
      %v8962 = vsel %vm8954, %v8945, %v8308
      %v8963 = vsel %vm8954, %v8946, %v8310
      %v8964 = vsel %vm8954, %v8947, %v8312
      %v8965 = vsel %vm8954, %v8948, %v8314
      %v8966 = vsel %vm8954, %v8949, %v8316
      %v8967 = vsel %vm8954, %v8950, %v8318
      %v8968 = vsel %vm8954, %v8951, %v8320
      %v8969 = vsel %vm8954, %v8952, %v8322
      %v8970 = vsel %vm8954, %v8953, %v8324
      %vm8971 = vcmask 261120
      %v8972 = vsel %vm8971, %v8955, %v8358
      %v8973 = vsel %vm8971, %v8956, %v8360
      %v8974 = vsel %vm8971, %v8957, %v8362
      %v8975 = vsel %vm8971, %v8958, %v8364
      %v8976 = vsel %vm8971, %v8959, %v8366
      %v8977 = vsel %vm8971, %v8960, %v8368
      %v8978 = vsel %vm8971, %v8961, %v8370
      %v8979 = vsel %vm8971, %v8962, %v8372
      %v8980 = vsel %vm8971, %v8963, %v8374
      %v8981 = vsel %vm8971, %v8964, %v8376
      %v8982 = vsel %vm8971, %v8965, %v8378
      %v8983 = vsel %vm8971, %v8966, %v8380
      %v8984 = vsel %vm8971, %v8967, %v8382
      %v8985 = vsel %vm8971, %v8968, %v8384
      %v8986 = vsel %vm8971, %v8969, %v8386
      %v8987 = vsel %vm8971, %v8970, %v8388
      %vm8988 = vcmask 293888
      %v8989 = vsel %vm8988, %v8972, %v8422
      %v8990 = vsel %vm8988, %v8973, %v8424
      %v8991 = vsel %vm8988, %v8974, %v8426
      %v8992 = vsel %vm8988, %v8975, %v8428
      %v8993 = vsel %vm8988, %v8976, %v8430
      %v8994 = vsel %vm8988, %v8977, %v8432
      %v8995 = vsel %vm8988, %v8978, %v8434
      %v8996 = vsel %vm8988, %v8979, %v8436
      %v8997 = vsel %vm8988, %v8980, %v8438
      %v8998 = vsel %vm8988, %v8981, %v8440
      %v8999 = vsel %vm8988, %v8982, %v8442
      %v9000 = vsel %vm8988, %v8983, %v8444
      %v9001 = vsel %vm8988, %v8984, %v8446
      %v9002 = vsel %vm8988, %v8985, %v8448
      %v9003 = vsel %vm8988, %v8986, %v8450
      %v9004 = vsel %vm8988, %v8987, %v8452
      %vm9005 = vcmask 326656
      %v9006 = vsel %vm9005, %v8989, %v8486
      %v9007 = vsel %vm9005, %v8990, %v8488
      %v9008 = vsel %vm9005, %v8991, %v8490
      %v9009 = vsel %vm9005, %v8992, %v8492
      %v9010 = vsel %vm9005, %v8993, %v8494
      %v9011 = vsel %vm9005, %v8994, %v8496
      %v9012 = vsel %vm9005, %v8995, %v8498
      %v9013 = vsel %vm9005, %v8996, %v8500
      %v9014 = vsel %vm9005, %v8997, %v8502
      %v9015 = vsel %vm9005, %v8998, %v8504
      %v9016 = vsel %vm9005, %v8999, %v8506
      %v9017 = vsel %vm9005, %v9000, %v8508
      %v9018 = vsel %vm9005, %v9001, %v8510
      %v9019 = vsel %vm9005, %v9002, %v8512
      %v9020 = vsel %vm9005, %v9003, %v8514
      %v9021 = vsel %vm9005, %v9004, %v8516
      %vm9022 = vcmask 359424
      %v9023 = vsel %vm9022, %v9006, %v8550
      %v9024 = vsel %vm9022, %v9007, %v8552
      %v9025 = vsel %vm9022, %v9008, %v8554
      %v9026 = vsel %vm9022, %v9009, %v8556
      %v9027 = vsel %vm9022, %v9010, %v8558
      %v9028 = vsel %vm9022, %v9011, %v8560
      %v9029 = vsel %vm9022, %v9012, %v8562
      %v9030 = vsel %vm9022, %v9013, %v8564
      %v9031 = vsel %vm9022, %v9014, %v8566
      %v9032 = vsel %vm9022, %v9015, %v8568
      %v9033 = vsel %vm9022, %v9016, %v8570
      %v9034 = vsel %vm9022, %v9017, %v8572
      %v9035 = vsel %vm9022, %v9018, %v8574
      %v9036 = vsel %vm9022, %v9019, %v8576
      %v9037 = vsel %vm9022, %v9020, %v8578
      %v9038 = vsel %vm9022, %v9021, %v8580
      %vm9039 = vcmask 392192
      %v9040 = vsel %vm9039, %v9023, %v8614
      %v9041 = vsel %vm9039, %v9024, %v8616
      %v9042 = vsel %vm9039, %v9025, %v8618
      %v9043 = vsel %vm9039, %v9026, %v8620
      %v9044 = vsel %vm9039, %v9027, %v8622
      %v9045 = vsel %vm9039, %v9028, %v8624
      %v9046 = vsel %vm9039, %v9029, %v8626
      %v9047 = vsel %vm9039, %v9030, %v8628
      %v9048 = vsel %vm9039, %v9031, %v8630
      %v9049 = vsel %vm9039, %v9032, %v8632
      %v9050 = vsel %vm9039, %v9033, %v8634
      %v9051 = vsel %vm9039, %v9034, %v8636
      %v9052 = vsel %vm9039, %v9035, %v8638
      %v9053 = vsel %vm9039, %v9036, %v8640
      %v9054 = vsel %vm9039, %v9037, %v8642
      %v9055 = vsel %vm9039, %v9038, %v8644
      %vm9056 = vcmask 424960
      %v9057 = vsel %vm9056, %v9040, %v8678
      %v9058 = vsel %vm9056, %v9041, %v8680
      %v9059 = vsel %vm9056, %v9042, %v8682
      %v9060 = vsel %vm9056, %v9043, %v8684
      %v9061 = vsel %vm9056, %v9044, %v8686
      %v9062 = vsel %vm9056, %v9045, %v8688
      %v9063 = vsel %vm9056, %v9046, %v8690
      %v9064 = vsel %vm9056, %v9047, %v8692
      %v9065 = vsel %vm9056, %v9048, %v8694
      %v9066 = vsel %vm9056, %v9049, %v8696
      %v9067 = vsel %vm9056, %v9050, %v8698
      %v9068 = vsel %vm9056, %v9051, %v8700
      %v9069 = vsel %vm9056, %v9052, %v8702
      %v9070 = vsel %vm9056, %v9053, %v8704
      %v9071 = vsel %vm9056, %v9054, %v8706
      %v9072 = vsel %vm9056, %v9055, %v8708
      %vm9073 = vcmask 457728
      %v9074 = vsel %vm9073, %v9057, %v8742
      %v9075 = vsel %vm9073, %v9058, %v8744
      %v9076 = vsel %vm9073, %v9059, %v8746
      %v9077 = vsel %vm9073, %v9060, %v8748
      %v9078 = vsel %vm9073, %v9061, %v8750
      %v9079 = vsel %vm9073, %v9062, %v8752
      %v9080 = vsel %vm9073, %v9063, %v8754
      %v9081 = vsel %vm9073, %v9064, %v8756
      %v9082 = vsel %vm9073, %v9065, %v8758
      %v9083 = vsel %vm9073, %v9066, %v8760
      %v9084 = vsel %vm9073, %v9067, %v8762
      %v9085 = vsel %vm9073, %v9068, %v8764
      %v9086 = vsel %vm9073, %v9069, %v8766
      %v9087 = vsel %vm9073, %v9070, %v8768
      %v9088 = vsel %vm9073, %v9071, %v8770
      %v9089 = vsel %vm9073, %v9072, %v8772
      %vm9090 = vcmask 490496
      %v9091 = vsel %vm9090, %v9074, %v8806
      %v9092 = vsel %vm9090, %v9075, %v8808
      %v9093 = vsel %vm9090, %v9076, %v8810
      %v9094 = vsel %vm9090, %v9077, %v8812
      %v9095 = vsel %vm9090, %v9078, %v8814
      %v9096 = vsel %vm9090, %v9079, %v8816
      %v9097 = vsel %vm9090, %v9080, %v8818
      %v9098 = vsel %vm9090, %v9081, %v8820
      %v9099 = vsel %vm9090, %v9082, %v8822
      %v9100 = vsel %vm9090, %v9083, %v8824
      %v9101 = vsel %vm9090, %v9084, %v8826
      %v9102 = vsel %vm9090, %v9085, %v8828
      %v9103 = vsel %vm9090, %v9086, %v8830
      %v9104 = vsel %vm9090, %v9087, %v8832
      %v9105 = vsel %vm9090, %v9088, %v8834
      %v9106 = vsel %vm9090, %v9089, %v8836
      %v9107 = vpack.c.bf16 %v9092, %v9091
      %v9108 = vpack.c.bf16 %v9094, %v9093
      %v9109 = vpack.c.bf16 %v9096, %v9095
      %v9110 = vpack.c.bf16 %v9098, %v9097
      %v9111 = vpack.c.bf16 %v9100, %v9099
      %v9112 = vpack.c.bf16 %v9102, %v9101
      %v9113 = vpack.c.bf16 %v9104, %v9103
      %v9114 = vpack.c.bf16 %v9106, %v9105
      %v9115 = vld [vmem:[%s2] sm:$0xf]
      %v9116 = vld [vmem:[%s2 + $0x4] sm:$0xf]
      %v9117 = vld [vmem:[%s2 + $0x8] sm:$0xf]
      %v9118 = vld [vmem:[%s2 + $0xc] sm:$0xf]
      %v9119 = vld [vmem:[%s2 + $0x10] sm:$0xf]
      %v9120 = vld [vmem:[%s2 + $0x14] sm:$0xf]
      %v9121 = vld [vmem:[%s2 + $0x18] sm:$0xf]
      %v9122 = vld [vmem:[%s2 + $0x1c] sm:$0xf]
      %v9123 = vld [vmem:[%s3] sm:$0x1]
      %v9125 = vlaneseq
      %v9126 = vshrl.u32 %v9125, 7
      %v9127 = vsub.s32 0, %v9126
      %v9128 = vrot.slane %v9123, %v9127
      %v9138 = vunpack.c.l.b16 %v9115
      %v9139 = vunpack.c.l.b16 %v9116
      %v9140 = vunpack.c.l.b16 %v9117
      %v9141 = vunpack.c.l.b16 %v9118
      %v9142 = vunpack.c.l.b16 %v9119
      %v9143 = vunpack.c.l.b16 %v9120
      %v9144 = vunpack.c.l.b16 %v9121
      %v9145 = vunpack.c.l.b16 %v9122
      %v9146 = vpack.c.b16 %v9139, %v9138
      %v9147 = vpack.c.b16 %v9141, %v9140
      %v9148 = vpack.c.b16 %v9143, %v9142
      %v9149 = vpack.c.b16 %v9145, %v9144
      %v9155 = vsel %vm514, %v9107, 0
      %v9158 = vsel %vm514, %v9108, 0
      %v9161 = vsel %vm514, %v9109, 0
      %v9164 = vsel %vm514, %v9110, 0
      %v9167 = vsel %vm514, %v9111, 0
      %v9170 = vsel %vm514, %v9112, 0
      %v9173 = vsel %vm514, %v9113, 0
      %v9176 = vsel %vm514, %v9114, 0
      %9178 = vmatprep.subr.bf16.mxu0 0
      %9179 = vmatpush1.bf16.msra.mxu0 %v9146
      %9180 = vmatprep.subr.bf16.mxu0 0
      %9181 = vmatpush1.bf16.msra.mxu0 %v9147
      %9182 = vmatprep.subr.bf16.mxu0 0
      %9183 = vmatpush1.bf16.msra.mxu0 %v9148
      %9184 = vmatprep.subr.bf16.mxu0 0
      %9185 = vmatpush1.bf16.msra.mxu0 %v9149
      %9186 = vmatprep.subr.bf16.mxu0 0
      %9187 = vmatpush1.bf16.msra.mxu0 0
      %9188 = vmatprep.subr.bf16.mxu0 0
      %9189 = vmatpush1.bf16.msra.mxu0 0
      %9190 = vmatprep.subr.bf16.mxu0 0
      %9191 = vmatpush1.bf16.msra.mxu0 0
      %9192 = vmatprep.subr.bf16.mxu0 0
      %9193 = vmatpush1.bf16.msra.mxu0 0
      %9194 = vmatprep.subr.bf16.mxu0 0
      %9195 = vmatpush1.bf16.msra.mxu0 0
      %9196 = vmatprep.subr.bf16.mxu0 0
      %9197 = vmatpush1.bf16.msra.mxu0 0
      %9198 = vmatprep.subr.bf16.mxu0 0
      %9199 = vmatpush1.bf16.msra.mxu0 0
      %9200 = vmatprep.subr.bf16.mxu0 0
      %9201 = vmatpush1.bf16.msra.mxu0 0
      %9202 = vmatprep.subr.bf16.mxu0 0
      %9203 = vmatpush1.bf16.msra.mxu0 0
      %9204 = vmatprep.subr.bf16.mxu0 0
      %9205 = vmatpush1.bf16.msra.mxu0 0
      %9206 = vmatprep.subr.bf16.mxu0 0
      %9207 = vmatpush1.bf16.msra.mxu0 0
      %9208 = vmatprep.subr.bf16.mxu0 0
      %9209 = vmatpush1.bf16.msra.mxu0 0
      %9210 = vmatprep.mubr.bf16.mxu0 0
      %9211 = vmatmul.mubr.bf16.gmra.mrb[0].mxu0 %v9155
      %v9212 = vpop.f32.mrb[0].mxu0
      %v9213 = vadd.f32 %v9128, %v9212
      %v9214 = vpop.f32.mrb[0].mxu0
      %v9215 = vpop.f32.mrb[0].mxu0
      %v9216 = vadd.f32 %v9128, %v9215
      %v9217 = vpop.f32.mrb[0].mxu0
      %9218 = vmatprep.mubr.bf16.mxu0 0
      %9219 = vmatmul.mubr.bf16.gmra.mrb[0].mxu0 %v9158
      %v9220 = vpop.f32.mrb[0].mxu0
      %v9221 = vadd.f32 %v9128, %v9220
      %v9222 = vpop.f32.mrb[0].mxu0
      %v9223 = vpop.f32.mrb[0].mxu0
      %v9224 = vadd.f32 %v9128, %v9223
      %v9225 = vpop.f32.mrb[0].mxu0
      %9226 = vmatprep.mubr.bf16.mxu0 0
      %9227 = vmatmul.mubr.bf16.gmra.mrb[0].mxu0 %v9161
      %v9228 = vpop.f32.mrb[0].mxu0
      %v9229 = vadd.f32 %v9128, %v9228
      %v9230 = vpop.f32.mrb[0].mxu0
      %v9231 = vpop.f32.mrb[0].mxu0
      %v9232 = vadd.f32 %v9128, %v9231
      %v9233 = vpop.f32.mrb[0].mxu0
      %9234 = vmatprep.mubr.bf16.mxu0 0
      %9235 = vmatmul.mubr.bf16.gmra.mrb[0].mxu0 %v9164
      %v9236 = vpop.f32.mrb[0].mxu0
      %v9237 = vadd.f32 %v9128, %v9236
      %v9238 = vpop.f32.mrb[0].mxu0
      %v9239 = vpop.f32.mrb[0].mxu0
      %v9240 = vadd.f32 %v9128, %v9239
      %v9241 = vpop.f32.mrb[0].mxu0
      %9242 = vmatprep.mubr.bf16.mxu0 0
      %9243 = vmatmul.mubr.bf16.gmra.mrb[0].mxu0 %v9167
      %v9244 = vpop.f32.mrb[0].mxu0
      %v9245 = vadd.f32 %v9128, %v9244
      %v9246 = vpop.f32.mrb[0].mxu0
      %v9247 = vpop.f32.mrb[0].mxu0
      %v9248 = vadd.f32 %v9128, %v9247
      %v9249 = vpop.f32.mrb[0].mxu0
      %9250 = vmatprep.mubr.bf16.mxu0 0
      %9251 = vmatmul.mubr.bf16.gmra.mrb[0].mxu0 %v9170
      %v9252 = vpop.f32.mrb[0].mxu0
      %v9253 = vadd.f32 %v9128, %v9252
      %v9254 = vpop.f32.mrb[0].mxu0
      %v9255 = vpop.f32.mrb[0].mxu0
      %v9256 = vadd.f32 %v9128, %v9255
      %v9257 = vpop.f32.mrb[0].mxu0
      %9258 = vmatprep.mubr.bf16.mxu0 0
      %9259 = vmatmul.mubr.bf16.gmra.mrb[0].mxu0 %v9173
      %v9260 = vpop.f32.mrb[0].mxu0
      %v9261 = vadd.f32 %v9128, %v9260
      %v9262 = vpop.f32.mrb[0].mxu0
      %v9263 = vpop.f32.mrb[0].mxu0
      %v9264 = vadd.f32 %v9128, %v9263
      %v9265 = vpop.f32.mrb[0].mxu0
      %9266 = vmatprep.mubr.bf16.mxu0 0
      %9267 = vmatmul.mubr.bf16.gmra.mrb[0].mxu0 %v9176
      %v9268 = vpop.f32.mrb[0].mxu0
      %v9269 = vadd.f32 %v9128, %v9268
      %v9270 = vpop.f32.mrb[0].mxu0
      %v9271 = vpop.f32.mrb[0].mxu0
      %v9272 = vadd.f32 %v9128, %v9271
      %v9273 = vpop.f32.mrb[0].mxu0
      %9274 = vdwg.mxu0
      %v9275 = vadd.f32 %v442, %v9213
      %v9276 = vadd.f32 %v443, %v9216
      %v9277 = vadd.f32 %v444, %v9221
      %v9278 = vadd.f32 %v445, %v9224
      %v9279 = vadd.f32 %v446, %v9229
      %v9280 = vadd.f32 %v447, %v9232
      %v9281 = vadd.f32 %v448, %v9237
      %v9282 = vadd.f32 %v449, %v9240
      %v9283 = vadd.f32 %v450, %v9245
      %v9284 = vadd.f32 %v451, %v9248
      %v9285 = vadd.f32 %v452, %v9253
      %v9286 = vadd.f32 %v453, %v9256
      %v9287 = vadd.f32 %v454, %v9261
      %v9288 = vadd.f32 %v455, %v9264
      %v9289 = vadd.f32 %v456, %v9269
      %v9290 = vadd.f32 %v457, %v9272
      %v9291 = vld [vmem:[%s5] sm:$0x1]
      %v9292 = vld [vmem:[%s6] sm:$0x1]
      %v9293 = vsel %vm514, %v9275, 0.0
      %9294 = vadd.xlane.f32.xlu0 %v9293
      %v9295 = vpop.xlane.xlu0 %9294
      %v9296 = vsel %vm514, %v9276, 0.0
      %9297 = vadd.xlane.f32.xlu0 %v9296
      %v9298 = vpop.xlane.xlu0 %9297
      %v9299 = vsel %vm514, %v9277, 0.0
      %9300 = vadd.xlane.f32.xlu0 %v9299
      %v9301 = vpop.xlane.xlu0 %9300
      %v9302 = vsel %vm514, %v9278, 0.0
      %9303 = vadd.xlane.f32.xlu0 %v9302
      %v9304 = vpop.xlane.xlu0 %9303
      %v9305 = vsel %vm514, %v9279, 0.0
      %9306 = vadd.xlane.f32.xlu0 %v9305
      %v9307 = vpop.xlane.xlu0 %9306
      %v9308 = vsel %vm514, %v9280, 0.0
      %9309 = vadd.xlane.f32.xlu0 %v9308
      %v9310 = vpop.xlane.xlu0 %9309
      %v9311 = vsel %vm514, %v9281, 0.0
      %9312 = vadd.xlane.f32.xlu0 %v9311
      %v9313 = vpop.xlane.xlu0 %9312
      %v9314 = vsel %vm514, %v9282, 0.0
      %9315 = vadd.xlane.f32.xlu0 %v9314
      %v9316 = vpop.xlane.xlu0 %9315
      %v9317 = vsel %vm514, %v9283, 0.0
      %9318 = vadd.xlane.f32.xlu0 %v9317
      %v9319 = vpop.xlane.xlu0 %9318
      %v9320 = vsel %vm514, %v9284, 0.0
      %9321 = vadd.xlane.f32.xlu0 %v9320
      %v9322 = vpop.xlane.xlu0 %9321
      %v9323 = vsel %vm514, %v9285, 0.0
      %9324 = vadd.xlane.f32.xlu0 %v9323
      %v9325 = vpop.xlane.xlu0 %9324
      %v9326 = vsel %vm514, %v9286, 0.0
      %9327 = vadd.xlane.f32.xlu0 %v9326
      %v9328 = vpop.xlane.xlu0 %9327
      %v9329 = vsel %vm514, %v9287, 0.0
      %9330 = vadd.xlane.f32.xlu0 %v9329
      %v9331 = vpop.xlane.xlu0 %9330
      %v9332 = vsel %vm514, %v9288, 0.0
      %9333 = vadd.xlane.f32.xlu0 %v9332
      %v9334 = vpop.xlane.xlu0 %9333
      %v9335 = vsel %vm514, %v9289, 0.0
      %9336 = vadd.xlane.f32.xlu0 %v9335
      %v9337 = vpop.xlane.xlu0 %9336
      %v9338 = vsel %vm514, %v9290, 0.0
      %9339 = vadd.xlane.f32.xlu0 %v9338
      %v9340 = vpop.xlane.xlu0 %9339
      %v9341 = vrcp.pop 64.0
      %v9342 = vmul.f32 %v9295, %v9341
      %v9343 = vmul.f32 %v9298, %v9341
      %v9344 = vmul.f32 %v9301, %v9341
      %v9345 = vmul.f32 %v9304, %v9341
      %v9346 = vmul.f32 %v9307, %v9341
      %v9347 = vmul.f32 %v9310, %v9341
      %v9348 = vmul.f32 %v9313, %v9341
      %v9349 = vmul.f32 %v9316, %v9341
      %v9350 = vmul.f32 %v9319, %v9341
      %v9351 = vmul.f32 %v9322, %v9341
      %v9352 = vmul.f32 %v9325, %v9341
      %v9353 = vmul.f32 %v9328, %v9341
      %v9354 = vmul.f32 %v9331, %v9341
      %v9355 = vmul.f32 %v9334, %v9341
      %v9356 = vmul.f32 %v9337, %v9341
      %v9357 = vmul.f32 %v9340, %v9341
      %v9358 = vsub.f32 %v9275, %v9342
      %v9359 = vsub.f32 %v9276, %v9343
      %v9360 = vsub.f32 %v9277, %v9344
      %v9361 = vsub.f32 %v9278, %v9345
      %v9362 = vsub.f32 %v9279, %v9346
      %v9363 = vsub.f32 %v9280, %v9347
      %v9364 = vsub.f32 %v9281, %v9348
      %v9365 = vsub.f32 %v9282, %v9349
      %v9366 = vsub.f32 %v9283, %v9350
      %v9367 = vsub.f32 %v9284, %v9351
      %v9368 = vsub.f32 %v9285, %v9352
      %v9369 = vsub.f32 %v9286, %v9353
      %v9370 = vsub.f32 %v9287, %v9354
      %v9371 = vsub.f32 %v9288, %v9355
      %v9372 = vsub.f32 %v9289, %v9356
      %v9373 = vsub.f32 %v9290, %v9357
      %v9374 = vmul.f32 %v9358, %v9358
      %v9375 = vmul.f32 %v9359, %v9359
      %v9376 = vmul.f32 %v9360, %v9360
      %v9377 = vmul.f32 %v9361, %v9361
      %v9378 = vmul.f32 %v9362, %v9362
      %v9379 = vmul.f32 %v9363, %v9363
      %v9380 = vmul.f32 %v9364, %v9364
      %v9381 = vmul.f32 %v9365, %v9365
      %v9382 = vmul.f32 %v9366, %v9366
      %v9383 = vmul.f32 %v9367, %v9367
      %v9384 = vmul.f32 %v9368, %v9368
      %v9385 = vmul.f32 %v9369, %v9369
      %v9386 = vmul.f32 %v9370, %v9370
      %v9387 = vmul.f32 %v9371, %v9371
      %v9388 = vmul.f32 %v9372, %v9372
      %v9389 = vmul.f32 %v9373, %v9373
      %v9390 = vsel %vm514, %v9374, 0.0
      %9391 = vadd.xlane.f32.xlu0 %v9390
      %v9392 = vpop.xlane.xlu0 %9391
      %v9393 = vsel %vm514, %v9375, 0.0
      %9394 = vadd.xlane.f32.xlu0 %v9393
      %v9395 = vpop.xlane.xlu0 %9394
      %v9396 = vsel %vm514, %v9376, 0.0
      %9397 = vadd.xlane.f32.xlu0 %v9396
      %v9398 = vpop.xlane.xlu0 %9397
      %v9399 = vsel %vm514, %v9377, 0.0
      %9400 = vadd.xlane.f32.xlu0 %v9399
      %v9401 = vpop.xlane.xlu0 %9400
      %v9402 = vsel %vm514, %v9378, 0.0
      %9403 = vadd.xlane.f32.xlu0 %v9402
      %v9404 = vpop.xlane.xlu0 %9403
      %v9405 = vsel %vm514, %v9379, 0.0
      %9406 = vadd.xlane.f32.xlu0 %v9405
      %v9407 = vpop.xlane.xlu0 %9406
      %v9408 = vsel %vm514, %v9380, 0.0
      %9409 = vadd.xlane.f32.xlu0 %v9408
      %v9410 = vpop.xlane.xlu0 %9409
      %v9411 = vsel %vm514, %v9381, 0.0
      %9412 = vadd.xlane.f32.xlu0 %v9411
      %v9413 = vpop.xlane.xlu0 %9412
      %v9414 = vsel %vm514, %v9382, 0.0
      %9415 = vadd.xlane.f32.xlu0 %v9414
      %v9416 = vpop.xlane.xlu0 %9415
      %v9417 = vsel %vm514, %v9383, 0.0
      %9418 = vadd.xlane.f32.xlu0 %v9417
      %v9419 = vpop.xlane.xlu0 %9418
      %v9420 = vsel %vm514, %v9384, 0.0
      %9421 = vadd.xlane.f32.xlu0 %v9420
      %v9422 = vpop.xlane.xlu0 %9421
      %v9423 = vsel %vm514, %v9385, 0.0
      %9424 = vadd.xlane.f32.xlu0 %v9423
      %v9425 = vpop.xlane.xlu0 %9424
      %v9426 = vsel %vm514, %v9386, 0.0
      %9427 = vadd.xlane.f32.xlu0 %v9426
      %v9428 = vpop.xlane.xlu0 %9427
      %v9429 = vsel %vm514, %v9387, 0.0
      %9430 = vadd.xlane.f32.xlu0 %v9429
      %v9431 = vpop.xlane.xlu0 %9430
      %v9432 = vsel %vm514, %v9388, 0.0
      %9433 = vadd.xlane.f32.xlu0 %v9432
      %v9434 = vpop.xlane.xlu0 %9433
      %v9435 = vsel %vm514, %v9389, 0.0
      %9436 = vadd.xlane.f32.xlu0 %v9435
      %v9437 = vpop.xlane.xlu0 %9436
      %v9438 = vmul.f32 %v9392, %v9341
      %v9439 = vmul.f32 %v9395, %v9341
      %v9440 = vmul.f32 %v9398, %v9341
      %v9441 = vmul.f32 %v9401, %v9341
      %v9442 = vmul.f32 %v9404, %v9341
      %v9443 = vmul.f32 %v9407, %v9341
      %v9444 = vmul.f32 %v9410, %v9341
      %v9445 = vmul.f32 %v9413, %v9341
      %v9446 = vmul.f32 %v9416, %v9341
      %v9447 = vmul.f32 %v9419, %v9341
      %v9448 = vmul.f32 %v9422, %v9341
      %v9449 = vmul.f32 %v9425, %v9341
      %v9450 = vmul.f32 %v9428, %v9341
      %v9451 = vmul.f32 %v9431, %v9341
      %v9452 = vmul.f32 %v9434, %v9341
      %v9453 = vmul.f32 %v9437, %v9341
      %v9454 = vadd.f32 %v9438, 1e-05
      %v9455 = vadd.f32 %v9439, 1e-05
      %v9456 = vadd.f32 %v9440, 1e-05
      %v9457 = vadd.f32 %v9441, 1e-05
      %v9458 = vadd.f32 %v9442, 1e-05
      %v9459 = vadd.f32 %v9443, 1e-05
      %v9460 = vadd.f32 %v9444, 1e-05
      %v9461 = vadd.f32 %v9445, 1e-05
      %v9462 = vadd.f32 %v9446, 1e-05
      %v9463 = vadd.f32 %v9447, 1e-05
      %v9464 = vadd.f32 %v9448, 1e-05
      %v9465 = vadd.f32 %v9449, 1e-05
      %v9466 = vadd.f32 %v9450, 1e-05
      %v9467 = vadd.f32 %v9451, 1e-05
      %v9468 = vadd.f32 %v9452, 1e-05
      %v9469 = vadd.f32 %v9453, 1e-05
      %v9470 = vrsqrt.pop %v9454
      %v9471 = vrsqrt.pop %v9455
      %v9472 = vrsqrt.pop %v9456
      %v9473 = vrsqrt.pop %v9457
      %v9474 = vrsqrt.pop %v9458
      %v9475 = vrsqrt.pop %v9459
      %v9476 = vrsqrt.pop %v9460
      %v9477 = vrsqrt.pop %v9461
      %v9478 = vrsqrt.pop %v9462
      %v9479 = vrsqrt.pop %v9463
      %v9480 = vrsqrt.pop %v9464
      %v9481 = vrsqrt.pop %v9465
      %v9482 = vrsqrt.pop %v9466
      %v9483 = vrsqrt.pop %v9467
      %v9484 = vrsqrt.pop %v9468
      %v9485 = vrsqrt.pop %v9469
      %v9486 = vmul.f32 %v9358, %v9470
      %v9487 = vmul.f32 %v9359, %v9471
      %v9488 = vmul.f32 %v9360, %v9472
      %v9489 = vmul.f32 %v9361, %v9473
      %v9490 = vmul.f32 %v9362, %v9474
      %v9491 = vmul.f32 %v9363, %v9475
      %v9492 = vmul.f32 %v9364, %v9476
      %v9493 = vmul.f32 %v9365, %v9477
      %v9494 = vmul.f32 %v9366, %v9478
      %v9495 = vmul.f32 %v9367, %v9479
      %v9496 = vmul.f32 %v9368, %v9480
      %v9497 = vmul.f32 %v9369, %v9481
      %v9498 = vmul.f32 %v9370, %v9482
      %v9499 = vmul.f32 %v9371, %v9483
      %v9500 = vmul.f32 %v9372, %v9484
      %v9501 = vmul.f32 %v9373, %v9485
      %v9503 = vlaneseq
      %v9504 = vshrl.u32 %v9503, 7
      %v9505 = vsub.s32 0, %v9504
      %v9506 = vrot.slane %v9291, %v9505
      %v9508 = vmul.f32 %v9486, %v9506
      %v9509 = vmul.f32 %v9487, %v9506
      %v9510 = vmul.f32 %v9488, %v9506
      %v9511 = vmul.f32 %v9489, %v9506
      %v9512 = vmul.f32 %v9490, %v9506
      %v9513 = vmul.f32 %v9491, %v9506
      %v9514 = vmul.f32 %v9492, %v9506
      %v9515 = vmul.f32 %v9493, %v9506
      %v9516 = vmul.f32 %v9494, %v9506
      %v9517 = vmul.f32 %v9495, %v9506
      %v9518 = vmul.f32 %v9496, %v9506
      %v9519 = vmul.f32 %v9497, %v9506
      %v9520 = vmul.f32 %v9498, %v9506
      %v9521 = vmul.f32 %v9499, %v9506
      %v9522 = vmul.f32 %v9500, %v9506
      %v9523 = vmul.f32 %v9501, %v9506
      %v9525 = vlaneseq
      %v9526 = vshrl.u32 %v9525, 7
      %v9527 = vsub.s32 0, %v9526
      %v9528 = vrot.slane %v9292, %v9527
      %v9530 = vadd.f32 %v9508, %v9528
      %v9531 = vadd.f32 %v9509, %v9528
      %v9532 = vadd.f32 %v9510, %v9528
      %v9533 = vadd.f32 %v9511, %v9528
      %v9534 = vadd.f32 %v9512, %v9528
      %v9535 = vadd.f32 %v9513, %v9528
      %v9536 = vadd.f32 %v9514, %v9528
      %v9537 = vadd.f32 %v9515, %v9528
      %v9538 = vadd.f32 %v9516, %v9528
      %v9539 = vadd.f32 %v9517, %v9528
      %v9540 = vadd.f32 %v9518, %v9528
      %v9541 = vadd.f32 %v9519, %v9528
      %v9542 = vadd.f32 %v9520, %v9528
      %v9543 = vadd.f32 %v9521, %v9528
      %v9544 = vadd.f32 %v9522, %v9528
      %v9545 = vadd.f32 %v9523, %v9528
      %v9546 = vpack.c.bf16 %v9531, %v9530
      %v9547 = vpack.c.bf16 %v9533, %v9532
      %v9548 = vpack.c.bf16 %v9535, %v9534
      %v9549 = vpack.c.bf16 %v9537, %v9536
      %v9550 = vpack.c.bf16 %v9539, %v9538
      %v9551 = vpack.c.bf16 %v9541, %v9540
      %v9552 = vpack.c.bf16 %v9543, %v9542
      %v9553 = vpack.c.bf16 %v9545, %v9544
      %v9554 = vld [vmem:[%s7] sm:$0xff]
      %v9555 = vld [vmem:[%s7 + $0x8] sm:$0xff]
      %v9556 = vld [vmem:[%s7 + $0x10] sm:$0xff]
      %v9557 = vld [vmem:[%s7 + $0x18] sm:$0xff]
      %v9558 = vld [vmem:[%s7 + $0x20] sm:$0xff]
      %v9559 = vld [vmem:[%s7 + $0x28] sm:$0xff]
      %v9560 = vld [vmem:[%s7 + $0x30] sm:$0xff]
      %v9561 = vld [vmem:[%s7 + $0x38] sm:$0xff]
      %v9562 = vld [vmem:[%s8] sm:$0x3]
      %v9564 = vlaneseq
      %v9565 = vshrl.u32 %v9564, 7
      %v9566 = vsub.s32 0, %v9565
      %v9567 = vrot.slane %v9562, %v9566
      %v9568 = vlaneseq
      %v9569 = vshrl.u32 %v9568, 7
      %v9570 = vsub.s32 1, %v9569
      %v9571 = vrot.slane %v9562, %v9570
      %v9582 = vunpack.c.l.b16 %v9554
      %v9583 = vunpack.c.h.b16 %v9554
      %v9584 = vunpack.c.l.b16 %v9555
      %v9585 = vunpack.c.h.b16 %v9555
      %v9586 = vunpack.c.l.b16 %v9556
      %v9587 = vunpack.c.h.b16 %v9556
      %v9588 = vunpack.c.l.b16 %v9557
      %v9589 = vunpack.c.h.b16 %v9557
      %v9590 = vunpack.c.l.b16 %v9558
      %v9591 = vunpack.c.h.b16 %v9558
      %v9592 = vunpack.c.l.b16 %v9559
      %v9593 = vunpack.c.h.b16 %v9559
      %v9594 = vunpack.c.l.b16 %v9560
      %v9595 = vunpack.c.h.b16 %v9560
      %v9596 = vunpack.c.l.b16 %v9561
      %v9597 = vunpack.c.h.b16 %v9561
      %v9598 = vpack.c.b16 %v9584, %v9582
      %v9599 = vpack.c.b16 %v9585, %v9583
      %v9600 = vpack.c.b16 %v9588, %v9586
      %v9601 = vpack.c.b16 %v9589, %v9587
      %v9602 = vpack.c.b16 %v9592, %v9590
      %v9603 = vpack.c.b16 %v9593, %v9591
      %v9604 = vpack.c.b16 %v9596, %v9594
      %v9605 = vpack.c.b16 %v9597, %v9595
      %v9615 = vsel %vm514, %v9546, 0
      %v9618 = vsel %vm514, %v9547, 0
      %v9621 = vsel %vm514, %v9548, 0
      %v9624 = vsel %vm514, %v9549, 0
      %v9627 = vsel %vm514, %v9550, 0
      %v9630 = vsel %vm514, %v9551, 0
      %v9633 = vsel %vm514, %v9552, 0
      %v9636 = vsel %vm514, %v9553, 0
      %9638 = vmatprep.subr.bf16.mxu0 %v9599
      %9639 = vmatpush1.bf16.msra.mxu0 %v9598
      %9640 = vmatprep.subr.bf16.mxu0 %v9601
      %9641 = vmatpush1.bf16.msra.mxu0 %v9600
      %9642 = vmatprep.subr.bf16.mxu0 %v9603
      %9643 = vmatpush1.bf16.msra.mxu0 %v9602
      %9644 = vmatprep.subr.bf16.mxu0 %v9605
      %9645 = vmatpush1.bf16.msra.mxu0 %v9604
      %9646 = vmatprep.subr.bf16.mxu0 0
      %9647 = vmatpush1.bf16.msra.mxu0 0
      %9648 = vmatprep.subr.bf16.mxu0 0
      %9649 = vmatpush1.bf16.msra.mxu0 0
      %9650 = vmatprep.subr.bf16.mxu0 0
      %9651 = vmatpush1.bf16.msra.mxu0 0
      %9652 = vmatprep.subr.bf16.mxu0 0
      %9653 = vmatpush1.bf16.msra.mxu0 0
      %9654 = vmatprep.subr.bf16.mxu0 0
      %9655 = vmatpush1.bf16.msra.mxu0 0
      %9656 = vmatprep.subr.bf16.mxu0 0
      %9657 = vmatpush1.bf16.msra.mxu0 0
      %9658 = vmatprep.subr.bf16.mxu0 0
      %9659 = vmatpush1.bf16.msra.mxu0 0
      %9660 = vmatprep.subr.bf16.mxu0 0
      %9661 = vmatpush1.bf16.msra.mxu0 0
      %9662 = vmatprep.subr.bf16.mxu0 0
      %9663 = vmatpush1.bf16.msra.mxu0 0
      %9664 = vmatprep.subr.bf16.mxu0 0
      %9665 = vmatpush1.bf16.msra.mxu0 0
      %9666 = vmatprep.subr.bf16.mxu0 0
      %9667 = vmatpush1.bf16.msra.mxu0 0
      %9668 = vmatprep.subr.bf16.mxu0 0
      %9669 = vmatpush1.bf16.msra.mxu0 0
      %9670 = vmatprep.mubr.bf16.mxu0 0
      %9671 = vmatmul.mubr.bf16.gmra.mrb[0].mxu0 %v9615
      %v9672 = vpop.f32.mrb[0].mxu0
      %v9673 = vadd.f32 %v9567, %v9672
      %v9674 = vpop.f32.mrb[0].mxu0
      %v9675 = vadd.f32 %v9571, %v9674
      %v9676 = vpop.f32.mrb[0].mxu0
      %v9677 = vadd.f32 %v9567, %v9676
      %v9678 = vpop.f32.mrb[0].mxu0
      %v9679 = vadd.f32 %v9571, %v9678
      %9680 = vmatprep.mubr.bf16.mxu0 0
      %9681 = vmatmul.mubr.bf16.gmra.mrb[0].mxu0 %v9618
      %v9682 = vpop.f32.mrb[0].mxu0
      %v9683 = vadd.f32 %v9567, %v9682
      %v9684 = vpop.f32.mrb[0].mxu0
      %v9685 = vadd.f32 %v9571, %v9684
      %v9686 = vpop.f32.mrb[0].mxu0
      %v9687 = vadd.f32 %v9567, %v9686
      %v9688 = vpop.f32.mrb[0].mxu0
      %v9689 = vadd.f32 %v9571, %v9688
      %9690 = vmatprep.mubr.bf16.mxu0 0
      %9691 = vmatmul.mubr.bf16.gmra.mrb[0].mxu0 %v9621
      %v9692 = vpop.f32.mrb[0].mxu0
      %v9693 = vadd.f32 %v9567, %v9692
      %v9694 = vpop.f32.mrb[0].mxu0
      %v9695 = vadd.f32 %v9571, %v9694
      %v9696 = vpop.f32.mrb[0].mxu0
      %v9697 = vadd.f32 %v9567, %v9696
      %v9698 = vpop.f32.mrb[0].mxu0
      %v9699 = vadd.f32 %v9571, %v9698
      %9700 = vmatprep.mubr.bf16.mxu0 0
      %9701 = vmatmul.mubr.bf16.gmra.mrb[0].mxu0 %v9624
      %v9702 = vpop.f32.mrb[0].mxu0
      %v9703 = vadd.f32 %v9567, %v9702
      %v9704 = vpop.f32.mrb[0].mxu0
      %v9705 = vadd.f32 %v9571, %v9704
      %v9706 = vpop.f32.mrb[0].mxu0
      %v9707 = vadd.f32 %v9567, %v9706
      %v9708 = vpop.f32.mrb[0].mxu0
      %v9709 = vadd.f32 %v9571, %v9708
      %9710 = vmatprep.mubr.bf16.mxu0 0
      %9711 = vmatmul.mubr.bf16.gmra.mrb[0].mxu0 %v9627
      %v9712 = vpop.f32.mrb[0].mxu0
      %v9713 = vadd.f32 %v9567, %v9712
      %v9714 = vpop.f32.mrb[0].mxu0
      %v9715 = vadd.f32 %v9571, %v9714
      %v9716 = vpop.f32.mrb[0].mxu0
      %v9717 = vadd.f32 %v9567, %v9716
      %v9718 = vpop.f32.mrb[0].mxu0
      %v9719 = vadd.f32 %v9571, %v9718
      %9720 = vmatprep.mubr.bf16.mxu0 0
      %9721 = vmatmul.mubr.bf16.gmra.mrb[0].mxu0 %v9630
      %v9722 = vpop.f32.mrb[0].mxu0
      %v9723 = vadd.f32 %v9567, %v9722
      %v9724 = vpop.f32.mrb[0].mxu0
      %v9725 = vadd.f32 %v9571, %v9724
      %v9726 = vpop.f32.mrb[0].mxu0
      %v9727 = vadd.f32 %v9567, %v9726
      %v9728 = vpop.f32.mrb[0].mxu0
      %v9729 = vadd.f32 %v9571, %v9728
      %9730 = vmatprep.mubr.bf16.mxu0 0
      %9731 = vmatmul.mubr.bf16.gmra.mrb[0].mxu0 %v9633
      %v9732 = vpop.f32.mrb[0].mxu0
      %v9733 = vadd.f32 %v9567, %v9732
      %v9734 = vpop.f32.mrb[0].mxu0
      %v9735 = vadd.f32 %v9571, %v9734
      %v9736 = vpop.f32.mrb[0].mxu0
      %v9737 = vadd.f32 %v9567, %v9736
      %v9738 = vpop.f32.mrb[0].mxu0
      %v9739 = vadd.f32 %v9571, %v9738
      %9740 = vmatprep.mubr.bf16.mxu0 0
      %9741 = vmatmul.mubr.bf16.gmra.mrb[0].mxu0 %v9636
      %v9742 = vpop.f32.mrb[0].mxu0
      %v9743 = vadd.f32 %v9567, %v9742
      %v9744 = vpop.f32.mrb[0].mxu0
      %v9745 = vadd.f32 %v9571, %v9744
      %v9746 = vpop.f32.mrb[0].mxu0
      %v9747 = vadd.f32 %v9567, %v9746
      %v9748 = vpop.f32.mrb[0].mxu0
      %v9749 = vadd.f32 %v9571, %v9748
      %9750 = vdwg.mxu0
      %v9751 = vmax.f32 %v9673, 0.0
      %v9752 = vmax.f32 %v9675, 0.0
      %v9753 = vmax.f32 %v9677, 0.0
      %v9754 = vmax.f32 %v9679, 0.0
      %v9755 = vmax.f32 %v9683, 0.0
      %v9756 = vmax.f32 %v9685, 0.0
      %v9757 = vmax.f32 %v9687, 0.0
      %v9758 = vmax.f32 %v9689, 0.0
      %v9759 = vmax.f32 %v9693, 0.0
      %v9760 = vmax.f32 %v9695, 0.0
      %v9761 = vmax.f32 %v9697, 0.0
      %v9762 = vmax.f32 %v9699, 0.0
      %v9763 = vmax.f32 %v9703, 0.0
      %v9764 = vmax.f32 %v9705, 0.0
      %v9765 = vmax.f32 %v9707, 0.0
      %v9766 = vmax.f32 %v9709, 0.0
      %v9767 = vmax.f32 %v9713, 0.0
      %v9768 = vmax.f32 %v9715, 0.0
      %v9769 = vmax.f32 %v9717, 0.0
      %v9770 = vmax.f32 %v9719, 0.0
      %v9771 = vmax.f32 %v9723, 0.0
      %v9772 = vmax.f32 %v9725, 0.0
      %v9773 = vmax.f32 %v9727, 0.0
      %v9774 = vmax.f32 %v9729, 0.0
      %v9775 = vmax.f32 %v9733, 0.0
      %v9776 = vmax.f32 %v9735, 0.0
      %v9777 = vmax.f32 %v9737, 0.0
      %v9778 = vmax.f32 %v9739, 0.0
      %v9779 = vmax.f32 %v9743, 0.0
      %v9780 = vmax.f32 %v9745, 0.0
      %v9781 = vmax.f32 %v9747, 0.0
      %v9782 = vmax.f32 %v9749, 0.0
      %v9783 = vpack.c.bf16 %v9753, %v9751
      %v9784 = vpack.c.bf16 %v9754, %v9752
      %v9785 = vpack.c.bf16 %v9757, %v9755
      %v9786 = vpack.c.bf16 %v9758, %v9756
      %v9787 = vpack.c.bf16 %v9761, %v9759
      %v9788 = vpack.c.bf16 %v9762, %v9760
      %v9789 = vpack.c.bf16 %v9765, %v9763
      %v9790 = vpack.c.bf16 %v9766, %v9764
      %v9791 = vpack.c.bf16 %v9769, %v9767
      %v9792 = vpack.c.bf16 %v9770, %v9768
      %v9793 = vpack.c.bf16 %v9773, %v9771
      %v9794 = vpack.c.bf16 %v9774, %v9772
      %v9795 = vpack.c.bf16 %v9777, %v9775
      %v9796 = vpack.c.bf16 %v9778, %v9776
      %v9797 = vpack.c.bf16 %v9781, %v9779
      %v9798 = vpack.c.bf16 %v9782, %v9780
      %v9799 = vld [vmem:[%s9] sm:$0xf]
      %v9800 = vld [vmem:[%s9 + $0x4] sm:$0xf]
      %v9801 = vld [vmem:[%s9 + $0x8] sm:$0xf]
      %v9802 = vld [vmem:[%s9 + $0xc] sm:$0xf]
      %v9803 = vld [vmem:[%s9 + $0x10] sm:$0xf]
      %v9804 = vld [vmem:[%s9 + $0x14] sm:$0xf]
      %v9805 = vld [vmem:[%s9 + $0x18] sm:$0xf]
      %v9806 = vld [vmem:[%s9 + $0x1c] sm:$0xf]
      %v9807 = vld [vmem:[%s9 + $0x20] sm:$0xf]
      %v9808 = vld [vmem:[%s9 + $0x24] sm:$0xf]
      %v9809 = vld [vmem:[%s9 + $0x28] sm:$0xf]
      %v9810 = vld [vmem:[%s9 + $0x2c] sm:$0xf]
      %v9811 = vld [vmem:[%s9 + $0x30] sm:$0xf]
      %v9812 = vld [vmem:[%s9 + $0x34] sm:$0xf]
      %v9813 = vld [vmem:[%s9 + $0x38] sm:$0xf]
      %v9814 = vld [vmem:[%s9 + $0x3c] sm:$0xf]
      %v9815 = vld [vmem:[%s9 + $0x40] sm:$0xf]
      %v9816 = vld [vmem:[%s9 + $0x44] sm:$0xf]
      %v9817 = vld [vmem:[%s9 + $0x48] sm:$0xf]
      %v9818 = vld [vmem:[%s9 + $0x4c] sm:$0xf]
      %v9819 = vld [vmem:[%s9 + $0x50] sm:$0xf]
      %v9820 = vld [vmem:[%s9 + $0x54] sm:$0xf]
      %v9821 = vld [vmem:[%s9 + $0x58] sm:$0xf]
      %v9822 = vld [vmem:[%s9 + $0x5c] sm:$0xf]
      %v9823 = vld [vmem:[%s9 + $0x60] sm:$0xf]
      %v9824 = vld [vmem:[%s9 + $0x64] sm:$0xf]
      %v9825 = vld [vmem:[%s9 + $0x68] sm:$0xf]
      %v9826 = vld [vmem:[%s9 + $0x6c] sm:$0xf]
      %v9827 = vld [vmem:[%s9 + $0x70] sm:$0xf]
      %v9828 = vld [vmem:[%s9 + $0x74] sm:$0xf]
      %v9829 = vld [vmem:[%s9 + $0x78] sm:$0xf]
      %v9830 = vld [vmem:[%s9 + $0x7c] sm:$0xf]
      %v9831 = vld [vmem:[%s10] sm:$0x1]
      %v9833 = vlaneseq
      %v9834 = vshrl.u32 %v9833, 7
      %v9835 = vsub.s32 0, %v9834
      %v9836 = vrot.slane %v9831, %v9835
      %v9870 = vunpack.c.l.b16 %v9799
      %v9871 = vunpack.c.l.b16 %v9800
      %v9872 = vunpack.c.l.b16 %v9801
      %v9873 = vunpack.c.l.b16 %v9802
      %v9874 = vunpack.c.l.b16 %v9803
      %v9875 = vunpack.c.l.b16 %v9804
      %v9876 = vunpack.c.l.b16 %v9805
      %v9877 = vunpack.c.l.b16 %v9806
      %v9878 = vunpack.c.l.b16 %v9807
      %v9879 = vunpack.c.l.b16 %v9808
      %v9880 = vunpack.c.l.b16 %v9809
      %v9881 = vunpack.c.l.b16 %v9810
      %v9882 = vunpack.c.l.b16 %v9811
      %v9883 = vunpack.c.l.b16 %v9812
      %v9884 = vunpack.c.l.b16 %v9813
      %v9885 = vunpack.c.l.b16 %v9814
      %v9886 = vunpack.c.l.b16 %v9815
      %v9887 = vunpack.c.l.b16 %v9816
      %v9888 = vunpack.c.l.b16 %v9817
      %v9889 = vunpack.c.l.b16 %v9818
      %v9890 = vunpack.c.l.b16 %v9819
      %v9891 = vunpack.c.l.b16 %v9820
      %v9892 = vunpack.c.l.b16 %v9821
      %v9893 = vunpack.c.l.b16 %v9822
      %v9894 = vunpack.c.l.b16 %v9823
      %v9895 = vunpack.c.l.b16 %v9824
      %v9896 = vunpack.c.l.b16 %v9825
      %v9897 = vunpack.c.l.b16 %v9826
      %v9898 = vunpack.c.l.b16 %v9827
      %v9899 = vunpack.c.l.b16 %v9828
      %v9900 = vunpack.c.l.b16 %v9829
      %v9901 = vunpack.c.l.b16 %v9830
      %v9902 = vpack.c.b16 %v9871, %v9870
      %v9903 = vpack.c.b16 %v9873, %v9872
      %v9904 = vpack.c.b16 %v9875, %v9874
      %v9905 = vpack.c.b16 %v9877, %v9876
      %v9906 = vpack.c.b16 %v9879, %v9878
      %v9907 = vpack.c.b16 %v9881, %v9880
      %v9908 = vpack.c.b16 %v9883, %v9882
      %v9909 = vpack.c.b16 %v9885, %v9884
      %v9910 = vpack.c.b16 %v9887, %v9886
      %v9911 = vpack.c.b16 %v9889, %v9888
      %v9912 = vpack.c.b16 %v9891, %v9890
      %v9913 = vpack.c.b16 %v9893, %v9892
      %v9914 = vpack.c.b16 %v9895, %v9894
      %v9915 = vpack.c.b16 %v9897, %v9896
      %v9916 = vpack.c.b16 %v9899, %v9898
      %v9917 = vpack.c.b16 %v9901, %v9900
      %9934 = vmatprep.subr.bf16.mxu0 0
      %9935 = vmatpush1.bf16.msra.mxu0 %v9902
      %9936 = vmatprep.subr.bf16.mxu0 0
      %9937 = vmatpush1.bf16.msra.mxu0 %v9903
      %9938 = vmatprep.subr.bf16.mxu0 0
      %9939 = vmatpush1.bf16.msra.mxu0 %v9904
      %9940 = vmatprep.subr.bf16.mxu0 0
      %9941 = vmatpush1.bf16.msra.mxu0 %v9905
      %9942 = vmatprep.subr.bf16.mxu0 0
      %9943 = vmatpush1.bf16.msra.mxu0 %v9906
      %9944 = vmatprep.subr.bf16.mxu0 0
      %9945 = vmatpush1.bf16.msra.mxu0 %v9907
      %9946 = vmatprep.subr.bf16.mxu0 0
      %9947 = vmatpush1.bf16.msra.mxu0 %v9908
      %9948 = vmatprep.subr.bf16.mxu0 0
      %9949 = vmatpush1.bf16.msra.mxu0 %v9909
      %9950 = vmatprep.subr.bf16.mxu0 0
      %9951 = vmatpush1.bf16.msra.mxu0 %v9910
      %9952 = vmatprep.subr.bf16.mxu0 0
      %9953 = vmatpush1.bf16.msra.mxu0 %v9911
      %9954 = vmatprep.subr.bf16.mxu0 0
      %9955 = vmatpush1.bf16.msra.mxu0 %v9912
      %9956 = vmatprep.subr.bf16.mxu0 0
      %9957 = vmatpush1.bf16.msra.mxu0 %v9913
      %9958 = vmatprep.subr.bf16.mxu0 0
      %9959 = vmatpush1.bf16.msra.mxu0 %v9914
      %9960 = vmatprep.subr.bf16.mxu0 0
      %9961 = vmatpush1.bf16.msra.mxu0 %v9915
      %9962 = vmatprep.subr.bf16.mxu0 0
      %9963 = vmatpush1.bf16.msra.mxu0 %v9916
      %9964 = vmatprep.subr.bf16.mxu0 0
      %9965 = vmatpush1.bf16.msra.mxu0 %v9917
      %9966 = vmatprep.mubr.bf16.mxu0 %v9784
      %9967 = vmatmul.mubr.bf16.gmra.mrb[0].mxu0 %v9783
      %v9968 = vpop.f32.mrb[0].mxu0
      %v9969 = vadd.f32 %v9836, %v9968
      %v9970 = vpop.f32.mrb[0].mxu0
      %v9971 = vpop.f32.mrb[0].mxu0
      %v9972 = vadd.f32 %v9836, %v9971
      %v9973 = vpop.f32.mrb[0].mxu0
      %9974 = vmatprep.mubr.bf16.mxu0 %v9786
      %9975 = vmatmul.mubr.bf16.gmra.mrb[0].mxu0 %v9785
      %v9976 = vpop.f32.mrb[0].mxu0
      %v9977 = vadd.f32 %v9836, %v9976
      %v9978 = vpop.f32.mrb[0].mxu0
      %v9979 = vpop.f32.mrb[0].mxu0
      %v9980 = vadd.f32 %v9836, %v9979
      %v9981 = vpop.f32.mrb[0].mxu0
      %9982 = vmatprep.mubr.bf16.mxu0 %v9788
      %9983 = vmatmul.mubr.bf16.gmra.mrb[0].mxu0 %v9787
      %v9984 = vpop.f32.mrb[0].mxu0
      %v9985 = vadd.f32 %v9836, %v9984
      %v9986 = vpop.f32.mrb[0].mxu0
      %v9987 = vpop.f32.mrb[0].mxu0
      %v9988 = vadd.f32 %v9836, %v9987
      %v9989 = vpop.f32.mrb[0].mxu0
      %9990 = vmatprep.mubr.bf16.mxu0 %v9790
      %9991 = vmatmul.mubr.bf16.gmra.mrb[0].mxu0 %v9789
      %v9992 = vpop.f32.mrb[0].mxu0
      %v9993 = vadd.f32 %v9836, %v9992
      %v9994 = vpop.f32.mrb[0].mxu0
      %v9995 = vpop.f32.mrb[0].mxu0
      %v9996 = vadd.f32 %v9836, %v9995
      %v9997 = vpop.f32.mrb[0].mxu0
      %9998 = vmatprep.mubr.bf16.mxu0 %v9792
      %9999 = vmatmul.mubr.bf16.gmra.mrb[0].mxu0 %v9791
      %v10000 = vpop.f32.mrb[0].mxu0
      %v10001 = vadd.f32 %v9836, %v10000
      %v10002 = vpop.f32.mrb[0].mxu0
      %v10003 = vpop.f32.mrb[0].mxu0
      %v10004 = vadd.f32 %v9836, %v10003
      %v10005 = vpop.f32.mrb[0].mxu0
      %10006 = vmatprep.mubr.bf16.mxu0 %v9794
      %10007 = vmatmul.mubr.bf16.gmra.mrb[0].mxu0 %v9793
      %v10008 = vpop.f32.mrb[0].mxu0
      %v10009 = vadd.f32 %v9836, %v10008
      %v10010 = vpop.f32.mrb[0].mxu0
      %v10011 = vpop.f32.mrb[0].mxu0
      %v10012 = vadd.f32 %v9836, %v10011
      %v10013 = vpop.f32.mrb[0].mxu0
      %10014 = vmatprep.mubr.bf16.mxu0 %v9796
      %10015 = vmatmul.mubr.bf16.gmra.mrb[0].mxu0 %v9795
      %v10016 = vpop.f32.mrb[0].mxu0
      %v10017 = vadd.f32 %v9836, %v10016
      %v10018 = vpop.f32.mrb[0].mxu0
      %v10019 = vpop.f32.mrb[0].mxu0
      %v10020 = vadd.f32 %v9836, %v10019
      %v10021 = vpop.f32.mrb[0].mxu0
      %10022 = vmatprep.mubr.bf16.mxu0 %v9798
      %10023 = vmatmul.mubr.bf16.gmra.mrb[0].mxu0 %v9797
      %v10024 = vpop.f32.mrb[0].mxu0
      %v10025 = vadd.f32 %v9836, %v10024
      %v10026 = vpop.f32.mrb[0].mxu0
      %v10027 = vpop.f32.mrb[0].mxu0
      %v10028 = vadd.f32 %v9836, %v10027
      %v10029 = vpop.f32.mrb[0].mxu0
      %10030 = vdwg.mxu0
      %v10031 = vadd.f32 %v9530, %v9969
      %v10032 = vadd.f32 %v9531, %v9972
      %v10033 = vadd.f32 %v9532, %v9977
      %v10034 = vadd.f32 %v9533, %v9980
      %v10035 = vadd.f32 %v9534, %v9985
      %v10036 = vadd.f32 %v9535, %v9988
      %v10037 = vadd.f32 %v9536, %v9993
      %v10038 = vadd.f32 %v9537, %v9996
      %v10039 = vadd.f32 %v9538, %v10001
      %v10040 = vadd.f32 %v9539, %v10004
      %v10041 = vadd.f32 %v9540, %v10009
      %v10042 = vadd.f32 %v9541, %v10012
      %v10043 = vadd.f32 %v9542, %v10017
      %v10044 = vadd.f32 %v9543, %v10020
      %v10045 = vadd.f32 %v9544, %v10025
      %v10046 = vadd.f32 %v9545, %v10028
      %v10047 = vld [vmem:[%s11] sm:$0x1]
      %v10048 = vld [vmem:[%s12] sm:$0x1]
      %v10049 = vsel %vm514, %v10031, 0.0
      %10050 = vadd.xlane.f32.xlu0 %v10049
      %v10051 = vpop.xlane.xlu0 %10050
      %v10052 = vsel %vm514, %v10032, 0.0
      %10053 = vadd.xlane.f32.xlu0 %v10052
      %v10054 = vpop.xlane.xlu0 %10053
      %v10055 = vsel %vm514, %v10033, 0.0
      %10056 = vadd.xlane.f32.xlu0 %v10055
      %v10057 = vpop.xlane.xlu0 %10056
      %v10058 = vsel %vm514, %v10034, 0.0
      %10059 = vadd.xlane.f32.xlu0 %v10058
      %v10060 = vpop.xlane.xlu0 %10059
      %v10061 = vsel %vm514, %v10035, 0.0
      %10062 = vadd.xlane.f32.xlu0 %v10061
      %v10063 = vpop.xlane.xlu0 %10062
      %v10064 = vsel %vm514, %v10036, 0.0
      %10065 = vadd.xlane.f32.xlu0 %v10064
      %v10066 = vpop.xlane.xlu0 %10065
      %v10067 = vsel %vm514, %v10037, 0.0
      %10068 = vadd.xlane.f32.xlu0 %v10067
      %v10069 = vpop.xlane.xlu0 %10068
      %v10070 = vsel %vm514, %v10038, 0.0
      %10071 = vadd.xlane.f32.xlu0 %v10070
      %v10072 = vpop.xlane.xlu0 %10071
      %v10073 = vsel %vm514, %v10039, 0.0
      %10074 = vadd.xlane.f32.xlu0 %v10073
      %v10075 = vpop.xlane.xlu0 %10074
      %v10076 = vsel %vm514, %v10040, 0.0
      %10077 = vadd.xlane.f32.xlu0 %v10076
      %v10078 = vpop.xlane.xlu0 %10077
      %v10079 = vsel %vm514, %v10041, 0.0
      %10080 = vadd.xlane.f32.xlu0 %v10079
      %v10081 = vpop.xlane.xlu0 %10080
      %v10082 = vsel %vm514, %v10042, 0.0
      %10083 = vadd.xlane.f32.xlu0 %v10082
      %v10084 = vpop.xlane.xlu0 %10083
      %v10085 = vsel %vm514, %v10043, 0.0
      %10086 = vadd.xlane.f32.xlu0 %v10085
      %v10087 = vpop.xlane.xlu0 %10086
      %v10088 = vsel %vm514, %v10044, 0.0
      %10089 = vadd.xlane.f32.xlu0 %v10088
      %v10090 = vpop.xlane.xlu0 %10089
      %v10091 = vsel %vm514, %v10045, 0.0
      %10092 = vadd.xlane.f32.xlu0 %v10091
      %v10093 = vpop.xlane.xlu0 %10092
      %v10094 = vsel %vm514, %v10046, 0.0
      %10095 = vadd.xlane.f32.xlu0 %v10094
      %v10096 = vpop.xlane.xlu0 %10095
      %v10097 = vmul.f32 %v10051, %v9341
      %v10098 = vmul.f32 %v10054, %v9341
      %v10099 = vmul.f32 %v10057, %v9341
      %v10100 = vmul.f32 %v10060, %v9341
      %v10101 = vmul.f32 %v10063, %v9341
      %v10102 = vmul.f32 %v10066, %v9341
      %v10103 = vmul.f32 %v10069, %v9341
      %v10104 = vmul.f32 %v10072, %v9341
      %v10105 = vmul.f32 %v10075, %v9341
      %v10106 = vmul.f32 %v10078, %v9341
      %v10107 = vmul.f32 %v10081, %v9341
      %v10108 = vmul.f32 %v10084, %v9341
      %v10109 = vmul.f32 %v10087, %v9341
      %v10110 = vmul.f32 %v10090, %v9341
      %v10111 = vmul.f32 %v10093, %v9341
      %v10112 = vmul.f32 %v10096, %v9341
      %v10113 = vsub.f32 %v10031, %v10097
      %v10114 = vsub.f32 %v10032, %v10098
      %v10115 = vsub.f32 %v10033, %v10099
      %v10116 = vsub.f32 %v10034, %v10100
      %v10117 = vsub.f32 %v10035, %v10101
      %v10118 = vsub.f32 %v10036, %v10102
      %v10119 = vsub.f32 %v10037, %v10103
      %v10120 = vsub.f32 %v10038, %v10104
      %v10121 = vsub.f32 %v10039, %v10105
      %v10122 = vsub.f32 %v10040, %v10106
      %v10123 = vsub.f32 %v10041, %v10107
      %v10124 = vsub.f32 %v10042, %v10108
      %v10125 = vsub.f32 %v10043, %v10109
      %v10126 = vsub.f32 %v10044, %v10110
      %v10127 = vsub.f32 %v10045, %v10111
      %v10128 = vsub.f32 %v10046, %v10112
      %v10129 = vmul.f32 %v10113, %v10113
      %v10130 = vmul.f32 %v10114, %v10114
      %v10131 = vmul.f32 %v10115, %v10115
      %v10132 = vmul.f32 %v10116, %v10116
      %v10133 = vmul.f32 %v10117, %v10117
      %v10134 = vmul.f32 %v10118, %v10118
      %v10135 = vmul.f32 %v10119, %v10119
      %v10136 = vmul.f32 %v10120, %v10120
      %v10137 = vmul.f32 %v10121, %v10121
      %v10138 = vmul.f32 %v10122, %v10122
      %v10139 = vmul.f32 %v10123, %v10123
      %v10140 = vmul.f32 %v10124, %v10124
      %v10141 = vmul.f32 %v10125, %v10125
      %v10142 = vmul.f32 %v10126, %v10126
      %v10143 = vmul.f32 %v10127, %v10127
      %v10144 = vmul.f32 %v10128, %v10128
      %v10145 = vsel %vm514, %v10129, 0.0
      %10146 = vadd.xlane.f32.xlu0 %v10145
      %v10147 = vpop.xlane.xlu0 %10146
      %v10148 = vsel %vm514, %v10130, 0.0
      %10149 = vadd.xlane.f32.xlu0 %v10148
      %v10150 = vpop.xlane.xlu0 %10149
      %v10151 = vsel %vm514, %v10131, 0.0
      %10152 = vadd.xlane.f32.xlu0 %v10151
      %v10153 = vpop.xlane.xlu0 %10152
      %v10154 = vsel %vm514, %v10132, 0.0
      %10155 = vadd.xlane.f32.xlu0 %v10154
      %v10156 = vpop.xlane.xlu0 %10155
      %v10157 = vsel %vm514, %v10133, 0.0
      %10158 = vadd.xlane.f32.xlu0 %v10157
      %v10159 = vpop.xlane.xlu0 %10158
      %v10160 = vsel %vm514, %v10134, 0.0
      %10161 = vadd.xlane.f32.xlu0 %v10160
      %v10162 = vpop.xlane.xlu0 %10161
      %v10163 = vsel %vm514, %v10135, 0.0
      %10164 = vadd.xlane.f32.xlu0 %v10163
      %v10165 = vpop.xlane.xlu0 %10164
      %v10166 = vsel %vm514, %v10136, 0.0
      %10167 = vadd.xlane.f32.xlu0 %v10166
      %v10168 = vpop.xlane.xlu0 %10167
      %v10169 = vsel %vm514, %v10137, 0.0
      %10170 = vadd.xlane.f32.xlu0 %v10169
      %v10171 = vpop.xlane.xlu0 %10170
      %v10172 = vsel %vm514, %v10138, 0.0
      %10173 = vadd.xlane.f32.xlu0 %v10172
      %v10174 = vpop.xlane.xlu0 %10173
      %v10175 = vsel %vm514, %v10139, 0.0
      %10176 = vadd.xlane.f32.xlu0 %v10175
      %v10177 = vpop.xlane.xlu0 %10176
      %v10178 = vsel %vm514, %v10140, 0.0
      %10179 = vadd.xlane.f32.xlu0 %v10178
      %v10180 = vpop.xlane.xlu0 %10179
      %v10181 = vsel %vm514, %v10141, 0.0
      %10182 = vadd.xlane.f32.xlu0 %v10181
      %v10183 = vpop.xlane.xlu0 %10182
      %v10184 = vsel %vm514, %v10142, 0.0
      %10185 = vadd.xlane.f32.xlu0 %v10184
      %v10186 = vpop.xlane.xlu0 %10185
      %v10187 = vsel %vm514, %v10143, 0.0
      %10188 = vadd.xlane.f32.xlu0 %v10187
      %v10189 = vpop.xlane.xlu0 %10188
      %v10190 = vsel %vm514, %v10144, 0.0
      %10191 = vadd.xlane.f32.xlu0 %v10190
      %v10192 = vpop.xlane.xlu0 %10191
      %v10193 = vmul.f32 %v10147, %v9341
      %v10194 = vmul.f32 %v10150, %v9341
      %v10195 = vmul.f32 %v10153, %v9341
      %v10196 = vmul.f32 %v10156, %v9341
      %v10197 = vmul.f32 %v10159, %v9341
      %v10198 = vmul.f32 %v10162, %v9341
      %v10199 = vmul.f32 %v10165, %v9341
      %v10200 = vmul.f32 %v10168, %v9341
      %v10201 = vmul.f32 %v10171, %v9341
      %v10202 = vmul.f32 %v10174, %v9341
      %v10203 = vmul.f32 %v10177, %v9341
      %v10204 = vmul.f32 %v10180, %v9341
      %v10205 = vmul.f32 %v10183, %v9341
      %v10206 = vmul.f32 %v10186, %v9341
      %v10207 = vmul.f32 %v10189, %v9341
      %v10208 = vmul.f32 %v10192, %v9341
      %v10209 = vadd.f32 %v10193, 1e-05
      %v10210 = vadd.f32 %v10194, 1e-05
      %v10211 = vadd.f32 %v10195, 1e-05
      %v10212 = vadd.f32 %v10196, 1e-05
      %v10213 = vadd.f32 %v10197, 1e-05
      %v10214 = vadd.f32 %v10198, 1e-05
      %v10215 = vadd.f32 %v10199, 1e-05
      %v10216 = vadd.f32 %v10200, 1e-05
      %v10217 = vadd.f32 %v10201, 1e-05
      %v10218 = vadd.f32 %v10202, 1e-05
      %v10219 = vadd.f32 %v10203, 1e-05
      %v10220 = vadd.f32 %v10204, 1e-05
      %v10221 = vadd.f32 %v10205, 1e-05
      %v10222 = vadd.f32 %v10206, 1e-05
      %v10223 = vadd.f32 %v10207, 1e-05
      %v10224 = vadd.f32 %v10208, 1e-05
      %v10225 = vrsqrt.pop %v10209
      %v10226 = vrsqrt.pop %v10210
      %v10227 = vrsqrt.pop %v10211
      %v10228 = vrsqrt.pop %v10212
      %v10229 = vrsqrt.pop %v10213
      %v10230 = vrsqrt.pop %v10214
      %v10231 = vrsqrt.pop %v10215
      %v10232 = vrsqrt.pop %v10216
      %v10233 = vrsqrt.pop %v10217
      %v10234 = vrsqrt.pop %v10218
      %v10235 = vrsqrt.pop %v10219
      %v10236 = vrsqrt.pop %v10220
      %v10237 = vrsqrt.pop %v10221
      %v10238 = vrsqrt.pop %v10222
      %v10239 = vrsqrt.pop %v10223
      %v10240 = vrsqrt.pop %v10224
      %v10241 = vmul.f32 %v10113, %v10225
      %v10242 = vmul.f32 %v10114, %v10226
      %v10243 = vmul.f32 %v10115, %v10227
      %v10244 = vmul.f32 %v10116, %v10228
      %v10245 = vmul.f32 %v10117, %v10229
      %v10246 = vmul.f32 %v10118, %v10230
      %v10247 = vmul.f32 %v10119, %v10231
      %v10248 = vmul.f32 %v10120, %v10232
      %v10249 = vmul.f32 %v10121, %v10233
      %v10250 = vmul.f32 %v10122, %v10234
      %v10251 = vmul.f32 %v10123, %v10235
      %v10252 = vmul.f32 %v10124, %v10236
      %v10253 = vmul.f32 %v10125, %v10237
      %v10254 = vmul.f32 %v10126, %v10238
      %v10255 = vmul.f32 %v10127, %v10239
      %v10256 = vmul.f32 %v10128, %v10240
      %v10258 = vlaneseq
      %v10259 = vshrl.u32 %v10258, 7
      %v10260 = vsub.s32 0, %v10259
      %v10261 = vrot.slane %v10047, %v10260
      %v10263 = vmul.f32 %v10241, %v10261
      %v10264 = vmul.f32 %v10242, %v10261
      %v10265 = vmul.f32 %v10243, %v10261
      %v10266 = vmul.f32 %v10244, %v10261
      %v10267 = vmul.f32 %v10245, %v10261
      %v10268 = vmul.f32 %v10246, %v10261
      %v10269 = vmul.f32 %v10247, %v10261
      %v10270 = vmul.f32 %v10248, %v10261
      %v10271 = vmul.f32 %v10249, %v10261
      %v10272 = vmul.f32 %v10250, %v10261
      %v10273 = vmul.f32 %v10251, %v10261
      %v10274 = vmul.f32 %v10252, %v10261
      %v10275 = vmul.f32 %v10253, %v10261
      %v10276 = vmul.f32 %v10254, %v10261
      %v10277 = vmul.f32 %v10255, %v10261
      %v10278 = vmul.f32 %v10256, %v10261
      %v10280 = vlaneseq
      %v10281 = vshrl.u32 %v10280, 7
      %v10282 = vsub.s32 0, %v10281
      %v10283 = vrot.slane %v10048, %v10282
      %v10285 = vadd.f32 %v10263, %v10283
      %v10286 = vadd.f32 %v10264, %v10283
      %v10287 = vadd.f32 %v10265, %v10283
      %v10288 = vadd.f32 %v10266, %v10283
      %v10289 = vadd.f32 %v10267, %v10283
      %v10290 = vadd.f32 %v10268, %v10283
      %v10291 = vadd.f32 %v10269, %v10283
      %v10292 = vadd.f32 %v10270, %v10283
      %v10293 = vadd.f32 %v10271, %v10283
      %v10294 = vadd.f32 %v10272, %v10283
      %v10295 = vadd.f32 %v10273, %v10283
      %v10296 = vadd.f32 %v10274, %v10283
      %v10297 = vadd.f32 %v10275, %v10283
      %v10298 = vadd.f32 %v10276, %v10283
      %v10299 = vadd.f32 %v10277, %v10283
      %v10300 = vadd.f32 %v10278, %v10283
      %10301 = vst.msk [vmem:[%s440] sm:$0xff] %vm514, %v10285
      %10302 = vst.msk [vmem:[%s440 + $0x8] sm:$0xff] %vm514, %v10286
      %10303 = vst.msk [vmem:[%s440 + $0x10] sm:$0xff] %vm514, %v10287
      %10304 = vst.msk [vmem:[%s440 + $0x18] sm:$0xff] %vm514, %v10288
      %10305 = vst.msk [vmem:[%s440 + $0x20] sm:$0xff] %vm514, %v10289
      %10306 = vst.msk [vmem:[%s440 + $0x28] sm:$0xff] %vm514, %v10290
      %10307 = vst.msk [vmem:[%s440 + $0x30] sm:$0xff] %vm514, %v10291
      %10308 = vst.msk [vmem:[%s440 + $0x38] sm:$0xff] %vm514, %v10292
      %10309 = vst.msk [vmem:[%s440 + $0x40] sm:$0xff] %vm514, %v10293
      %10310 = vst.msk [vmem:[%s440 + $0x48] sm:$0xff] %vm514, %v10294
      %10311 = vst.msk [vmem:[%s440 + $0x50] sm:$0xff] %vm514, %v10295
      %10312 = vst.msk [vmem:[%s440 + $0x58] sm:$0xff] %vm514, %v10296
      %10313 = vst.msk [vmem:[%s440 + $0x60] sm:$0xff] %vm514, %v10297
      %10314 = vst.msk [vmem:[%s440 + $0x68] sm:$0xff] %vm514, %v10298
      %10315 = vst.msk [vmem:[%s440 + $0x70] sm:$0xff] %vm514, %v10299
      %10316 = vst.msk [vmem:[%s440 + $0x78] sm:$0xff] %vm514, %v10300
      %p10317 = scmp.lt.s32.totalorder %s24, 1
      %s10318 = scalar_select %p10317, %s24, 1
      %s10319 = smul.addr %s10318, 16
      %s10320 = smul.addr %s10319, 8
      %s10321 = scalar_lea.vmem %s13, %s10320
      // Predicated region
      $region73: #{tpu_custom_call.1} parent=71 // pred_check
        %p10322 = pneg %p320
      $region74: #{tpu_custom_call.1} parent=71 // pred_check_branch
        %10324 = sbr.rel (%p10322) target = $region76
      $region75: #{tpu_custom_call.1} parent=71 // pred_region
        _
      $region76: #{tpu_custom_call.1} parent=71 // pred_fallthru
        _
    $region72: #{tpu_custom_call.1} parent=5 // pred_fallthru
      _
    %p10325 = scmp.le.s32.totalorder 2, %s19
    // Predicated region
    $region77: #{tpu_custom_call.1} parent=5 // pred_check
      %p10326 = pneg %p10325
    $region78: #{tpu_custom_call.1} parent=5 // pred_check_branch
      %10328 = sbr.rel (%p10326) target = $region80
    $region79: #{tpu_custom_call.1} parent=5 // pred_region
      %s10329 = ssub.s32 %s19, 2
      // Predicated region
      $region81: #{tpu_custom_call.1} parent=79 // pred_check
        %p10330 = pneg %p326
      $region82: #{tpu_custom_call.1} parent=79 // pred_check_branch
        %10332 = sbr.rel (%p10330) target = $region84
      $region83: #{tpu_custom_call.1} parent=79 // pred_region
        %p10333 = scmp.lt.s32.totalorder %s25, 1
        %s10334 = scalar_select %p10333, %s25, 1
        %s10335 = smul.addr %s10334, 16
        %s10336 = smul.addr %s10335, 8
        %s10337 = scalar_lea.vmem %s13, %s10336
      $region84: #{tpu_custom_call.1} parent=79 // pred_fallthru
        _
    $region80: #{tpu_custom_call.1} parent=5 // pred_fallthru
      _
  $region6: #{tpu_custom_call.1} parent=0 // loop_footer
    %s23 = sadd.s32 1, %s19
  $region7: #{tpu_custom_call.1} parent=0 // loop_footer_branch
    %18 = sbr.rel target = $region3
  $region8: #{tpu_custom_call.1} parent=0 // loop_exit
    _

</llo_original>
